<compile_context>
chip_gen: v6e
topology: v6e:2x2x1
jax: 0.10.0
libtpu: 0.0.40
codegen_flags: <defaults>
</compile_context>

<pallas_src>
import functools
import math

import jax
import jax.numpy as jnp
import numpy as np
from jax import lax
from jax.experimental import pallas as pl
from jax.experimental.pallas import tpu as pltpu


# ------------------------------------------------------------------ helpers --

def _round_up(x, m):
    return ((x + m - 1) // m) * m


def _row_block(m, cap=512):
    """Largest row tile: full M when small, else a multiple-of-8 divisor <= cap."""
    if m <= cap:
        return m
    for bm in range(cap - cap % 8, 7, -8):
        if m % bm == 0:
            return bm
    return m


# ------------------------------------------------------------------ kernels --

def _linear_kernel(x_ref, w_ref, b_ref, o_ref, *, activation):
    y = jnp.dot(x_ref[...], w_ref[...], preferred_element_type=jnp.float32)
    y = y + b_ref[...]
    if activation == "relu":
        y = jnp.maximum(y, 0.0)
    o_ref[...] = y.astype(o_ref.dtype)


def _linear_res_ln_kernel(x_ref, w_ref, b_ref, r_ref, g_ref, bb_ref, o_ref, *, eps):
    """Fused: y = LayerNorm(residual + (x @ w + b)) * gamma + beta."""
    y = jnp.dot(x_ref[...], w_ref[...], preferred_element_type=jnp.float32)
    y = y + b_ref[...] + r_ref[...]
    mean = jnp.mean(y, axis=-1, keepdims=True)
    var = jnp.mean((y - mean) ** 2, axis=-1, keepdims=True)
    yn = (y - mean) * lax.rsqrt(var + eps)
    o_ref[...] = (yn * g_ref[...] + bb_ref[...]).astype(o_ref.dtype)


def _mha_kernel(q_ref, k_ref, v_ref, kmask_ref, o_ref, *maybe_attn,
                scale, num_heads, causal, with_weights):
    """All heads of one batch element; heads packed along lanes ([S, H*dh])."""
    q = q_ref[0]                    # [Sq, D]
    k = k_ref[0]                    # [Sk, D]
    v = v_ref[0]                    # [Sk, D]
    sq, dim = q.shape
    sk = k.shape[0]
    dh = dim // num_heads

    # Additive mask built once (hoisted out of the head loop).
    mask_add = jnp.broadcast_to(kmask_ref[0], (sq, sk))          # key padding
    if causal:
        row = lax.broadcasted_iota(jnp.int32, (sq, sk), 0)
        col = lax.broadcasted_iota(jnp.int32, (sq, sk), 1)
        mask_add = mask_add + jnp.where(row >= col, 0.0, -1e9).astype(jnp.float32)

    attn_ref = maybe_attn[0] if with_weights else None
    ctx_parts = []
    for h in range(num_heads):
        qh = q[:, h * dh:(h + 1) * dh]
        kh = k[:, h * dh:(h + 1) * dh]
        vh = v[:, h * dh:(h + 1) * dh]
        # q @ k^T without an explicit transpose (contract the dh axes directly).
        s = lax.dot_general(qh, kh, (((1,), (1,)), ((), ())),
                            preferred_element_type=jnp.float32) * scale
        s = s + mask_add
        m = jnp.max(s, axis=-1, keepdims=True)
        e = jnp.exp(s - m)
        denom = jnp.sum(e, axis=-1, keepdims=True)
        p = e * pl.reciprocal(denom, approx=True)
        if with_weights:
            attn_ref[0, h] = p
        ctx_parts.append(jnp.dot(p, vh, preferred_element_type=jnp.float32))
    # Single dense store of the whole [Sq, D] context (heads back in lane order).
    o_ref[0] = jnp.concatenate(ctx_parts, axis=-1)


# ----------------------------------------------------------------- wrappers --

def linear(x2d, w, b, activation=None):
    """x2d: [M, Din] @ w: [Din, Dout] + b -> [M, Dout] (optionally relu)."""
    m, d_in = x2d.shape
    d_out = w.shape[1]
    bm = _row_block(m)
    return pl.pallas_call(
        functools.partial(_linear_kernel, activation=activation),
        grid=(m // bm,),
        in_specs=[
            pl.BlockSpec((bm, d_in), lambda i: (i, 0)),
            pl.BlockSpec((d_in, d_out), lambda i: (0, 0)),
            pl.BlockSpec((1, d_out), lambda i: (0, 0)),
        ],
        out_specs=pl.BlockSpec((bm, d_out), lambda i: (i, 0)),
        out_shape=jax.ShapeDtypeStruct((m, d_out), jnp.float32),
        compiler_params=pltpu.CompilerParams(dimension_semantics=("parallel",)),
    )(x2d, w, b.reshape(1, -1))


def linear_residual_layernorm(x2d, w, b, residual2d, gamma, beta, eps=1e-5):
    """Fused: LayerNorm(residual + x @ w + b)."""
    m, d_in = x2d.shape
    d_out = w.shape[1]
    bm = _row_block(m)
    return pl.pallas_call(
        functools.partial(_linear_res_ln_kernel, eps=eps),
        grid=(m // bm,),
        in_specs=[
            pl.BlockSpec((bm, d_in), lambda i: (i, 0)),
            pl.BlockSpec((d_in, d_out), lambda i: (0, 0)),
            pl.BlockSpec((1, d_out), lambda i: (0, 0)),
            pl.BlockSpec((bm, d_out), lambda i: (i, 0)),
            pl.BlockSpec((1, d_out), lambda i: (0, 0)),
            pl.BlockSpec((1, d_out), lambda i: (0, 0)),
        ],
        out_specs=pl.BlockSpec((bm, d_out), lambda i: (i, 0)),
        out_shape=jax.ShapeDtypeStruct((m, d_out), jnp.float32),
        compiler_params=pltpu.CompilerParams(dimension_semantics=("parallel",)),
    )(x2d, w, b.reshape(1, -1), residual2d, gamma.reshape(1, -1), beta.reshape(1, -1))


def multi_head_attention(xq, xkv, key_mask_add, p, num_heads, *, causal, is_self,
                         with_weights):
    """Returns (context [B, Sq, D], attn [B, H, Sq, Sk] or None). Heads stay in lanes."""
    batch, sq, dim = xq.shape
    sk = xkv.shape[1]
    dh = dim // num_heads

    if is_self:
        qkv = linear(xq.reshape(batch * sq, dim), p["w_qkv"], p["b_qkv"])   # [M, 3D]
        q = qkv[:, :dim].reshape(batch, sq, dim)
        k = qkv[:, dim:2 * dim].reshape(batch, sk, dim)
        v = qkv[:, 2 * dim:].reshape(batch, sk, dim)
    else:
        q = linear(xq.reshape(batch * sq, dim), p["wq"], p["bq"]).reshape(batch, sq, dim)
        kv = linear(xkv.reshape(batch * sk, dim), p["w_kv"], p["b_kv"])     # [M, 2D]
        k = kv[:, :dim].reshape(batch, sk, dim)
        v = kv[:, dim:].reshape(batch, sk, dim)

    kernel = functools.partial(_mha_kernel, scale=1.0 / math.sqrt(dh),
                               num_heads=num_heads, causal=causal,
                               with_weights=with_weights)
    in_specs = [
        pl.BlockSpec((1, sq, dim), lambda i: (i, 0, 0)),
        pl.BlockSpec((1, sk, dim), lambda i: (i, 0, 0)),
        pl.BlockSpec((1, sk, dim), lambda i: (i, 0, 0)),
        pl.BlockSpec((1, 1, sk), lambda i: (i, 0, 0)),
    ]
    if with_weights:
        outs = pl.pallas_call(
            kernel,
            grid=(batch,),
            in_specs=in_specs,
            out_specs=(
                pl.BlockSpec((1, sq, dim), lambda i: (i, 0, 0)),
                pl.BlockSpec((1, num_heads, sq, sk), lambda i: (i, 0, 0, 0)),
            ),
            out_shape=(
                jax.ShapeDtypeStruct((batch, sq, dim), jnp.float32),
                jax.ShapeDtypeStruct((batch, num_heads, sq, sk), jnp.float32),
            ),
            compiler_params=pltpu.CompilerParams(dimension_semantics=("parallel",)),
        )(q, k, v, key_mask_add)
        ctx, attn = outs
    else:
        ctx = pl.pallas_call(
            kernel,
            grid=(batch,),
            in_specs=in_specs,
            out_specs=pl.BlockSpec((1, sq, dim), lambda i: (i, 0, 0)),
            out_shape=jax.ShapeDtypeStruct((batch, sq, dim), jnp.float32),
            compiler_params=pltpu.CompilerParams(dimension_semantics=("parallel",)),
        )(q, k, v, key_mask_add)
        attn = None
    return ctx, attn


def attention_sublayer(x, kv_src, key_mask_add, p, ln_g, ln_b, num_heads, *,
                       causal, is_self, with_weights):
    batch, sq, dim = x.shape
    ctx, attn = multi_head_attention(x, kv_src, key_mask_add, p, num_heads,
                                     causal=causal, is_self=is_self,
                                     with_weights=with_weights)
    out2d = linear_residual_layernorm(ctx.reshape(batch * sq, dim), p["wo"], p["bo"],
                                      x.reshape(batch * sq, dim), ln_g, ln_b)
    return out2d.reshape(batch, sq, dim), attn


def ffn_sublayer(x, p, ln_g, ln_b):
    batch, seq, dim = x.shape
    x2d = x.reshape(batch * seq, dim)
    h = linear(x2d, p["w1"], p["b1"], activation="relu")
    out2d = linear_residual_layernorm(h, p["w2"], p["b2"], x2d, ln_g, ln_b)
    return out2d.reshape(batch, seq, dim)


# ------------------------------------------------------------- model pieces --

def sinusoidal_pe(max_len, dim):
    pos = np.arange(max_len)[:, None].astype(np.float64)
    i = np.arange(dim)[None, :].astype(np.float64)
    angle = pos / np.power(10000.0, (2.0 * (i // 2)) / dim)
    pe = np.zeros((max_len, dim))
    pe[:, 0::2] = np.sin(angle[:, 0::2])
    pe[:, 1::2] = np.cos(angle[:, 1::2])
    return jnp.asarray(pe, jnp.float32)


def embed(tokens, emb_table, pe):
    # Embedding gather + positional add kept in XLA (tiny, data-dependent gather).
    dim = emb_table.shape[1]
    x = emb_table[tokens] * math.sqrt(dim)
    return x + pe[: tokens.shape[1]][None, :, :]


def key_padding_mask_add(tokens):
    """[B, 1, Sk] additive mask: 0 for real tokens, -1e9 for padding (token 0)."""
    return jnp.where(tokens != 0, 0.0, -1e9).astype(jnp.float32)[:, None, :]


def encoder_forward(src, params, src_key_mask_add, num_heads):
    x = embed(src, params["embed"], params["pe"])
    attn_w = None
    n = len(params["layers"])
    for li, lp in enumerate(params["layers"]):
        last = li == n - 1
        x, w = attention_sublayer(x, x, src_key_mask_add, lp["mha"],
                                  lp["ln1_g"], lp["ln1_b"], num_heads,
                                  causal=False, is_self=True, with_weights=last)
        if last:
            attn_w = w
        x = ffn_sublayer(x, lp["ffn"], lp["ln2_g"], lp["ln2_b"])
    return x, attn_w


def decoder_forward(tgt, enc_out, params, tgt_key_mask_add, src_key_mask_add, num_heads):
    x = embed(tgt, params["embed"], params["pe"])
    self_w = cross_w = None
    n = len(params["layers"])
    for li, lp in enumerate(params["layers"]):
        last = li == n - 1
        x, w_s = attention_sublayer(x, x, tgt_key_mask_add, lp["self_mha"],
                                    lp["ln1_g"], lp["ln1_b"], num_heads,
                                    causal=True, is_self=True, with_weights=last)
        x, w_c = attention_sublayer(x, enc_out, src_key_mask_add, lp["cross_mha"],
                                    lp["ln2_g"], lp["ln2_b"], num_heads,
                                    causal=False, is_self=False, with_weights=last)
        x = ffn_sublayer(x, lp["ffn"], lp["ln3_g"], lp["ln3_b"])
        if last:
            self_w, cross_w = w_s, w_c
    return x, self_w, cross_w


def transformer_forward(src, tgt, params, num_heads):
    src_kmask = key_padding_mask_add(src)        # [B,1,Ss]  (== reference src_mask)
    tgt_kmask = key_padding_mask_add(tgt)        # [B,1,St]  (+ causal in-kernel == combined)

    enc_out, enc_attn = encoder_forward(src, params["encoder"], src_kmask, num_heads)
    dec_out, dec_self, dec_cross = decoder_forward(
        tgt, enc_out, params["decoder"], tgt_kmask, src_kmask, num_heads)

    batch, st, dim = dec_out.shape
    tgt_vocab = params["decoder"]["embed"].shape[0]
    # out_w / out_b are stored zero-padded to a lane multiple for dense stores.
    logits = linear(dec_out.reshape(batch * st, dim), params["out_w"], params["out_b"])
    logits = logits[:, :tgt_vocab].reshape(batch, st, tgt_vocab)
    return logits, {"encoder_attention": enc_attn,
                    "decoder_self_attention": dec_self,
                    "decoder_cross_attention": dec_cross}


# --------------------------------------------------------------- param init --

def init_params(key, src_vocab, tgt_vocab, dim, layers, ff_dim, max_len):
    def nrm(k, shape, scale=0.02):
        return jax.random.normal(k, shape, jnp.float32) * scale

    keys = iter(jax.random.split(key, 512))

    def self_mha_params():
        return {"w_qkv": nrm(next(keys), (dim, 3 * dim)),
                "b_qkv": jnp.zeros((3 * dim,), jnp.float32),
                "wo": nrm(next(keys), (dim, dim)),
                "bo": jnp.zeros((dim,), jnp.float32)}

    def cross_mha_params():
        return {"wq": nrm(next(keys), (dim, dim)),
                "bq": jnp.zeros((dim,), jnp.float32),
                "w_kv": nrm(next(keys), (dim, 2 * dim)),
                "b_kv": jnp.zeros((2 * dim,), jnp.float32),
                "wo": nrm(next(keys), (dim, dim)),
                "bo": jnp.zeros((dim,), jnp.float32)}

    def ffn_params():
        # Zero-pad the hidden dim to a lane multiple: exact (relu(0)=0, zero rows in w2).
        ffp = _round_up(ff_dim, 128)
        w1 = jnp.pad(nrm(next(keys), (dim, ff_dim)), ((0, 0), (0, ffp - ff_dim)))
        b1 = jnp.zeros((ffp,), jnp.float32)
        w2 = jnp.pad(nrm(next(keys), (ff_dim, dim)), ((0, ffp - ff_dim), (0, 0)))
        b2 = jnp.zeros((dim,), jnp.float32)
        return {"w1": w1, "b1": b1, "w2": w2, "b2": b2}

    def ln():
        return jnp.ones((dim,), jnp.float32), jnp.zeros((dim,), jnp.float32)

    pe = sinusoidal_pe(max_len, dim)

    enc_layers = []
    for _ in range(layers):
        g1, b1 = ln(); g2, b2 = ln()
        enc_layers.append({"mha": self_mha_params(), "ffn": ffn_params(),
                           "ln1_g": g1, "ln1_b": b1, "ln2_g": g2, "ln2_b": b2})
    dec_layers = []
    for _ in range(layers):
        g1, b1 = ln(); g2, b2 = ln(); g3, b3 = ln()
        dec_layers.append({"self_mha": self_mha_params(), "cross_mha": cross_mha_params(),
                           "ffn": ffn_params(),
                           "ln1_g": g1, "ln1_b": b1, "ln2_g": g2, "ln2_b": b2,
                           "ln3_g": g3, "ln3_b": b3})

    vpad = _round_up(tgt_vocab, 128)
    out_w = jnp.pad(nrm(next(keys), (dim, tgt_vocab)), ((0, 0), (0, vpad - tgt_vocab)))
    out_b = jnp.zeros((vpad,), jnp.float32)

    return {
        "encoder": {"embed": nrm(next(keys), (src_vocab, dim), 1.0), "pe": pe,
                    "layers": enc_layers},
        "decoder": {"embed": nrm(next(keys), (tgt_vocab, dim), 1.0), "pe": pe,
                    "layers": dec_layers},
        "out_w": out_w,
        "out_b": out_b,
    }


# --------------------------------------------------------------------- main --

if __name__ == "__main__":
    SRC_VOCAB, TGT_VOCAB = 50, 60
    EMBED_DIM, NUM_LAYERS, NUM_HEADS, FF_DIM = 32, 2, 4, 64
    MAX_SEQ_LEN = 64
    B, S_SRC, S_TGT = 2, 8, 8

    key = jax.random.PRNGKey(0)
    kp, ks, kt = jax.random.split(key, 3)

    params = init_params(kp, SRC_VOCAB, TGT_VOCAB, EMBED_DIM, NUM_LAYERS, FF_DIM,
                         MAX_SEQ_LEN)

    src = jax.random.randint(ks, (B, S_SRC), 1, SRC_VOCAB, dtype=jnp.int32)
    tgt = jax.random.randint(kt, (B, S_TGT), 1, TGT_VOCAB, dtype=jnp.int32)
    # introduce padding (token 0) so the padding masks are exercised
    src = src.at[1, -2:].set(0)
    tgt = tgt.at[1, -3:].set(0)

    logits, attn = jax.jit(
        functools.partial(transformer_forward, num_heads=NUM_HEADS)
    )(src, tgt, params)

    jax.block_until_ready(logits)
    jax.block_until_ready(attn)

    assert logits.shape == (B, S_TGT, TGT_VOCAB)
    assert attn["encoder_attention"].shape == (B, NUM_HEADS, S_SRC, S_SRC)
    assert attn["decoder_self_attention"].shape == (B, NUM_HEADS, S_TGT, S_TGT)
    assert attn["decoder_cross_attention"].shape == (B, NUM_HEADS, S_TGT, S_SRC)
    assert bool(jnp.all(jnp.isfinite(logits)))

    print("KERNEL_OK")
</pallas_src>

<mosaic_0001>
module attributes {stable_mosaic.version = 11 : i64} {
  func.func @_linear_kernel(%arg0: i32, %arg1: memref<16x32xf32, #tpu.memory_space<vmem>>, %arg2: memref<32x96xf32, #tpu.memory_space<vmem>>, %arg3: memref<1x96xf32, #tpu.memory_space<vmem>>, %arg4: memref<16x96xf32, #tpu.memory_space<vmem>>) attributes {dimension_semantics = [#tpu.dimension_semantics<parallel>], iteration_bounds = array<i64: 1>, scalar_prefetch = 0 : i64, scratch_operands = 0 : i64, tpu.core_type = #tpu.core_type<tc>, window_params = [{transform_indices = @transform_0, window_bounds = array<i64: 16, 32>}, {pipeline_mode = #tpu.pipeline_mode<synchronous>, transform_indices = @transform_1, window_bounds = array<i64: 32, 96>}, {pipeline_mode = #tpu.pipeline_mode<synchronous>, transform_indices = @transform_2, window_bounds = array<i64: 1, 96>}, {transform_indices = @transform_3, window_bounds = array<i64: 16, 96>}]} {
    %c0 = arith.constant 0 : index
    %c0_0 = arith.constant 0 : index
    %0 = vector.load %arg1[%c0, %c0_0] : memref<16x32xf32, #tpu.memory_space<vmem>>, vector<16x32xf32>
    %c0_1 = arith.constant 0 : index
    %c0_2 = arith.constant 0 : index
    %1 = vector.load %arg2[%c0_1, %c0_2] : memref<32x96xf32, #tpu.memory_space<vmem>>, vector<32x96xf32>
    %cst = arith.constant dense<0.000000e+00> : vector<16x96xf32>
    %2 = tpu.matmul %0, %1, %cst {dimension_numbers = #tpu.dot_dimension_numbers<[1], [0], [0], [1], [0, 0, 1, 1], [], []>} : vector<16x32xf32>, vector<32x96xf32>, vector<16x96xf32> -> vector<16x96xf32>
    %c0_3 = arith.constant 0 : index
    %c0_4 = arith.constant 0 : index
    %3 = vector.load %arg3[%c0_3, %c0_4] : memref<1x96xf32, #tpu.memory_space<vmem>>, vector<1x96xf32>
    %4 = vector.broadcast %3 : vector<1x96xf32> to vector<16x96xf32>
    %5 = arith.addf %2, %4 : vector<16x96xf32>
    %c0_5 = arith.constant 0 : index
    %c0_6 = arith.constant 0 : index
    %6 = vector.load %arg4[%c0_5, %c0_6] : memref<16x96xf32, #tpu.memory_space<vmem>>, vector<16x96xf32>
    tpu.vector_store %arg4[%c0_5, %c0_6], %5 {strides = array<i32>} : memref<16x96xf32, #tpu.memory_space<vmem>>, vector<16x96xf32>,
    return
  }
  func.func @transform_0(%arg0: i32) -> (i32, i32) {
    %c0_i32 = arith.constant 0 : i32
    %c0_i32_0 = arith.constant 0 : i32
    return %arg0, %c0_i32 : i32, i32
  }
  func.func @transform_1(%arg0: i32) -> (i32, i32) {
    %c0_i32 = arith.constant 0 : i32
    %c0_i32_0 = arith.constant 0 : i32
    %c0_i32_1 = arith.constant 0 : i32
    return %c0_i32, %c0_i32_0 : i32, i32
  }
  func.func @transform_2(%arg0: i32) -> (i32, i32) {
    %c0_i32 = arith.constant 0 : i32
    %c0_i32_0 = arith.constant 0 : i32
    %c0_i32_1 = arith.constant 0 : i32
    return %c0_i32, %c0_i32_0 : i32, i32
  }
  func.func @transform_3(%arg0: i32) -> (i32, i32) {
    %c0_i32 = arith.constant 0 : i32
    %c0_i32_0 = arith.constant 0 : i32
    return %arg0, %c0_i32 : i32, i32
  }
}

module attributes {stable_mosaic.version = 11 : i64} {
  func.func @_mha_kernel(%arg0: i32, %arg1: memref<1x8x32xf32, #tpu.memory_space<vmem>>, %arg2: memref<1x8x32xf32, #tpu.memory_space<vmem>>, %arg3: memref<1x8x32xf32, #tpu.memory_space<vmem>>, %arg4: memref<1x1x8xf32, #tpu.memory_space<vmem>>, %arg5: memref<1x8x32xf32, #tpu.memory_space<vmem>>) attributes {dimension_semantics = [#tpu.dimension_semantics<parallel>], iteration_bounds = array<i64: 2>, scalar_prefetch = 0 : i64, scratch_operands = 0 : i64, tpu.core_type = #tpu.core_type<tc>, window_params = [{transform_indices = @transform_0, window_bounds = array<i64: 1, 8, 32>}, {transform_indices = @transform_1, window_bounds = array<i64: 1, 8, 32>}, {transform_indices = @transform_2, window_bounds = array<i64: 1, 8, 32>}, {transform_indices = @transform_3, window_bounds = array<i64: 1, 1, 8>}, {transform_indices = @transform_4, window_bounds = array<i64: 1, 8, 32>}]} {
    %c0 = arith.constant 0 : index
    %c0_0 = arith.constant 0 : index
    %c0_1 = arith.constant 0 : index
    %0 = vector.load %arg1[%c0, %c0_0, %c0_1] : memref<1x8x32xf32, #tpu.memory_space<vmem>>, vector<1x8x32xf32>
    %1 = vector.shape_cast %0 : vector<1x8x32xf32> to vector<8x32xf32>
    %c0_2 = arith.constant 0 : index
    %c0_3 = arith.constant 0 : index
    %c0_4 = arith.constant 0 : index
    %2 = vector.load %arg2[%c0_2, %c0_3, %c0_4] : memref<1x8x32xf32, #tpu.memory_space<vmem>>, vector<1x8x32xf32>
    %3 = vector.shape_cast %2 : vector<1x8x32xf32> to vector<8x32xf32>
    %c0_5 = arith.constant 0 : index
    %c0_6 = arith.constant 0 : index
    %c0_7 = arith.constant 0 : index
    %4 = vector.load %arg3[%c0_5, %c0_6, %c0_7] : memref<1x8x32xf32, #tpu.memory_space<vmem>>, vector<1x8x32xf32>
    %5 = vector.shape_cast %4 : vector<1x8x32xf32> to vector<8x32xf32>
    %c0_8 = arith.constant 0 : index
    %c0_9 = arith.constant 0 : index
    %c0_10 = arith.constant 0 : index
    %6 = vector.load %arg4[%c0_8, %c0_9, %c0_10] : memref<1x1x8xf32, #tpu.memory_space<vmem>>, vector<1x1x8xf32>
    %7 = vector.shape_cast %6 : vector<1x1x8xf32> to vector<1x8xf32>
    %8 = vector.shape_cast %7 : vector<1x8xf32> to vector<1x8xf32>
    %9 = vector.broadcast %8 : vector<1x8xf32> to vector<8x8xf32>
    %10 = vector.extract_strided_slice %1 {offsets = [0, 0], sizes = [8, 8], strides = [1, 1]} : vector<8x32xf32> to vector<8x8xf32>
    %11 = vector.extract_strided_slice %3 {offsets = [0, 0], sizes = [8, 8], strides = [1, 1]} : vector<8x32xf32> to vector<8x8xf32>
    %12 = vector.extract_strided_slice %5 {offsets = [0, 0], sizes = [8, 8], strides = [1, 1]} : vector<8x32xf32> to vector<8x8xf32>
    %cst = arith.constant dense<0.000000e+00> : vector<8x8xf32>
    %13 = tpu.matmul %10, %11, %cst {dimension_numbers = #tpu.dot_dimension_numbers<[1], [1], [0], [0], [0, 0, 1, 0], [], []>} : vector<8x8xf32>, vector<8x8xf32>, vector<8x8xf32> -> vector<8x8xf32>
    %cst_11 = arith.constant 0.353553385 : f32
    %14 = vector.broadcast %cst_11 : f32 to vector<8x8xf32>
    %15 = arith.mulf %13, %14 : vector<8x8xf32>
    %16 = arith.addf %15, %9 : vector<8x8xf32>
    %cst_12 = arith.constant dense<0xFF800000> : vector<8xf32>
    %17 = vector.multi_reduction <maximumf>, %16, %cst_12 [1] : vector<8x8xf32> to vector<8xf32>
    %18 = vector.shape_cast %17 : vector<8xf32> to vector<8x1xf32>
    %19 = vector.broadcast %18 : vector<8x1xf32> to vector<8x8xf32>
    %20 = arith.subf %16, %19 : vector<8x8xf32>
    %21 = math.exp %20 : vector<8x8xf32>
    %cst_13 = arith.constant dense<0.000000e+00> : vector<8xf32>
    %22 = vector.multi_reduction <add>, %21, %cst_13 [1] : vector<8x8xf32> to vector<8xf32>
    %23 = vector.shape_cast %22 : vector<8xf32> to vector<8x1xf32>
    %24 = tpu.reciprocal %23 {approx = true} : vector<8x1xf32> -> vector<8x1xf32>
    %25 = vector.broadcast %24 : vector<8x1xf32> to vector<8x8xf32>
    %26 = arith.mulf %21, %25 : vector<8x8xf32>
    %cst_14 = arith.constant dense<0.000000e+00> : vector<8x8xf32>
    %27 = tpu.matmul %26, %12, %cst_14 {dimension_numbers = #tpu.dot_dimension_numbers<[1], [0], [0], [1], [0, 0, 1, 1], [], []>} : vector<8x8xf32>, vector<8x8xf32>, vector<8x8xf32> -> vector<8x8xf32>
    %28 = vector.extract_strided_slice %1 {offsets = [0, 8], sizes = [8, 8], strides = [1, 1]} : vector<8x32xf32> to vector<8x8xf32>
    %29 = vector.extract_strided_slice %3 {offsets = [0, 8], sizes = [8, 8], strides = [1, 1]} : vector<8x32xf32> to vector<8x8xf32>
    %30 = vector.extract_strided_slice %5 {offsets = [0, 8], sizes = [8, 8], strides = [1, 1]} : vector<8x32xf32> to vector<8x8xf32>
    %cst_15 = arith.constant dense<0.000000e+00> : vector<8x8xf32>
    %31 = tpu.matmul %28, %29, %cst_15 {dimension_numbers = #tpu.dot_dimension_numbers<[1], [1], [0], [0], [0, 0, 1, 0], [], []>} : vector<8x8xf32>, vector<8x8xf32>, vector<8x8xf32> -> vector<8x8xf32>
    %cst_16 = arith.constant 0.353553385 : f32
    %32 = vector.broadcast %cst_16 : f32 to vector<8x8xf32>
    %33 = arith.mulf %31, %32 : vector<8x8xf32>
    %34 = arith.addf %33, %9 : vector<8x8xf32>
    %cst_17 = arith.constant dense<0xFF800000> : vector<8xf32>
    %35 = vector.multi_reduction <maximumf>, %34, %cst_17 [1] : vector<8x8xf32> to vector<8xf32>
    %36 = vector.shape_cast %35 : vector<8xf32> to vector<8x1xf32>
    %37 = vector.broadcast %36 : vector<8x1xf32> to vector<8x8xf32>
    %38 = arith.subf %34, %37 : vector<8x8xf32>
    %39 = math.exp %38 : vector<8x8xf32>
    %cst_18 = arith.constant dense<0.000000e+00> : vector<8xf32>
    %40 = vector.multi_reduction <add>, %39, %cst_18 [1] : vector<8x8xf32> to vector<8xf32>
    %41 = vector.shape_cast %40 : vector<8xf32> to vector<8x1xf32>
    %42 = tpu.reciprocal %41 {approx = true} : vector<8x1xf32> -> vector<8x1xf32>
    %43 = vector.broadcast %42 : vector<8x1xf32> to vector<8x8xf32>
    %44 = arith.mulf %39, %43 : vector<8x8xf32>
    %cst_19 = arith.constant dense<0.000000e+00> : vector<8x8xf32>
    %45 = tpu.matmul %44, %30, %cst_19 {dimension_numbers = #tpu.dot_dimension_numbers<[1], [0], [0], [1], [0, 0, 1, 1], [], []>} : vector<8x8xf32>, vector<8x8xf32>, vector<8x8xf32> -> vector<8x8xf32>
    %46 = vector.extract_strided_slice %1 {offsets = [0, 16], sizes = [8, 8], strides = [1, 1]} : vector<8x32xf32> to vector<8x8xf32>
    %47 = vector.extract_strided_slice %3 {offsets = [0, 16], sizes = [8, 8], strides = [1, 1]} : vector<8x32xf32> to vector<8x8xf32>
    %48 = vector.extract_strided_slice %5 {offsets = [0, 16], sizes = [8, 8], strides = [1, 1]} : vector<8x32xf32> to vector<8x8xf32>
    %cst_20 = arith.constant dense<0.000000e+00> : vector<8x8xf32>
    %49 = tpu.matmul %46, %47, %cst_20 {dimension_numbers = #tpu.dot_dimension_numbers<[1], [1], [0], [0], [0, 0, 1, 0], [], []>} : vector<8x8xf32>, vector<8x8xf32>, vector<8x8xf32> -> vector<8x8xf32>
    %cst_21 = arith.constant 0.353553385 : f32
    %50 = vector.broadcast %cst_21 : f32 to vector<8x8xf32>
    %51 = arith.mulf %49, %50 : vector<8x8xf32>
    %52 = arith.addf %51, %9 : vector<8x8xf32>
    %cst_22 = arith.constant dense<0xFF800000> : vector<8xf32>
    %53 = vector.multi_reduction <maximumf>, %52, %cst_22 [1] : vector<8x8xf32> to vector<8xf32>
    %54 = vector.shape_cast %53 : vector<8xf32> to vector<8x1xf32>
    %55 = vector.broadcast %54 : vector<8x1xf32> to vector<8x8xf32>
    %56 = arith.subf %52, %55 : vector<8x8xf32>
    %57 = math.exp %56 : vector<8x8xf32>
    %cst_23 = arith.constant dense<0.000000e+00> : vector<8xf32>
    %58 = vector.multi_reduction <add>, %57, %cst_23 [1] : vector<8x8xf32> to vector<8xf32>
    %59 = vector.shape_cast %58 : vector<8xf32> to vector<8x1xf32>
    %60 = tpu.reciprocal %59 {approx = true} : vector<8x1xf32> -> vector<8x1xf32>
    %61 = vector.broadcast %60 : vector<8x1xf32> to vector<8x8xf32>
    %62 = arith.mulf %57, %61 : vector<8x8xf32>
    %cst_24 = arith.constant dense<0.000000e+00> : vector<8x8xf32>
    %63 = tpu.matmul %62, %48, %cst_24 {dimension_numbers = #tpu.dot_dimension_numbers<[1], [0], [0], [1], [0, 0, 1, 1], [], []>} : vector<8x8xf32>, vector<8x8xf32>, vector<8x8xf32> -> vector<8x8xf32>
    %64 = vector.extract_strided_slice %1 {offsets = [0, 24], sizes = [8, 8], strides = [1, 1]} : vector<8x32xf32> to vector<8x8xf32>
    %65 = vector.extract_strided_slice %3 {offsets = [0, 24], sizes = [8, 8], strides = [1, 1]} : vector<8x32xf32> to vector<8x8xf32>
    %66 = vector.extract_strided_slice %5 {offsets = [0, 24], sizes = [8, 8], strides = [1, 1]} : vector<8x32xf32> to vector<8x8xf32>
    %cst_25 = arith.constant dense<0.000000e+00> : vector<8x8xf32>
    %67 = tpu.matmul %64, %65, %cst_25 {dimension_numbers = #tpu.dot_dimension_numbers<[1], [1], [0], [0], [0, 0, 1, 0], [], []>} : vector<8x8xf32>, vector<8x8xf32>, vector<8x8xf32> -> vector<8x8xf32>
    %cst_26 = arith.constant 0.353553385 : f32
    %68 = vector.broadcast %cst_26 : f32 to vector<8x8xf32>
    %69 = arith.mulf %67, %68 : vector<8x8xf32>
    %70 = arith.addf %69, %9 : vector<8x8xf32>
    %cst_27 = arith.constant dense<0xFF800000> : vector<8xf32>
    %71 = vector.multi_reduction <maximumf>, %70, %cst_27 [1] : vector<8x8xf32> to vector<8xf32>
    %72 = vector.shape_cast %71 : vector<8xf32> to vector<8x1xf32>
    %73 = vector.broadcast %72 : vector<8x1xf32> to vector<8x8xf32>
    %74 = arith.subf %70, %73 : vector<8x8xf32>
    %75 = math.exp %74 : vector<8x8xf32>
    %cst_28 = arith.constant dense<0.000000e+00> : vector<8xf32>
    %76 = vector.multi_reduction <add>, %75, %cst_28 [1] : vector<8x8xf32> to vector<8xf32>
    %77 = vector.shape_cast %76 : vector<8xf32> to vector<8x1xf32>
    %78 = tpu.reciprocal %77 {approx = true} : vector<8x1xf32> -> vector<8x1xf32>
    %79 = vector.broadcast %78 : vector<8x1xf32> to vector<8x8xf32>
    %80 = arith.mulf %75, %79 : vector<8x8xf32>
    %cst_29 = arith.constant dense<0.000000e+00> : vector<8x8xf32>
    %81 = tpu.matmul %80, %66, %cst_29 {dimension_numbers = #tpu.dot_dimension_numbers<[1], [0], [0], [1], [0, 0, 1, 1], [], []>} : vector<8x8xf32>, vector<8x8xf32>, vector<8x8xf32> -> vector<8x8xf32>
    %82 = tpu.concatenate %27, %45, %63, %81 in 1 : vector<8x8xf32>, vector<8x8xf32>, vector<8x8xf32>, vector<8x8xf32> -> vector<8x32xf32>
    %c0_30 = arith.constant 0 : index
    %c0_31 = arith.constant 0 : index
    %c0_32 = arith.constant 0 : index
    %83 = vector.load %arg5[%c0_30, %c0_31, %c0_32] : memref<1x8x32xf32, #tpu.memory_space<vmem>>, vector<1x8x32xf32>
    %84 = vector.shape_cast %83 : vector<1x8x32xf32> to vector<8x32xf32>
    %85 = vector.shape_cast %82 : vector<8x32xf32> to vector<1x8x32xf32>
    tpu.vector_store %arg5[%c0_30, %c0_31, %c0_32], %85 {strides = array<i32>} : memref<1x8x32xf32, #tpu.memory_space<vmem>>, vector<1x8x32xf32>,
    return
  }
  func.func @transform_0(%arg0: i32) -> (i32, i32, i32) {
    %c0_i32 = arith.constant 0 : i32
    %c0_i32_0 = arith.constant 0 : i32
    %c0_i32_1 = arith.constant 0 : i32
    return %arg0, %c0_i32, %c0_i32_0 : i32, i32, i32
  }
  func.func @transform_1(%arg0: i32) -> (i32, i32, i32) {
    %c0_i32 = arith.constant 0 : i32
    %c0_i32_0 = arith.constant 0 : i32
    %c0_i32_1 = arith.constant 0 : i32
    return %arg0, %c0_i32, %c0_i32_0 : i32, i32, i32
  }
  func.func @transform_2(%arg0: i32) -> (i32, i32, i32) {
    %c0_i32 = arith.constant 0 : i32
    %c0_i32_0 = arith.constant 0 : i32
    %c0_i32_1 = arith.constant 0 : i32
    return %arg0, %c0_i32, %c0_i32_0 : i32, i32, i32
  }
  func.func @transform_3(%arg0: i32) -> (i32, i32, i32) {
    %c0_i32 = arith.constant 0 : i32
    %c0_i32_0 = arith.constant 0 : i32
    %c0_i32_1 = arith.constant 0 : i32
    return %arg0, %c0_i32, %c0_i32_0 : i32, i32, i32
  }
  func.func @transform_4(%arg0: i32) -> (i32, i32, i32) {
    %c0_i32 = arith.constant 0 : i32
    %c0_i32_0 = arith.constant 0 : i32
    %c0_i32_1 = arith.constant 0 : i32
    return %arg0, %c0_i32, %c0_i32_0 : i32, i32, i32
  }
}

module attributes {stable_mosaic.version = 11 : i64} {
  func.func @_linear_res_ln_kernel(%arg0: i32, %arg1: memref<16x32xf32, #tpu.memory_space<vmem>>, %arg2: memref<32x32xf32, #tpu.memory_space<vmem>>, %arg3: memref<1x32xf32, #tpu.memory_space<vmem>>, %arg4: memref<16x32xf32, #tpu.memory_space<vmem>>, %arg5: memref<1x32xf32, #tpu.memory_space<vmem>>, %arg6: memref<1x32xf32, #tpu.memory_space<vmem>>, %arg7: memref<16x32xf32, #tpu.memory_space<vmem>>) attributes {dimension_semantics = [#tpu.dimension_semantics<parallel>], iteration_bounds = array<i64: 1>, scalar_prefetch = 0 : i64, scratch_operands = 0 : i64, tpu.core_type = #tpu.core_type<tc>, window_params = [{transform_indices = @transform_0, window_bounds = array<i64: 16, 32>}, {pipeline_mode = #tpu.pipeline_mode<synchronous>, transform_indices = @transform_1, window_bounds = array<i64: 32, 32>}, {pipeline_mode = #tpu.pipeline_mode<synchronous>, transform_indices = @transform_2, window_bounds = array<i64: 1, 32>}, {transform_indices = @transform_3, window_bounds = array<i64: 16, 32>}, {pipeline_mode = #tpu.pipeline_mode<synchronous>, transform_indices = @transform_4, window_bounds = array<i64: 1, 32>}, {pipeline_mode = #tpu.pipeline_mode<synchronous>, transform_indices = @transform_5, window_bounds = array<i64: 1, 32>}, {transform_indices = @transform_6, window_bounds = array<i64: 16, 32>}]} {
    %c0 = arith.constant 0 : index
    %c0_0 = arith.constant 0 : index
    %0 = vector.load %arg1[%c0, %c0_0] : memref<16x32xf32, #tpu.memory_space<vmem>>, vector<16x32xf32>
    %c0_1 = arith.constant 0 : index
    %c0_2 = arith.constant 0 : index
    %1 = vector.load %arg2[%c0_1, %c0_2] : memref<32x32xf32, #tpu.memory_space<vmem>>, vector<32x32xf32>
    %cst = arith.constant dense<0.000000e+00> : vector<16x32xf32>
    %2 = tpu.matmul %0, %1, %cst {dimension_numbers = #tpu.dot_dimension_numbers<[1], [0], [0], [1], [0, 0, 1, 1], [], []>} : vector<16x32xf32>, vector<32x32xf32>, vector<16x32xf32> -> vector<16x32xf32>
    %c0_3 = arith.constant 0 : index
    %c0_4 = arith.constant 0 : index
    %3 = vector.load %arg3[%c0_3, %c0_4] : memref<1x32xf32, #tpu.memory_space<vmem>>, vector<1x32xf32>
    %4 = vector.broadcast %3 : vector<1x32xf32> to vector<16x32xf32>
    %5 = arith.addf %2, %4 : vector<16x32xf32>
    %c0_5 = arith.constant 0 : index
    %c0_6 = arith.constant 0 : index
    %6 = vector.load %arg4[%c0_5, %c0_6] : memref<16x32xf32, #tpu.memory_space<vmem>>, vector<16x32xf32>
    %7 = arith.addf %5, %6 : vector<16x32xf32>
    %cst_7 = arith.constant dense<0.000000e+00> : vector<16xf32>
    %8 = vector.multi_reduction <add>, %7, %cst_7 [1] : vector<16x32xf32> to vector<16xf32>
    %9 = vector.shape_cast %8 : vector<16xf32> to vector<16x1xf32>
    %cst_8 = arith.constant 3.200000e+01 : f32
    %10 = vector.broadcast %cst_8 : f32 to vector<16x1xf32>
    %11 = arith.divf %9, %10 : vector<16x1xf32>
    %12 = vector.broadcast %11 : vector<16x1xf32> to vector<16x32xf32>
    %13 = arith.subf %7, %12 : vector<16x32xf32>
    %14 = arith.mulf %13, %13 : vector<16x32xf32>
    %cst_9 = arith.constant dense<0.000000e+00> : vector<16xf32>
    %15 = vector.multi_reduction <add>, %14, %cst_9 [1] : vector<16x32xf32> to vector<16xf32>
    %16 = vector.shape_cast %15 : vector<16xf32> to vector<16x1xf32>
    %cst_10 = arith.constant 3.200000e+01 : f32
    %17 = vector.broadcast %cst_10 : f32 to vector<16x1xf32>
    %18 = arith.divf %16, %17 : vector<16x1xf32>
    %19 = vector.broadcast %11 : vector<16x1xf32> to vector<16x32xf32>
    %20 = arith.subf %7, %19 : vector<16x32xf32>
    %cst_11 = arith.constant 9.99999974E-6 : f32
    %21 = vector.broadcast %cst_11 : f32 to vector<16x1xf32>
    %22 = arith.addf %18, %21 : vector<16x1xf32>
    %23 = math.rsqrt %22 : vector<16x1xf32>
    %24 = vector.broadcast %23 : vector<16x1xf32> to vector<16x32xf32>
    %25 = arith.mulf %20, %24 : vector<16x32xf32>
    %c0_12 = arith.constant 0 : index
    %c0_13 = arith.constant 0 : index
    %26 = vector.load %arg5[%c0_12, %c0_13] : memref<1x32xf32, #tpu.memory_space<vmem>>, vector<1x32xf32>
    %27 = vector.broadcast %26 : vector<1x32xf32> to vector<16x32xf32>
    %28 = arith.mulf %25, %27 : vector<16x32xf32>
    %c0_14 = arith.constant 0 : index
    %c0_15 = arith.constant 0 : index
    %29 = vector.load %arg6[%c0_14, %c0_15] : memref<1x32xf32, #tpu.memory_space<vmem>>, vector<1x32xf32>
    %30 = vector.broadcast %29 : vector<1x32xf32> to vector<16x32xf32>
    %31 = arith.addf %28, %30 : vector<16x32xf32>
    %c0_16 = arith.constant 0 : index
    %c0_17 = arith.constant 0 : index
    %32 = vector.load %arg7[%c0_16, %c0_17] : memref<16x32xf32, #tpu.memory_space<vmem>>, vector<16x32xf32>
    tpu.vector_store %arg7[%c0_16, %c0_17], %31 {strides = array<i32>} : memref<16x32xf32, #tpu.memory_space<vmem>>, vector<16x32xf32>,
    return
  }
  func.func @transform_0(%arg0: i32) -> (i32, i32) {
    %c0_i32 = arith.constant 0 : i32
    %c0_i32_0 = arith.constant 0 : i32
    return %arg0, %c0_i32 : i32, i32
  }
  func.func @transform_1(%arg0: i32) -> (i32, i32) {
    %c0_i32 = arith.constant 0 : i32
    %c0_i32_0 = arith.constant 0 : i32
    %c0_i32_1 = arith.constant 0 : i32
    return %c0_i32, %c0_i32_0 : i32, i32
  }
  func.func @transform_2(%arg0: i32) -> (i32, i32) {
    %c0_i32 = arith.constant 0 : i32
    %c0_i32_0 = arith.constant 0 : i32
    %c0_i32_1 = arith.constant 0 : i32
    return %c0_i32, %c0_i32_0 : i32, i32
  }
  func.func @transform_3(%arg0: i32) -> (i32, i32) {
    %c0_i32 = arith.constant 0 : i32
    %c0_i32_0 = arith.constant 0 : i32
    return %arg0, %c0_i32 : i32, i32
  }
  func.func @transform_4(%arg0: i32) -> (i32, i32) {
    %c0_i32 = arith.constant 0 : i32
    %c0_i32_0 = arith.constant 0 : i32
    %c0_i32_1 = arith.constant 0 : i32
    return %c0_i32, %c0_i32_0 : i32, i32
  }
  func.func @transform_5(%arg0: i32) -> (i32, i32) {
    %c0_i32 = arith.constant 0 : i32
    %c0_i32_0 = arith.constant 0 : i32
    %c0_i32_1 = arith.constant 0 : i32
    return %c0_i32, %c0_i32_0 : i32, i32
  }
  func.func @transform_6(%arg0: i32) -> (i32, i32) {
    %c0_i32 = arith.constant 0 : i32
    %c0_i32_0 = arith.constant 0 : i32
    return %arg0, %c0_i32 : i32, i32
  }
}

module attributes {stable_mosaic.version = 11 : i64} {
  func.func @_linear_kernel(%arg0: i32, %arg1: memref<16x32xf32, #tpu.memory_space<vmem>>, %arg2: memref<32x128xf32, #tpu.memory_space<vmem>>, %arg3: memref<1x128xf32, #tpu.memory_space<vmem>>, %arg4: memref<16x128xf32, #tpu.memory_space<vmem>>) attributes {dimension_semantics = [#tpu.dimension_semantics<parallel>], iteration_bounds = array<i64: 1>, scalar_prefetch = 0 : i64, scratch_operands = 0 : i64, tpu.core_type = #tpu.core_type<tc>, window_params = [{transform_indices = @transform_0, window_bounds = array<i64: 16, 32>}, {pipeline_mode = #tpu.pipeline_mode<synchronous>, transform_indices = @transform_1, window_bounds = array<i64: 32, 128>}, {pipeline_mode = #tpu.pipeline_mode<synchronous>, transform_indices = @transform_2, window_bounds = array<i64: 1, 128>}, {transform_indices = @transform_3, window_bounds = array<i64: 16, 128>}]} {
    %c0 = arith.constant 0 : index
    %c0_0 = arith.constant 0 : index
    %0 = vector.load %arg1[%c0, %c0_0] : memref<16x32xf32, #tpu.memory_space<vmem>>, vector<16x32xf32>
    %c0_1 = arith.constant 0 : index
    %c0_2 = arith.constant 0 : index
    %1 = vector.load %arg2[%c0_1, %c0_2] : memref<32x128xf32, #tpu.memory_space<vmem>>, vector<32x128xf32>
    %cst = arith.constant dense<0.000000e+00> : vector<16x128xf32>
    %2 = tpu.matmul %0, %1, %cst {dimension_numbers = #tpu.dot_dimension_numbers<[1], [0], [0], [1], [0, 0, 1, 1], [], []>} : vector<16x32xf32>, vector<32x128xf32>, vector<16x128xf32> -> vector<16x128xf32>
    %c0_3 = arith.constant 0 : index
    %c0_4 = arith.constant 0 : index
    %3 = vector.load %arg3[%c0_3, %c0_4] : memref<1x128xf32, #tpu.memory_space<vmem>>, vector<1x128xf32>
    %4 = vector.broadcast %3 : vector<1x128xf32> to vector<16x128xf32>
    %5 = arith.addf %2, %4 : vector<16x128xf32>
    %cst_5 = arith.constant 0.000000e+00 : f32
    %6 = vector.broadcast %cst_5 : f32 to vector<16x128xf32>
    %7 = arith.maximumf %5, %6 : vector<16x128xf32>
    %c0_6 = arith.constant 0 : index
    %c0_7 = arith.constant 0 : index
    %8 = vector.load %arg4[%c0_6, %c0_7] : memref<16x128xf32, #tpu.memory_space<vmem>>, vector<16x128xf32>
    tpu.vector_store %arg4[%c0_6, %c0_7], %7 {strides = array<i32>} : memref<16x128xf32, #tpu.memory_space<vmem>>, vector<16x128xf32>,
    return
  }
  func.func @transform_0(%arg0: i32) -> (i32, i32) {
    %c0_i32 = arith.constant 0 : i32
    %c0_i32_0 = arith.constant 0 : i32
    return %arg0, %c0_i32 : i32, i32
  }
  func.func @transform_1(%arg0: i32) -> (i32, i32) {
    %c0_i32 = arith.constant 0 : i32
    %c0_i32_0 = arith.constant 0 : i32
    %c0_i32_1 = arith.constant 0 : i32
    return %c0_i32, %c0_i32_0 : i32, i32
  }
  func.func @transform_2(%arg0: i32) -> (i32, i32) {
    %c0_i32 = arith.constant 0 : i32
    %c0_i32_0 = arith.constant 0 : i32
    %c0_i32_1 = arith.constant 0 : i32
    return %c0_i32, %c0_i32_0 : i32, i32
  }
  func.func @transform_3(%arg0: i32) -> (i32, i32) {
    %c0_i32 = arith.constant 0 : i32
    %c0_i32_0 = arith.constant 0 : i32
    return %arg0, %c0_i32 : i32, i32
  }
}

module attributes {stable_mosaic.version = 11 : i64} {
  func.func @_linear_res_ln_kernel(%arg0: i32, %arg1: memref<16x128xf32, #tpu.memory_space<vmem>>, %arg2: memref<128x32xf32, #tpu.memory_space<vmem>>, %arg3: memref<1x32xf32, #tpu.memory_space<vmem>>, %arg4: memref<16x32xf32, #tpu.memory_space<vmem>>, %arg5: memref<1x32xf32, #tpu.memory_space<vmem>>, %arg6: memref<1x32xf32, #tpu.memory_space<vmem>>, %arg7: memref<16x32xf32, #tpu.memory_space<vmem>>) attributes {dimension_semantics = [#tpu.dimension_semantics<parallel>], iteration_bounds = array<i64: 1>, scalar_prefetch = 0 : i64, scratch_operands = 0 : i64, tpu.core_type = #tpu.core_type<tc>, window_params = [{transform_indices = @transform_0, window_bounds = array<i64: 16, 128>}, {pipeline_mode = #tpu.pipeline_mode<synchronous>, transform_indices = @transform_1, window_bounds = array<i64: 128, 32>}, {pipeline_mode = #tpu.pipeline_mode<synchronous>, transform_indices = @transform_2, window_bounds = array<i64: 1, 32>}, {transform_indices = @transform_3, window_bounds = array<i64: 16, 32>}, {pipeline_mode = #tpu.pipeline_mode<synchronous>, transform_indices = @transform_4, window_bounds = array<i64: 1, 32>}, {pipeline_mode = #tpu.pipeline_mode<synchronous>, transform_indices = @transform_5, window_bounds = array<i64: 1, 32>}, {transform_indices = @transform_6, window_bounds = array<i64: 16, 32>}]} {
    %c0 = arith.constant 0 : index
    %c0_0 = arith.constant 0 : index
    %0 = vector.load %arg1[%c0, %c0_0] : memref<16x128xf32, #tpu.memory_space<vmem>>, vector<16x128xf32>
    %c0_1 = arith.constant 0 : index
    %c0_2 = arith.constant 0 : index
    %1 = vector.load %arg2[%c0_1, %c0_2] : memref<128x32xf32, #tpu.memory_space<vmem>>, vector<128x32xf32>
    %cst = arith.constant dense<0.000000e+00> : vector<16x32xf32>
    %2 = tpu.matmul %0, %1, %cst {dimension_numbers = #tpu.dot_dimension_numbers<[1], [0], [0], [1], [0, 0, 1, 1], [], []>} : vector<16x128xf32>, vector<128x32xf32>, vector<16x32xf32> -> vector<16x32xf32>
    %c0_3 = arith.constant 0 : index
    %c0_4 = arith.constant 0 : index
    %3 = vector.load %arg3[%c0_3, %c0_4] : memref<1x32xf32, #tpu.memory_space<vmem>>, vector<1x32xf32>
    %4 = vector.broadcast %3 : vector<1x32xf32> to vector<16x32xf32>
    %5 = arith.addf %2, %4 : vector<16x32xf32>
    %c0_5 = arith.constant 0 : index
    %c0_6 = arith.constant 0 : index
    %6 = vector.load %arg4[%c0_5, %c0_6] : memref<16x32xf32, #tpu.memory_space<vmem>>, vector<16x32xf32>
    %7 = arith.addf %5, %6 : vector<16x32xf32>
    %cst_7 = arith.constant dense<0.000000e+00> : vector<16xf32>
    %8 = vector.multi_reduction <add>, %7, %cst_7 [1] : vector<16x32xf32> to vector<16xf32>
    %9 = vector.shape_cast %8 : vector<16xf32> to vector<16x1xf32>
    %cst_8 = arith.constant 3.200000e+01 : f32
    %10 = vector.broadcast %cst_8 : f32 to vector<16x1xf32>
    %11 = arith.divf %9, %10 : vector<16x1xf32>
    %12 = vector.broadcast %11 : vector<16x1xf32> to vector<16x32xf32>
    %13 = arith.subf %7, %12 : vector<16x32xf32>
    %14 = arith.mulf %13, %13 : vector<16x32xf32>
    %cst_9 = arith.constant dense<0.000000e+00> : vector<16xf32>
    %15 = vector.multi_reduction <add>, %14, %cst_9 [1] : vector<16x32xf32> to vector<16xf32>
    %16 = vector.shape_cast %15 : vector<16xf32> to vector<16x1xf32>
    %cst_10 = arith.constant 3.200000e+01 : f32
    %17 = vector.broadcast %cst_10 : f32 to vector<16x1xf32>
    %18 = arith.divf %16, %17 : vector<16x1xf32>
    %19 = vector.broadcast %11 : vector<16x1xf32> to vector<16x32xf32>
    %20 = arith.subf %7, %19 : vector<16x32xf32>
    %cst_11 = arith.constant 9.99999974E-6 : f32
    %21 = vector.broadcast %cst_11 : f32 to vector<16x1xf32>
    %22 = arith.addf %18, %21 : vector<16x1xf32>
    %23 = math.rsqrt %22 : vector<16x1xf32>
    %24 = vector.broadcast %23 : vector<16x1xf32> to vector<16x32xf32>
    %25 = arith.mulf %20, %24 : vector<16x32xf32>
    %c0_12 = arith.constant 0 : index
    %c0_13 = arith.constant 0 : index
    %26 = vector.load %arg5[%c0_12, %c0_13] : memref<1x32xf32, #tpu.memory_space<vmem>>, vector<1x32xf32>
    %27 = vector.broadcast %26 : vector<1x32xf32> to vector<16x32xf32>
    %28 = arith.mulf %25, %27 : vector<16x32xf32>
    %c0_14 = arith.constant 0 : index
    %c0_15 = arith.constant 0 : index
    %29 = vector.load %arg6[%c0_14, %c0_15] : memref<1x32xf32, #tpu.memory_space<vmem>>, vector<1x32xf32>
    %30 = vector.broadcast %29 : vector<1x32xf32> to vector<16x32xf32>
    %31 = arith.addf %28, %30 : vector<16x32xf32>
    %c0_16 = arith.constant 0 : index
    %c0_17 = arith.constant 0 : index
    %32 = vector.load %arg7[%c0_16, %c0_17] : memref<16x32xf32, #tpu.memory_space<vmem>>, vector<16x32xf32>
    tpu.vector_store %arg7[%c0_16, %c0_17], %31 {strides = array<i32>} : memref<16x32xf32, #tpu.memory_space<vmem>>, vector<16x32xf32>,
    return
  }
  func.func @transform_0(%arg0: i32) -> (i32, i32) {
    %c0_i32 = arith.constant 0 : i32
    %c0_i32_0 = arith.constant 0 : i32
    return %arg0, %c0_i32 : i32, i32
  }
  func.func @transform_1(%arg0: i32) -> (i32, i32) {
    %c0_i32 = arith.constant 0 : i32
    %c0_i32_0 = arith.constant 0 : i32
    %c0_i32_1 = arith.constant 0 : i32
    return %c0_i32, %c0_i32_0 : i32, i32
  }
  func.func @transform_2(%arg0: i32) -> (i32, i32) {
    %c0_i32 = arith.constant 0 : i32
    %c0_i32_0 = arith.constant 0 : i32
    %c0_i32_1 = arith.constant 0 : i32
    return %c0_i32, %c0_i32_0 : i32, i32
  }
  func.func @transform_3(%arg0: i32) -> (i32, i32) {
    %c0_i32 = arith.constant 0 : i32
    %c0_i32_0 = arith.constant 0 : i32
    return %arg0, %c0_i32 : i32, i32
  }
  func.func @transform_4(%arg0: i32) -> (i32, i32) {
    %c0_i32 = arith.constant 0 : i32
    %c0_i32_0 = arith.constant 0 : i32
    %c0_i32_1 = arith.constant 0 : i32
    return %c0_i32, %c0_i32_0 : i32, i32
  }
  func.func @transform_5(%arg0: i32) -> (i32, i32) {
    %c0_i32 = arith.constant 0 : i32
    %c0_i32_0 = arith.constant 0 : i32
    %c0_i32_1 = arith.constant 0 : i32
    return %c0_i32, %c0_i32_0 : i32, i32
  }
  func.func @transform_6(%arg0: i32) -> (i32, i32) {
    %c0_i32 = arith.constant 0 : i32
    %c0_i32_0 = arith.constant 0 : i32
    return %arg0, %c0_i32 : i32, i32
  }
}

module attributes {stable_mosaic.version = 11 : i64} {
  func.func @_linear_kernel(%arg0: i32, %arg1: memref<16x32xf32, #tpu.memory_space<vmem>>, %arg2: memref<32x64xf32, #tpu.memory_space<vmem>>, %arg3: memref<1x64xf32, #tpu.memory_space<vmem>>, %arg4: memref<16x64xf32, #tpu.memory_space<vmem>>) attributes {dimension_semantics = [#tpu.dimension_semantics<parallel>], iteration_bounds = array<i64: 1>, scalar_prefetch = 0 : i64, scratch_operands = 0 : i64, tpu.core_type = #tpu.core_type<tc>, window_params = [{transform_indices = @transform_0, window_bounds = array<i64: 16, 32>}, {pipeline_mode = #tpu.pipeline_mode<synchronous>, transform_indices = @transform_1, window_bounds = array<i64: 32, 64>}, {pipeline_mode = #tpu.pipeline_mode<synchronous>, transform_indices = @transform_2, window_bounds = array<i64: 1, 64>}, {transform_indices = @transform_3, window_bounds = array<i64: 16, 64>}]} {
    %c0 = arith.constant 0 : index
    %c0_0 = arith.constant 0 : index
    %0 = vector.load %arg1[%c0, %c0_0] : memref<16x32xf32, #tpu.memory_space<vmem>>, vector<16x32xf32>
    %c0_1 = arith.constant 0 : index
    %c0_2 = arith.constant 0 : index
    %1 = vector.load %arg2[%c0_1, %c0_2] : memref<32x64xf32, #tpu.memory_space<vmem>>, vector<32x64xf32>
    %cst = arith.constant dense<0.000000e+00> : vector<16x64xf32>
    %2 = tpu.matmul %0, %1, %cst {dimension_numbers = #tpu.dot_dimension_numbers<[1], [0], [0], [1], [0, 0, 1, 1], [], []>} : vector<16x32xf32>, vector<32x64xf32>, vector<16x64xf32> -> vector<16x64xf32>
    %c0_3 = arith.constant 0 : index
    %c0_4 = arith.constant 0 : index
    %3 = vector.load %arg3[%c0_3, %c0_4] : memref<1x64xf32, #tpu.memory_space<vmem>>, vector<1x64xf32>
    %4 = vector.broadcast %3 : vector<1x64xf32> to vector<16x64xf32>
    %5 = arith.addf %2, %4 : vector<16x64xf32>
    %c0_5 = arith.constant 0 : index
    %c0_6 = arith.constant 0 : index
    %6 = vector.load %arg4[%c0_5, %c0_6] : memref<16x64xf32, #tpu.memory_space<vmem>>, vector<16x64xf32>
    tpu.vector_store %arg4[%c0_5, %c0_6], %5 {strides = array<i32>} : memref<16x64xf32, #tpu.memory_space<vmem>>, vector<16x64xf32>,
    return
  }
  func.func @transform_0(%arg0: i32) -> (i32, i32) {
    %c0_i32 = arith.constant 0 : i32
    %c0_i32_0 = arith.constant 0 : i32
    return %arg0, %c0_i32 : i32, i32
  }
  func.func @transform_1(%arg0: i32) -> (i32, i32) {
    %c0_i32 = arith.constant 0 : i32
    %c0_i32_0 = arith.constant 0 : i32
    %c0_i32_1 = arith.constant 0 : i32
    return %c0_i32, %c0_i32_0 : i32, i32
  }
  func.func @transform_2(%arg0: i32) -> (i32, i32) {
    %c0_i32 = arith.constant 0 : i32
    %c0_i32_0 = arith.constant 0 : i32
    %c0_i32_1 = arith.constant 0 : i32
    return %c0_i32, %c0_i32_0 : i32, i32
  }
  func.func @transform_3(%arg0: i32) -> (i32, i32) {
    %c0_i32 = arith.constant 0 : i32
    %c0_i32_0 = arith.constant 0 : i32
    return %arg0, %c0_i32 : i32, i32
  }
}

module attributes {stable_mosaic.version = 11 : i64} {
  func.func @_mha_kernel(%arg0: i32, %arg1: memref<1x8x32xf32, #tpu.memory_space<vmem>>, %arg2: memref<1x8x32xf32, #tpu.memory_space<vmem>>, %arg3: memref<1x8x32xf32, #tpu.memory_space<vmem>>, %arg4: memref<1x1x8xf32, #tpu.memory_space<vmem>>, %arg5: memref<1x8x32xf32, #tpu.memory_space<vmem>>, %arg6: memref<1x4x8x8xf32, #tpu.memory_space<vmem>>) attributes {dimension_semantics = [#tpu.dimension_semantics<parallel>], iteration_bounds = array<i64: 2>, scalar_prefetch = 0 : i64, scratch_operands = 0 : i64, tpu.core_type = #tpu.core_type<tc>, window_params = [{transform_indices = @transform_0, window_bounds = array<i64: 1, 8, 32>}, {transform_indices = @transform_1, window_bounds = array<i64: 1, 8, 32>}, {transform_indices = @transform_2, window_bounds = array<i64: 1, 8, 32>}, {transform_indices = @transform_3, window_bounds = array<i64: 1, 1, 8>}, {transform_indices = @transform_4, window_bounds = array<i64: 1, 8, 32>}, {transform_indices = @transform_5, window_bounds = array<i64: 1, 4, 8, 8>}]} {
    %c0 = arith.constant 0 : index
    %c0_0 = arith.constant 0 : index
    %c0_1 = arith.constant 0 : index
    %0 = vector.load %arg1[%c0, %c0_0, %c0_1] : memref<1x8x32xf32, #tpu.memory_space<vmem>>, vector<1x8x32xf32>
    %1 = vector.shape_cast %0 : vector<1x8x32xf32> to vector<8x32xf32>
    %c0_2 = arith.constant 0 : index
    %c0_3 = arith.constant 0 : index
    %c0_4 = arith.constant 0 : index
    %2 = vector.load %arg2[%c0_2, %c0_3, %c0_4] : memref<1x8x32xf32, #tpu.memory_space<vmem>>, vector<1x8x32xf32>
    %3 = vector.shape_cast %2 : vector<1x8x32xf32> to vector<8x32xf32>
    %c0_5 = arith.constant 0 : index
    %c0_6 = arith.constant 0 : index
    %c0_7 = arith.constant 0 : index
    %4 = vector.load %arg3[%c0_5, %c0_6, %c0_7] : memref<1x8x32xf32, #tpu.memory_space<vmem>>, vector<1x8x32xf32>
    %5 = vector.shape_cast %4 : vector<1x8x32xf32> to vector<8x32xf32>
    %c0_8 = arith.constant 0 : index
    %c0_9 = arith.constant 0 : index
    %c0_10 = arith.constant 0 : index
    %6 = vector.load %arg4[%c0_8, %c0_9, %c0_10] : memref<1x1x8xf32, #tpu.memory_space<vmem>>, vector<1x1x8xf32>
    %7 = vector.shape_cast %6 : vector<1x1x8xf32> to vector<1x8xf32>
    %8 = vector.shape_cast %7 : vector<1x8xf32> to vector<1x8xf32>
    %9 = vector.broadcast %8 : vector<1x8xf32> to vector<8x8xf32>
    %10 = vector.extract_strided_slice %1 {offsets = [0, 0], sizes = [8, 8], strides = [1, 1]} : vector<8x32xf32> to vector<8x8xf32>
    %11 = vector.extract_strided_slice %3 {offsets = [0, 0], sizes = [8, 8], strides = [1, 1]} : vector<8x32xf32> to vector<8x8xf32>
    %12 = vector.extract_strided_slice %5 {offsets = [0, 0], sizes = [8, 8], strides = [1, 1]} : vector<8x32xf32> to vector<8x8xf32>
    %cst = arith.constant dense<0.000000e+00> : vector<8x8xf32>
    %13 = tpu.matmul %10, %11, %cst {dimension_numbers = #tpu.dot_dimension_numbers<[1], [1], [0], [0], [0, 0, 1, 0], [], []>} : vector<8x8xf32>, vector<8x8xf32>, vector<8x8xf32> -> vector<8x8xf32>
    %cst_11 = arith.constant 0.353553385 : f32
    %14 = vector.broadcast %cst_11 : f32 to vector<8x8xf32>
    %15 = arith.mulf %13, %14 : vector<8x8xf32>
    %16 = arith.addf %15, %9 : vector<8x8xf32>
    %cst_12 = arith.constant dense<0xFF800000> : vector<8xf32>
    %17 = vector.multi_reduction <maximumf>, %16, %cst_12 [1] : vector<8x8xf32> to vector<8xf32>
    %18 = vector.shape_cast %17 : vector<8xf32> to vector<8x1xf32>
    %19 = vector.broadcast %18 : vector<8x1xf32> to vector<8x8xf32>
    %20 = arith.subf %16, %19 : vector<8x8xf32>
    %21 = math.exp %20 : vector<8x8xf32>
    %cst_13 = arith.constant dense<0.000000e+00> : vector<8xf32>
    %22 = vector.multi_reduction <add>, %21, %cst_13 [1] : vector<8x8xf32> to vector<8xf32>
    %23 = vector.shape_cast %22 : vector<8xf32> to vector<8x1xf32>
    %24 = tpu.reciprocal %23 {approx = true} : vector<8x1xf32> -> vector<8x1xf32>
    %25 = vector.broadcast %24 : vector<8x1xf32> to vector<8x8xf32>
    %26 = arith.mulf %21, %25 : vector<8x8xf32>
    %c0_14 = arith.constant 0 : index
    %c0_15 = arith.constant 0 : index
    %c0_16 = arith.constant 0 : index
    %c0_17 = arith.constant 0 : index
    %27 = vector.load %arg6[%c0_14, %c0_15, %c0_16, %c0_17] : memref<1x4x8x8xf32, #tpu.memory_space<vmem>>, vector<1x1x8x8xf32>
    %28 = vector.shape_cast %27 : vector<1x1x8x8xf32> to vector<8x8xf32>
    %29 = vector.shape_cast %26 : vector<8x8xf32> to vector<1x1x8x8xf32>
    tpu.vector_store %arg6[%c0_14, %c0_15, %c0_16, %c0_17], %29 {strides = array<i32>} : memref<1x4x8x8xf32, #tpu.memory_space<vmem>>, vector<1x1x8x8xf32>,
    %cst_18 = arith.constant dense<0.000000e+00> : vector<8x8xf32>
    %30 = tpu.matmul %26, %12, %cst_18 {dimension_numbers = #tpu.dot_dimension_numbers<[1], [0], [0], [1], [0, 0, 1, 1], [], []>} : vector<8x8xf32>, vector<8x8xf32>, vector<8x8xf32> -> vector<8x8xf32>
    %31 = vector.extract_strided_slice %1 {offsets = [0, 8], sizes = [8, 8], strides = [1, 1]} : vector<8x32xf32> to vector<8x8xf32>
    %32 = vector.extract_strided_slice %3 {offsets = [0, 8], sizes = [8, 8], strides = [1, 1]} : vector<8x32xf32> to vector<8x8xf32>
    %33 = vector.extract_strided_slice %5 {offsets = [0, 8], sizes = [8, 8], strides = [1, 1]} : vector<8x32xf32> to vector<8x8xf32>
    %cst_19 = arith.constant dense<0.000000e+00> : vector<8x8xf32>
    %34 = tpu.matmul %31, %32, %cst_19 {dimension_numbers = #tpu.dot_dimension_numbers<[1], [1], [0], [0], [0, 0, 1, 0], [], []>} : vector<8x8xf32>, vector<8x8xf32>, vector<8x8xf32> -> vector<8x8xf32>
    %cst_20 = arith.constant 0.353553385 : f32
    %35 = vector.broadcast %cst_20 : f32 to vector<8x8xf32>
    %36 = arith.mulf %34, %35 : vector<8x8xf32>
    %37 = arith.addf %36, %9 : vector<8x8xf32>
    %cst_21 = arith.constant dense<0xFF800000> : vector<8xf32>
    %38 = vector.multi_reduction <maximumf>, %37, %cst_21 [1] : vector<8x8xf32> to vector<8xf32>
    %39 = vector.shape_cast %38 : vector<8xf32> to vector<8x1xf32>
    %40 = vector.broadcast %39 : vector<8x1xf32> to vector<8x8xf32>
    %41 = arith.subf %37, %40 : vector<8x8xf32>
    %42 = math.exp %41 : vector<8x8xf32>
    %cst_22 = arith.constant dense<0.000000e+00> : vector<8xf32>
    %43 = vector.multi_reduction <add>, %42, %cst_22 [1] : vector<8x8xf32> to vector<8xf32>
    %44 = vector.shape_cast %43 : vector<8xf32> to vector<8x1xf32>
    %45 = tpu.reciprocal %44 {approx = true} : vector<8x1xf32> -> vector<8x1xf32>
    %46 = vector.broadcast %45 : vector<8x1xf32> to vector<8x8xf32>
    %47 = arith.mulf %42, %46 : vector<8x8xf32>
    %c0_23 = arith.constant 0 : index
    %c1 = arith.constant 1 : index
    %c0_24 = arith.constant 0 : index
    %c0_25 = arith.constant 0 : index
    %48 = vector.load %arg6[%c0_23, %c1, %c0_24, %c0_25] : memref<1x4x8x8xf32, #tpu.memory_space<vmem>>, vector<1x1x8x8xf32>
    %49 = vector.shape_cast %48 : vector<1x1x8x8xf32> to vector<8x8xf32>
    %50 = vector.shape_cast %47 : vector<8x8xf32> to vector<1x1x8x8xf32>
    tpu.vector_store %arg6[%c0_23, %c1, %c0_24, %c0_25], %50 {strides = array<i32>} : memref<1x4x8x8xf32, #tpu.memory_space<vmem>>, vector<1x1x8x8xf32>,
    %cst_26 = arith.constant dense<0.000000e+00> : vector<8x8xf32>
    %51 = tpu.matmul %47, %33, %cst_26 {dimension_numbers = #tpu.dot_dimension_numbers<[1], [0], [0], [1], [0, 0, 1, 1], [], []>} : vector<8x8xf32>, vector<8x8xf32>, vector<8x8xf32> -> vector<8x8xf32>
    %52 = vector.extract_strided_slice %1 {offsets = [0, 16], sizes = [8, 8], strides = [1, 1]} : vector<8x32xf32> to vector<8x8xf32>
    %53 = vector.extract_strided_slice %3 {offsets = [0, 16], sizes = [8, 8], strides = [1, 1]} : vector<8x32xf32> to vector<8x8xf32>
    %54 = vector.extract_strided_slice %5 {offsets = [0, 16], sizes = [8, 8], strides = [1, 1]} : vector<8x32xf32> to vector<8x8xf32>
    %cst_27 = arith.constant dense<0.000000e+00> : vector<8x8xf32>
    %55 = tpu.matmul %52, %53, %cst_27 {dimension_numbers = #tpu.dot_dimension_numbers<[1], [1], [0], [0], [0, 0, 1, 0], [], []>} : vector<8x8xf32>, vector<8x8xf32>, vector<8x8xf32> -> vector<8x8xf32>
    %cst_28 = arith.constant 0.353553385 : f32
    %56 = vector.broadcast %cst_28 : f32 to vector<8x8xf32>
    %57 = arith.mulf %55, %56 : vector<8x8xf32>
    %58 = arith.addf %57, %9 : vector<8x8xf32>
    %cst_29 = arith.constant dense<0xFF800000> : vector<8xf32>
    %59 = vector.multi_reduction <maximumf>, %58, %cst_29 [1] : vector<8x8xf32> to vector<8xf32>
    %60 = vector.shape_cast %59 : vector<8xf32> to vector<8x1xf32>
    %61 = vector.broadcast %60 : vector<8x1xf32> to vector<8x8xf32>
    %62 = arith.subf %58, %61 : vector<8x8xf32>
    %63 = math.exp %62 : vector<8x8xf32>
    %cst_30 = arith.constant dense<0.000000e+00> : vector<8xf32>
    %64 = vector.multi_reduction <add>, %63, %cst_30 [1] : vector<8x8xf32> to vector<8xf32>
    %65 = vector.shape_cast %64 : vector<8xf32> to vector<8x1xf32>
    %66 = tpu.reciprocal %65 {approx = true} : vector<8x1xf32> -> vector<8x1xf32>
    %67 = vector.broadcast %66 : vector<8x1xf32> to vector<8x8xf32>
    %68 = arith.mulf %63, %67 : vector<8x8xf32>
    %c0_31 = arith.constant 0 : index
    %c2 = arith.constant 2 : index
    %c0_32 = arith.constant 0 : index
    %c0_33 = arith.constant 0 : index
    %69 = vector.load %arg6[%c0_31, %c2, %c0_32, %c0_33] : memref<1x4x8x8xf32, #tpu.memory_space<vmem>>, vector<1x1x8x8xf32>
    %70 = vector.shape_cast %69 : vector<1x1x8x8xf32> to vector<8x8xf32>
    %71 = vector.shape_cast %68 : vector<8x8xf32> to vector<1x1x8x8xf32>
    tpu.vector_store %arg6[%c0_31, %c2, %c0_32, %c0_33], %71 {strides = array<i32>} : memref<1x4x8x8xf32, #tpu.memory_space<vmem>>, vector<1x1x8x8xf32>,
    %cst_34 = arith.constant dense<0.000000e+00> : vector<8x8xf32>
    %72 = tpu.matmul %68, %54, %cst_34 {dimension_numbers = #tpu.dot_dimension_numbers<[1], [0], [0], [1], [0, 0, 1, 1], [], []>} : vector<8x8xf32>, vector<8x8xf32>, vector<8x8xf32> -> vector<8x8xf32>
    %73 = vector.extract_strided_slice %1 {offsets = [0, 24], sizes = [8, 8], strides = [1, 1]} : vector<8x32xf32> to vector<8x8xf32>
    %74 = vector.extract_strided_slice %3 {offsets = [0, 24], sizes = [8, 8], strides = [1, 1]} : vector<8x32xf32> to vector<8x8xf32>
    %75 = vector.extract_strided_slice %5 {offsets = [0, 24], sizes = [8, 8], strides = [1, 1]} : vector<8x32xf32> to vector<8x8xf32>
    %cst_35 = arith.constant dense<0.000000e+00> : vector<8x8xf32>
    %76 = tpu.matmul %73, %74, %cst_35 {dimension_numbers = #tpu.dot_dimension_numbers<[1], [1], [0], [0], [0, 0, 1, 0], [], []>} : vector<8x8xf32>, vector<8x8xf32>, vector<8x8xf32> -> vector<8x8xf32>
    %cst_36 = arith.constant 0.353553385 : f32
    %77 = vector.broadcast %cst_36 : f32 to vector<8x8xf32>
    %78 = arith.mulf %76, %77 : vector<8x8xf32>
    %79 = arith.addf %78, %9 : vector<8x8xf32>
    %cst_37 = arith.constant dense<0xFF800000> : vector<8xf32>
    %80 = vector.multi_reduction <maximumf>, %79, %cst_37 [1] : vector<8x8xf32> to vector<8xf32>
    %81 = vector.shape_cast %80 : vector<8xf32> to vector<8x1xf32>
    %82 = vector.broadcast %81 : vector<8x1xf32> to vector<8x8xf32>
    %83 = arith.subf %79, %82 : vector<8x8xf32>
    %84 = math.exp %83 : vector<8x8xf32>
    %cst_38 = arith.constant dense<0.000000e+00> : vector<8xf32>
    %85 = vector.multi_reduction <add>, %84, %cst_38 [1] : vector<8x8xf32> to vector<8xf32>
    %86 = vector.shape_cast %85 : vector<8xf32> to vector<8x1xf32>
    %87 = tpu.reciprocal %86 {approx = true} : vector<8x1xf32> -> vector<8x1xf32>
    %88 = vector.broadcast %87 : vector<8x1xf32> to vector<8x8xf32>
    %89 = arith.mulf %84, %88 : vector<8x8xf32>
    %c0_39 = arith.constant 0 : index
    %c3 = arith.constant 3 : index
    %c0_40 = arith.constant 0 : index
    %c0_41 = arith.constant 0 : index
    %90 = vector.load %arg6[%c0_39, %c3, %c0_40, %c0_41] : memref<1x4x8x8xf32, #tpu.memory_space<vmem>>, vector<1x1x8x8xf32>
    %91 = vector.shape_cast %90 : vector<1x1x8x8xf32> to vector<8x8xf32>
    %92 = vector.shape_cast %89 : vector<8x8xf32> to vector<1x1x8x8xf32>
    tpu.vector_store %arg6[%c0_39, %c3, %c0_40, %c0_41], %92 {strides = array<i32>} : memref<1x4x8x8xf32, #tpu.memory_space<vmem>>, vector<1x1x8x8xf32>,
    %cst_42 = arith.constant dense<0.000000e+00> : vector<8x8xf32>
    %93 = tpu.matmul %89, %75, %cst_42 {dimension_numbers = #tpu.dot_dimension_numbers<[1], [0], [0], [1], [0, 0, 1, 1], [], []>} : vector<8x8xf32>, vector<8x8xf32>, vector<8x8xf32> -> vector<8x8xf32>
    %94 = tpu.concatenate %30, %51, %72, %93 in 1 : vector<8x8xf32>, vector<8x8xf32>, vector<8x8xf32>, vector<8x8xf32> -> vector<8x32xf32>
    %c0_43 = arith.constant 0 : index
    %c0_44 = arith.constant 0 : index
    %c0_45 = arith.constant 0 : index
    %95 = vector.load %arg5[%c0_43, %c0_44, %c0_45] : memref<1x8x32xf32, #tpu.memory_space<vmem>>, vector<1x8x32xf32>
    %96 = vector.shape_cast %95 : vector<1x8x32xf32> to vector<8x32xf32>
    %97 = vector.shape_cast %94 : vector<8x32xf32> to vector<1x8x32xf32>
    tpu.vector_store %arg5[%c0_43, %c0_44, %c0_45], %97 {strides = array<i32>} : memref<1x8x32xf32, #tpu.memory_space<vmem>>, vector<1x8x32xf32>,
    return
  }
  func.func @transform_0(%arg0: i32) -> (i32, i32, i32) {
    %c0_i32 = arith.constant 0 : i32
    %c0_i32_0 = arith.constant 0 : i32
    %c0_i32_1 = arith.constant 0 : i32
    return %arg0, %c0_i32, %c0_i32_0 : i32, i32, i32
  }
  func.func @transform_1(%arg0: i32) -> (i32, i32, i32) {
    %c0_i32 = arith.constant 0 : i32
    %c0_i32_0 = arith.constant 0 : i32
    %c0_i32_1 = arith.constant 0 : i32
    return %arg0, %c0_i32, %c0_i32_0 : i32, i32, i32
  }
  func.func @transform_2(%arg0: i32) -> (i32, i32, i32) {
    %c0_i32 = arith.constant 0 : i32
    %c0_i32_0 = arith.constant 0 : i32
    %c0_i32_1 = arith.constant 0 : i32
    return %arg0, %c0_i32, %c0_i32_0 : i32, i32, i32
  }
  func.func @transform_3(%arg0: i32) -> (i32, i32, i32) {
    %c0_i32 = arith.constant 0 : i32
    %c0_i32_0 = arith.constant 0 : i32
    %c0_i32_1 = arith.constant 0 : i32
    return %arg0, %c0_i32, %c0_i32_0 : i32, i32, i32
  }
  func.func @transform_4(%arg0: i32) -> (i32, i32, i32) {
    %c0_i32 = arith.constant 0 : i32
    %c0_i32_0 = arith.constant 0 : i32
    %c0_i32_1 = arith.constant 0 : i32
    return %arg0, %c0_i32, %c0_i32_0 : i32, i32, i32
  }
  func.func @transform_5(%arg0: i32) -> (i32, i32, i32, i32) {
    %c0_i32 = arith.constant 0 : i32
    %c0_i32_0 = arith.constant 0 : i32
    %c0_i32_1 = arith.constant 0 : i32
    %c0_i32_2 = arith.constant 0 : i32
    return %arg0, %c0_i32, %c0_i32_0, %c0_i32_1 : i32, i32, i32, i32
  }
}

module attributes {stable_mosaic.version = 11 : i64} {
  func.func @_mha_kernel(%arg0: i32, %arg1: memref<1x8x32xf32, #tpu.memory_space<vmem>>, %arg2: memref<1x8x32xf32, #tpu.memory_space<vmem>>, %arg3: memref<1x8x32xf32, #tpu.memory_space<vmem>>, %arg4: memref<1x1x8xf32, #tpu.memory_space<vmem>>, %arg5: memref<1x8x32xf32, #tpu.memory_space<vmem>>) attributes {dimension_semantics = [#tpu.dimension_semantics<parallel>], iteration_bounds = array<i64: 2>, scalar_prefetch = 0 : i64, scratch_operands = 0 : i64, tpu.core_type = #tpu.core_type<tc>, window_params = [{transform_indices = @transform_0, window_bounds = array<i64: 1, 8, 32>}, {transform_indices = @transform_1, window_bounds = array<i64: 1, 8, 32>}, {transform_indices = @transform_2, window_bounds = array<i64: 1, 8, 32>}, {transform_indices = @transform_3, window_bounds = array<i64: 1, 1, 8>}, {transform_indices = @transform_4, window_bounds = array<i64: 1, 8, 32>}]} {
    %c0 = arith.constant 0 : index
    %c0_0 = arith.constant 0 : index
    %c0_1 = arith.constant 0 : index
    %0 = vector.load %arg1[%c0, %c0_0, %c0_1] : memref<1x8x32xf32, #tpu.memory_space<vmem>>, vector<1x8x32xf32>
    %1 = vector.shape_cast %0 : vector<1x8x32xf32> to vector<8x32xf32>
    %c0_2 = arith.constant 0 : index
    %c0_3 = arith.constant 0 : index
    %c0_4 = arith.constant 0 : index
    %2 = vector.load %arg2[%c0_2, %c0_3, %c0_4] : memref<1x8x32xf32, #tpu.memory_space<vmem>>, vector<1x8x32xf32>
    %3 = vector.shape_cast %2 : vector<1x8x32xf32> to vector<8x32xf32>
    %c0_5 = arith.constant 0 : index
    %c0_6 = arith.constant 0 : index
    %c0_7 = arith.constant 0 : index
    %4 = vector.load %arg3[%c0_5, %c0_6, %c0_7] : memref<1x8x32xf32, #tpu.memory_space<vmem>>, vector<1x8x32xf32>
    %5 = vector.shape_cast %4 : vector<1x8x32xf32> to vector<8x32xf32>
    %c0_8 = arith.constant 0 : index
    %c0_9 = arith.constant 0 : index
    %c0_10 = arith.constant 0 : index
    %6 = vector.load %arg4[%c0_8, %c0_9, %c0_10] : memref<1x1x8xf32, #tpu.memory_space<vmem>>, vector<1x1x8xf32>
    %7 = vector.shape_cast %6 : vector<1x1x8xf32> to vector<1x8xf32>
    %8 = vector.shape_cast %7 : vector<1x8xf32> to vector<1x8xf32>
    %9 = vector.broadcast %8 : vector<1x8xf32> to vector<8x8xf32>
    %10 = tpu.iota {dimensions = array<i32: 0>} : vector<8x8xi32>
    %11 = tpu.iota {dimensions = array<i32: 1>} : vector<8x8xi32>
    %12 = arith.cmpi sge, %10, %11 : vector<8x8xi32>
    %cst = arith.constant 0.000000e+00 : f32
    %cst_11 = arith.constant -1.000000e+09 : f32
    %13 = vector.broadcast %cst : f32 to vector<8x8xf32>
    %14 = vector.broadcast %cst_11 : f32 to vector<8x8xf32>
    %15 = arith.select %12, %13, %14 : vector<8x8xi1>, vector<8x8xf32>
    %16 = arith.addf %9, %15 : vector<8x8xf32>
    %17 = vector.extract_strided_slice %1 {offsets = [0, 0], sizes = [8, 8], strides = [1, 1]} : vector<8x32xf32> to vector<8x8xf32>
    %18 = vector.extract_strided_slice %3 {offsets = [0, 0], sizes = [8, 8], strides = [1, 1]} : vector<8x32xf32> to vector<8x8xf32>
    %19 = vector.extract_strided_slice %5 {offsets = [0, 0], sizes = [8, 8], strides = [1, 1]} : vector<8x32xf32> to vector<8x8xf32>
    %cst_12 = arith.constant dense<0.000000e+00> : vector<8x8xf32>
    %20 = tpu.matmul %17, %18, %cst_12 {dimension_numbers = #tpu.dot_dimension_numbers<[1], [1], [0], [0], [0, 0, 1, 0], [], []>} : vector<8x8xf32>, vector<8x8xf32>, vector<8x8xf32> -> vector<8x8xf32>
    %cst_13 = arith.constant 0.353553385 : f32
    %21 = vector.broadcast %cst_13 : f32 to vector<8x8xf32>
    %22 = arith.mulf %20, %21 : vector<8x8xf32>
    %23 = arith.addf %22, %16 : vector<8x8xf32>
    %cst_14 = arith.constant dense<0xFF800000> : vector<8xf32>
    %24 = vector.multi_reduction <maximumf>, %23, %cst_14 [1] : vector<8x8xf32> to vector<8xf32>
    %25 = vector.shape_cast %24 : vector<8xf32> to vector<8x1xf32>
    %26 = vector.broadcast %25 : vector<8x1xf32> to vector<8x8xf32>
    %27 = arith.subf %23, %26 : vector<8x8xf32>
    %28 = math.exp %27 : vector<8x8xf32>
    %cst_15 = arith.constant dense<0.000000e+00> : vector<8xf32>
    %29 = vector.multi_reduction <add>, %28, %cst_15 [1] : vector<8x8xf32> to vector<8xf32>
    %30 = vector.shape_cast %29 : vector<8xf32> to vector<8x1xf32>
    %31 = tpu.reciprocal %30 {approx = true} : vector<8x1xf32> -> vector<8x1xf32>
    %32 = vector.broadcast %31 : vector<8x1xf32> to vector<8x8xf32>
    %33 = arith.mulf %28, %32 : vector<8x8xf32>
    %cst_16 = arith.constant dense<0.000000e+00> : vector<8x8xf32>
    %34 = tpu.matmul %33, %19, %cst_16 {dimension_numbers = #tpu.dot_dimension_numbers<[1], [0], [0], [1], [0, 0, 1, 1], [], []>} : vector<8x8xf32>, vector<8x8xf32>, vector<8x8xf32> -> vector<8x8xf32>
    %35 = vector.extract_strided_slice %1 {offsets = [0, 8], sizes = [8, 8], strides = [1, 1]} : vector<8x32xf32> to vector<8x8xf32>
    %36 = vector.extract_strided_slice %3 {offsets = [0, 8], sizes = [8, 8], strides = [1, 1]} : vector<8x32xf32> to vector<8x8xf32>
    %37 = vector.extract_strided_slice %5 {offsets = [0, 8], sizes = [8, 8], strides = [1, 1]} : vector<8x32xf32> to vector<8x8xf32>
    %cst_17 = arith.constant dense<0.000000e+00> : vector<8x8xf32>
    %38 = tpu.matmul %35, %36, %cst_17 {dimension_numbers = #tpu.dot_dimension_numbers<[1], [1], [0], [0], [0, 0, 1, 0], [], []>} : vector<8x8xf32>, vector<8x8xf32>, vector<8x8xf32> -> vector<8x8xf32>
    %cst_18 = arith.constant 0.353553385 : f32
    %39 = vector.broadcast %cst_18 : f32 to vector<8x8xf32>
    %40 = arith.mulf %38, %39 : vector<8x8xf32>
    %41 = arith.addf %40, %16 : vector<8x8xf32>
    %cst_19 = arith.constant dense<0xFF800000> : vector<8xf32>
    %42 = vector.multi_reduction <maximumf>, %41, %cst_19 [1] : vector<8x8xf32> to vector<8xf32>
    %43 = vector.shape_cast %42 : vector<8xf32> to vector<8x1xf32>
    %44 = vector.broadcast %43 : vector<8x1xf32> to vector<8x8xf32>
    %45 = arith.subf %41, %44 : vector<8x8xf32>
    %46 = math.exp %45 : vector<8x8xf32>
    %cst_20 = arith.constant dense<0.000000e+00> : vector<8xf32>
    %47 = vector.multi_reduction <add>, %46, %cst_20 [1] : vector<8x8xf32> to vector<8xf32>
    %48 = vector.shape_cast %47 : vector<8xf32> to vector<8x1xf32>
    %49 = tpu.reciprocal %48 {approx = true} : vector<8x1xf32> -> vector<8x1xf32>
    %50 = vector.broadcast %49 : vector<8x1xf32> to vector<8x8xf32>
    %51 = arith.mulf %46, %50 : vector<8x8xf32>
    %cst_21 = arith.constant dense<0.000000e+00> : vector<8x8xf32>
    %52 = tpu.matmul %51, %37, %cst_21 {dimension_numbers = #tpu.dot_dimension_numbers<[1], [0], [0], [1], [0, 0, 1, 1], [], []>} : vector<8x8xf32>, vector<8x8xf32>, vector<8x8xf32> -> vector<8x8xf32>
    %53 = vector.extract_strided_slice %1 {offsets = [0, 16], sizes = [8, 8], strides = [1, 1]} : vector<8x32xf32> to vector<8x8xf32>
    %54 = vector.extract_strided_slice %3 {offsets = [0, 16], sizes = [8, 8], strides = [1, 1]} : vector<8x32xf32> to vector<8x8xf32>
    %55 = vector.extract_strided_slice %5 {offsets = [0, 16], sizes = [8, 8], strides = [1, 1]} : vector<8x32xf32> to vector<8x8xf32>
    %cst_22 = arith.constant dense<0.000000e+00> : vector<8x8xf32>
    %56 = tpu.matmul %53, %54, %cst_22 {dimension_numbers = #tpu.dot_dimension_numbers<[1], [1], [0], [0], [0, 0, 1, 0], [], []>} : vector<8x8xf32>, vector<8x8xf32>, vector<8x8xf32> -> vector<8x8xf32>
    %cst_23 = arith.constant 0.353553385 : f32
    %57 = vector.broadcast %cst_23 : f32 to vector<8x8xf32>
    %58 = arith.mulf %56, %57 : vector<8x8xf32>
    %59 = arith.addf %58, %16 : vector<8x8xf32>
    %cst_24 = arith.constant dense<0xFF800000> : vector<8xf32>
    %60 = vector.multi_reduction <maximumf>, %59, %cst_24 [1] : vector<8x8xf32> to vector<8xf32>
    %61 = vector.shape_cast %60 : vector<8xf32> to vector<8x1xf32>
    %62 = vector.broadcast %61 : vector<8x1xf32> to vector<8x8xf32>
    %63 = arith.subf %59, %62 : vector<8x8xf32>
    %64 = math.exp %63 : vector<8x8xf32>
    %cst_25 = arith.constant dense<0.000000e+00> : vector<8xf32>
    %65 = vector.multi_reduction <add>, %64, %cst_25 [1] : vector<8x8xf32> to vector<8xf32>
    %66 = vector.shape_cast %65 : vector<8xf32> to vector<8x1xf32>
    %67 = tpu.reciprocal %66 {approx = true} : vector<8x1xf32> -> vector<8x1xf32>
    %68 = vector.broadcast %67 : vector<8x1xf32> to vector<8x8xf32>
    %69 = arith.mulf %64, %68 : vector<8x8xf32>
    %cst_26 = arith.constant dense<0.000000e+00> : vector<8x8xf32>
    %70 = tpu.matmul %69, %55, %cst_26 {dimension_numbers = #tpu.dot_dimension_numbers<[1], [0], [0], [1], [0, 0, 1, 1], [], []>} : vector<8x8xf32>, vector<8x8xf32>, vector<8x8xf32> -> vector<8x8xf32>
    %71 = vector.extract_strided_slice %1 {offsets = [0, 24], sizes = [8, 8], strides = [1, 1]} : vector<8x32xf32> to vector<8x8xf32>
    %72 = vector.extract_strided_slice %3 {offsets = [0, 24], sizes = [8, 8], strides = [1, 1]} : vector<8x32xf32> to vector<8x8xf32>
    %73 = vector.extract_strided_slice %5 {offsets = [0, 24], sizes = [8, 8], strides = [1, 1]} : vector<8x32xf32> to vector<8x8xf32>
    %cst_27 = arith.constant dense<0.000000e+00> : vector<8x8xf32>
    %74 = tpu.matmul %71, %72, %cst_27 {dimension_numbers = #tpu.dot_dimension_numbers<[1], [1], [0], [0], [0, 0, 1, 0], [], []>} : vector<8x8xf32>, vector<8x8xf32>, vector<8x8xf32> -> vector<8x8xf32>
    %cst_28 = arith.constant 0.353553385 : f32
    %75 = vector.broadcast %cst_28 : f32 to vector<8x8xf32>
    %76 = arith.mulf %74, %75 : vector<8x8xf32>
    %77 = arith.addf %76, %16 : vector<8x8xf32>
    %cst_29 = arith.constant dense<0xFF800000> : vector<8xf32>
    %78 = vector.multi_reduction <maximumf>, %77, %cst_29 [1] : vector<8x8xf32> to vector<8xf32>
    %79 = vector.shape_cast %78 : vector<8xf32> to vector<8x1xf32>
    %80 = vector.broadcast %79 : vector<8x1xf32> to vector<8x8xf32>
    %81 = arith.subf %77, %80 : vector<8x8xf32>
    %82 = math.exp %81 : vector<8x8xf32>
    %cst_30 = arith.constant dense<0.000000e+00> : vector<8xf32>
    %83 = vector.multi_reduction <add>, %82, %cst_30 [1] : vector<8x8xf32> to vector<8xf32>
    %84 = vector.shape_cast %83 : vector<8xf32> to vector<8x1xf32>
    %85 = tpu.reciprocal %84 {approx = true} : vector<8x1xf32> -> vector<8x1xf32>
    %86 = vector.broadcast %85 : vector<8x1xf32> to vector<8x8xf32>
    %87 = arith.mulf %82, %86 : vector<8x8xf32>
    %cst_31 = arith.constant dense<0.000000e+00> : vector<8x8xf32>
    %88 = tpu.matmul %87, %73, %cst_31 {dimension_numbers = #tpu.dot_dimension_numbers<[1], [0], [0], [1], [0, 0, 1, 1], [], []>} : vector<8x8xf32>, vector<8x8xf32>, vector<8x8xf32> -> vector<8x8xf32>
    %89 = tpu.concatenate %34, %52, %70, %88 in 1 : vector<8x8xf32>, vector<8x8xf32>, vector<8x8xf32>, vector<8x8xf32> -> vector<8x32xf32>
    %c0_32 = arith.constant 0 : index
    %c0_33 = arith.constant 0 : index
    %c0_34 = arith.constant 0 : index
    %90 = vector.load %arg5[%c0_32, %c0_33, %c0_34] : memref<1x8x32xf32, #tpu.memory_space<vmem>>, vector<1x8x32xf32>
    %91 = vector.shape_cast %90 : vector<1x8x32xf32> to vector<8x32xf32>
    %92 = vector.shape_cast %89 : vector<8x32xf32> to vector<1x8x32xf32>
    tpu.vector_store %arg5[%c0_32, %c0_33, %c0_34], %92 {strides = array<i32>} : memref<1x8x32xf32, #tpu.memory_space<vmem>>, vector<1x8x32xf32>,
    return
  }
  func.func @transform_0(%arg0: i32) -> (i32, i32, i32) {
    %c0_i32 = arith.constant 0 : i32
    %c0_i32_0 = arith.constant 0 : i32
    %c0_i32_1 = arith.constant 0 : i32
    return %arg0, %c0_i32, %c0_i32_0 : i32, i32, i32
  }
  func.func @transform_1(%arg0: i32) -> (i32, i32, i32) {
    %c0_i32 = arith.constant 0 : i32
    %c0_i32_0 = arith.constant 0 : i32
    %c0_i32_1 = arith.constant 0 : i32
    return %arg0, %c0_i32, %c0_i32_0 : i32, i32, i32
  }
  func.func @transform_2(%arg0: i32) -> (i32, i32, i32) {
    %c0_i32 = arith.constant 0 : i32
    %c0_i32_0 = arith.constant 0 : i32
    %c0_i32_1 = arith.constant 0 : i32
    return %arg0, %c0_i32, %c0_i32_0 : i32, i32, i32
  }
  func.func @transform_3(%arg0: i32) -> (i32, i32, i32) {
    %c0_i32 = arith.constant 0 : i32
    %c0_i32_0 = arith.constant 0 : i32
    %c0_i32_1 = arith.constant 0 : i32
    return %arg0, %c0_i32, %c0_i32_0 : i32, i32, i32
  }
  func.func @transform_4(%arg0: i32) -> (i32, i32, i32) {
    %c0_i32 = arith.constant 0 : i32
    %c0_i32_0 = arith.constant 0 : i32
    %c0_i32_1 = arith.constant 0 : i32
    return %arg0, %c0_i32, %c0_i32_0 : i32, i32, i32
  }
}

module attributes {stable_mosaic.version = 11 : i64} {
  func.func @_linear_kernel(%arg0: i32, %arg1: memref<16x32xf32, #tpu.memory_space<vmem>>, %arg2: memref<32x32xf32, #tpu.memory_space<vmem>>, %arg3: memref<1x32xf32, #tpu.memory_space<vmem>>, %arg4: memref<16x32xf32, #tpu.memory_space<vmem>>) attributes {dimension_semantics = [#tpu.dimension_semantics<parallel>], iteration_bounds = array<i64: 1>, scalar_prefetch = 0 : i64, scratch_operands = 0 : i64, tpu.core_type = #tpu.core_type<tc>, window_params = [{transform_indices = @transform_0, window_bounds = array<i64: 16, 32>}, {pipeline_mode = #tpu.pipeline_mode<synchronous>, transform_indices = @transform_1, window_bounds = array<i64: 32, 32>}, {pipeline_mode = #tpu.pipeline_mode<synchronous>, transform_indices = @transform_2, window_bounds = array<i64: 1, 32>}, {transform_indices = @transform_3, window_bounds = array<i64: 16, 32>}]} {
    %c0 = arith.constant 0 : index
    %c0_0 = arith.constant 0 : index
    %0 = vector.load %arg1[%c0, %c0_0] : memref<16x32xf32, #tpu.memory_space<vmem>>, vector<16x32xf32>
    %c0_1 = arith.constant 0 : index
    %c0_2 = arith.constant 0 : index
    %1 = vector.load %arg2[%c0_1, %c0_2] : memref<32x32xf32, #tpu.memory_space<vmem>>, vector<32x32xf32>
    %cst = arith.constant dense<0.000000e+00> : vector<16x32xf32>
    %2 = tpu.matmul %0, %1, %cst {dimension_numbers = #tpu.dot_dimension_numbers<[1], [0], [0], [1], [0, 0, 1, 1], [], []>} : vector<16x32xf32>, vector<32x32xf32>, vector<16x32xf32> -> vector<16x32xf32>
    %c0_3 = arith.constant 0 : index
    %c0_4 = arith.constant 0 : index
    %3 = vector.load %arg3[%c0_3, %c0_4] : memref<1x32xf32, #tpu.memory_space<vmem>>, vector<1x32xf32>
    %4 = vector.broadcast %3 : vector<1x32xf32> to vector<16x32xf32>
    %5 = arith.addf %2, %4 : vector<16x32xf32>
    %c0_5 = arith.constant 0 : index
    %c0_6 = arith.constant 0 : index
    %6 = vector.load %arg4[%c0_5, %c0_6] : memref<16x32xf32, #tpu.memory_space<vmem>>, vector<16x32xf32>
    tpu.vector_store %arg4[%c0_5, %c0_6], %5 {strides = array<i32>} : memref<16x32xf32, #tpu.memory_space<vmem>>, vector<16x32xf32>,
    return
  }
  func.func @transform_0(%arg0: i32) -> (i32, i32) {
    %c0_i32 = arith.constant 0 : i32
    %c0_i32_0 = arith.constant 0 : i32
    return %arg0, %c0_i32 : i32, i32
  }
  func.func @transform_1(%arg0: i32) -> (i32, i32) {
    %c0_i32 = arith.constant 0 : i32
    %c0_i32_0 = arith.constant 0 : i32
    %c0_i32_1 = arith.constant 0 : i32
    return %c0_i32, %c0_i32_0 : i32, i32
  }
  func.func @transform_2(%arg0: i32) -> (i32, i32) {
    %c0_i32 = arith.constant 0 : i32
    %c0_i32_0 = arith.constant 0 : i32
    %c0_i32_1 = arith.constant 0 : i32
    return %c0_i32, %c0_i32_0 : i32, i32
  }
  func.func @transform_3(%arg0: i32) -> (i32, i32) {
    %c0_i32 = arith.constant 0 : i32
    %c0_i32_0 = arith.constant 0 : i32
    return %arg0, %c0_i32 : i32, i32
  }
}

module attributes {stable_mosaic.version = 11 : i64} {
  func.func @_mha_kernel(%arg0: i32, %arg1: memref<1x8x32xf32, #tpu.memory_space<vmem>>, %arg2: memref<1x8x32xf32, #tpu.memory_space<vmem>>, %arg3: memref<1x8x32xf32, #tpu.memory_space<vmem>>, %arg4: memref<1x1x8xf32, #tpu.memory_space<vmem>>, %arg5: memref<1x8x32xf32, #tpu.memory_space<vmem>>, %arg6: memref<1x4x8x8xf32, #tpu.memory_space<vmem>>) attributes {dimension_semantics = [#tpu.dimension_semantics<parallel>], iteration_bounds = array<i64: 2>, scalar_prefetch = 0 : i64, scratch_operands = 0 : i64, tpu.core_type = #tpu.core_type<tc>, window_params = [{transform_indices = @transform_0, window_bounds = array<i64: 1, 8, 32>}, {transform_indices = @transform_1, window_bounds = array<i64: 1, 8, 32>}, {transform_indices = @transform_2, window_bounds = array<i64: 1, 8, 32>}, {transform_indices = @transform_3, window_bounds = array<i64: 1, 1, 8>}, {transform_indices = @transform_4, window_bounds = array<i64: 1, 8, 32>}, {transform_indices = @transform_5, window_bounds = array<i64: 1, 4, 8, 8>}]} {
    %c0 = arith.constant 0 : index
    %c0_0 = arith.constant 0 : index
    %c0_1 = arith.constant 0 : index
    %0 = vector.load %arg1[%c0, %c0_0, %c0_1] : memref<1x8x32xf32, #tpu.memory_space<vmem>>, vector<1x8x32xf32>
    %1 = vector.shape_cast %0 : vector<1x8x32xf32> to vector<8x32xf32>
    %c0_2 = arith.constant 0 : index
    %c0_3 = arith.constant 0 : index
    %c0_4 = arith.constant 0 : index
    %2 = vector.load %arg2[%c0_2, %c0_3, %c0_4] : memref<1x8x32xf32, #tpu.memory_space<vmem>>, vector<1x8x32xf32>
    %3 = vector.shape_cast %2 : vector<1x8x32xf32> to vector<8x32xf32>
    %c0_5 = arith.constant 0 : index
    %c0_6 = arith.constant 0 : index
    %c0_7 = arith.constant 0 : index
    %4 = vector.load %arg3[%c0_5, %c0_6, %c0_7] : memref<1x8x32xf32, #tpu.memory_space<vmem>>, vector<1x8x32xf32>
    %5 = vector.shape_cast %4 : vector<1x8x32xf32> to vector<8x32xf32>
    %c0_8 = arith.constant 0 : index
    %c0_9 = arith.constant 0 : index
    %c0_10 = arith.constant 0 : index
    %6 = vector.load %arg4[%c0_8, %c0_9, %c0_10] : memref<1x1x8xf32, #tpu.memory_space<vmem>>, vector<1x1x8xf32>
    %7 = vector.shape_cast %6 : vector<1x1x8xf32> to vector<1x8xf32>
    %8 = vector.shape_cast %7 : vector<1x8xf32> to vector<1x8xf32>
    %9 = vector.broadcast %8 : vector<1x8xf32> to vector<8x8xf32>
    %10 = tpu.iota {dimensions = array<i32: 0>} : vector<8x8xi32>
    %11 = tpu.iota {dimensions = array<i32: 1>} : vector<8x8xi32>
    %12 = arith.cmpi sge, %10, %11 : vector<8x8xi32>
    %cst = arith.constant 0.000000e+00 : f32
    %cst_11 = arith.constant -1.000000e+09 : f32
    %13 = vector.broadcast %cst : f32 to vector<8x8xf32>
    %14 = vector.broadcast %cst_11 : f32 to vector<8x8xf32>
    %15 = arith.select %12, %13, %14 : vector<8x8xi1>, vector<8x8xf32>
    %16 = arith.addf %9, %15 : vector<8x8xf32>
    %17 = vector.extract_strided_slice %1 {offsets = [0, 0], sizes = [8, 8], strides = [1, 1]} : vector<8x32xf32> to vector<8x8xf32>
    %18 = vector.extract_strided_slice %3 {offsets = [0, 0], sizes = [8, 8], strides = [1, 1]} : vector<8x32xf32> to vector<8x8xf32>
    %19 = vector.extract_strided_slice %5 {offsets = [0, 0], sizes = [8, 8], strides = [1, 1]} : vector<8x32xf32> to vector<8x8xf32>
    %cst_12 = arith.constant dense<0.000000e+00> : vector<8x8xf32>
    %20 = tpu.matmul %17, %18, %cst_12 {dimension_numbers = #tpu.dot_dimension_numbers<[1], [1], [0], [0], [0, 0, 1, 0], [], []>} : vector<8x8xf32>, vector<8x8xf32>, vector<8x8xf32> -> vector<8x8xf32>
    %cst_13 = arith.constant 0.353553385 : f32
    %21 = vector.broadcast %cst_13 : f32 to vector<8x8xf32>
    %22 = arith.mulf %20, %21 : vector<8x8xf32>
    %23 = arith.addf %22, %16 : vector<8x8xf32>
    %cst_14 = arith.constant dense<0xFF800000> : vector<8xf32>
    %24 = vector.multi_reduction <maximumf>, %23, %cst_14 [1] : vector<8x8xf32> to vector<8xf32>
    %25 = vector.shape_cast %24 : vector<8xf32> to vector<8x1xf32>
    %26 = vector.broadcast %25 : vector<8x1xf32> to vector<8x8xf32>
    %27 = arith.subf %23, %26 : vector<8x8xf32>
    %28 = math.exp %27 : vector<8x8xf32>
    %cst_15 = arith.constant dense<0.000000e+00> : vector<8xf32>
    %29 = vector.multi_reduction <add>, %28, %cst_15 [1] : vector<8x8xf32> to vector<8xf32>
    %30 = vector.shape_cast %29 : vector<8xf32> to vector<8x1xf32>
    %31 = tpu.reciprocal %30 {approx = true} : vector<8x1xf32> -> vector<8x1xf32>
    %32 = vector.broadcast %31 : vector<8x1xf32> to vector<8x8xf32>
    %33 = arith.mulf %28, %32 : vector<8x8xf32>
    %c0_16 = arith.constant 0 : index
    %c0_17 = arith.constant 0 : index
    %c0_18 = arith.constant 0 : index
    %c0_19 = arith.constant 0 : index
    %34 = vector.load %arg6[%c0_16, %c0_17, %c0_18, %c0_19] : memref<1x4x8x8xf32, #tpu.memory_space<vmem>>, vector<1x1x8x8xf32>
    %35 = vector.shape_cast %34 : vector<1x1x8x8xf32> to vector<8x8xf32>
    %36 = vector.shape_cast %33 : vector<8x8xf32> to vector<1x1x8x8xf32>
    tpu.vector_store %arg6[%c0_16, %c0_17, %c0_18, %c0_19], %36 {strides = array<i32>} : memref<1x4x8x8xf32, #tpu.memory_space<vmem>>, vector<1x1x8x8xf32>,
    %cst_20 = arith.constant dense<0.000000e+00> : vector<8x8xf32>
    %37 = tpu.matmul %33, %19, %cst_20 {dimension_numbers = #tpu.dot_dimension_numbers<[1], [0], [0], [1], [0, 0, 1, 1], [], []>} : vector<8x8xf32>, vector<8x8xf32>, vector<8x8xf32> -> vector<8x8xf32>
    %38 = vector.extract_strided_slice %1 {offsets = [0, 8], sizes = [8, 8], strides = [1, 1]} : vector<8x32xf32> to vector<8x8xf32>
    %39 = vector.extract_strided_slice %3 {offsets = [0, 8], sizes = [8, 8], strides = [1, 1]} : vector<8x32xf32> to vector<8x8xf32>
    %40 = vector.extract_strided_slice %5 {offsets = [0, 8], sizes = [8, 8], strides = [1, 1]} : vector<8x32xf32> to vector<8x8xf32>
    %cst_21 = arith.constant dense<0.000000e+00> : vector<8x8xf32>
    %41 = tpu.matmul %38, %39, %cst_21 {dimension_numbers = #tpu.dot_dimension_numbers<[1], [1], [0], [0], [0, 0, 1, 0], [], []>} : vector<8x8xf32>, vector<8x8xf32>, vector<8x8xf32> -> vector<8x8xf32>
    %cst_22 = arith.constant 0.353553385 : f32
    %42 = vector.broadcast %cst_22 : f32 to vector<8x8xf32>
    %43 = arith.mulf %41, %42 : vector<8x8xf32>
    %44 = arith.addf %43, %16 : vector<8x8xf32>
    %cst_23 = arith.constant dense<0xFF800000> : vector<8xf32>
    %45 = vector.multi_reduction <maximumf>, %44, %cst_23 [1] : vector<8x8xf32> to vector<8xf32>
    %46 = vector.shape_cast %45 : vector<8xf32> to vector<8x1xf32>
    %47 = vector.broadcast %46 : vector<8x1xf32> to vector<8x8xf32>
    %48 = arith.subf %44, %47 : vector<8x8xf32>
    %49 = math.exp %48 : vector<8x8xf32>
    %cst_24 = arith.constant dense<0.000000e+00> : vector<8xf32>
    %50 = vector.multi_reduction <add>, %49, %cst_24 [1] : vector<8x8xf32> to vector<8xf32>
    %51 = vector.shape_cast %50 : vector<8xf32> to vector<8x1xf32>
    %52 = tpu.reciprocal %51 {approx = true} : vector<8x1xf32> -> vector<8x1xf32>
    %53 = vector.broadcast %52 : vector<8x1xf32> to vector<8x8xf32>
    %54 = arith.mulf %49, %53 : vector<8x8xf32>
    %c0_25 = arith.constant 0 : index
    %c1 = arith.constant 1 : index
    %c0_26 = arith.constant 0 : index
    %c0_27 = arith.constant 0 : index
    %55 = vector.load %arg6[%c0_25, %c1, %c0_26, %c0_27] : memref<1x4x8x8xf32, #tpu.memory_space<vmem>>, vector<1x1x8x8xf32>
    %56 = vector.shape_cast %55 : vector<1x1x8x8xf32> to vector<8x8xf32>
    %57 = vector.shape_cast %54 : vector<8x8xf32> to vector<1x1x8x8xf32>
    tpu.vector_store %arg6[%c0_25, %c1, %c0_26, %c0_27], %57 {strides = array<i32>} : memref<1x4x8x8xf32, #tpu.memory_space<vmem>>, vector<1x1x8x8xf32>,
    %cst_28 = arith.constant dense<0.000000e+00> : vector<8x8xf32>
    %58 = tpu.matmul %54, %40, %cst_28 {dimension_numbers = #tpu.dot_dimension_numbers<[1], [0], [0], [1], [0, 0, 1, 1], [], []>} : vector<8x8xf32>, vector<8x8xf32>, vector<8x8xf32> -> vector<8x8xf32>
    %59 = vector.extract_strided_slice %1 {offsets = [0, 16], sizes = [8, 8], strides = [1, 1]} : vector<8x32xf32> to vector<8x8xf32>
    %60 = vector.extract_strided_slice %3 {offsets = [0, 16], sizes = [8, 8], strides = [1, 1]} : vector<8x32xf32> to vector<8x8xf32>
    %61 = vector.extract_strided_slice %5 {offsets = [0, 16], sizes = [8, 8], strides = [1, 1]} : vector<8x32xf32> to vector<8x8xf32>
    %cst_29 = arith.constant dense<0.000000e+00> : vector<8x8xf32>
    %62 = tpu.matmul %59, %60, %cst_29 {dimension_numbers = #tpu.dot_dimension_numbers<[1], [1], [0], [0], [0, 0, 1, 0], [], []>} : vector<8x8xf32>, vector<8x8xf32>, vector<8x8xf32> -> vector<8x8xf32>
    %cst_30 = arith.constant 0.353553385 : f32
    %63 = vector.broadcast %cst_30 : f32 to vector<8x8xf32>
    %64 = arith.mulf %62, %63 : vector<8x8xf32>
    %65 = arith.addf %64, %16 : vector<8x8xf32>
    %cst_31 = arith.constant dense<0xFF800000> : vector<8xf32>
    %66 = vector.multi_reduction <maximumf>, %65, %cst_31 [1] : vector<8x8xf32> to vector<8xf32>
    %67 = vector.shape_cast %66 : vector<8xf32> to vector<8x1xf32>
    %68 = vector.broadcast %67 : vector<8x1xf32> to vector<8x8xf32>
    %69 = arith.subf %65, %68 : vector<8x8xf32>
    %70 = math.exp %69 : vector<8x8xf32>
    %cst_32 = arith.constant dense<0.000000e+00> : vector<8xf32>
    %71 = vector.multi_reduction <add>, %70, %cst_32 [1] : vector<8x8xf32> to vector<8xf32>
    %72 = vector.shape_cast %71 : vector<8xf32> to vector<8x1xf32>
    %73 = tpu.reciprocal %72 {approx = true} : vector<8x1xf32> -> vector<8x1xf32>
    %74 = vector.broadcast %73 : vector<8x1xf32> to vector<8x8xf32>
    %75 = arith.mulf %70, %74 : vector<8x8xf32>
    %c0_33 = arith.constant 0 : index
    %c2 = arith.constant 2 : index
    %c0_34 = arith.constant 0 : index
    %c0_35 = arith.constant 0 : index
    %76 = vector.load %arg6[%c0_33, %c2, %c0_34, %c0_35] : memref<1x4x8x8xf32, #tpu.memory_space<vmem>>, vector<1x1x8x8xf32>
    %77 = vector.shape_cast %76 : vector<1x1x8x8xf32> to vector<8x8xf32>
    %78 = vector.shape_cast %75 : vector<8x8xf32> to vector<1x1x8x8xf32>
    tpu.vector_store %arg6[%c0_33, %c2, %c0_34, %c0_35], %78 {strides = array<i32>} : memref<1x4x8x8xf32, #tpu.memory_space<vmem>>, vector<1x1x8x8xf32>,
    %cst_36 = arith.constant dense<0.000000e+00> : vector<8x8xf32>
    %79 = tpu.matmul %75, %61, %cst_36 {dimension_numbers = #tpu.dot_dimension_numbers<[1], [0], [0], [1], [0, 0, 1, 1], [], []>} : vector<8x8xf32>, vector<8x8xf32>, vector<8x8xf32> -> vector<8x8xf32>
    %80 = vector.extract_strided_slice %1 {offsets = [0, 24], sizes = [8, 8], strides = [1, 1]} : vector<8x32xf32> to vector<8x8xf32>
    %81 = vector.extract_strided_slice %3 {offsets = [0, 24], sizes = [8, 8], strides = [1, 1]} : vector<8x32xf32> to vector<8x8xf32>
    %82 = vector.extract_strided_slice %5 {offsets = [0, 24], sizes = [8, 8], strides = [1, 1]} : vector<8x32xf32> to vector<8x8xf32>
    %cst_37 = arith.constant dense<0.000000e+00> : vector<8x8xf32>
    %83 = tpu.matmul %80, %81, %cst_37 {dimension_numbers = #tpu.dot_dimension_numbers<[1], [1], [0], [0], [0, 0, 1, 0], [], []>} : vector<8x8xf32>, vector<8x8xf32>, vector<8x8xf32> -> vector<8x8xf32>
    %cst_38 = arith.constant 0.353553385 : f32
    %84 = vector.broadcast %cst_38 : f32 to vector<8x8xf32>
    %85 = arith.mulf %83, %84 : vector<8x8xf32>
    %86 = arith.addf %85, %16 : vector<8x8xf32>
    %cst_39 = arith.constant dense<0xFF800000> : vector<8xf32>
    %87 = vector.multi_reduction <maximumf>, %86, %cst_39 [1] : vector<8x8xf32> to vector<8xf32>
    %88 = vector.shape_cast %87 : vector<8xf32> to vector<8x1xf32>
    %89 = vector.broadcast %88 : vector<8x1xf32> to vector<8x8xf32>
    %90 = arith.subf %86, %89 : vector<8x8xf32>
    %91 = math.exp %90 : vector<8x8xf32>
    %cst_40 = arith.constant dense<0.000000e+00> : vector<8xf32>
    %92 = vector.multi_reduction <add>, %91, %cst_40 [1] : vector<8x8xf32> to vector<8xf32>
    %93 = vector.shape_cast %92 : vector<8xf32> to vector<8x1xf32>
    %94 = tpu.reciprocal %93 {approx = true} : vector<8x1xf32> -> vector<8x1xf32>
    %95 = vector.broadcast %94 : vector<8x1xf32> to vector<8x8xf32>
    %96 = arith.mulf %91, %95 : vector<8x8xf32>
    %c0_41 = arith.constant 0 : index
    %c3 = arith.constant 3 : index
    %c0_42 = arith.constant 0 : index
    %c0_43 = arith.constant 0 : index
    %97 = vector.load %arg6[%c0_41, %c3, %c0_42, %c0_43] : memref<1x4x8x8xf32, #tpu.memory_space<vmem>>, vector<1x1x8x8xf32>
    %98 = vector.shape_cast %97 : vector<1x1x8x8xf32> to vector<8x8xf32>
    %99 = vector.shape_cast %96 : vector<8x8xf32> to vector<1x1x8x8xf32>
    tpu.vector_store %arg6[%c0_41, %c3, %c0_42, %c0_43], %99 {strides = array<i32>} : memref<1x4x8x8xf32, #tpu.memory_space<vmem>>, vector<1x1x8x8xf32>,
    %cst_44 = arith.constant dense<0.000000e+00> : vector<8x8xf32>
    %100 = tpu.matmul %96, %82, %cst_44 {dimension_numbers = #tpu.dot_dimension_numbers<[1], [0], [0], [1], [0, 0, 1, 1], [], []>} : vector<8x8xf32>, vector<8x8xf32>, vector<8x8xf32> -> vector<8x8xf32>
    %101 = tpu.concatenate %37, %58, %79, %100 in 1 : vector<8x8xf32>, vector<8x8xf32>, vector<8x8xf32>, vector<8x8xf32> -> vector<8x32xf32>
    %c0_45 = arith.constant 0 : index
    %c0_46 = arith.constant 0 : index
    %c0_47 = arith.constant 0 : index
    %102 = vector.load %arg5[%c0_45, %c0_46, %c0_47] : memref<1x8x32xf32, #tpu.memory_space<vmem>>, vector<1x8x32xf32>
    %103 = vector.shape_cast %102 : vector<1x8x32xf32> to vector<8x32xf32>
    %104 = vector.shape_cast %101 : vector<8x32xf32> to vector<1x8x32xf32>
    tpu.vector_store %arg5[%c0_45, %c0_46, %c0_47], %104 {strides = array<i32>} : memref<1x8x32xf32, #tpu.memory_space<vmem>>, vector<1x8x32xf32>,
    return
  }
  func.func @transform_0(%arg0: i32) -> (i32, i32, i32) {
    %c0_i32 = arith.constant 0 : i32
    %c0_i32_0 = arith.constant 0 : i32
    %c0_i32_1 = arith.constant 0 : i32
    return %arg0, %c0_i32, %c0_i32_0 : i32, i32, i32
  }
  func.func @transform_1(%arg0: i32) -> (i32, i32, i32) {
    %c0_i32 = arith.constant 0 : i32
    %c0_i32_0 = arith.constant 0 : i32
    %c0_i32_1 = arith.constant 0 : i32
    return %arg0, %c0_i32, %c0_i32_0 : i32, i32, i32
  }
  func.func @transform_2(%arg0: i32) -> (i32, i32, i32) {
    %c0_i32 = arith.constant 0 : i32
    %c0_i32_0 = arith.constant 0 : i32
    %c0_i32_1 = arith.constant 0 : i32
    return %arg0, %c0_i32, %c0_i32_0 : i32, i32, i32
  }
  func.func @transform_3(%arg0: i32) -> (i32, i32, i32) {
    %c0_i32 = arith.constant 0 : i32
    %c0_i32_0 = arith.constant 0 : i32
    %c0_i32_1 = arith.constant 0 : i32
    return %arg0, %c0_i32, %c0_i32_0 : i32, i32, i32
  }
  func.func @transform_4(%arg0: i32) -> (i32, i32, i32) {
    %c0_i32 = arith.constant 0 : i32
    %c0_i32_0 = arith.constant 0 : i32
    %c0_i32_1 = arith.constant 0 : i32
    return %arg0, %c0_i32, %c0_i32_0 : i32, i32, i32
  }
  func.func @transform_5(%arg0: i32) -> (i32, i32, i32, i32) {
    %c0_i32 = arith.constant 0 : i32
    %c0_i32_0 = arith.constant 0 : i32
    %c0_i32_1 = arith.constant 0 : i32
    %c0_i32_2 = arith.constant 0 : i32
    return %arg0, %c0_i32, %c0_i32_0, %c0_i32_1 : i32, i32, i32, i32
  }
}

module attributes {stable_mosaic.version = 11 : i64} {
  func.func @_linear_kernel(%arg0: i32, %arg1: memref<16x32xf32, #tpu.memory_space<vmem>>, %arg2: memref<32x128xf32, #tpu.memory_space<vmem>>, %arg3: memref<1x128xf32, #tpu.memory_space<vmem>>, %arg4: memref<16x128xf32, #tpu.memory_space<vmem>>) attributes {dimension_semantics = [#tpu.dimension_semantics<parallel>], iteration_bounds = array<i64: 1>, scalar_prefetch = 0 : i64, scratch_operands = 0 : i64, tpu.core_type = #tpu.core_type<tc>, window_params = [{transform_indices = @transform_0, window_bounds = array<i64: 16, 32>}, {pipeline_mode = #tpu.pipeline_mode<synchronous>, transform_indices = @transform_1, window_bounds = array<i64: 32, 128>}, {pipeline_mode = #tpu.pipeline_mode<synchronous>, transform_indices = @transform_2, window_bounds = array<i64: 1, 128>}, {transform_indices = @transform_3, window_bounds = array<i64: 16, 128>}]} {
    %c0 = arith.constant 0 : index
    %c0_0 = arith.constant 0 : index
    %0 = vector.load %arg1[%c0, %c0_0] : memref<16x32xf32, #tpu.memory_space<vmem>>, vector<16x32xf32>
    %c0_1 = arith.constant 0 : index
    %c0_2 = arith.constant 0 : index
    %1 = vector.load %arg2[%c0_1, %c0_2] : memref<32x128xf32, #tpu.memory_space<vmem>>, vector<32x128xf32>
    %cst = arith.constant dense<0.000000e+00> : vector<16x128xf32>
    %2 = tpu.matmul %0, %1, %cst {dimension_numbers = #tpu.dot_dimension_numbers<[1], [0], [0], [1], [0, 0, 1, 1], [], []>} : vector<16x32xf32>, vector<32x128xf32>, vector<16x128xf32> -> vector<16x128xf32>
    %c0_3 = arith.constant 0 : index
    %c0_4 = arith.constant 0 : index
    %3 = vector.load %arg3[%c0_3, %c0_4] : memref<1x128xf32, #tpu.memory_space<vmem>>, vector<1x128xf32>
    %4 = vector.broadcast %3 : vector<1x128xf32> to vector<16x128xf32>
    %5 = arith.addf %2, %4 : vector<16x128xf32>
    %c0_5 = arith.constant 0 : index
    %c0_6 = arith.constant 0 : index
    %6 = vector.load %arg4[%c0_5, %c0_6] : memref<16x128xf32, #tpu.memory_space<vmem>>, vector<16x128xf32>
    tpu.vector_store %arg4[%c0_5, %c0_6], %5 {strides = array<i32>} : memref<16x128xf32, #tpu.memory_space<vmem>>, vector<16x128xf32>,
    return
  }
  func.func @transform_0(%arg0: i32) -> (i32, i32) {
    %c0_i32 = arith.constant 0 : i32
    %c0_i32_0 = arith.constant 0 : i32
    return %arg0, %c0_i32 : i32, i32
  }
  func.func @transform_1(%arg0: i32) -> (i32, i32) {
    %c0_i32 = arith.constant 0 : i32
    %c0_i32_0 = arith.constant 0 : i32
    %c0_i32_1 = arith.constant 0 : i32
    return %c0_i32, %c0_i32_0 : i32, i32
  }
  func.func @transform_2(%arg0: i32) -> (i32, i32) {
    %c0_i32 = arith.constant 0 : i32
    %c0_i32_0 = arith.constant 0 : i32
    %c0_i32_1 = arith.constant 0 : i32
    return %c0_i32, %c0_i32_0 : i32, i32
  }
  func.func @transform_3(%arg0: i32) -> (i32, i32) {
    %c0_i32 = arith.constant 0 : i32
    %c0_i32_0 = arith.constant 0 : i32
    return %arg0, %c0_i32 : i32, i32
  }
}

</mosaic_0001>

<llo_original>
// kernel: transformer_forward.29
$region0: #{transformer_forward.29}
  #allocation0 [shape = 'u32[]', space=smem, size = 0x4, offset = 0x4, fixed_abs, tag = 'smem constant byte address 0x4 - core index']
  #allocation1 [shape = 'u32[144,128]{1,0:T(1,128)}', space=vmem, size = 0x12000, scoped, tag = 'internal scratch']
  %s0 = inlined_call_operand.vmem [shape: f32[16,32], index: 0, kind: input, shape index: {}]
  %s1 = inlined_call_operand.vmem [shape: f32[32,96], index: 1, kind: input, shape index: {}]
  %s2 = inlined_call_operand.vmem [shape: f32[1,96], index: 2, kind: input, shape index: {}]
  %s3 = inlined_call_operand.vmem [shape: f32[16,96], index: 3, kind: output, shape index: {}]
  %s4 = sld [smem:[#allocation0]]
  $region22: #{transformer_forward.29} parent=0
    _
  %s6 = ssub.s32 1, %s4
  %s7 = scalar_select 0, %s6, %s4
  // Predicated region
  $region2: #{transformer_forward.29} parent=0 // pred_check
    _
  $region3: #{transformer_forward.29} parent=0 // pred_check_branch
    %9 = sbr.rel (0) target = $region5
  $region4: #{transformer_forward.29} parent=0 // pred_region
    _
  $region5: #{transformer_forward.29} parent=0 // pred_fallthru
    _
  // Predicated region
  $region6: #{transformer_forward.29} parent=0 // pred_check
    _
  $region7: #{transformer_forward.29} parent=0 // pred_check_branch
    %11 = sbr.rel (0) target = $region9
  $region8: #{transformer_forward.29} parent=0 // pred_region
    _
  $region9: #{transformer_forward.29} parent=0 // pred_fallthru
    _
  // Predicated region
  $region10: #{transformer_forward.29} parent=0 // pred_check
    _
  $region11: #{transformer_forward.29} parent=0 // pred_check_branch
    %13 = sbr.rel (0) target = $region13
  $region12: #{transformer_forward.29} parent=0 // pred_region
    _
  $region13: #{transformer_forward.29} parent=0 // pred_fallthru
    _
  %v14 = vld [vmem:[%s0] sm:$0xff]
  %v15 = vld [vmem:[%s0 + $0x8] sm:$0xff]
  %v16 = vld [vmem:[%s1] sm:$0xff]
  %v17 = vld [vmem:[%s1 + $0x8] sm:$0xff]
  %v18 = vld [vmem:[%s1 + $0x10] sm:$0xff]
  %v19 = vld [vmem:[%s1 + $0x18] sm:$0xff]
  %v20 = vld [vmem:[%s2] sm:$0x1]
  %v22 = vlaneseq
  %v23 = vshrl.u32 %v22, 7
  %v24 = vsub.s32 0, %v23
  %v25 = vrot.slane %v20, %v24
  %vm27 = vcmask 261120
  %v29 = vsel %vm27, %v14, 0
  %v32 = vsel %vm27, %v15, 0
  %34 = vmatprep.subr.mxu0 0.0
  %35 = vmatpush1.msra.mxu0 0.0
  %36 = vmatprep.subr.mxu0 0.0
  %37 = vmatpush1.msra.mxu0 0.0
  %38 = vmatprep.subr.mxu0 0.0
  %39 = vmatpush1.msra.mxu0 0.0
  %40 = vmatprep.subr.mxu0 0.0
  %41 = vmatpush1.msra.mxu0 0.0
  %42 = vmatprep.subr.mxu0 0.0
  %43 = vmatpush1.msra.mxu0 0.0
  %44 = vmatprep.subr.mxu0 0.0
  %45 = vmatpush1.msra.mxu0 0.0
  %46 = vmatprep.subr.mxu0 0.0
  %47 = vmatpush1.msra.mxu0 0.0
  %48 = vmatprep.subr.mxu0 0.0
  %49 = vmatpush1.msra.mxu0 0.0
  %50 = vmatprep.subr.mxu0 0.0
  %51 = vmatpush1.msra.mxu0 0.0
  %52 = vmatprep.subr.mxu0 0.0
  %53 = vmatpush1.msra.mxu0 0.0
  %54 = vmatprep.subr.mxu0 0.0
  %55 = vmatpush1.msra.mxu0 0.0
  %56 = vmatprep.subr.mxu0 0.0
  %57 = vmatpush1.msra.mxu0 0.0
  %58 = vmatprep.subr.mxu0 0.0
  %59 = vmatpush1.msra.mxu0 %v19
  %60 = vmatprep.subr.mxu0 0.0
  %61 = vmatpush1.msra.mxu0 %v18
  %62 = vmatprep.subr.mxu0 0.0
  %63 = vmatpush1.msra.mxu0 %v17
  %64 = vmatprep.subr.mxu0 0.0
  %65 = vmatpush1.msra.mxu0 %v16
  %66 = vmatprep.subr.mxu0 0.0
  %67 = vmatpush2.msra.mxu0 0.0
  %68 = vmatprep.subr.mxu0 0.0
  %69 = vmatpush2.msra.mxu0 0.0
  %70 = vmatprep.subr.mxu0 0.0
  %71 = vmatpush2.msra.mxu0 0.0
  %72 = vmatprep.subr.mxu0 0.0
  %73 = vmatpush2.msra.mxu0 0.0
  %74 = vmatprep.subr.mxu0 0.0
  %75 = vmatpush2.msra.mxu0 0.0
  %76 = vmatprep.subr.mxu0 0.0
  %77 = vmatpush2.msra.mxu0 0.0
  %78 = vmatprep.subr.mxu0 0.0
  %79 = vmatpush2.msra.mxu0 0.0
  %80 = vmatprep.subr.mxu0 0.0
  %81 = vmatpush2.msra.mxu0 0.0
  %82 = vmatprep.subr.mxu0 0.0
  %83 = vmatpush2.msra.mxu0 0.0
  %84 = vmatprep.subr.mxu0 0.0
  %85 = vmatpush2.msra.mxu0 0.0
  %86 = vmatprep.subr.mxu0 0.0
  %87 = vmatpush2.msra.mxu0 0.0
  %88 = vmatprep.subr.mxu0 0.0
  %89 = vmatpush2.msra.mxu0 0.0
  %90 = vmatprep.subr.mxu0 0.0
  %91 = vmatpush2.msra.mxu0 0.0
  %92 = vmatprep.subr.mxu0 0.0
  %93 = vmatpush2.msra.mxu0 0.0
  %94 = vmatprep.subr.mxu0 0.0
  %95 = vmatpush2.msra.mxu0 0.0
  %96 = vmatprep.subr.mxu0 0.0
  %97 = vmatpush2.msra.mxu0 0.0
  %98 = vmatprep.mubr.f32.mxu0 0.0
  %99 = vmatmul.mubr.f32.gmra.mxu0 %v29
  %v100 = vpop.f32.mrf.mxu0
  %v101 = vadd.f32 %v25, %v100
  %v102 = vpop.f32.mrf.mxu0
  %103 = vmatprep.mubr.f32.mxu0 0.0
  %104 = vmatmul.mubr.f32.gmra.mxu0 %v32
  %v105 = vpop.f32.mrf.mxu0
  %v106 = vadd.f32 %v25, %v105
  %v107 = vpop.f32.mrf.mxu0
  %108 = vdwg.mxu0
  %vm109 = vcmask 785408
  %110 = vst.msk [vmem:[%s3] sm:$0xff] %vm109, %v101
  %111 = vst.msk [vmem:[%s3 + $0x8] sm:$0xff] %vm109, %v106
  // Predicated region
  $region14: #{transformer_forward.29} parent=0 // pred_check
    _
  $region15: #{transformer_forward.29} parent=0 // pred_check_branch
    %113 = sbr.rel (0) target = $region17
  $region16: #{transformer_forward.29} parent=0 // pred_region
    _
  $region17: #{transformer_forward.29} parent=0 // pred_fallthru
    _
  // Predicated region
  $region18: #{transformer_forward.29} parent=0 // pred_check
    _
  $region19: #{transformer_forward.29} parent=0 // pred_check_branch
    %115 = sbr.rel (0) target = $region21
  $region20: #{transformer_forward.29} parent=0 // pred_region
    _
  $region21: #{transformer_forward.29} parent=0 // pred_fallthru
    _

// kernel: transformer_forward.32
$region0: #{transformer_forward.32}
  #allocation0 [shape = 'u32[]', space=smem, size = 0x4, offset = 0x4, fixed_abs, tag = 'smem constant byte address 0x4 - core index']
  #allocation1 [shape = 'u32[144,128]{1,0:T(1,128)}', space=vmem, size = 0x12000, scoped, tag = 'internal scratch']
  %s0 = inlined_call_operand.vmem [shape: f32[16,32], index: 0, kind: input, shape index: {}]
  %s1 = inlined_call_operand.vmem [shape: f32[32,128], index: 1, kind: input, shape index: {}]
  %s2 = inlined_call_operand.vmem [shape: f32[1,128], index: 2, kind: input, shape index: {}]
  %s3 = inlined_call_operand.vmem [shape: f32[16,128], index: 3, kind: output, shape index: {}]
  %s4 = sld [smem:[#allocation0]]
  $region22: #{transformer_forward.32} parent=0
    _
  %s6 = ssub.s32 1, %s4
  %s7 = scalar_select 0, %s6, %s4
  // Predicated region
  $region2: #{transformer_forward.32} parent=0 // pred_check
    _
  $region3: #{transformer_forward.32} parent=0 // pred_check_branch
    %9 = sbr.rel (0) target = $region5
  $region4: #{transformer_forward.32} parent=0 // pred_region
    _
  $region5: #{transformer_forward.32} parent=0 // pred_fallthru
    _
  // Predicated region
  $region6: #{transformer_forward.32} parent=0 // pred_check
    _
  $region7: #{transformer_forward.32} parent=0 // pred_check_branch
    %11 = sbr.rel (0) target = $region9
  $region8: #{transformer_forward.32} parent=0 // pred_region
    _
  $region9: #{transformer_forward.32} parent=0 // pred_fallthru
    _
  // Predicated region
  $region10: #{transformer_forward.32} parent=0 // pred_check
    _
  $region11: #{transformer_forward.32} parent=0 // pred_check_branch
    %13 = sbr.rel (0) target = $region13
  $region12: #{transformer_forward.32} parent=0 // pred_region
    _
  $region13: #{transformer_forward.32} parent=0 // pred_fallthru
    _
  %v14 = vld [vmem:[%s0] sm:$0xff]
  %v15 = vld [vmem:[%s0 + $0x8] sm:$0xff]
  %v16 = vld [vmem:[%s1] sm:$0xff]
  %v17 = vld [vmem:[%s1 + $0x8] sm:$0xff]
  %v18 = vld [vmem:[%s1 + $0x10] sm:$0xff]
  %v19 = vld [vmem:[%s1 + $0x18] sm:$0xff]
  %v20 = vld [vmem:[%s2] sm:$0x1]
  %v22 = vlaneseq
  %v23 = vshrl.u32 %v22, 7
  %v24 = vsub.s32 0, %v23
  %v25 = vrot.slane %v20, %v24
  %vm27 = vcmask 261120
  %v29 = vsel %vm27, %v14, 0
  %v32 = vsel %vm27, %v15, 0
  %34 = vmatprep.subr.mxu0 0.0
  %35 = vmatpush1.msra.mxu0 0.0
  %36 = vmatprep.subr.mxu0 0.0
  %37 = vmatpush1.msra.mxu0 0.0
  %38 = vmatprep.subr.mxu0 0.0
  %39 = vmatpush1.msra.mxu0 0.0
  %40 = vmatprep.subr.mxu0 0.0
  %41 = vmatpush1.msra.mxu0 0.0
  %42 = vmatprep.subr.mxu0 0.0
  %43 = vmatpush1.msra.mxu0 0.0
  %44 = vmatprep.subr.mxu0 0.0
  %45 = vmatpush1.msra.mxu0 0.0
  %46 = vmatprep.subr.mxu0 0.0
  %47 = vmatpush1.msra.mxu0 0.0
  %48 = vmatprep.subr.mxu0 0.0
  %49 = vmatpush1.msra.mxu0 0.0
  %50 = vmatprep.subr.mxu0 0.0
  %51 = vmatpush1.msra.mxu0 0.0
  %52 = vmatprep.subr.mxu0 0.0
  %53 = vmatpush1.msra.mxu0 0.0
  %54 = vmatprep.subr.mxu0 0.0
  %55 = vmatpush1.msra.mxu0 0.0
  %56 = vmatprep.subr.mxu0 0.0
  %57 = vmatpush1.msra.mxu0 0.0
  %58 = vmatprep.subr.mxu0 0.0
  %59 = vmatpush1.msra.mxu0 %v19
  %60 = vmatprep.subr.mxu0 0.0
  %61 = vmatpush1.msra.mxu0 %v18
  %62 = vmatprep.subr.mxu0 0.0
  %63 = vmatpush1.msra.mxu0 %v17
  %64 = vmatprep.subr.mxu0 0.0
  %65 = vmatpush1.msra.mxu0 %v16
  %66 = vmatprep.subr.mxu0 0.0
  %67 = vmatpush2.msra.mxu0 0.0
  %68 = vmatprep.subr.mxu0 0.0
  %69 = vmatpush2.msra.mxu0 0.0
  %70 = vmatprep.subr.mxu0 0.0
  %71 = vmatpush2.msra.mxu0 0.0
  %72 = vmatprep.subr.mxu0 0.0
  %73 = vmatpush2.msra.mxu0 0.0
  %74 = vmatprep.subr.mxu0 0.0
  %75 = vmatpush2.msra.mxu0 0.0
  %76 = vmatprep.subr.mxu0 0.0
  %77 = vmatpush2.msra.mxu0 0.0
  %78 = vmatprep.subr.mxu0 0.0
  %79 = vmatpush2.msra.mxu0 0.0
  %80 = vmatprep.subr.mxu0 0.0
  %81 = vmatpush2.msra.mxu0 0.0
  %82 = vmatprep.subr.mxu0 0.0
  %83 = vmatpush2.msra.mxu0 0.0
  %84 = vmatprep.subr.mxu0 0.0
  %85 = vmatpush2.msra.mxu0 0.0
  %86 = vmatprep.subr.mxu0 0.0
  %87 = vmatpush2.msra.mxu0 0.0
  %88 = vmatprep.subr.mxu0 0.0
  %89 = vmatpush2.msra.mxu0 0.0
  %90 = vmatprep.subr.mxu0 0.0
  %91 = vmatpush2.msra.mxu0 0.0
  %92 = vmatprep.subr.mxu0 0.0
  %93 = vmatpush2.msra.mxu0 0.0
  %94 = vmatprep.subr.mxu0 0.0
  %95 = vmatpush2.msra.mxu0 0.0
  %96 = vmatprep.subr.mxu0 0.0
  %97 = vmatpush2.msra.mxu0 0.0
  %98 = vmatprep.mubr.f32.mxu0 0.0
  %99 = vmatmul.mubr.f32.gmra.mxu0 %v29
  %v100 = vpop.f32.mrf.mxu0
  %v101 = vadd.f32 %v25, %v100
  %v102 = vpop.f32.mrf.mxu0
  %103 = vmatprep.mubr.f32.mxu0 0.0
  %104 = vmatmul.mubr.f32.gmra.mxu0 %v32
  %v105 = vpop.f32.mrf.mxu0
  %v106 = vadd.f32 %v25, %v105
  %v107 = vpop.f32.mrf.mxu0
  %108 = vdwg.mxu0
  %v109 = vmax.f32 %v101, 0.0
  %v110 = vmax.f32 %v106, 0.0
  %111 = vst [vmem:[%s3] sm:$0xff] %v109
  %112 = vst [vmem:[%s3 + $0x8] sm:$0xff] %v110
  // Predicated region
  $region14: #{transformer_forward.32} parent=0 // pred_check
    _
  $region15: #{transformer_forward.32} parent=0 // pred_check_branch
    %114 = sbr.rel (0) target = $region17
  $region16: #{transformer_forward.32} parent=0 // pred_region
    _
  $region17: #{transformer_forward.32} parent=0 // pred_fallthru
    _
  // Predicated region
  $region18: #{transformer_forward.32} parent=0 // pred_check
    _
  $region19: #{transformer_forward.32} parent=0 // pred_check_branch
    %116 = sbr.rel (0) target = $region21
  $region20: #{transformer_forward.32} parent=0 // pred_region
    _
  $region21: #{transformer_forward.32} parent=0 // pred_fallthru
    _

// kernel: transformer_forward.31
$region0: #{transformer_forward.31}
  #allocation0 [shape = 'u32[]', space=smem, size = 0x4, offset = 0x4, fixed_abs, tag = 'smem constant byte address 0x4 - core index']
  #allocation1 [shape = 'u32[144,128]{1,0:T(1,128)}', space=vmem, size = 0x12000, scoped, tag = 'internal scratch']
  %s0 = inlined_call_operand.vmem [shape: f32[16,32], index: 0, kind: input, shape index: {}]
  %s1 = inlined_call_operand.vmem [shape: f32[32,32], index: 1, kind: input, shape index: {}]
  %s2 = inlined_call_operand.vmem [shape: f32[1,32], index: 2, kind: input, shape index: {}]
  %s3 = inlined_call_operand.vmem [shape: f32[16,32], index: 3, kind: input, shape index: {}]
  %s4 = inlined_call_operand.vmem [shape: f32[1,32], index: 4, kind: input, shape index: {}]
  %s5 = inlined_call_operand.vmem [shape: f32[1,32], index: 5, kind: input, shape index: {}]
  %s6 = inlined_call_operand.vmem [shape: f32[16,32], index: 6, kind: output, shape index: {}]
  %s7 = sld [smem:[#allocation0]]
  $region34: #{transformer_forward.31} parent=0
    _
  %s9 = ssub.s32 1, %s7
  %s10 = scalar_select 0, %s9, %s7
  // Predicated region
  $region2: #{transformer_forward.31} parent=0 // pred_check
    _
  $region3: #{transformer_forward.31} parent=0 // pred_check_branch
    %12 = sbr.rel (0) target = $region5
  $region4: #{transformer_forward.31} parent=0 // pred_region
    _
  $region5: #{transformer_forward.31} parent=0 // pred_fallthru
    _
  // Predicated region
  $region6: #{transformer_forward.31} parent=0 // pred_check
    _
  $region7: #{transformer_forward.31} parent=0 // pred_check_branch
    %14 = sbr.rel (0) target = $region9
  $region8: #{transformer_forward.31} parent=0 // pred_region
    _
  $region9: #{transformer_forward.31} parent=0 // pred_fallthru
    _
  // Predicated region
  $region10: #{transformer_forward.31} parent=0 // pred_check
    _
  $region11: #{transformer_forward.31} parent=0 // pred_check_branch
    %16 = sbr.rel (0) target = $region13
  $region12: #{transformer_forward.31} parent=0 // pred_region
    _
  $region13: #{transformer_forward.31} parent=0 // pred_fallthru
    _
  // Predicated region
  $region14: #{transformer_forward.31} parent=0 // pred_check
    _
  $region15: #{transformer_forward.31} parent=0 // pred_check_branch
    %18 = sbr.rel (0) target = $region17
  $region16: #{transformer_forward.31} parent=0 // pred_region
    _
  $region17: #{transformer_forward.31} parent=0 // pred_fallthru
    _
  // Predicated region
  $region18: #{transformer_forward.31} parent=0 // pred_check
    _
  $region19: #{transformer_forward.31} parent=0 // pred_check_branch
    %20 = sbr.rel (0) target = $region21
  $region20: #{transformer_forward.31} parent=0 // pred_region
    _
  $region21: #{transformer_forward.31} parent=0 // pred_fallthru
    _
  // Predicated region
  $region22: #{transformer_forward.31} parent=0 // pred_check
    _
  $region23: #{transformer_forward.31} parent=0 // pred_check_branch
    %22 = sbr.rel (0) target = $region25
  $region24: #{transformer_forward.31} parent=0 // pred_region
    _
  $region25: #{transformer_forward.31} parent=0 // pred_fallthru
    _
  %v23 = vld [vmem:[%s0] sm:$0xff]
  %v24 = vld [vmem:[%s0 + $0x8] sm:$0xff]
  %v25 = vld [vmem:[%s1] sm:$0xff]
  %v26 = vld [vmem:[%s1 + $0x8] sm:$0xff]
  %v27 = vld [vmem:[%s1 + $0x10] sm:$0xff]
  %v28 = vld [vmem:[%s1 + $0x18] sm:$0xff]
  %v29 = vld [vmem:[%s2] sm:$0x1]
  %v31 = vlaneseq
  %v32 = vshrl.u32 %v31, 7
  %v33 = vsub.s32 0, %v32
  %v34 = vrot.slane %v29, %v33
  %vm36 = vcmask 261120
  %v38 = vsel %vm36, %v23, 0
  %v41 = vsel %vm36, %v24, 0
  %43 = vmatprep.subr.mxu0 0.0
  %44 = vmatpush1.msra.mxu0 0.0
  %45 = vmatprep.subr.mxu0 0.0
  %46 = vmatpush1.msra.mxu0 0.0
  %47 = vmatprep.subr.mxu0 0.0
  %48 = vmatpush1.msra.mxu0 0.0
  %49 = vmatprep.subr.mxu0 0.0
  %50 = vmatpush1.msra.mxu0 0.0
  %51 = vmatprep.subr.mxu0 0.0
  %52 = vmatpush1.msra.mxu0 0.0
  %53 = vmatprep.subr.mxu0 0.0
  %54 = vmatpush1.msra.mxu0 0.0
  %55 = vmatprep.subr.mxu0 0.0
  %56 = vmatpush1.msra.mxu0 0.0
  %57 = vmatprep.subr.mxu0 0.0
  %58 = vmatpush1.msra.mxu0 0.0
  %59 = vmatprep.subr.mxu0 0.0
  %60 = vmatpush1.msra.mxu0 0.0
  %61 = vmatprep.subr.mxu0 0.0
  %62 = vmatpush1.msra.mxu0 0.0
  %63 = vmatprep.subr.mxu0 0.0
  %64 = vmatpush1.msra.mxu0 0.0
  %65 = vmatprep.subr.mxu0 0.0
  %66 = vmatpush1.msra.mxu0 0.0
  %67 = vmatprep.subr.mxu0 0.0
  %68 = vmatpush1.msra.mxu0 %v28
  %69 = vmatprep.subr.mxu0 0.0
  %70 = vmatpush1.msra.mxu0 %v27
  %71 = vmatprep.subr.mxu0 0.0
  %72 = vmatpush1.msra.mxu0 %v26
  %73 = vmatprep.subr.mxu0 0.0
  %74 = vmatpush1.msra.mxu0 %v25
  %75 = vmatprep.subr.mxu0 0.0
  %76 = vmatpush2.msra.mxu0 0.0
  %77 = vmatprep.subr.mxu0 0.0
  %78 = vmatpush2.msra.mxu0 0.0
  %79 = vmatprep.subr.mxu0 0.0
  %80 = vmatpush2.msra.mxu0 0.0
  %81 = vmatprep.subr.mxu0 0.0
  %82 = vmatpush2.msra.mxu0 0.0
  %83 = vmatprep.subr.mxu0 0.0
  %84 = vmatpush2.msra.mxu0 0.0
  %85 = vmatprep.subr.mxu0 0.0
  %86 = vmatpush2.msra.mxu0 0.0
  %87 = vmatprep.subr.mxu0 0.0
  %88 = vmatpush2.msra.mxu0 0.0
  %89 = vmatprep.subr.mxu0 0.0
  %90 = vmatpush2.msra.mxu0 0.0
  %91 = vmatprep.subr.mxu0 0.0
  %92 = vmatpush2.msra.mxu0 0.0
  %93 = vmatprep.subr.mxu0 0.0
  %94 = vmatpush2.msra.mxu0 0.0
  %95 = vmatprep.subr.mxu0 0.0
  %96 = vmatpush2.msra.mxu0 0.0
  %97 = vmatprep.subr.mxu0 0.0
  %98 = vmatpush2.msra.mxu0 0.0
  %99 = vmatprep.subr.mxu0 0.0
  %100 = vmatpush2.msra.mxu0 0.0
  %101 = vmatprep.subr.mxu0 0.0
  %102 = vmatpush2.msra.mxu0 0.0
  %103 = vmatprep.subr.mxu0 0.0
  %104 = vmatpush2.msra.mxu0 0.0
  %105 = vmatprep.subr.mxu0 0.0
  %106 = vmatpush2.msra.mxu0 0.0
  %107 = vmatprep.mubr.f32.mxu0 0.0
  %108 = vmatmul.mubr.f32.gmra.mxu0 %v38
  %v109 = vpop.f32.mrf.mxu0
  %v110 = vadd.f32 %v34, %v109
  %v111 = vpop.f32.mrf.mxu0
  %112 = vmatprep.mubr.f32.mxu0 0.0
  %113 = vmatmul.mubr.f32.gmra.mxu0 %v41
  %v114 = vpop.f32.mrf.mxu0
  %v115 = vadd.f32 %v34, %v114
  %v116 = vpop.f32.mrf.mxu0
  %117 = vdwg.mxu0
  %v118 = vld [vmem:[%s3] sm:$0xff]
  %v119 = vld [vmem:[%s3 + $0x8] sm:$0xff]
  %v120 = vadd.f32 %v110, %v118
  %v121 = vadd.f32 %v115, %v119
  %v122 = vsel %vm36, %v120, 0.0
  %123 = vadd.xlane.f32.xlu0 %v122
  %v124 = vpop.xlane.xlu0 %123
  %v125 = vsel %vm36, %v121, 0.0
  %126 = vadd.xlane.f32.xlu0 %v125
  %v127 = vpop.xlane.xlu0 %126
  %v128 = vrcp.pop 32.0
  %v129 = vmul.f32 %v124, %v128
  %v130 = vmul.f32 %v127, %v128
  %v131 = vsub.f32 %v120, %v129
  %v132 = vsub.f32 %v121, %v130
  %v133 = vmul.f32 %v131, %v131
  %v134 = vmul.f32 %v132, %v132
  %v135 = vsel %vm36, %v133, 0.0
  %136 = vadd.xlane.f32.xlu0 %v135
  %v137 = vpop.xlane.xlu0 %136
  %v138 = vsel %vm36, %v134, 0.0
  %139 = vadd.xlane.f32.xlu0 %v138
  %v140 = vpop.xlane.xlu0 %139
  %v141 = vmul.f32 %v137, %v128
  %v142 = vmul.f32 %v140, %v128
  %v143 = vadd.f32 %v141, 1e-05
  %v144 = vadd.f32 %v142, 1e-05
  %v145 = vrsqrt.pop %v143
  %v146 = vrsqrt.pop %v144
  %v147 = vmul.f32 %v131, %v145
  %v148 = vmul.f32 %v132, %v146
  %v149 = vld [vmem:[%s4] sm:$0x1]
  %v151 = vlaneseq
  %v152 = vshrl.u32 %v151, 7
  %v153 = vsub.s32 0, %v152
  %v154 = vrot.slane %v149, %v153
  %v156 = vmul.f32 %v147, %v154
  %v157 = vmul.f32 %v148, %v154
  %v158 = vld [vmem:[%s5] sm:$0x1]
  %v160 = vlaneseq
  %v161 = vshrl.u32 %v160, 7
  %v162 = vsub.s32 0, %v161
  %v163 = vrot.slane %v158, %v162
  %v165 = vadd.f32 %v156, %v163
  %v166 = vadd.f32 %v157, %v163
  %167 = vst.msk [vmem:[%s6] sm:$0xff] %vm36, %v165
  %168 = vst.msk [vmem:[%s6 + $0x8] sm:$0xff] %vm36, %v166
  // Predicated region
  $region26: #{transformer_forward.31} parent=0 // pred_check
    _
  $region27: #{transformer_forward.31} parent=0 // pred_check_branch
    %170 = sbr.rel (0) target = $region29
  $region28: #{transformer_forward.31} parent=0 // pred_region
    _
  $region29: #{transformer_forward.31} parent=0 // pred_fallthru
    _
  // Predicated region
  $region30: #{transformer_forward.31} parent=0 // pred_check
    _
  $region31: #{transformer_forward.31} parent=0 // pred_check_branch
    %172 = sbr.rel (0) target = $region33
  $region32: #{transformer_forward.31} parent=0 // pred_region
    _
  $region33: #{transformer_forward.31} parent=0 // pred_fallthru
    _

// kernel: transformer_forward.30
$region0: #{transformer_forward.30}
  #allocation0 [shape = 'u32[]', space=smem, size = 0x4, offset = 0x4, fixed_abs, tag = 'smem constant byte address 0x4 - core index']
  #allocation1 [shape = 'u32[144,128]{1,0:T(1,128)}', space=vmem, size = 0x12000, scoped, tag = 'internal scratch']
  %s0 = inlined_call_operand.vmem [shape: f32[2,8,32], index: 0, kind: input, shape index: {}]
  %s1 = inlined_call_operand.vmem [shape: f32[2,8,32], index: 1, kind: input, shape index: {}]
  %s2 = inlined_call_operand.vmem [shape: f32[2,8,32], index: 2, kind: input, shape index: {}]
  %s3 = inlined_call_operand.vmem [shape: f32[2,1,8], index: 3, kind: input, shape index: {}]
  %s4 = inlined_call_operand.vmem [shape: f32[2,8,32], index: 4, kind: output, shape index: {}]
  %s5 = sld [smem:[#allocation0]]
  $region49: #{transformer_forward.30} parent=0
    _
  %s7 = ssub.s32 1, %s5
  %s8 = scalar_select 0, %s7, %s5
  loop: start=0, step=1, limit=4
  $region2: #{transformer_forward.30} parent=0 // loop_pre_header
    _
  $region3: #{transformer_forward.30} parent=0 // loop_header
    %s10 = sphi 0, %s14
    %p11 = scmp.ge.s32.totalorder %s10, 4
    %s20 = sphi 0, %s22
    %s23 = sphi 0, %s20
    %s24 = sphi 0, %s23
    %s40 = sphi 0, %s24
    %s46 = sphi 0, %s48
    %s49 = sphi 0, %s46
    %s50 = sphi 0, %s49
    %s66 = sphi 0, %s50
    %s72 = sphi 0, %s74
    %s75 = sphi 0, %s72
    %s76 = sphi 0, %s75
    %s92 = sphi 0, %s76
    %s98 = sphi 0, %s100
    %s101 = sphi 0, %s98
    %s102 = sphi 0, %s101
    %s118 = sphi 0, %s102
    %s124 = sphi 0, %s126
    %s127 = sphi 0, %s124
    %s128 = sphi 0, %s127
    %s144 = sphi 0, %s128
  $region4: #{transformer_forward.30} parent=0 // loop_header_branch
    %13 = sbr.rel (%p11) target = $region8
  $region5: #{transformer_forward.30} parent=0 // loop_body
    %s15 = ssub.s32 %s10, 1
    %s16 = ssub.s32 %s10, 2
    %s17 = sadd.s32 %s10, 1
    %s18 = ssub.s32 %s10, %s17
    %p19 = scmp.eq.s32.totalorder %s18, 0
    %s21 = sadd.s32 %s20, 1
    %s22 = scalar_select %p19, %s20, %s21
    %p25 = pneg %p19
    %p26 = scmp.eq.s32.totalorder %s10, 1
    %p27 = por %p25, %p26
    %p28 = scmp.ne.s32.totalorder %s20, %s23
    %p29 = scmp.eq.s32.totalorder %s10, 0
    %p30 = por %p28, %p29
    %p31 = scmp.ne.s32.totalorder %s20, %s23
    %p32 = scmp.eq.s32.totalorder %s15, 1
    %p33 = por %p31, %p32
    %p34 = scmp.ne.s32.totalorder %s23, %s24
    %p35 = scmp.eq.s32.totalorder %s15, 0
    %p36 = por %p34, %p35
    %p37 = scmp.ne.s32.totalorder %s23, %s24
    %p38 = scmp.eq.s32.totalorder %s16, 1
    %p39 = por %p37, %p38
    %p41 = scmp.ne.s32.totalorder %s24, %s40
    %p42 = scmp.eq.s32.totalorder %s16, 0
    %p43 = por %p41, %p42
    %s44 = ssub.s32 %s10, %s17
    %p45 = scmp.eq.s32.totalorder %s44, 0
    %s47 = sadd.s32 %s46, 1
    %s48 = scalar_select %p45, %s46, %s47
    %p51 = pneg %p45
    %p52 = scmp.eq.s32.totalorder %s10, 1
    %p53 = por %p51, %p52
    %p54 = scmp.ne.s32.totalorder %s46, %s49
    %p55 = scmp.eq.s32.totalorder %s10, 0
    %p56 = por %p54, %p55
    %p57 = scmp.ne.s32.totalorder %s46, %s49
    %p58 = scmp.eq.s32.totalorder %s15, 1
    %p59 = por %p57, %p58
    %p60 = scmp.ne.s32.totalorder %s49, %s50
    %p61 = scmp.eq.s32.totalorder %s15, 0
    %p62 = por %p60, %p61
    %p63 = scmp.ne.s32.totalorder %s49, %s50
    %p64 = scmp.eq.s32.totalorder %s16, 1
    %p65 = por %p63, %p64
    %p67 = scmp.ne.s32.totalorder %s50, %s66
    %p68 = scmp.eq.s32.totalorder %s16, 0
    %p69 = por %p67, %p68
    %s70 = ssub.s32 %s10, %s17
    %p71 = scmp.eq.s32.totalorder %s70, 0
    %s73 = sadd.s32 %s72, 1
    %s74 = scalar_select %p71, %s72, %s73
    %p77 = pneg %p71
    %p78 = scmp.eq.s32.totalorder %s10, 1
    %p79 = por %p77, %p78
    %p80 = scmp.ne.s32.totalorder %s72, %s75
    %p81 = scmp.eq.s32.totalorder %s10, 0
    %p82 = por %p80, %p81
    %p83 = scmp.ne.s32.totalorder %s72, %s75
    %p84 = scmp.eq.s32.totalorder %s15, 1
    %p85 = por %p83, %p84
    %p86 = scmp.ne.s32.totalorder %s75, %s76
    %p87 = scmp.eq.s32.totalorder %s15, 0
    %p88 = por %p86, %p87
    %p89 = scmp.ne.s32.totalorder %s75, %s76
    %p90 = scmp.eq.s32.totalorder %s16, 1
    %p91 = por %p89, %p90
    %p93 = scmp.ne.s32.totalorder %s76, %s92
    %p94 = scmp.eq.s32.totalorder %s16, 0
    %p95 = por %p93, %p94
    %s96 = ssub.s32 %s10, %s17
    %p97 = scmp.eq.s32.totalorder %s96, 0
    %s99 = sadd.s32 %s98, 1
    %s100 = scalar_select %p97, %s98, %s99
    %p103 = pneg %p97
    %p104 = scmp.eq.s32.totalorder %s10, 1
    %p105 = por %p103, %p104
    %p106 = scmp.ne.s32.totalorder %s98, %s101
    %p107 = scmp.eq.s32.totalorder %s10, 0
    %p108 = por %p106, %p107
    %p109 = scmp.ne.s32.totalorder %s98, %s101
    %p110 = scmp.eq.s32.totalorder %s15, 1
    %p111 = por %p109, %p110
    %p112 = scmp.ne.s32.totalorder %s101, %s102
    %p113 = scmp.eq.s32.totalorder %s15, 0
    %p114 = por %p112, %p113
    %p115 = scmp.ne.s32.totalorder %s101, %s102
    %p116 = scmp.eq.s32.totalorder %s16, 1
    %p117 = por %p115, %p116
    %p119 = scmp.ne.s32.totalorder %s102, %s118
    %p120 = scmp.eq.s32.totalorder %s16, 0
    %p121 = por %p119, %p120
    %s122 = ssub.s32 %s10, %s17
    %p123 = scmp.eq.s32.totalorder %s122, 0
    %s125 = sadd.s32 %s124, 1
    %s126 = scalar_select %p123, %s124, %s125
    %p129 = pneg %p123
    %p130 = scmp.eq.s32.totalorder %s10, 1
    %p131 = por %p129, %p130
    %p132 = scmp.ne.s32.totalorder %s124, %s127
    %p133 = scmp.eq.s32.totalorder %s10, 0
    %p134 = por %p132, %p133
    %p135 = scmp.ne.s32.totalorder %s124, %s127
    %p136 = scmp.eq.s32.totalorder %s15, 1
    %p137 = por %p135, %p136
    %p138 = scmp.ne.s32.totalorder %s127, %s128
    %p139 = scmp.eq.s32.totalorder %s15, 0
    %p140 = por %p138, %p139
    %p141 = scmp.ne.s32.totalorder %s127, %s128
    %p142 = scmp.eq.s32.totalorder %s16, 1
    %p143 = por %p141, %p142
    %p145 = scmp.ne.s32.totalorder %s128, %s144
    %p146 = scmp.eq.s32.totalorder %s16, 0
    %p147 = por %p145, %p146
    %p148 = scmp.le.s32.totalorder 1, %s10
    %p149 = scmp.lt.s32.totalorder %s10, 3
    %p150 = pnand %p148, %p149
    %p151 = pneg %p150
    // Predicated region
    $region9: #{transformer_forward.30} parent=5 // pred_check
      _
    $region10: #{transformer_forward.30} parent=5 // pred_check_branch
      %153 = sbr.rel (%p150) target = $region12
    $region11: #{transformer_forward.30} parent=5 // pred_region
      %s154 = ssub.s32 %s10, 1
    $region12: #{transformer_forward.30} parent=5 // pred_fallthru
      _
    %p155 = scmp.lt.s32.totalorder %s10, 2
    // Predicated region
    $region13: #{transformer_forward.30} parent=5 // pred_check
      %p156 = pneg %p155
    $region14: #{transformer_forward.30} parent=5 // pred_check_branch
      %158 = sbr.rel (%p156) target = $region16
    $region15: #{transformer_forward.30} parent=5 // pred_region
      // Predicated region
      $region17: #{transformer_forward.30} parent=15 // pred_check
        %p159 = pneg %p30
      $region18: #{transformer_forward.30} parent=15 // pred_check_branch
        %161 = sbr.rel (%p159) target = $region20
      $region19: #{transformer_forward.30} parent=15 // pred_region
        %p162 = scmp.lt.s32.totalorder %s10, 1
        %s163 = scalar_select %p162, %s10, 1
        %s164 = smul.addr %s163, 8
        %s165 = scalar_lea.vmem %s0, %s164
      $region20: #{transformer_forward.30} parent=15 // pred_fallthru
        _
      // Predicated region
      $region21: #{transformer_forward.30} parent=15 // pred_check
        %p166 = pneg %p56
      $region22: #{transformer_forward.30} parent=15 // pred_check_branch
        %168 = sbr.rel (%p166) target = $region24
      $region23: #{transformer_forward.30} parent=15 // pred_region
        %p169 = scmp.lt.s32.totalorder %s10, 1
        %s170 = scalar_select %p169, %s10, 1
        %s171 = smul.addr %s170, 8
        %s172 = scalar_lea.vmem %s1, %s171
      $region24: #{transformer_forward.30} parent=15 // pred_fallthru
        _
      // Predicated region
      $region25: #{transformer_forward.30} parent=15 // pred_check
        %p173 = pneg %p82
      $region26: #{transformer_forward.30} parent=15 // pred_check_branch
        %175 = sbr.rel (%p173) target = $region28
      $region27: #{transformer_forward.30} parent=15 // pred_region
        %p176 = scmp.lt.s32.totalorder %s10, 1
        %s177 = scalar_select %p176, %s10, 1
        %s178 = smul.addr %s177, 8
        %s179 = scalar_lea.vmem %s2, %s178
      $region28: #{transformer_forward.30} parent=15 // pred_fallthru
        _
      // Predicated region
      $region29: #{transformer_forward.30} parent=15 // pred_check
        %p180 = pneg %p108
      $region30: #{transformer_forward.30} parent=15 // pred_check_branch
        %182 = sbr.rel (%p180) target = $region32
      $region31: #{transformer_forward.30} parent=15 // pred_region
        %p183 = scmp.lt.s32.totalorder %s10, 1
        %s184 = scalar_select %p183, %s10, 1
        %s185 = scalar_lea.vmem %s3, %s184
      $region32: #{transformer_forward.30} parent=15 // pred_fallthru
        _
    $region16: #{transformer_forward.30} parent=5 // pred_fallthru
      _
    %p186 = scmp.le.s32.totalorder 1, %s10
    %p187 = scmp.lt.s32.totalorder %s10, 3
    %p188 = pnand %p186, %p187
    %p189 = pneg %p188
    // Predicated region
    $region33: #{transformer_forward.30} parent=5 // pred_check
      _
    $region34: #{transformer_forward.30} parent=5 // pred_check_branch
      %191 = sbr.rel (%p188) target = $region36
    $region35: #{transformer_forward.30} parent=5 // pred_region
      %s192 = ssub.s32 %s10, 1
      %p193 = scmp.lt.s32.totalorder %s15, 1
      %s194 = scalar_select %p193, %s15, 1
      %s195 = smul.addr %s194, 8
      %s196 = scalar_lea.vmem %s0, %s195
      %p197 = pneg %p36
      %p198 = pneg %p33
      %p199 = scmp.lt.s32.totalorder %s15, 1
      %s200 = scalar_select %p199, %s15, 1
      %s201 = smul.addr %s200, 8
      %s202 = scalar_lea.vmem %s1, %s201
      %p203 = pneg %p62
      %p204 = pneg %p59
      %p205 = scmp.lt.s32.totalorder %s15, 1
      %s206 = scalar_select %p205, %s15, 1
      %s207 = smul.addr %s206, 8
      %s208 = scalar_lea.vmem %s2, %s207
      %p209 = pneg %p88
      %p210 = pneg %p85
      %p211 = scmp.lt.s32.totalorder %s15, 1
      %s212 = scalar_select %p211, %s15, 1
      %s213 = scalar_lea.vmem %s3, %s212
      %p214 = pneg %p114
      %p215 = pneg %p111
      %p216 = pneg %p140
      %p217 = pneg %p137
      %p218 = scmp.lt.s32.totalorder %s15, 1
      %s219 = scalar_select %p218, %s15, 1
      %s220 = smul.addr %s219, 8
      %s221 = scalar_lea.vmem %s4, %s220
      %p222 = scmp.lt.s32.totalorder %s15, 1
      %s223 = scalar_select %p222, %s15, 1
      %s224 = smul.addr %s223, 8
      %s225 = scalar_lea.vmem %s0, %s224
      %p226 = scmp.lt.s32.totalorder %s15, 1
      %s227 = scalar_select %p226, %s15, 1
      %s228 = smul.addr %s227, 8
      %s229 = scalar_lea.vmem %s1, %s228
      %p230 = scmp.lt.s32.totalorder %s15, 1
      %s231 = scalar_select %p230, %s15, 1
      %s232 = smul.addr %s231, 8
      %s233 = scalar_lea.vmem %s2, %s232
      %p234 = scmp.lt.s32.totalorder %s15, 1
      %s235 = scalar_select %p234, %s15, 1
      %s236 = scalar_lea.vmem %s3, %s235
      %p237 = scmp.lt.s32.totalorder %s15, 1
      %s238 = scalar_select %p237, %s15, 1
      %s239 = smul.addr %s238, 8
      %s240 = scalar_lea.vmem %s4, %s239
      %v241 = vld [vmem:[%s225] sm:$0xff]
      %v242 = vld [vmem:[%s229] sm:$0xff]
      %v243 = vld [vmem:[%s233] sm:$0xff]
      %v244 = vld [vmem:[%s236] sm:$0x1]
      %v246 = vlaneseq
      %v247 = vshrl.u32 %v246, 7
      %v248 = vsub.s32 0, %v247
      %v249 = vrot.slane %v244, %v248
      %vm251 = vcmask 64512
      %v253 = vsel %vm251, %v241, 0
      %v256 = vsel %vm251, %v242, 0
      %258 = vmatprep.subr.mxu0 0.0
      %259 = vmatpush1.xpose.msra.mxu0 0.0
      %260 = vmatprep.subr.mxu0 0.0
      %261 = vmatpush1.xpose.msra.mxu0 0.0
      %262 = vmatprep.subr.mxu0 0.0
      %263 = vmatpush1.xpose.msra.mxu0 0.0
      %264 = vmatprep.subr.mxu0 0.0
      %265 = vmatpush1.xpose.msra.mxu0 0.0
      %266 = vmatprep.subr.mxu0 0.0
      %267 = vmatpush1.xpose.msra.mxu0 0.0
      %268 = vmatprep.subr.mxu0 0.0
      %269 = vmatpush1.xpose.msra.mxu0 0.0
      %270 = vmatprep.subr.mxu0 0.0
      %271 = vmatpush1.xpose.msra.mxu0 0.0
      %272 = vmatprep.subr.mxu0 0.0
      %273 = vmatpush1.xpose.msra.mxu0 0.0
      %274 = vmatprep.subr.mxu0 0.0
      %275 = vmatpush1.xpose.msra.mxu0 0.0
      %276 = vmatprep.subr.mxu0 0.0
      %277 = vmatpush1.xpose.msra.mxu0 0.0
      %278 = vmatprep.subr.mxu0 0.0
      %279 = vmatpush1.xpose.msra.mxu0 0.0
      %280 = vmatprep.subr.mxu0 0.0
      %281 = vmatpush1.xpose.msra.mxu0 0.0
      %282 = vmatprep.subr.mxu0 0.0
      %283 = vmatpush1.xpose.msra.mxu0 0.0
      %284 = vmatprep.subr.mxu0 0.0
      %285 = vmatpush1.xpose.msra.mxu0 0.0
      %286 = vmatprep.subr.mxu0 0.0
      %287 = vmatpush1.xpose.msra.mxu0 0.0
      %288 = vmatprep.subr.mxu0 0.0
      %289 = vmatpush1.xpose.msra.mxu0 %v256
      %290 = vmatprep.subr.mxu0 0.0
      %291 = vmatpush2.xpose.msra.mxu0 0.0
      %292 = vmatprep.subr.mxu0 0.0
      %293 = vmatpush2.xpose.msra.mxu0 0.0
      %294 = vmatprep.subr.mxu0 0.0
      %295 = vmatpush2.xpose.msra.mxu0 0.0
      %296 = vmatprep.subr.mxu0 0.0
      %297 = vmatpush2.xpose.msra.mxu0 0.0
      %298 = vmatprep.subr.mxu0 0.0
      %299 = vmatpush2.xpose.msra.mxu0 0.0
      %300 = vmatprep.subr.mxu0 0.0
      %301 = vmatpush2.xpose.msra.mxu0 0.0
      %302 = vmatprep.subr.mxu0 0.0
      %303 = vmatpush2.xpose.msra.mxu0 0.0
      %304 = vmatprep.subr.mxu0 0.0
      %305 = vmatpush2.xpose.msra.mxu0 0.0
      %306 = vmatprep.subr.mxu0 0.0
      %307 = vmatpush2.xpose.msra.mxu0 0.0
      %308 = vmatprep.subr.mxu0 0.0
      %309 = vmatpush2.xpose.msra.mxu0 0.0
      %310 = vmatprep.subr.mxu0 0.0
      %311 = vmatpush2.xpose.msra.mxu0 0.0
      %312 = vmatprep.subr.mxu0 0.0
      %313 = vmatpush2.xpose.msra.mxu0 0.0
      %314 = vmatprep.subr.mxu0 0.0
      %315 = vmatpush2.xpose.msra.mxu0 0.0
      %316 = vmatprep.subr.mxu0 0.0
      %317 = vmatpush2.xpose.msra.mxu0 0.0
      %318 = vmatprep.subr.mxu0 0.0
      %319 = vmatpush2.xpose.msra.mxu0 0.0
      %320 = vmatprep.subr.mxu0 0.0
      %321 = vmatpush2.xpose.msra.mxu0 0.0
      %322 = vmatprep.mubr.f32.mxu0 0.0
      %323 = vmatmul.mubr.f32.gmra.mxu0 %v253
      %v324 = vpop.f32.mrf.mxu0
      %v325 = vadd.f32 0.0, %v324
      %v326 = vpop.f32.mrf.mxu0
      %327 = vdwg.mxu0
      %v328 = vmul.f32 %v325, 0.35355338
      %v329 = vadd.f32 %v328, %v249
      %v330 = vsel %vm251, %v329, -inf
      %331 = vmax.xlane.f32.xlu0 %v330
      %v332 = vpop.xlane.xlu0 %331
      %v333 = vsub.f32 %v329, %v332
      %v334 = vmul.f32 %v333, 1.442695
      %v335 = vpow.pop %v334
      %v336 = vsel %vm251, %v335, 0.0
      %337 = vadd.xlane.f32.xlu0 %v336
      %v338 = vpop.xlane.xlu0 %337
      %v339 = vrcp.pop %v338
      %v340 = vmul.f32 %v335, %v339
      %v342 = vsel %vm251, %v340, 0
      %344 = vmatprep.subr.mxu0 0.0
      %345 = vmatpush1.msra.mxu0 0.0
      %346 = vmatprep.subr.mxu0 0.0
      %347 = vmatpush1.msra.mxu0 0.0
      %348 = vmatprep.subr.mxu0 0.0
      %349 = vmatpush1.msra.mxu0 0.0
      %350 = vmatprep.subr.mxu0 0.0
      %351 = vmatpush1.msra.mxu0 0.0
      %352 = vmatprep.subr.mxu0 0.0
      %353 = vmatpush1.msra.mxu0 0.0
      %354 = vmatprep.subr.mxu0 0.0
      %355 = vmatpush1.msra.mxu0 0.0
      %356 = vmatprep.subr.mxu0 0.0
      %357 = vmatpush1.msra.mxu0 0.0
      %358 = vmatprep.subr.mxu0 0.0
      %359 = vmatpush1.msra.mxu0 0.0
      %360 = vmatprep.subr.mxu0 0.0
      %361 = vmatpush1.msra.mxu0 0.0
      %362 = vmatprep.subr.mxu0 0.0
      %363 = vmatpush1.msra.mxu0 0.0
      %364 = vmatprep.subr.mxu0 0.0
      %365 = vmatpush1.msra.mxu0 0.0
      %366 = vmatprep.subr.mxu0 0.0
      %367 = vmatpush1.msra.mxu0 0.0
      %368 = vmatprep.subr.mxu0 0.0
      %369 = vmatpush1.msra.mxu0 0.0
      %370 = vmatprep.subr.mxu0 0.0
      %371 = vmatpush1.msra.mxu0 0.0
      %372 = vmatprep.subr.mxu0 0.0
      %373 = vmatpush1.msra.mxu0 0.0
      %374 = vmatprep.subr.mxu0 0.0
      %375 = vmatpush1.msra.mxu0 %v243
      %376 = vmatprep.subr.mxu0 0.0
      %377 = vmatpush2.msra.mxu0 0.0
      %378 = vmatprep.subr.mxu0 0.0
      %379 = vmatpush2.msra.mxu0 0.0
      %380 = vmatprep.subr.mxu0 0.0
      %381 = vmatpush2.msra.mxu0 0.0
      %382 = vmatprep.subr.mxu0 0.0
      %383 = vmatpush2.msra.mxu0 0.0
      %384 = vmatprep.subr.mxu0 0.0
      %385 = vmatpush2.msra.mxu0 0.0
      %386 = vmatprep.subr.mxu0 0.0
      %387 = vmatpush2.msra.mxu0 0.0
      %388 = vmatprep.subr.mxu0 0.0
      %389 = vmatpush2.msra.mxu0 0.0
      %390 = vmatprep.subr.mxu0 0.0
      %391 = vmatpush2.msra.mxu0 0.0
      %392 = vmatprep.subr.mxu0 0.0
      %393 = vmatpush2.msra.mxu0 0.0
      %394 = vmatprep.subr.mxu0 0.0
      %395 = vmatpush2.msra.mxu0 0.0
      %396 = vmatprep.subr.mxu0 0.0
      %397 = vmatpush2.msra.mxu0 0.0
      %398 = vmatprep.subr.mxu0 0.0
      %399 = vmatpush2.msra.mxu0 0.0
      %400 = vmatprep.subr.mxu0 0.0
      %401 = vmatpush2.msra.mxu0 0.0
      %402 = vmatprep.subr.mxu0 0.0
      %403 = vmatpush2.msra.mxu0 0.0
      %404 = vmatprep.subr.mxu0 0.0
      %405 = vmatpush2.msra.mxu0 0.0
      %406 = vmatprep.subr.mxu0 0.0
      %407 = vmatpush2.msra.mxu0 0.0
      %408 = vmatprep.mubr.f32.mxu0 0.0
      %409 = vmatmul.mubr.f32.gmra.mxu0 %v342
      %v410 = vpop.f32.mrf.mxu0
      %v411 = vadd.f32 0.0, %v410
      %v412 = vpop.f32.mrf.mxu0
      %413 = vdwg.mxu0
      %414 = vrot.lane.b32.xlu0 %v241, 120
      %v415 = vpop.permute.xlu0 %414
      %416 = vrot.lane.b32.xlu0 %v242, 120
      %v417 = vpop.permute.xlu0 %416
      %v418 = vsel %vm251, %v415, 0
      %v420 = vsel %vm251, %v417, 0
      %422 = vmatprep.subr.mxu0 0.0
      %423 = vmatpush1.xpose.msra.mxu0 0.0
      %424 = vmatprep.subr.mxu0 0.0
      %425 = vmatpush1.xpose.msra.mxu0 0.0
      %426 = vmatprep.subr.mxu0 0.0
      %427 = vmatpush1.xpose.msra.mxu0 0.0
      %428 = vmatprep.subr.mxu0 0.0
      %429 = vmatpush1.xpose.msra.mxu0 0.0
      %430 = vmatprep.subr.mxu0 0.0
      %431 = vmatpush1.xpose.msra.mxu0 0.0
      %432 = vmatprep.subr.mxu0 0.0
      %433 = vmatpush1.xpose.msra.mxu0 0.0
      %434 = vmatprep.subr.mxu0 0.0
      %435 = vmatpush1.xpose.msra.mxu0 0.0
      %436 = vmatprep.subr.mxu0 0.0
      %437 = vmatpush1.xpose.msra.mxu0 0.0
      %438 = vmatprep.subr.mxu0 0.0
      %439 = vmatpush1.xpose.msra.mxu0 0.0
      %440 = vmatprep.subr.mxu0 0.0
      %441 = vmatpush1.xpose.msra.mxu0 0.0
      %442 = vmatprep.subr.mxu0 0.0
      %443 = vmatpush1.xpose.msra.mxu0 0.0
      %444 = vmatprep.subr.mxu0 0.0
      %445 = vmatpush1.xpose.msra.mxu0 0.0
      %446 = vmatprep.subr.mxu0 0.0
      %447 = vmatpush1.xpose.msra.mxu0 0.0
      %448 = vmatprep.subr.mxu0 0.0
      %449 = vmatpush1.xpose.msra.mxu0 0.0
      %450 = vmatprep.subr.mxu0 0.0
      %451 = vmatpush1.xpose.msra.mxu0 0.0
      %452 = vmatprep.subr.mxu0 0.0
      %453 = vmatpush1.xpose.msra.mxu0 %v420
      %454 = vmatprep.subr.mxu0 0.0
      %455 = vmatpush2.xpose.msra.mxu0 0.0
      %456 = vmatprep.subr.mxu0 0.0
      %457 = vmatpush2.xpose.msra.mxu0 0.0
      %458 = vmatprep.subr.mxu0 0.0
      %459 = vmatpush2.xpose.msra.mxu0 0.0
      %460 = vmatprep.subr.mxu0 0.0
      %461 = vmatpush2.xpose.msra.mxu0 0.0
      %462 = vmatprep.subr.mxu0 0.0
      %463 = vmatpush2.xpose.msra.mxu0 0.0
      %464 = vmatprep.subr.mxu0 0.0
      %465 = vmatpush2.xpose.msra.mxu0 0.0
      %466 = vmatprep.subr.mxu0 0.0
      %467 = vmatpush2.xpose.msra.mxu0 0.0
      %468 = vmatprep.subr.mxu0 0.0
      %469 = vmatpush2.xpose.msra.mxu0 0.0
      %470 = vmatprep.subr.mxu0 0.0
      %471 = vmatpush2.xpose.msra.mxu0 0.0
      %472 = vmatprep.subr.mxu0 0.0
      %473 = vmatpush2.xpose.msra.mxu0 0.0
      %474 = vmatprep.subr.mxu0 0.0
      %475 = vmatpush2.xpose.msra.mxu0 0.0
      %476 = vmatprep.subr.mxu0 0.0
      %477 = vmatpush2.xpose.msra.mxu0 0.0
      %478 = vmatprep.subr.mxu0 0.0
      %479 = vmatpush2.xpose.msra.mxu0 0.0
      %480 = vmatprep.subr.mxu0 0.0
      %481 = vmatpush2.xpose.msra.mxu0 0.0
      %482 = vmatprep.subr.mxu0 0.0
      %483 = vmatpush2.xpose.msra.mxu0 0.0
      %484 = vmatprep.subr.mxu0 0.0
      %485 = vmatpush2.xpose.msra.mxu0 0.0
      %486 = vmatprep.mubr.f32.mxu0 0.0
      %487 = vmatmul.mubr.f32.gmra.mxu0 %v418
      %v488 = vpop.f32.mrf.mxu0
      %v489 = vadd.f32 0.0, %v488
      %v490 = vpop.f32.mrf.mxu0
      %491 = vdwg.mxu0
      %v492 = vmul.f32 %v489, 0.35355338
      %v493 = vadd.f32 %v492, %v249
      %v494 = vsel %vm251, %v493, -inf
      %495 = vmax.xlane.f32.xlu0 %v494
      %v496 = vpop.xlane.xlu0 %495
      %v497 = vsub.f32 %v493, %v496
      %v498 = vmul.f32 %v497, 1.442695
      %v499 = vpow.pop %v498
      %v500 = vsel %vm251, %v499, 0.0
      %501 = vadd.xlane.f32.xlu0 %v500
      %v502 = vpop.xlane.xlu0 %501
      %v503 = vrcp.pop %v502
      %v504 = vmul.f32 %v499, %v503
      %506 = vrot.lane.b32.xlu0 %v243, 120
      %v507 = vpop.permute.xlu0 %506
      %v510 = vsel %vm251, %v504, 0
      %512 = vmatprep.subr.mxu0 0.0
      %513 = vmatpush1.msra.mxu0 0.0
      %514 = vmatprep.subr.mxu0 0.0
      %515 = vmatpush1.msra.mxu0 0.0
      %516 = vmatprep.subr.mxu0 0.0
      %517 = vmatpush1.msra.mxu0 0.0
      %518 = vmatprep.subr.mxu0 0.0
      %519 = vmatpush1.msra.mxu0 0.0
      %520 = vmatprep.subr.mxu0 0.0
      %521 = vmatpush1.msra.mxu0 0.0
      %522 = vmatprep.subr.mxu0 0.0
      %523 = vmatpush1.msra.mxu0 0.0
      %524 = vmatprep.subr.mxu0 0.0
      %525 = vmatpush1.msra.mxu0 0.0
      %526 = vmatprep.subr.mxu0 0.0
      %527 = vmatpush1.msra.mxu0 0.0
      %528 = vmatprep.subr.mxu0 0.0
      %529 = vmatpush1.msra.mxu0 0.0
      %530 = vmatprep.subr.mxu0 0.0
      %531 = vmatpush1.msra.mxu0 0.0
      %532 = vmatprep.subr.mxu0 0.0
      %533 = vmatpush1.msra.mxu0 0.0
      %534 = vmatprep.subr.mxu0 0.0
      %535 = vmatpush1.msra.mxu0 0.0
      %536 = vmatprep.subr.mxu0 0.0
      %537 = vmatpush1.msra.mxu0 0.0
      %538 = vmatprep.subr.mxu0 0.0
      %539 = vmatpush1.msra.mxu0 0.0
      %540 = vmatprep.subr.mxu0 0.0
      %541 = vmatpush1.msra.mxu0 0.0
      %542 = vmatprep.subr.mxu0 0.0
      %543 = vmatpush1.msra.mxu0 %v507
      %544 = vmatprep.subr.mxu0 0.0
      %545 = vmatpush2.msra.mxu0 0.0
      %546 = vmatprep.subr.mxu0 0.0
      %547 = vmatpush2.msra.mxu0 0.0
      %548 = vmatprep.subr.mxu0 0.0
      %549 = vmatpush2.msra.mxu0 0.0
      %550 = vmatprep.subr.mxu0 0.0
      %551 = vmatpush2.msra.mxu0 0.0
      %552 = vmatprep.subr.mxu0 0.0
      %553 = vmatpush2.msra.mxu0 0.0
      %554 = vmatprep.subr.mxu0 0.0
      %555 = vmatpush2.msra.mxu0 0.0
      %556 = vmatprep.subr.mxu0 0.0
      %557 = vmatpush2.msra.mxu0 0.0
      %558 = vmatprep.subr.mxu0 0.0
      %559 = vmatpush2.msra.mxu0 0.0
      %560 = vmatprep.subr.mxu0 0.0
      %561 = vmatpush2.msra.mxu0 0.0
      %562 = vmatprep.subr.mxu0 0.0
      %563 = vmatpush2.msra.mxu0 0.0
      %564 = vmatprep.subr.mxu0 0.0
      %565 = vmatpush2.msra.mxu0 0.0
      %566 = vmatprep.subr.mxu0 0.0
      %567 = vmatpush2.msra.mxu0 0.0
      %568 = vmatprep.subr.mxu0 0.0
      %569 = vmatpush2.msra.mxu0 0.0
      %570 = vmatprep.subr.mxu0 0.0
      %571 = vmatpush2.msra.mxu0 0.0
      %572 = vmatprep.subr.mxu0 0.0
      %573 = vmatpush2.msra.mxu0 0.0
      %574 = vmatprep.subr.mxu0 0.0
      %575 = vmatpush2.msra.mxu0 0.0
      %576 = vmatprep.mubr.f32.mxu0 0.0
      %577 = vmatmul.mubr.f32.gmra.mxu0 %v510
      %v578 = vpop.f32.mrf.mxu0
      %v579 = vadd.f32 0.0, %v578
      %v580 = vpop.f32.mrf.mxu0
      %581 = vdwg.mxu0
      %582 = vrot.lane.b32.xlu0 %v241, 112
      %v583 = vpop.permute.xlu0 %582
      %584 = vrot.lane.b32.xlu0 %v242, 112
      %v585 = vpop.permute.xlu0 %584
      %v586 = vsel %vm251, %v583, 0
      %v588 = vsel %vm251, %v585, 0
      %590 = vmatprep.subr.mxu0 0.0
      %591 = vmatpush1.xpose.msra.mxu0 0.0
      %592 = vmatprep.subr.mxu0 0.0
      %593 = vmatpush1.xpose.msra.mxu0 0.0
      %594 = vmatprep.subr.mxu0 0.0
      %595 = vmatpush1.xpose.msra.mxu0 0.0
      %596 = vmatprep.subr.mxu0 0.0
      %597 = vmatpush1.xpose.msra.mxu0 0.0
      %598 = vmatprep.subr.mxu0 0.0
      %599 = vmatpush1.xpose.msra.mxu0 0.0
      %600 = vmatprep.subr.mxu0 0.0
      %601 = vmatpush1.xpose.msra.mxu0 0.0
      %602 = vmatprep.subr.mxu0 0.0
      %603 = vmatpush1.xpose.msra.mxu0 0.0
      %604 = vmatprep.subr.mxu0 0.0
      %605 = vmatpush1.xpose.msra.mxu0 0.0
      %606 = vmatprep.subr.mxu0 0.0
      %607 = vmatpush1.xpose.msra.mxu0 0.0
      %608 = vmatprep.subr.mxu0 0.0
      %609 = vmatpush1.xpose.msra.mxu0 0.0
      %610 = vmatprep.subr.mxu0 0.0
      %611 = vmatpush1.xpose.msra.mxu0 0.0
      %612 = vmatprep.subr.mxu0 0.0
      %613 = vmatpush1.xpose.msra.mxu0 0.0
      %614 = vmatprep.subr.mxu0 0.0
      %615 = vmatpush1.xpose.msra.mxu0 0.0
      %616 = vmatprep.subr.mxu0 0.0
      %617 = vmatpush1.xpose.msra.mxu0 0.0
      %618 = vmatprep.subr.mxu0 0.0
      %619 = vmatpush1.xpose.msra.mxu0 0.0
      %620 = vmatprep.subr.mxu0 0.0
      %621 = vmatpush1.xpose.msra.mxu0 %v588
      %622 = vmatprep.subr.mxu0 0.0
      %623 = vmatpush2.xpose.msra.mxu0 0.0
      %624 = vmatprep.subr.mxu0 0.0
      %625 = vmatpush2.xpose.msra.mxu0 0.0
      %626 = vmatprep.subr.mxu0 0.0
      %627 = vmatpush2.xpose.msra.mxu0 0.0
      %628 = vmatprep.subr.mxu0 0.0
      %629 = vmatpush2.xpose.msra.mxu0 0.0
      %630 = vmatprep.subr.mxu0 0.0
      %631 = vmatpush2.xpose.msra.mxu0 0.0
      %632 = vmatprep.subr.mxu0 0.0
      %633 = vmatpush2.xpose.msra.mxu0 0.0
      %634 = vmatprep.subr.mxu0 0.0
      %635 = vmatpush2.xpose.msra.mxu0 0.0
      %636 = vmatprep.subr.mxu0 0.0
      %637 = vmatpush2.xpose.msra.mxu0 0.0
      %638 = vmatprep.subr.mxu0 0.0
      %639 = vmatpush2.xpose.msra.mxu0 0.0
      %640 = vmatprep.subr.mxu0 0.0
      %641 = vmatpush2.xpose.msra.mxu0 0.0
      %642 = vmatprep.subr.mxu0 0.0
      %643 = vmatpush2.xpose.msra.mxu0 0.0
      %644 = vmatprep.subr.mxu0 0.0
      %645 = vmatpush2.xpose.msra.mxu0 0.0
      %646 = vmatprep.subr.mxu0 0.0
      %647 = vmatpush2.xpose.msra.mxu0 0.0
      %648 = vmatprep.subr.mxu0 0.0
      %649 = vmatpush2.xpose.msra.mxu0 0.0
      %650 = vmatprep.subr.mxu0 0.0
      %651 = vmatpush2.xpose.msra.mxu0 0.0
      %652 = vmatprep.subr.mxu0 0.0
      %653 = vmatpush2.xpose.msra.mxu0 0.0
      %654 = vmatprep.mubr.f32.mxu0 0.0
      %655 = vmatmul.mubr.f32.gmra.mxu0 %v586
      %v656 = vpop.f32.mrf.mxu0
      %v657 = vadd.f32 0.0, %v656
      %v658 = vpop.f32.mrf.mxu0
      %659 = vdwg.mxu0
      %v660 = vmul.f32 %v657, 0.35355338
      %v661 = vadd.f32 %v660, %v249
      %v662 = vsel %vm251, %v661, -inf
      %663 = vmax.xlane.f32.xlu0 %v662
      %v664 = vpop.xlane.xlu0 %663
      %v665 = vsub.f32 %v661, %v664
      %v666 = vmul.f32 %v665, 1.442695
      %v667 = vpow.pop %v666
      %v668 = vsel %vm251, %v667, 0.0
      %669 = vadd.xlane.f32.xlu0 %v668
      %v670 = vpop.xlane.xlu0 %669
      %v671 = vrcp.pop %v670
      %v672 = vmul.f32 %v667, %v671
      %673 = vrot.lane.b32.xlu0 %v243, 112
      %v674 = vpop.permute.xlu0 %673
      %v677 = vsel %vm251, %v672, 0
      %679 = vmatprep.subr.mxu0 0.0
      %680 = vmatpush1.msra.mxu0 0.0
      %681 = vmatprep.subr.mxu0 0.0
      %682 = vmatpush1.msra.mxu0 0.0
      %683 = vmatprep.subr.mxu0 0.0
      %684 = vmatpush1.msra.mxu0 0.0
      %685 = vmatprep.subr.mxu0 0.0
      %686 = vmatpush1.msra.mxu0 0.0
      %687 = vmatprep.subr.mxu0 0.0
      %688 = vmatpush1.msra.mxu0 0.0
      %689 = vmatprep.subr.mxu0 0.0
      %690 = vmatpush1.msra.mxu0 0.0
      %691 = vmatprep.subr.mxu0 0.0
      %692 = vmatpush1.msra.mxu0 0.0
      %693 = vmatprep.subr.mxu0 0.0
      %694 = vmatpush1.msra.mxu0 0.0
      %695 = vmatprep.subr.mxu0 0.0
      %696 = vmatpush1.msra.mxu0 0.0
      %697 = vmatprep.subr.mxu0 0.0
      %698 = vmatpush1.msra.mxu0 0.0
      %699 = vmatprep.subr.mxu0 0.0
      %700 = vmatpush1.msra.mxu0 0.0
      %701 = vmatprep.subr.mxu0 0.0
      %702 = vmatpush1.msra.mxu0 0.0
      %703 = vmatprep.subr.mxu0 0.0
      %704 = vmatpush1.msra.mxu0 0.0
      %705 = vmatprep.subr.mxu0 0.0
      %706 = vmatpush1.msra.mxu0 0.0
      %707 = vmatprep.subr.mxu0 0.0
      %708 = vmatpush1.msra.mxu0 0.0
      %709 = vmatprep.subr.mxu0 0.0
      %710 = vmatpush1.msra.mxu0 %v674
      %711 = vmatprep.subr.mxu0 0.0
      %712 = vmatpush2.msra.mxu0 0.0
      %713 = vmatprep.subr.mxu0 0.0
      %714 = vmatpush2.msra.mxu0 0.0
      %715 = vmatprep.subr.mxu0 0.0
      %716 = vmatpush2.msra.mxu0 0.0
      %717 = vmatprep.subr.mxu0 0.0
      %718 = vmatpush2.msra.mxu0 0.0
      %719 = vmatprep.subr.mxu0 0.0
      %720 = vmatpush2.msra.mxu0 0.0
      %721 = vmatprep.subr.mxu0 0.0
      %722 = vmatpush2.msra.mxu0 0.0
      %723 = vmatprep.subr.mxu0 0.0
      %724 = vmatpush2.msra.mxu0 0.0
      %725 = vmatprep.subr.mxu0 0.0
      %726 = vmatpush2.msra.mxu0 0.0
      %727 = vmatprep.subr.mxu0 0.0
      %728 = vmatpush2.msra.mxu0 0.0
      %729 = vmatprep.subr.mxu0 0.0
      %730 = vmatpush2.msra.mxu0 0.0
      %731 = vmatprep.subr.mxu0 0.0
      %732 = vmatpush2.msra.mxu0 0.0
      %733 = vmatprep.subr.mxu0 0.0
      %734 = vmatpush2.msra.mxu0 0.0
      %735 = vmatprep.subr.mxu0 0.0
      %736 = vmatpush2.msra.mxu0 0.0
      %737 = vmatprep.subr.mxu0 0.0
      %738 = vmatpush2.msra.mxu0 0.0
      %739 = vmatprep.subr.mxu0 0.0
      %740 = vmatpush2.msra.mxu0 0.0
      %741 = vmatprep.subr.mxu0 0.0
      %742 = vmatpush2.msra.mxu0 0.0
      %743 = vmatprep.mubr.f32.mxu0 0.0
      %744 = vmatmul.mubr.f32.gmra.mxu0 %v677
      %v745 = vpop.f32.mrf.mxu0
      %v746 = vadd.f32 0.0, %v745
      %v747 = vpop.f32.mrf.mxu0
      %748 = vdwg.mxu0
      %749 = vrot.lane.b32.xlu0 %v241, 104
      %v750 = vpop.permute.xlu0 %749
      %751 = vrot.lane.b32.xlu0 %v242, 104
      %v752 = vpop.permute.xlu0 %751
      %v753 = vsel %vm251, %v750, 0
      %v755 = vsel %vm251, %v752, 0
      %757 = vmatprep.subr.mxu0 0.0
      %758 = vmatpush1.xpose.msra.mxu0 0.0
      %759 = vmatprep.subr.mxu0 0.0
      %760 = vmatpush1.xpose.msra.mxu0 0.0
      %761 = vmatprep.subr.mxu0 0.0
      %762 = vmatpush1.xpose.msra.mxu0 0.0
      %763 = vmatprep.subr.mxu0 0.0
      %764 = vmatpush1.xpose.msra.mxu0 0.0
      %765 = vmatprep.subr.mxu0 0.0
      %766 = vmatpush1.xpose.msra.mxu0 0.0
      %767 = vmatprep.subr.mxu0 0.0
      %768 = vmatpush1.xpose.msra.mxu0 0.0
      %769 = vmatprep.subr.mxu0 0.0
      %770 = vmatpush1.xpose.msra.mxu0 0.0
      %771 = vmatprep.subr.mxu0 0.0
      %772 = vmatpush1.xpose.msra.mxu0 0.0
      %773 = vmatprep.subr.mxu0 0.0
      %774 = vmatpush1.xpose.msra.mxu0 0.0
      %775 = vmatprep.subr.mxu0 0.0
      %776 = vmatpush1.xpose.msra.mxu0 0.0
      %777 = vmatprep.subr.mxu0 0.0
      %778 = vmatpush1.xpose.msra.mxu0 0.0
      %779 = vmatprep.subr.mxu0 0.0
      %780 = vmatpush1.xpose.msra.mxu0 0.0
      %781 = vmatprep.subr.mxu0 0.0
      %782 = vmatpush1.xpose.msra.mxu0 0.0
      %783 = vmatprep.subr.mxu0 0.0
      %784 = vmatpush1.xpose.msra.mxu0 0.0
      %785 = vmatprep.subr.mxu0 0.0
      %786 = vmatpush1.xpose.msra.mxu0 0.0
      %787 = vmatprep.subr.mxu0 0.0
      %788 = vmatpush1.xpose.msra.mxu0 %v755
      %789 = vmatprep.subr.mxu0 0.0
      %790 = vmatpush2.xpose.msra.mxu0 0.0
      %791 = vmatprep.subr.mxu0 0.0
      %792 = vmatpush2.xpose.msra.mxu0 0.0
      %793 = vmatprep.subr.mxu0 0.0
      %794 = vmatpush2.xpose.msra.mxu0 0.0
      %795 = vmatprep.subr.mxu0 0.0
      %796 = vmatpush2.xpose.msra.mxu0 0.0
      %797 = vmatprep.subr.mxu0 0.0
      %798 = vmatpush2.xpose.msra.mxu0 0.0
      %799 = vmatprep.subr.mxu0 0.0
      %800 = vmatpush2.xpose.msra.mxu0 0.0
      %801 = vmatprep.subr.mxu0 0.0
      %802 = vmatpush2.xpose.msra.mxu0 0.0
      %803 = vmatprep.subr.mxu0 0.0
      %804 = vmatpush2.xpose.msra.mxu0 0.0
      %805 = vmatprep.subr.mxu0 0.0
      %806 = vmatpush2.xpose.msra.mxu0 0.0
      %807 = vmatprep.subr.mxu0 0.0
      %808 = vmatpush2.xpose.msra.mxu0 0.0
      %809 = vmatprep.subr.mxu0 0.0
      %810 = vmatpush2.xpose.msra.mxu0 0.0
      %811 = vmatprep.subr.mxu0 0.0
      %812 = vmatpush2.xpose.msra.mxu0 0.0
      %813 = vmatprep.subr.mxu0 0.0
      %814 = vmatpush2.xpose.msra.mxu0 0.0
      %815 = vmatprep.subr.mxu0 0.0
      %816 = vmatpush2.xpose.msra.mxu0 0.0
      %817 = vmatprep.subr.mxu0 0.0
      %818 = vmatpush2.xpose.msra.mxu0 0.0
      %819 = vmatprep.subr.mxu0 0.0
      %820 = vmatpush2.xpose.msra.mxu0 0.0
      %821 = vmatprep.mubr.f32.mxu0 0.0
      %822 = vmatmul.mubr.f32.gmra.mxu0 %v753
      %v823 = vpop.f32.mrf.mxu0
      %v824 = vadd.f32 0.0, %v823
      %v825 = vpop.f32.mrf.mxu0
      %826 = vdwg.mxu0
      %v827 = vmul.f32 %v824, 0.35355338
      %v828 = vadd.f32 %v827, %v249
      %v829 = vsel %vm251, %v828, -inf
      %830 = vmax.xlane.f32.xlu0 %v829
      %v831 = vpop.xlane.xlu0 %830
      %v832 = vsub.f32 %v828, %v831
      %v833 = vmul.f32 %v832, 1.442695
      %v834 = vpow.pop %v833
      %v835 = vsel %vm251, %v834, 0.0
      %836 = vadd.xlane.f32.xlu0 %v835
      %v837 = vpop.xlane.xlu0 %836
      %v838 = vrcp.pop %v837
      %v839 = vmul.f32 %v834, %v838
      %840 = vrot.lane.b32.xlu0 %v243, 104
      %v841 = vpop.permute.xlu0 %840
      %v844 = vsel %vm251, %v839, 0
      %846 = vmatprep.subr.mxu0 0.0
      %847 = vmatpush1.msra.mxu0 0.0
      %848 = vmatprep.subr.mxu0 0.0
      %849 = vmatpush1.msra.mxu0 0.0
      %850 = vmatprep.subr.mxu0 0.0
      %851 = vmatpush1.msra.mxu0 0.0
      %852 = vmatprep.subr.mxu0 0.0
      %853 = vmatpush1.msra.mxu0 0.0
      %854 = vmatprep.subr.mxu0 0.0
      %855 = vmatpush1.msra.mxu0 0.0
      %856 = vmatprep.subr.mxu0 0.0
      %857 = vmatpush1.msra.mxu0 0.0
      %858 = vmatprep.subr.mxu0 0.0
      %859 = vmatpush1.msra.mxu0 0.0
      %860 = vmatprep.subr.mxu0 0.0
      %861 = vmatpush1.msra.mxu0 0.0
      %862 = vmatprep.subr.mxu0 0.0
      %863 = vmatpush1.msra.mxu0 0.0
      %864 = vmatprep.subr.mxu0 0.0
      %865 = vmatpush1.msra.mxu0 0.0
      %866 = vmatprep.subr.mxu0 0.0
      %867 = vmatpush1.msra.mxu0 0.0
      %868 = vmatprep.subr.mxu0 0.0
      %869 = vmatpush1.msra.mxu0 0.0
      %870 = vmatprep.subr.mxu0 0.0
      %871 = vmatpush1.msra.mxu0 0.0
      %872 = vmatprep.subr.mxu0 0.0
      %873 = vmatpush1.msra.mxu0 0.0
      %874 = vmatprep.subr.mxu0 0.0
      %875 = vmatpush1.msra.mxu0 0.0
      %876 = vmatprep.subr.mxu0 0.0
      %877 = vmatpush1.msra.mxu0 %v841
      %878 = vmatprep.subr.mxu0 0.0
      %879 = vmatpush2.msra.mxu0 0.0
      %880 = vmatprep.subr.mxu0 0.0
      %881 = vmatpush2.msra.mxu0 0.0
      %882 = vmatprep.subr.mxu0 0.0
      %883 = vmatpush2.msra.mxu0 0.0
      %884 = vmatprep.subr.mxu0 0.0
      %885 = vmatpush2.msra.mxu0 0.0
      %886 = vmatprep.subr.mxu0 0.0
      %887 = vmatpush2.msra.mxu0 0.0
      %888 = vmatprep.subr.mxu0 0.0
      %889 = vmatpush2.msra.mxu0 0.0
      %890 = vmatprep.subr.mxu0 0.0
      %891 = vmatpush2.msra.mxu0 0.0
      %892 = vmatprep.subr.mxu0 0.0
      %893 = vmatpush2.msra.mxu0 0.0
      %894 = vmatprep.subr.mxu0 0.0
      %895 = vmatpush2.msra.mxu0 0.0
      %896 = vmatprep.subr.mxu0 0.0
      %897 = vmatpush2.msra.mxu0 0.0
      %898 = vmatprep.subr.mxu0 0.0
      %899 = vmatpush2.msra.mxu0 0.0
      %900 = vmatprep.subr.mxu0 0.0
      %901 = vmatpush2.msra.mxu0 0.0
      %902 = vmatprep.subr.mxu0 0.0
      %903 = vmatpush2.msra.mxu0 0.0
      %904 = vmatprep.subr.mxu0 0.0
      %905 = vmatpush2.msra.mxu0 0.0
      %906 = vmatprep.subr.mxu0 0.0
      %907 = vmatpush2.msra.mxu0 0.0
      %908 = vmatprep.subr.mxu0 0.0
      %909 = vmatpush2.msra.mxu0 0.0
      %910 = vmatprep.mubr.f32.mxu0 0.0
      %911 = vmatmul.mubr.f32.gmra.mxu0 %v844
      %v912 = vpop.f32.mrf.mxu0
      %v913 = vadd.f32 0.0, %v912
      %v914 = vpop.f32.mrf.mxu0
      %915 = vdwg.mxu0
      %917 = vrot.lane.b32.xlu0 %v579, 8
      %v918 = vpop.permute.xlu0 %917
      %921 = vrot.lane.b32.xlu0 %v746, 16
      %v922 = vpop.permute.xlu0 %921
      %925 = vrot.lane.b32.xlu0 %v913, 24
      %v926 = vpop.permute.xlu0 %925
      %v928 = vsel %vm251, %v411, %v918
      %vm929 = vcmask 130048
      %v930 = vsel %vm929, %v928, %v922
      %vm931 = vcmask 195584
      %v932 = vsel %vm931, %v930, %v926
      %vm933 = vcmask 261120
      %934 = vst.msk [vmem:[%s240] sm:$0xff] %vm933, %v932
      %p935 = scmp.lt.s32.totalorder %s15, 1
      %s936 = scalar_select %p935, %s15, 1
      %s937 = smul.addr %s936, 8
      %s938 = scalar_lea.vmem %s4, %s937
      // Predicated region
      $region37: #{transformer_forward.30} parent=35 // pred_check
        %p939 = pneg %p137
      $region38: #{transformer_forward.30} parent=35 // pred_check_branch
        %941 = sbr.rel (%p939) target = $region40
      $region39: #{transformer_forward.30} parent=35 // pred_region
        _
      $region40: #{transformer_forward.30} parent=35 // pred_fallthru
        _
    $region36: #{transformer_forward.30} parent=5 // pred_fallthru
      _
    %p942 = scmp.le.s32.totalorder 2, %s10
    // Predicated region
    $region41: #{transformer_forward.30} parent=5 // pred_check
      %p943 = pneg %p942
    $region42: #{transformer_forward.30} parent=5 // pred_check_branch
      %945 = sbr.rel (%p943) target = $region44
    $region43: #{transformer_forward.30} parent=5 // pred_region
      %s946 = ssub.s32 %s10, 2
      // Predicated region
      $region45: #{transformer_forward.30} parent=43 // pred_check
        %p947 = pneg %p143
      $region46: #{transformer_forward.30} parent=43 // pred_check_branch
        %949 = sbr.rel (%p947) target = $region48
      $region47: #{transformer_forward.30} parent=43 // pred_region
        %p950 = scmp.lt.s32.totalorder %s16, 1
        %s951 = scalar_select %p950, %s16, 1
        %s952 = smul.addr %s951, 8
        %s953 = scalar_lea.vmem %s4, %s952
      $region48: #{transformer_forward.30} parent=43 // pred_fallthru
        _
    $region44: #{transformer_forward.30} parent=5 // pred_fallthru
      _
  $region6: #{transformer_forward.30} parent=0 // loop_footer
    %s14 = sadd.s32 1, %s10
  $region7: #{transformer_forward.30} parent=0 // loop_footer_branch
    %9 = sbr.rel target = $region3
  $region8: #{transformer_forward.30} parent=0 // loop_exit
    _

// kernel: transformer_forward.33
$region0: #{transformer_forward.33}
  #allocation0 [shape = 'u32[]', space=smem, size = 0x4, offset = 0x4, fixed_abs, tag = 'smem constant byte address 0x4 - core index']
  #allocation1 [shape = 'u32[144,128]{1,0:T(1,128)}', space=vmem, size = 0x12000, scoped, tag = 'internal scratch']
  %s0 = inlined_call_operand.vmem [shape: f32[16,128], index: 0, kind: input, shape index: {}]
  %s1 = inlined_call_operand.vmem [shape: f32[128,32], index: 1, kind: input, shape index: {}]
  %s2 = inlined_call_operand.vmem [shape: f32[1,32], index: 2, kind: input, shape index: {}]
  %s3 = inlined_call_operand.vmem [shape: f32[16,32], index: 3, kind: input, shape index: {}]
  %s4 = inlined_call_operand.vmem [shape: f32[1,32], index: 4, kind: input, shape index: {}]
  %s5 = inlined_call_operand.vmem [shape: f32[1,32], index: 5, kind: input, shape index: {}]
  %s6 = inlined_call_operand.vmem [shape: f32[16,32], index: 6, kind: output, shape index: {}]
  %s7 = sld [smem:[#allocation0]]
  $region34: #{transformer_forward.33} parent=0
    _
  %s9 = ssub.s32 1, %s7
  %s10 = scalar_select 0, %s9, %s7
  // Predicated region
  $region2: #{transformer_forward.33} parent=0 // pred_check
    _
  $region3: #{transformer_forward.33} parent=0 // pred_check_branch
    %12 = sbr.rel (0) target = $region5
  $region4: #{transformer_forward.33} parent=0 // pred_region
    _
  $region5: #{transformer_forward.33} parent=0 // pred_fallthru
    _
  // Predicated region
  $region6: #{transformer_forward.33} parent=0 // pred_check
    _
  $region7: #{transformer_forward.33} parent=0 // pred_check_branch
    %14 = sbr.rel (0) target = $region9
  $region8: #{transformer_forward.33} parent=0 // pred_region
    _
  $region9: #{transformer_forward.33} parent=0 // pred_fallthru
    _
  // Predicated region
  $region10: #{transformer_forward.33} parent=0 // pred_check
    _
  $region11: #{transformer_forward.33} parent=0 // pred_check_branch
    %16 = sbr.rel (0) target = $region13
  $region12: #{transformer_forward.33} parent=0 // pred_region
    _
  $region13: #{transformer_forward.33} parent=0 // pred_fallthru
    _
  // Predicated region
  $region14: #{transformer_forward.33} parent=0 // pred_check
    _
  $region15: #{transformer_forward.33} parent=0 // pred_check_branch
    %18 = sbr.rel (0) target = $region17
  $region16: #{transformer_forward.33} parent=0 // pred_region
    _
  $region17: #{transformer_forward.33} parent=0 // pred_fallthru
    _
  // Predicated region
  $region18: #{transformer_forward.33} parent=0 // pred_check
    _
  $region19: #{transformer_forward.33} parent=0 // pred_check_branch
    %20 = sbr.rel (0) target = $region21
  $region20: #{transformer_forward.33} parent=0 // pred_region
    _
  $region21: #{transformer_forward.33} parent=0 // pred_fallthru
    _
  // Predicated region
  $region22: #{transformer_forward.33} parent=0 // pred_check
    _
  $region23: #{transformer_forward.33} parent=0 // pred_check_branch
    %22 = sbr.rel (0) target = $region25
  $region24: #{transformer_forward.33} parent=0 // pred_region
    _
  $region25: #{transformer_forward.33} parent=0 // pred_fallthru
    _
  %v23 = vld [vmem:[%s0] sm:$0xff]
  %v24 = vld [vmem:[%s0 + $0x8] sm:$0xff]
  %v25 = vld [vmem:[%s1] sm:$0xff]
  %v26 = vld [vmem:[%s1 + $0x8] sm:$0xff]
  %v27 = vld [vmem:[%s1 + $0x10] sm:$0xff]
  %v28 = vld [vmem:[%s1 + $0x18] sm:$0xff]
  %v29 = vld [vmem:[%s1 + $0x20] sm:$0xff]
  %v30 = vld [vmem:[%s1 + $0x28] sm:$0xff]
  %v31 = vld [vmem:[%s1 + $0x30] sm:$0xff]
  %v32 = vld [vmem:[%s1 + $0x38] sm:$0xff]
  %v33 = vld [vmem:[%s1 + $0x40] sm:$0xff]
  %v34 = vld [vmem:[%s1 + $0x48] sm:$0xff]
  %v35 = vld [vmem:[%s1 + $0x50] sm:$0xff]
  %v36 = vld [vmem:[%s1 + $0x58] sm:$0xff]
  %v37 = vld [vmem:[%s1 + $0x60] sm:$0xff]
  %v38 = vld [vmem:[%s1 + $0x68] sm:$0xff]
  %v39 = vld [vmem:[%s1 + $0x70] sm:$0xff]
  %v40 = vld [vmem:[%s1 + $0x78] sm:$0xff]
  %v41 = vld [vmem:[%s2] sm:$0x1]
  %v43 = vlaneseq
  %v44 = vshrl.u32 %v43, 7
  %v45 = vsub.s32 0, %v44
  %v46 = vrot.slane %v41, %v45
  %48 = vmatprep.subr.mxu0 0.0
  %49 = vmatpush1.msra.mxu0 %v40
  %50 = vmatprep.subr.mxu0 0.0
  %51 = vmatpush1.msra.mxu0 %v39
  %52 = vmatprep.subr.mxu0 0.0
  %53 = vmatpush1.msra.mxu0 %v38
  %54 = vmatprep.subr.mxu0 0.0
  %55 = vmatpush1.msra.mxu0 %v37
  %56 = vmatprep.subr.mxu0 0.0
  %57 = vmatpush1.msra.mxu0 %v36
  %58 = vmatprep.subr.mxu0 0.0
  %59 = vmatpush1.msra.mxu0 %v35
  %60 = vmatprep.subr.mxu0 0.0
  %61 = vmatpush1.msra.mxu0 %v34
  %62 = vmatprep.subr.mxu0 0.0
  %63 = vmatpush1.msra.mxu0 %v33
  %64 = vmatprep.subr.mxu0 0.0
  %65 = vmatpush1.msra.mxu0 %v32
  %66 = vmatprep.subr.mxu0 0.0
  %67 = vmatpush1.msra.mxu0 %v31
  %68 = vmatprep.subr.mxu0 0.0
  %69 = vmatpush1.msra.mxu0 %v30
  %70 = vmatprep.subr.mxu0 0.0
  %71 = vmatpush1.msra.mxu0 %v29
  %72 = vmatprep.subr.mxu0 0.0
  %73 = vmatpush1.msra.mxu0 %v28
  %74 = vmatprep.subr.mxu0 0.0
  %75 = vmatpush1.msra.mxu0 %v27
  %76 = vmatprep.subr.mxu0 0.0
  %77 = vmatpush1.msra.mxu0 %v26
  %78 = vmatprep.subr.mxu0 0.0
  %79 = vmatpush1.msra.mxu0 %v25
  %80 = vmatprep.subr.mxu0 0.0
  %81 = vmatpush2.msra.mxu0 0.0
  %82 = vmatprep.subr.mxu0 0.0
  %83 = vmatpush2.msra.mxu0 0.0
  %84 = vmatprep.subr.mxu0 0.0
  %85 = vmatpush2.msra.mxu0 0.0
  %86 = vmatprep.subr.mxu0 0.0
  %87 = vmatpush2.msra.mxu0 0.0
  %88 = vmatprep.subr.mxu0 0.0
  %89 = vmatpush2.msra.mxu0 0.0
  %90 = vmatprep.subr.mxu0 0.0
  %91 = vmatpush2.msra.mxu0 0.0
  %92 = vmatprep.subr.mxu0 0.0
  %93 = vmatpush2.msra.mxu0 0.0
  %94 = vmatprep.subr.mxu0 0.0
  %95 = vmatpush2.msra.mxu0 0.0
  %96 = vmatprep.subr.mxu0 0.0
  %97 = vmatpush2.msra.mxu0 0.0
  %98 = vmatprep.subr.mxu0 0.0
  %99 = vmatpush2.msra.mxu0 0.0
  %100 = vmatprep.subr.mxu0 0.0
  %101 = vmatpush2.msra.mxu0 0.0
  %102 = vmatprep.subr.mxu0 0.0
  %103 = vmatpush2.msra.mxu0 0.0
  %104 = vmatprep.subr.mxu0 0.0
  %105 = vmatpush2.msra.mxu0 0.0
  %106 = vmatprep.subr.mxu0 0.0
  %107 = vmatpush2.msra.mxu0 0.0
  %108 = vmatprep.subr.mxu0 0.0
  %109 = vmatpush2.msra.mxu0 0.0
  %110 = vmatprep.subr.mxu0 0.0
  %111 = vmatpush2.msra.mxu0 0.0
  %112 = vmatprep.mubr.f32.mxu0 0.0
  %113 = vmatmul.mubr.f32.gmra.mxu0 %v23
  %v114 = vpop.f32.mrf.mxu0
  %v115 = vadd.f32 %v46, %v114
  %v116 = vpop.f32.mrf.mxu0
  %117 = vmatprep.mubr.f32.mxu0 0.0
  %118 = vmatmul.mubr.f32.gmra.mxu0 %v24
  %v119 = vpop.f32.mrf.mxu0
  %v120 = vadd.f32 %v46, %v119
  %v121 = vpop.f32.mrf.mxu0
  %122 = vdwg.mxu0
  %v123 = vld [vmem:[%s3] sm:$0xff]
  %v124 = vld [vmem:[%s3 + $0x8] sm:$0xff]
  %v125 = vadd.f32 %v115, %v123
  %v126 = vadd.f32 %v120, %v124
  %vm127 = vcmask 261120
  %v128 = vsel %vm127, %v125, 0.0
  %129 = vadd.xlane.f32.xlu0 %v128
  %v130 = vpop.xlane.xlu0 %129
  %v131 = vsel %vm127, %v126, 0.0
  %132 = vadd.xlane.f32.xlu0 %v131
  %v133 = vpop.xlane.xlu0 %132
  %v134 = vrcp.pop 32.0
  %v135 = vmul.f32 %v130, %v134
  %v136 = vmul.f32 %v133, %v134
  %v137 = vsub.f32 %v125, %v135
  %v138 = vsub.f32 %v126, %v136
  %v139 = vmul.f32 %v137, %v137
  %v140 = vmul.f32 %v138, %v138
  %v141 = vsel %vm127, %v139, 0.0
  %142 = vadd.xlane.f32.xlu0 %v141
  %v143 = vpop.xlane.xlu0 %142
  %v144 = vsel %vm127, %v140, 0.0
  %145 = vadd.xlane.f32.xlu0 %v144
  %v146 = vpop.xlane.xlu0 %145
  %v147 = vmul.f32 %v143, %v134
  %v148 = vmul.f32 %v146, %v134
  %v149 = vadd.f32 %v147, 1e-05
  %v150 = vadd.f32 %v148, 1e-05
  %v151 = vrsqrt.pop %v149
  %v152 = vrsqrt.pop %v150
  %v153 = vmul.f32 %v137, %v151
  %v154 = vmul.f32 %v138, %v152
  %v155 = vld [vmem:[%s4] sm:$0x1]
  %v157 = vlaneseq
  %v158 = vshrl.u32 %v157, 7
  %v159 = vsub.s32 0, %v158
  %v160 = vrot.slane %v155, %v159
  %v162 = vmul.f32 %v153, %v160
  %v163 = vmul.f32 %v154, %v160
  %v164 = vld [vmem:[%s5] sm:$0x1]
  %v166 = vlaneseq
  %v167 = vshrl.u32 %v166, 7
  %v168 = vsub.s32 0, %v167
  %v169 = vrot.slane %v164, %v168
  %v171 = vadd.f32 %v162, %v169
  %v172 = vadd.f32 %v163, %v169
  %173 = vst.msk [vmem:[%s6] sm:$0xff] %vm127, %v171
  %174 = vst.msk [vmem:[%s6 + $0x8] sm:$0xff] %vm127, %v172
  // Predicated region
  $region26: #{transformer_forward.33} parent=0 // pred_check
    _
  $region27: #{transformer_forward.33} parent=0 // pred_check_branch
    %176 = sbr.rel (0) target = $region29
  $region28: #{transformer_forward.33} parent=0 // pred_region
    _
  $region29: #{transformer_forward.33} parent=0 // pred_fallthru
    _
  // Predicated region
  $region30: #{transformer_forward.33} parent=0 // pred_check
    _
  $region31: #{transformer_forward.33} parent=0 // pred_check_branch
    %178 = sbr.rel (0) target = $region33
  $region32: #{transformer_forward.33} parent=0 // pred_region
    _
  $region33: #{transformer_forward.33} parent=0 // pred_fallthru
    _

// kernel: transformer_forward.43
$region0: #{transformer_forward.43}
  #allocation0 [shape = 'u32[]', space=smem, size = 0x4, offset = 0x4, fixed_abs, tag = 'smem constant byte address 0x4 - core index']
  #allocation1 [shape = 'u32[144,128]{1,0:T(1,128)}', space=vmem, size = 0x12000, scoped, tag = 'internal scratch']
  %s0 = inlined_call_operand.vmem [shape: f32[16,32], index: 0, kind: input, shape index: {}]
  %s1 = inlined_call_operand.vmem [shape: f32[32,64], index: 1, kind: input, shape index: {}]
  %s2 = inlined_call_operand.vmem [shape: f32[1,64], index: 2, kind: input, shape index: {}]
  %s3 = inlined_call_operand.vmem [shape: f32[16,64], index: 3, kind: output, shape index: {}]
  %s4 = sld [smem:[#allocation0]]
  $region22: #{transformer_forward.43} parent=0
    _
  %s6 = ssub.s32 1, %s4
  %s7 = scalar_select 0, %s6, %s4
  // Predicated region
  $region2: #{transformer_forward.43} parent=0 // pred_check
    _
  $region3: #{transformer_forward.43} parent=0 // pred_check_branch
    %9 = sbr.rel (0) target = $region5
  $region4: #{transformer_forward.43} parent=0 // pred_region
    _
  $region5: #{transformer_forward.43} parent=0 // pred_fallthru
    _
  // Predicated region
  $region6: #{transformer_forward.43} parent=0 // pred_check
    _
  $region7: #{transformer_forward.43} parent=0 // pred_check_branch
    %11 = sbr.rel (0) target = $region9
  $region8: #{transformer_forward.43} parent=0 // pred_region
    _
  $region9: #{transformer_forward.43} parent=0 // pred_fallthru
    _
  // Predicated region
  $region10: #{transformer_forward.43} parent=0 // pred_check
    _
  $region11: #{transformer_forward.43} parent=0 // pred_check_branch
    %13 = sbr.rel (0) target = $region13
  $region12: #{transformer_forward.43} parent=0 // pred_region
    _
  $region13: #{transformer_forward.43} parent=0 // pred_fallthru
    _
  %v14 = vld [vmem:[%s0] sm:$0xff]
  %v15 = vld [vmem:[%s0 + $0x8] sm:$0xff]
  %v16 = vld [vmem:[%s1] sm:$0xff]
  %v17 = vld [vmem:[%s1 + $0x8] sm:$0xff]
  %v18 = vld [vmem:[%s1 + $0x10] sm:$0xff]
  %v19 = vld [vmem:[%s1 + $0x18] sm:$0xff]
  %v20 = vld [vmem:[%s2] sm:$0x1]
  %v22 = vlaneseq
  %v23 = vshrl.u32 %v22, 7
  %v24 = vsub.s32 0, %v23
  %v25 = vrot.slane %v20, %v24
  %vm27 = vcmask 261120
  %v29 = vsel %vm27, %v14, 0
  %v32 = vsel %vm27, %v15, 0
  %34 = vmatprep.subr.mxu0 0.0
  %35 = vmatpush1.msra.mxu0 0.0
  %36 = vmatprep.subr.mxu0 0.0
  %37 = vmatpush1.msra.mxu0 0.0
  %38 = vmatprep.subr.mxu0 0.0
  %39 = vmatpush1.msra.mxu0 0.0
  %40 = vmatprep.subr.mxu0 0.0
  %41 = vmatpush1.msra.mxu0 0.0
  %42 = vmatprep.subr.mxu0 0.0
  %43 = vmatpush1.msra.mxu0 0.0
  %44 = vmatprep.subr.mxu0 0.0
  %45 = vmatpush1.msra.mxu0 0.0
  %46 = vmatprep.subr.mxu0 0.0
  %47 = vmatpush1.msra.mxu0 0.0
  %48 = vmatprep.subr.mxu0 0.0
  %49 = vmatpush1.msra.mxu0 0.0
  %50 = vmatprep.subr.mxu0 0.0
  %51 = vmatpush1.msra.mxu0 0.0
  %52 = vmatprep.subr.mxu0 0.0
  %53 = vmatpush1.msra.mxu0 0.0
  %54 = vmatprep.subr.mxu0 0.0
  %55 = vmatpush1.msra.mxu0 0.0
  %56 = vmatprep.subr.mxu0 0.0
  %57 = vmatpush1.msra.mxu0 0.0
  %58 = vmatprep.subr.mxu0 0.0
  %59 = vmatpush1.msra.mxu0 %v19
  %60 = vmatprep.subr.mxu0 0.0
  %61 = vmatpush1.msra.mxu0 %v18
  %62 = vmatprep.subr.mxu0 0.0
  %63 = vmatpush1.msra.mxu0 %v17
  %64 = vmatprep.subr.mxu0 0.0
  %65 = vmatpush1.msra.mxu0 %v16
  %66 = vmatprep.subr.mxu0 0.0
  %67 = vmatpush2.msra.mxu0 0.0
  %68 = vmatprep.subr.mxu0 0.0
  %69 = vmatpush2.msra.mxu0 0.0
  %70 = vmatprep.subr.mxu0 0.0
  %71 = vmatpush2.msra.mxu0 0.0
  %72 = vmatprep.subr.mxu0 0.0
  %73 = vmatpush2.msra.mxu0 0.0
  %74 = vmatprep.subr.mxu0 0.0
  %75 = vmatpush2.msra.mxu0 0.0
  %76 = vmatprep.subr.mxu0 0.0
  %77 = vmatpush2.msra.mxu0 0.0
  %78 = vmatprep.subr.mxu0 0.0
  %79 = vmatpush2.msra.mxu0 0.0
  %80 = vmatprep.subr.mxu0 0.0
  %81 = vmatpush2.msra.mxu0 0.0
  %82 = vmatprep.subr.mxu0 0.0
  %83 = vmatpush2.msra.mxu0 0.0
  %84 = vmatprep.subr.mxu0 0.0
  %85 = vmatpush2.msra.mxu0 0.0
  %86 = vmatprep.subr.mxu0 0.0
  %87 = vmatpush2.msra.mxu0 0.0
  %88 = vmatprep.subr.mxu0 0.0
  %89 = vmatpush2.msra.mxu0 0.0
  %90 = vmatprep.subr.mxu0 0.0
  %91 = vmatpush2.msra.mxu0 0.0
  %92 = vmatprep.subr.mxu0 0.0
  %93 = vmatpush2.msra.mxu0 0.0
  %94 = vmatprep.subr.mxu0 0.0
  %95 = vmatpush2.msra.mxu0 0.0
  %96 = vmatprep.subr.mxu0 0.0
  %97 = vmatpush2.msra.mxu0 0.0
  %98 = vmatprep.mubr.f32.mxu0 0.0
  %99 = vmatmul.mubr.f32.gmra.mxu0 %v29
  %v100 = vpop.f32.mrf.mxu0
  %v101 = vadd.f32 %v25, %v100
  %v102 = vpop.f32.mrf.mxu0
  %103 = vmatprep.mubr.f32.mxu0 0.0
  %104 = vmatmul.mubr.f32.gmra.mxu0 %v32
  %v105 = vpop.f32.mrf.mxu0
  %v106 = vadd.f32 %v25, %v105
  %v107 = vpop.f32.mrf.mxu0
  %108 = vdwg.mxu0
  %vm109 = vcmask 523264
  %110 = vst.msk [vmem:[%s3] sm:$0xff] %vm109, %v101
  %111 = vst.msk [vmem:[%s3 + $0x8] sm:$0xff] %vm109, %v106
  // Predicated region
  $region14: #{transformer_forward.43} parent=0 // pred_check
    _
  $region15: #{transformer_forward.43} parent=0 // pred_check_branch
    %113 = sbr.rel (0) target = $region17
  $region16: #{transformer_forward.43} parent=0 // pred_region
    _
  $region17: #{transformer_forward.43} parent=0 // pred_fallthru
    _
  // Predicated region
  $region18: #{transformer_forward.43} parent=0 // pred_check
    _
  $region19: #{transformer_forward.43} parent=0 // pred_check_branch
    %115 = sbr.rel (0) target = $region21
  $region20: #{transformer_forward.43} parent=0 // pred_region
    _
  $region21: #{transformer_forward.43} parent=0 // pred_fallthru
    _

// kernel: transformer_forward.35
$region0: #{transformer_forward.35}
  #allocation0 [shape = 'u32[]', space=smem, size = 0x4, offset = 0x4, fixed_abs, tag = 'smem constant byte address 0x4 - core index']
  #allocation1 [shape = 'u32[144,128]{1,0:T(1,128)}', space=vmem, size = 0x12000, scoped, tag = 'internal scratch']
  %s0 = inlined_call_operand.vmem [shape: f32[2,8,32], index: 0, kind: input, shape index: {}]
  %s1 = inlined_call_operand.vmem [shape: f32[2,8,32], index: 1, kind: input, shape index: {}]
  %s2 = inlined_call_operand.vmem [shape: f32[2,8,32], index: 2, kind: input, shape index: {}]
  %s3 = inlined_call_operand.vmem [shape: f32[2,1,8], index: 3, kind: input, shape index: {}]
  %s4 = inlined_call_operand.vmem [shape: f32[2,8,32], index: 4, kind: output, shape index: {0}]
  %s5 = inlined_call_operand.hbm [shape: f32[2,4,8,8], index: 5, kind: output, shape index: {1}]
  %6 = xla_tuple %s4, %s5
  %s7 = sld [smem:[#allocation0]]
  $region57: #{transformer_forward.35} parent=0
    _
  %s9 = ssub.s32 1, %s7
  %s10 = scalar_select 0, %s9, %s7
  $region1: #{transformer_forward.35} parent=0
    #allocation2 [shape = 'u8[32768]{0}', space=vmem, size = 0x8000, scoped, tag = 'output window, operand 1']
    #allocation3 [shape = 's32[2]{0}', space=sflag, size = 0x8, scoped, tag = 'scoped memory for transformer_forward.35']
    %11 = vsyncpa [#allocation3], 0
    %s12 = scalar_lea.sflag [#allocation3], 1
    %13 = vsyncpa %s12, 0
    loop: start=0, step=1, limit=4
    $region2: #{transformer_forward.35} parent=1 // loop_pre_header
      _
    $region3: #{transformer_forward.35} parent=1 // loop_header
      %s15 = sphi 0, %s19
      %p16 = scmp.ge.s32.totalorder %s15, 4
      %s25 = sphi 0, %s27
      %s28 = sphi 0, %s25
      %s29 = sphi 0, %s28
      %s45 = sphi 0, %s29
      %s51 = sphi 0, %s53
      %s54 = sphi 0, %s51
      %s55 = sphi 0, %s54
      %s71 = sphi 0, %s55
      %s77 = sphi 0, %s79
      %s80 = sphi 0, %s77
      %s81 = sphi 0, %s80
      %s97 = sphi 0, %s81
      %s103 = sphi 0, %s105
      %s106 = sphi 0, %s103
      %s107 = sphi 0, %s106
      %s123 = sphi 0, %s107
      %s129 = sphi 0, %s131
      %s132 = sphi 0, %s129
      %s133 = sphi 0, %s132
      %s149 = sphi 0, %s133
      %s155 = sphi 0, %s157
      %s158 = sphi 0, %s155
      %s159 = sphi 0, %s158
      %s175 = sphi 0, %s159
    $region4: #{transformer_forward.35} parent=1 // loop_header_branch
      %18 = sbr.rel (%p16) target = $region8
    $region5: #{transformer_forward.35} parent=1 // loop_body
      %s20 = ssub.s32 %s15, 1
      %s21 = ssub.s32 %s15, 2
      %s22 = sadd.s32 %s15, 1
      %s23 = ssub.s32 %s15, %s22
      %p24 = scmp.eq.s32.totalorder %s23, 0
      %s26 = sadd.s32 %s25, 1
      %s27 = scalar_select %p24, %s25, %s26
      %p30 = pneg %p24
      %p31 = scmp.eq.s32.totalorder %s15, 1
      %p32 = por %p30, %p31
      %p33 = scmp.ne.s32.totalorder %s25, %s28
      %p34 = scmp.eq.s32.totalorder %s15, 0
      %p35 = por %p33, %p34
      %p36 = scmp.ne.s32.totalorder %s25, %s28
      %p37 = scmp.eq.s32.totalorder %s20, 1
      %p38 = por %p36, %p37
      %p39 = scmp.ne.s32.totalorder %s28, %s29
      %p40 = scmp.eq.s32.totalorder %s20, 0
      %p41 = por %p39, %p40
      %p42 = scmp.ne.s32.totalorder %s28, %s29
      %p43 = scmp.eq.s32.totalorder %s21, 1
      %p44 = por %p42, %p43
      %p46 = scmp.ne.s32.totalorder %s29, %s45
      %p47 = scmp.eq.s32.totalorder %s21, 0
      %p48 = por %p46, %p47
      %s49 = ssub.s32 %s15, %s22
      %p50 = scmp.eq.s32.totalorder %s49, 0
      %s52 = sadd.s32 %s51, 1
      %s53 = scalar_select %p50, %s51, %s52
      %p56 = pneg %p50
      %p57 = scmp.eq.s32.totalorder %s15, 1
      %p58 = por %p56, %p57
      %p59 = scmp.ne.s32.totalorder %s51, %s54
      %p60 = scmp.eq.s32.totalorder %s15, 0
      %p61 = por %p59, %p60
      %p62 = scmp.ne.s32.totalorder %s51, %s54
      %p63 = scmp.eq.s32.totalorder %s20, 1
      %p64 = por %p62, %p63
      %p65 = scmp.ne.s32.totalorder %s54, %s55
      %p66 = scmp.eq.s32.totalorder %s20, 0
      %p67 = por %p65, %p66
      %p68 = scmp.ne.s32.totalorder %s54, %s55
      %p69 = scmp.eq.s32.totalorder %s21, 1
      %p70 = por %p68, %p69
      %p72 = scmp.ne.s32.totalorder %s55, %s71
      %p73 = scmp.eq.s32.totalorder %s21, 0
      %p74 = por %p72, %p73
      %s75 = ssub.s32 %s15, %s22
      %p76 = scmp.eq.s32.totalorder %s75, 0
      %s78 = sadd.s32 %s77, 1
      %s79 = scalar_select %p76, %s77, %s78
      %p82 = pneg %p76
      %p83 = scmp.eq.s32.totalorder %s15, 1
      %p84 = por %p82, %p83
      %p85 = scmp.ne.s32.totalorder %s77, %s80
      %p86 = scmp.eq.s32.totalorder %s15, 0
      %p87 = por %p85, %p86
      %p88 = scmp.ne.s32.totalorder %s77, %s80
      %p89 = scmp.eq.s32.totalorder %s20, 1
      %p90 = por %p88, %p89
      %p91 = scmp.ne.s32.totalorder %s80, %s81
      %p92 = scmp.eq.s32.totalorder %s20, 0
      %p93 = por %p91, %p92
      %p94 = scmp.ne.s32.totalorder %s80, %s81
      %p95 = scmp.eq.s32.totalorder %s21, 1
      %p96 = por %p94, %p95
      %p98 = scmp.ne.s32.totalorder %s81, %s97
      %p99 = scmp.eq.s32.totalorder %s21, 0
      %p100 = por %p98, %p99
      %s101 = ssub.s32 %s15, %s22
      %p102 = scmp.eq.s32.totalorder %s101, 0
      %s104 = sadd.s32 %s103, 1
      %s105 = scalar_select %p102, %s103, %s104
      %p108 = pneg %p102
      %p109 = scmp.eq.s32.totalorder %s15, 1
      %p110 = por %p108, %p109
      %p111 = scmp.ne.s32.totalorder %s103, %s106
      %p112 = scmp.eq.s32.totalorder %s15, 0
      %p113 = por %p111, %p112
      %p114 = scmp.ne.s32.totalorder %s103, %s106
      %p115 = scmp.eq.s32.totalorder %s20, 1
      %p116 = por %p114, %p115
      %p117 = scmp.ne.s32.totalorder %s106, %s107
      %p118 = scmp.eq.s32.totalorder %s20, 0
      %p119 = por %p117, %p118
      %p120 = scmp.ne.s32.totalorder %s106, %s107
      %p121 = scmp.eq.s32.totalorder %s21, 1
      %p122 = por %p120, %p121
      %p124 = scmp.ne.s32.totalorder %s107, %s123
      %p125 = scmp.eq.s32.totalorder %s21, 0
      %p126 = por %p124, %p125
      %s127 = ssub.s32 %s15, %s22
      %p128 = scmp.eq.s32.totalorder %s127, 0
      %s130 = sadd.s32 %s129, 1
      %s131 = scalar_select %p128, %s129, %s130
      %p134 = pneg %p128
      %p135 = scmp.eq.s32.totalorder %s15, 1
      %p136 = por %p134, %p135
      %p137 = scmp.ne.s32.totalorder %s129, %s132
      %p138 = scmp.eq.s32.totalorder %s15, 0
      %p139 = por %p137, %p138
      %p140 = scmp.ne.s32.totalorder %s129, %s132
      %p141 = scmp.eq.s32.totalorder %s20, 1
      %p142 = por %p140, %p141
      %p143 = scmp.ne.s32.totalorder %s132, %s133
      %p144 = scmp.eq.s32.totalorder %s20, 0
      %p145 = por %p143, %p144
      %p146 = scmp.ne.s32.totalorder %s132, %s133
      %p147 = scmp.eq.s32.totalorder %s21, 1
      %p148 = por %p146, %p147
      %p150 = scmp.ne.s32.totalorder %s133, %s149
      %p151 = scmp.eq.s32.totalorder %s21, 0
      %p152 = por %p150, %p151
      %s153 = ssub.s32 %s15, %s22
      %p154 = scmp.eq.s32.totalorder %s153, 0
      %s156 = sadd.s32 %s155, 1
      %s157 = scalar_select %p154, %s155, %s156
      %p160 = pneg %p154
      %p161 = scmp.eq.s32.totalorder %s15, 1
      %p162 = por %p160, %p161
      %p163 = scmp.ne.s32.totalorder %s155, %s158
      %p164 = scmp.eq.s32.totalorder %s15, 0
      %p165 = por %p163, %p164
      %p166 = scmp.ne.s32.totalorder %s155, %s158
      %p167 = scmp.eq.s32.totalorder %s20, 1
      %p168 = por %p166, %p167
      %p169 = scmp.ne.s32.totalorder %s158, %s159
      %p170 = scmp.eq.s32.totalorder %s20, 0
      %p171 = por %p169, %p170
      %p172 = scmp.ne.s32.totalorder %s158, %s159
      %p173 = scmp.eq.s32.totalorder %s21, 1
      %p174 = por %p172, %p173
      %p176 = scmp.ne.s32.totalorder %s159, %s175
      %p177 = scmp.eq.s32.totalorder %s21, 0
      %p178 = por %p176, %p177
      %p179 = scmp.le.s32.totalorder 1, %s15
      %p180 = scmp.lt.s32.totalorder %s15, 3
      %p181 = pnand %p179, %p180
      %p182 = pneg %p181
      // Predicated region
      $region9: #{transformer_forward.35} parent=5 // pred_check
        _
      $region10: #{transformer_forward.35} parent=5 // pred_check_branch
        %184 = sbr.rel (%p181) target = $region12
      $region11: #{transformer_forward.35} parent=5 // pred_region
        %s185 = ssub.s32 %s15, 1
      $region12: #{transformer_forward.35} parent=5 // pred_fallthru
        _
      %p186 = scmp.lt.s32.totalorder %s15, 2
      // Predicated region
      $region13: #{transformer_forward.35} parent=5 // pred_check
        %p187 = pneg %p186
      $region14: #{transformer_forward.35} parent=5 // pred_check_branch
        %189 = sbr.rel (%p187) target = $region16
      $region15: #{transformer_forward.35} parent=5 // pred_region
        // Predicated region
        $region17: #{transformer_forward.35} parent=15 // pred_check
          %p190 = pneg %p35
        $region18: #{transformer_forward.35} parent=15 // pred_check_branch
          %192 = sbr.rel (%p190) target = $region20
        $region19: #{transformer_forward.35} parent=15 // pred_region
          %p193 = scmp.lt.s32.totalorder %s15, 1
          %s194 = scalar_select %p193, %s15, 1
          %s195 = smul.addr %s194, 8
          %s196 = scalar_lea.vmem %s0, %s195
        $region20: #{transformer_forward.35} parent=15 // pred_fallthru
          _
        // Predicated region
        $region21: #{transformer_forward.35} parent=15 // pred_check
          %p197 = pneg %p61
        $region22: #{transformer_forward.35} parent=15 // pred_check_branch
          %199 = sbr.rel (%p197) target = $region24
        $region23: #{transformer_forward.35} parent=15 // pred_region
          %p200 = scmp.lt.s32.totalorder %s15, 1
          %s201 = scalar_select %p200, %s15, 1
          %s202 = smul.addr %s201, 8
          %s203 = scalar_lea.vmem %s1, %s202
        $region24: #{transformer_forward.35} parent=15 // pred_fallthru
          _
        // Predicated region
        $region25: #{transformer_forward.35} parent=15 // pred_check
          %p204 = pneg %p87
        $region26: #{transformer_forward.35} parent=15 // pred_check_branch
          %206 = sbr.rel (%p204) target = $region28
        $region27: #{transformer_forward.35} parent=15 // pred_region
          %p207 = scmp.lt.s32.totalorder %s15, 1
          %s208 = scalar_select %p207, %s15, 1
          %s209 = smul.addr %s208, 8
          %s210 = scalar_lea.vmem %s2, %s209
        $region28: #{transformer_forward.35} parent=15 // pred_fallthru
          _
        // Predicated region
        $region29: #{transformer_forward.35} parent=15 // pred_check
          %p211 = pneg %p113
        $region30: #{transformer_forward.35} parent=15 // pred_check_branch
          %213 = sbr.rel (%p211) target = $region32
        $region31: #{transformer_forward.35} parent=15 // pred_region
          %p214 = scmp.lt.s32.totalorder %s15, 1
          %s215 = scalar_select %p214, %s15, 1
          %s216 = scalar_lea.vmem %s3, %s215
        $region32: #{transformer_forward.35} parent=15 // pred_fallthru
          _
      $region16: #{transformer_forward.35} parent=5 // pred_fallthru
        _
      %p217 = scmp.le.s32.totalorder 1, %s15
      %p218 = scmp.lt.s32.totalorder %s15, 3
      %p219 = pnand %p217, %p218
      %p220 = pneg %p219
      // Predicated region
      $region33: #{transformer_forward.35} parent=5 // pred_check
        _
      $region34: #{transformer_forward.35} parent=5 // pred_check_branch
        %222 = sbr.rel (%p219) target = $region36
      $region35: #{transformer_forward.35} parent=5 // pred_region
        %s223 = ssub.s32 %s15, 1
        %p224 = scmp.lt.s32.totalorder %s20, 1
        %s225 = scalar_select %p224, %s20, 1
        %s226 = smul.addr %s225, 8
        %s227 = scalar_lea.vmem %s0, %s226
        %p228 = pneg %p41
        %p229 = pneg %p38
        %p230 = scmp.lt.s32.totalorder %s20, 1
        %s231 = scalar_select %p230, %s20, 1
        %s232 = smul.addr %s231, 8
        %s233 = scalar_lea.vmem %s1, %s232
        %p234 = pneg %p67
        %p235 = pneg %p64
        %p236 = scmp.lt.s32.totalorder %s20, 1
        %s237 = scalar_select %p236, %s20, 1
        %s238 = smul.addr %s237, 8
        %s239 = scalar_lea.vmem %s2, %s238
        %p240 = pneg %p93
        %p241 = pneg %p90
        %p242 = scmp.lt.s32.totalorder %s20, 1
        %s243 = scalar_select %p242, %s20, 1
        %s244 = scalar_lea.vmem %s3, %s243
        %p245 = pneg %p119
        %p246 = pneg %p116
        %p247 = pneg %p145
        %p248 = pneg %p142
        %p249 = scmp.lt.s32.totalorder %s20, 1
        %s250 = scalar_select %p249, %s20, 1
        %s251 = smul.addr %s250, 8
        %s252 = scalar_lea.vmem %s4, %s251
        %p253 = pneg %p171
        %p254 = pneg %p168
        %s255 = sand.u32 %s158, 1
        %s256 = scalar_lea.sflag [#allocation3], %s255
        %s257 = sand.u32 %s158, 1
        %s258 = smul.addr %s257, 32
        %s259 = scalar_lea.vmem [#allocation2], %s258
        %p260 = scmp.lt.s32.totalorder %s20, 1
        %s261 = scalar_select %p260, %s20, 1
        %s262 = smul.addr %s261, 8
        %s263 = scalar_lea.vmem %s0, %s262
        %p264 = scmp.lt.s32.totalorder %s20, 1
        %s265 = scalar_select %p264, %s20, 1
        %s266 = smul.addr %s265, 8
        %s267 = scalar_lea.vmem %s1, %s266
        %p268 = scmp.lt.s32.totalorder %s20, 1
        %s269 = scalar_select %p268, %s20, 1
        %s270 = smul.addr %s269, 8
        %s271 = scalar_lea.vmem %s2, %s270
        %p272 = scmp.lt.s32.totalorder %s20, 1
        %s273 = scalar_select %p272, %s20, 1
        %s274 = scalar_lea.vmem %s3, %s273
        %p275 = scmp.lt.s32.totalorder %s20, 1
        %s276 = scalar_select %p275, %s20, 1
        %s277 = smul.addr %s276, 8
        %s278 = scalar_lea.vmem %s4, %s277
        %v279 = vld [vmem:[%s263] sm:$0xff]
        %v280 = vld [vmem:[%s267] sm:$0xff]
        %v281 = vld [vmem:[%s271] sm:$0xff]
        %v282 = vld [vmem:[%s274] sm:$0x1]
        %v284 = vlaneseq
        %v285 = vshrl.u32 %v284, 7
        %v286 = vsub.s32 0, %v285
        %v287 = vrot.slane %v282, %v286
        %vm289 = vcmask 64512
        %v291 = vsel %vm289, %v279, 0
        %v294 = vsel %vm289, %v280, 0
        %296 = vmatprep.subr.mxu0 0.0
        %297 = vmatpush1.xpose.msra.mxu0 0.0
        %298 = vmatprep.subr.mxu0 0.0
        %299 = vmatpush1.xpose.msra.mxu0 0.0
        %300 = vmatprep.subr.mxu0 0.0
        %301 = vmatpush1.xpose.msra.mxu0 0.0
        %302 = vmatprep.subr.mxu0 0.0
        %303 = vmatpush1.xpose.msra.mxu0 0.0
        %304 = vmatprep.subr.mxu0 0.0
        %305 = vmatpush1.xpose.msra.mxu0 0.0
        %306 = vmatprep.subr.mxu0 0.0
        %307 = vmatpush1.xpose.msra.mxu0 0.0
        %308 = vmatprep.subr.mxu0 0.0
        %309 = vmatpush1.xpose.msra.mxu0 0.0
        %310 = vmatprep.subr.mxu0 0.0
        %311 = vmatpush1.xpose.msra.mxu0 0.0
        %312 = vmatprep.subr.mxu0 0.0
        %313 = vmatpush1.xpose.msra.mxu0 0.0
        %314 = vmatprep.subr.mxu0 0.0
        %315 = vmatpush1.xpose.msra.mxu0 0.0
        %316 = vmatprep.subr.mxu0 0.0
        %317 = vmatpush1.xpose.msra.mxu0 0.0
        %318 = vmatprep.subr.mxu0 0.0
        %319 = vmatpush1.xpose.msra.mxu0 0.0
        %320 = vmatprep.subr.mxu0 0.0
        %321 = vmatpush1.xpose.msra.mxu0 0.0
        %322 = vmatprep.subr.mxu0 0.0
        %323 = vmatpush1.xpose.msra.mxu0 0.0
        %324 = vmatprep.subr.mxu0 0.0
        %325 = vmatpush1.xpose.msra.mxu0 0.0
        %326 = vmatprep.subr.mxu0 0.0
        %327 = vmatpush1.xpose.msra.mxu0 %v294
        %328 = vmatprep.subr.mxu0 0.0
        %329 = vmatpush2.xpose.msra.mxu0 0.0
        %330 = vmatprep.subr.mxu0 0.0
        %331 = vmatpush2.xpose.msra.mxu0 0.0
        %332 = vmatprep.subr.mxu0 0.0
        %333 = vmatpush2.xpose.msra.mxu0 0.0
        %334 = vmatprep.subr.mxu0 0.0
        %335 = vmatpush2.xpose.msra.mxu0 0.0
        %336 = vmatprep.subr.mxu0 0.0
        %337 = vmatpush2.xpose.msra.mxu0 0.0
        %338 = vmatprep.subr.mxu0 0.0
        %339 = vmatpush2.xpose.msra.mxu0 0.0
        %340 = vmatprep.subr.mxu0 0.0
        %341 = vmatpush2.xpose.msra.mxu0 0.0
        %342 = vmatprep.subr.mxu0 0.0
        %343 = vmatpush2.xpose.msra.mxu0 0.0
        %344 = vmatprep.subr.mxu0 0.0
        %345 = vmatpush2.xpose.msra.mxu0 0.0
        %346 = vmatprep.subr.mxu0 0.0
        %347 = vmatpush2.xpose.msra.mxu0 0.0
        %348 = vmatprep.subr.mxu0 0.0
        %349 = vmatpush2.xpose.msra.mxu0 0.0
        %350 = vmatprep.subr.mxu0 0.0
        %351 = vmatpush2.xpose.msra.mxu0 0.0
        %352 = vmatprep.subr.mxu0 0.0
        %353 = vmatpush2.xpose.msra.mxu0 0.0
        %354 = vmatprep.subr.mxu0 0.0
        %355 = vmatpush2.xpose.msra.mxu0 0.0
        %356 = vmatprep.subr.mxu0 0.0
        %357 = vmatpush2.xpose.msra.mxu0 0.0
        %358 = vmatprep.subr.mxu0 0.0
        %359 = vmatpush2.xpose.msra.mxu0 0.0
        %360 = vmatprep.mubr.f32.mxu0 0.0
        %361 = vmatmul.mubr.f32.gmra.mxu0 %v291
        %v362 = vpop.f32.mrf.mxu0
        %v363 = vadd.f32 0.0, %v362
        %v364 = vpop.f32.mrf.mxu0
        %365 = vdwg.mxu0
        %v366 = vmul.f32 %v363, 0.35355338
        %v367 = vadd.f32 %v366, %v287
        %v368 = vsel %vm289, %v367, -inf
        %369 = vmax.xlane.f32.xlu0 %v368
        %v370 = vpop.xlane.xlu0 %369
        %v371 = vsub.f32 %v367, %v370
        %v372 = vmul.f32 %v371, 1.442695
        %v373 = vpow.pop %v372
        %v374 = vsel %vm289, %v373, 0.0
        %375 = vadd.xlane.f32.xlu0 %v374
        %v376 = vpop.xlane.xlu0 %375
        %v377 = vrcp.pop %v376
        %v378 = vmul.f32 %v373, %v377
        %379 = vst.msk [vmem:[%s259] sm:$0xff] %vm289, %v378
        %v381 = vsel %vm289, %v378, 0
        %383 = vmatprep.subr.mxu0 0.0
        %384 = vmatpush1.msra.mxu0 0.0
        %385 = vmatprep.subr.mxu0 0.0
        %386 = vmatpush1.msra.mxu0 0.0
        %387 = vmatprep.subr.mxu0 0.0
        %388 = vmatpush1.msra.mxu0 0.0
        %389 = vmatprep.subr.mxu0 0.0
        %390 = vmatpush1.msra.mxu0 0.0
        %391 = vmatprep.subr.mxu0 0.0
        %392 = vmatpush1.msra.mxu0 0.0
        %393 = vmatprep.subr.mxu0 0.0
        %394 = vmatpush1.msra.mxu0 0.0
        %395 = vmatprep.subr.mxu0 0.0
        %396 = vmatpush1.msra.mxu0 0.0
        %397 = vmatprep.subr.mxu0 0.0
        %398 = vmatpush1.msra.mxu0 0.0
        %399 = vmatprep.subr.mxu0 0.0
        %400 = vmatpush1.msra.mxu0 0.0
        %401 = vmatprep.subr.mxu0 0.0
        %402 = vmatpush1.msra.mxu0 0.0
        %403 = vmatprep.subr.mxu0 0.0
        %404 = vmatpush1.msra.mxu0 0.0
        %405 = vmatprep.subr.mxu0 0.0
        %406 = vmatpush1.msra.mxu0 0.0
        %407 = vmatprep.subr.mxu0 0.0
        %408 = vmatpush1.msra.mxu0 0.0
        %409 = vmatprep.subr.mxu0 0.0
        %410 = vmatpush1.msra.mxu0 0.0
        %411 = vmatprep.subr.mxu0 0.0
        %412 = vmatpush1.msra.mxu0 0.0
        %413 = vmatprep.subr.mxu0 0.0
        %414 = vmatpush1.msra.mxu0 %v281
        %415 = vmatprep.subr.mxu0 0.0
        %416 = vmatpush2.msra.mxu0 0.0
        %417 = vmatprep.subr.mxu0 0.0
        %418 = vmatpush2.msra.mxu0 0.0
        %419 = vmatprep.subr.mxu0 0.0
        %420 = vmatpush2.msra.mxu0 0.0
        %421 = vmatprep.subr.mxu0 0.0
        %422 = vmatpush2.msra.mxu0 0.0
        %423 = vmatprep.subr.mxu0 0.0
        %424 = vmatpush2.msra.mxu0 0.0
        %425 = vmatprep.subr.mxu0 0.0
        %426 = vmatpush2.msra.mxu0 0.0
        %427 = vmatprep.subr.mxu0 0.0
        %428 = vmatpush2.msra.mxu0 0.0
        %429 = vmatprep.subr.mxu0 0.0
        %430 = vmatpush2.msra.mxu0 0.0
        %431 = vmatprep.subr.mxu0 0.0
        %432 = vmatpush2.msra.mxu0 0.0
        %433 = vmatprep.subr.mxu0 0.0
        %434 = vmatpush2.msra.mxu0 0.0
        %435 = vmatprep.subr.mxu0 0.0
        %436 = vmatpush2.msra.mxu0 0.0
        %437 = vmatprep.subr.mxu0 0.0
        %438 = vmatpush2.msra.mxu0 0.0
        %439 = vmatprep.subr.mxu0 0.0
        %440 = vmatpush2.msra.mxu0 0.0
        %441 = vmatprep.subr.mxu0 0.0
        %442 = vmatpush2.msra.mxu0 0.0
        %443 = vmatprep.subr.mxu0 0.0
        %444 = vmatpush2.msra.mxu0 0.0
        %445 = vmatprep.subr.mxu0 0.0
        %446 = vmatpush2.msra.mxu0 0.0
        %447 = vmatprep.mubr.f32.mxu0 0.0
        %448 = vmatmul.mubr.f32.gmra.mxu0 %v381
        %v449 = vpop.f32.mrf.mxu0
        %v450 = vadd.f32 0.0, %v449
        %v451 = vpop.f32.mrf.mxu0
        %452 = vdwg.mxu0
        %453 = vrot.lane.b32.xlu0 %v279, 120
        %v454 = vpop.permute.xlu0 %453
        %455 = vrot.lane.b32.xlu0 %v280, 120
        %v456 = vpop.permute.xlu0 %455
        %v457 = vsel %vm289, %v454, 0
        %v459 = vsel %vm289, %v456, 0
        %461 = vmatprep.subr.mxu0 0.0
        %462 = vmatpush1.xpose.msra.mxu0 0.0
        %463 = vmatprep.subr.mxu0 0.0
        %464 = vmatpush1.xpose.msra.mxu0 0.0
        %465 = vmatprep.subr.mxu0 0.0
        %466 = vmatpush1.xpose.msra.mxu0 0.0
        %467 = vmatprep.subr.mxu0 0.0
        %468 = vmatpush1.xpose.msra.mxu0 0.0
        %469 = vmatprep.subr.mxu0 0.0
        %470 = vmatpush1.xpose.msra.mxu0 0.0
        %471 = vmatprep.subr.mxu0 0.0
        %472 = vmatpush1.xpose.msra.mxu0 0.0
        %473 = vmatprep.subr.mxu0 0.0
        %474 = vmatpush1.xpose.msra.mxu0 0.0
        %475 = vmatprep.subr.mxu0 0.0
        %476 = vmatpush1.xpose.msra.mxu0 0.0
        %477 = vmatprep.subr.mxu0 0.0
        %478 = vmatpush1.xpose.msra.mxu0 0.0
        %479 = vmatprep.subr.mxu0 0.0
        %480 = vmatpush1.xpose.msra.mxu0 0.0
        %481 = vmatprep.subr.mxu0 0.0
        %482 = vmatpush1.xpose.msra.mxu0 0.0
        %483 = vmatprep.subr.mxu0 0.0
        %484 = vmatpush1.xpose.msra.mxu0 0.0
        %485 = vmatprep.subr.mxu0 0.0
        %486 = vmatpush1.xpose.msra.mxu0 0.0
        %487 = vmatprep.subr.mxu0 0.0
        %488 = vmatpush1.xpose.msra.mxu0 0.0
        %489 = vmatprep.subr.mxu0 0.0
        %490 = vmatpush1.xpose.msra.mxu0 0.0
        %491 = vmatprep.subr.mxu0 0.0
        %492 = vmatpush1.xpose.msra.mxu0 %v459
        %493 = vmatprep.subr.mxu0 0.0
        %494 = vmatpush2.xpose.msra.mxu0 0.0
        %495 = vmatprep.subr.mxu0 0.0
        %496 = vmatpush2.xpose.msra.mxu0 0.0
        %497 = vmatprep.subr.mxu0 0.0
        %498 = vmatpush2.xpose.msra.mxu0 0.0
        %499 = vmatprep.subr.mxu0 0.0
        %500 = vmatpush2.xpose.msra.mxu0 0.0
        %501 = vmatprep.subr.mxu0 0.0
        %502 = vmatpush2.xpose.msra.mxu0 0.0
        %503 = vmatprep.subr.mxu0 0.0
        %504 = vmatpush2.xpose.msra.mxu0 0.0
        %505 = vmatprep.subr.mxu0 0.0
        %506 = vmatpush2.xpose.msra.mxu0 0.0
        %507 = vmatprep.subr.mxu0 0.0
        %508 = vmatpush2.xpose.msra.mxu0 0.0
        %509 = vmatprep.subr.mxu0 0.0
        %510 = vmatpush2.xpose.msra.mxu0 0.0
        %511 = vmatprep.subr.mxu0 0.0
        %512 = vmatpush2.xpose.msra.mxu0 0.0
        %513 = vmatprep.subr.mxu0 0.0
        %514 = vmatpush2.xpose.msra.mxu0 0.0
        %515 = vmatprep.subr.mxu0 0.0
        %516 = vmatpush2.xpose.msra.mxu0 0.0
        %517 = vmatprep.subr.mxu0 0.0
        %518 = vmatpush2.xpose.msra.mxu0 0.0
        %519 = vmatprep.subr.mxu0 0.0
        %520 = vmatpush2.xpose.msra.mxu0 0.0
        %521 = vmatprep.subr.mxu0 0.0
        %522 = vmatpush2.xpose.msra.mxu0 0.0
        %523 = vmatprep.subr.mxu0 0.0
        %524 = vmatpush2.xpose.msra.mxu0 0.0
        %525 = vmatprep.mubr.f32.mxu0 0.0
        %526 = vmatmul.mubr.f32.gmra.mxu0 %v457
        %v527 = vpop.f32.mrf.mxu0
        %v528 = vadd.f32 0.0, %v527
        %v529 = vpop.f32.mrf.mxu0
        %530 = vdwg.mxu0
        %v531 = vmul.f32 %v528, 0.35355338
        %v532 = vadd.f32 %v531, %v287
        %v533 = vsel %vm289, %v532, -inf
        %534 = vmax.xlane.f32.xlu0 %v533
        %v535 = vpop.xlane.xlu0 %534
        %v536 = vsub.f32 %v532, %v535
        %v537 = vmul.f32 %v536, 1.442695
        %v538 = vpow.pop %v537
        %v539 = vsel %vm289, %v538, 0.0
        %540 = vadd.xlane.f32.xlu0 %v539
        %v541 = vpop.xlane.xlu0 %540
        %v542 = vrcp.pop %v541
        %v543 = vmul.f32 %v538, %v542
        %s544 = scalar_lea.vmem %s259, 8 [#allocation2]
        %545 = vst.msk [vmem:[%s544] sm:$0xff] %vm289, %v543
        %547 = vrot.lane.b32.xlu0 %v281, 120
        %v548 = vpop.permute.xlu0 %547
        %v551 = vsel %vm289, %v543, 0
        %553 = vmatprep.subr.mxu0 0.0
        %554 = vmatpush1.msra.mxu0 0.0
        %555 = vmatprep.subr.mxu0 0.0
        %556 = vmatpush1.msra.mxu0 0.0
        %557 = vmatprep.subr.mxu0 0.0
        %558 = vmatpush1.msra.mxu0 0.0
        %559 = vmatprep.subr.mxu0 0.0
        %560 = vmatpush1.msra.mxu0 0.0
        %561 = vmatprep.subr.mxu0 0.0
        %562 = vmatpush1.msra.mxu0 0.0
        %563 = vmatprep.subr.mxu0 0.0
        %564 = vmatpush1.msra.mxu0 0.0
        %565 = vmatprep.subr.mxu0 0.0
        %566 = vmatpush1.msra.mxu0 0.0
        %567 = vmatprep.subr.mxu0 0.0
        %568 = vmatpush1.msra.mxu0 0.0
        %569 = vmatprep.subr.mxu0 0.0
        %570 = vmatpush1.msra.mxu0 0.0
        %571 = vmatprep.subr.mxu0 0.0
        %572 = vmatpush1.msra.mxu0 0.0
        %573 = vmatprep.subr.mxu0 0.0
        %574 = vmatpush1.msra.mxu0 0.0
        %575 = vmatprep.subr.mxu0 0.0
        %576 = vmatpush1.msra.mxu0 0.0
        %577 = vmatprep.subr.mxu0 0.0
        %578 = vmatpush1.msra.mxu0 0.0
        %579 = vmatprep.subr.mxu0 0.0
        %580 = vmatpush1.msra.mxu0 0.0
        %581 = vmatprep.subr.mxu0 0.0
        %582 = vmatpush1.msra.mxu0 0.0
        %583 = vmatprep.subr.mxu0 0.0
        %584 = vmatpush1.msra.mxu0 %v548
        %585 = vmatprep.subr.mxu0 0.0
        %586 = vmatpush2.msra.mxu0 0.0
        %587 = vmatprep.subr.mxu0 0.0
        %588 = vmatpush2.msra.mxu0 0.0
        %589 = vmatprep.subr.mxu0 0.0
        %590 = vmatpush2.msra.mxu0 0.0
        %591 = vmatprep.subr.mxu0 0.0
        %592 = vmatpush2.msra.mxu0 0.0
        %593 = vmatprep.subr.mxu0 0.0
        %594 = vmatpush2.msra.mxu0 0.0
        %595 = vmatprep.subr.mxu0 0.0
        %596 = vmatpush2.msra.mxu0 0.0
        %597 = vmatprep.subr.mxu0 0.0
        %598 = vmatpush2.msra.mxu0 0.0
        %599 = vmatprep.subr.mxu0 0.0
        %600 = vmatpush2.msra.mxu0 0.0
        %601 = vmatprep.subr.mxu0 0.0
        %602 = vmatpush2.msra.mxu0 0.0
        %603 = vmatprep.subr.mxu0 0.0
        %604 = vmatpush2.msra.mxu0 0.0
        %605 = vmatprep.subr.mxu0 0.0
        %606 = vmatpush2.msra.mxu0 0.0
        %607 = vmatprep.subr.mxu0 0.0
        %608 = vmatpush2.msra.mxu0 0.0
        %609 = vmatprep.subr.mxu0 0.0
        %610 = vmatpush2.msra.mxu0 0.0
        %611 = vmatprep.subr.mxu0 0.0
        %612 = vmatpush2.msra.mxu0 0.0
        %613 = vmatprep.subr.mxu0 0.0
        %614 = vmatpush2.msra.mxu0 0.0
        %615 = vmatprep.subr.mxu0 0.0
        %616 = vmatpush2.msra.mxu0 0.0
        %617 = vmatprep.mubr.f32.mxu0 0.0
        %618 = vmatmul.mubr.f32.gmra.mxu0 %v551
        %v619 = vpop.f32.mrf.mxu0
        %v620 = vadd.f32 0.0, %v619
        %v621 = vpop.f32.mrf.mxu0
        %622 = vdwg.mxu0
        %623 = vrot.lane.b32.xlu0 %v279, 112
        %v624 = vpop.permute.xlu0 %623
        %625 = vrot.lane.b32.xlu0 %v280, 112
        %v626 = vpop.permute.xlu0 %625
        %v627 = vsel %vm289, %v624, 0
        %v629 = vsel %vm289, %v626, 0
        %631 = vmatprep.subr.mxu0 0.0
        %632 = vmatpush1.xpose.msra.mxu0 0.0
        %633 = vmatprep.subr.mxu0 0.0
        %634 = vmatpush1.xpose.msra.mxu0 0.0
        %635 = vmatprep.subr.mxu0 0.0
        %636 = vmatpush1.xpose.msra.mxu0 0.0
        %637 = vmatprep.subr.mxu0 0.0
        %638 = vmatpush1.xpose.msra.mxu0 0.0
        %639 = vmatprep.subr.mxu0 0.0
        %640 = vmatpush1.xpose.msra.mxu0 0.0
        %641 = vmatprep.subr.mxu0 0.0
        %642 = vmatpush1.xpose.msra.mxu0 0.0
        %643 = vmatprep.subr.mxu0 0.0
        %644 = vmatpush1.xpose.msra.mxu0 0.0
        %645 = vmatprep.subr.mxu0 0.0
        %646 = vmatpush1.xpose.msra.mxu0 0.0
        %647 = vmatprep.subr.mxu0 0.0
        %648 = vmatpush1.xpose.msra.mxu0 0.0
        %649 = vmatprep.subr.mxu0 0.0
        %650 = vmatpush1.xpose.msra.mxu0 0.0
        %651 = vmatprep.subr.mxu0 0.0
        %652 = vmatpush1.xpose.msra.mxu0 0.0
        %653 = vmatprep.subr.mxu0 0.0
        %654 = vmatpush1.xpose.msra.mxu0 0.0
        %655 = vmatprep.subr.mxu0 0.0
        %656 = vmatpush1.xpose.msra.mxu0 0.0
        %657 = vmatprep.subr.mxu0 0.0
        %658 = vmatpush1.xpose.msra.mxu0 0.0
        %659 = vmatprep.subr.mxu0 0.0
        %660 = vmatpush1.xpose.msra.mxu0 0.0
        %661 = vmatprep.subr.mxu0 0.0
        %662 = vmatpush1.xpose.msra.mxu0 %v629
        %663 = vmatprep.subr.mxu0 0.0
        %664 = vmatpush2.xpose.msra.mxu0 0.0
        %665 = vmatprep.subr.mxu0 0.0
        %666 = vmatpush2.xpose.msra.mxu0 0.0
        %667 = vmatprep.subr.mxu0 0.0
        %668 = vmatpush2.xpose.msra.mxu0 0.0
        %669 = vmatprep.subr.mxu0 0.0
        %670 = vmatpush2.xpose.msra.mxu0 0.0
        %671 = vmatprep.subr.mxu0 0.0
        %672 = vmatpush2.xpose.msra.mxu0 0.0
        %673 = vmatprep.subr.mxu0 0.0
        %674 = vmatpush2.xpose.msra.mxu0 0.0
        %675 = vmatprep.subr.mxu0 0.0
        %676 = vmatpush2.xpose.msra.mxu0 0.0
        %677 = vmatprep.subr.mxu0 0.0
        %678 = vmatpush2.xpose.msra.mxu0 0.0
        %679 = vmatprep.subr.mxu0 0.0
        %680 = vmatpush2.xpose.msra.mxu0 0.0
        %681 = vmatprep.subr.mxu0 0.0
        %682 = vmatpush2.xpose.msra.mxu0 0.0
        %683 = vmatprep.subr.mxu0 0.0
        %684 = vmatpush2.xpose.msra.mxu0 0.0
        %685 = vmatprep.subr.mxu0 0.0
        %686 = vmatpush2.xpose.msra.mxu0 0.0
        %687 = vmatprep.subr.mxu0 0.0
        %688 = vmatpush2.xpose.msra.mxu0 0.0
        %689 = vmatprep.subr.mxu0 0.0
        %690 = vmatpush2.xpose.msra.mxu0 0.0
        %691 = vmatprep.subr.mxu0 0.0
        %692 = vmatpush2.xpose.msra.mxu0 0.0
        %693 = vmatprep.subr.mxu0 0.0
        %694 = vmatpush2.xpose.msra.mxu0 0.0
        %695 = vmatprep.mubr.f32.mxu0 0.0
        %696 = vmatmul.mubr.f32.gmra.mxu0 %v627
        %v697 = vpop.f32.mrf.mxu0
        %v698 = vadd.f32 0.0, %v697
        %v699 = vpop.f32.mrf.mxu0
        %700 = vdwg.mxu0
        %v701 = vmul.f32 %v698, 0.35355338
        %v702 = vadd.f32 %v701, %v287
        %v703 = vsel %vm289, %v702, -inf
        %704 = vmax.xlane.f32.xlu0 %v703
        %v705 = vpop.xlane.xlu0 %704
        %v706 = vsub.f32 %v702, %v705
        %v707 = vmul.f32 %v706, 1.442695
        %v708 = vpow.pop %v707
        %v709 = vsel %vm289, %v708, 0.0
        %710 = vadd.xlane.f32.xlu0 %v709
        %v711 = vpop.xlane.xlu0 %710
        %v712 = vrcp.pop %v711
        %v713 = vmul.f32 %v708, %v712
        %s714 = scalar_lea.vmem %s259, 16 [#allocation2]
        %715 = vst.msk [vmem:[%s714] sm:$0xff] %vm289, %v713
        %716 = vrot.lane.b32.xlu0 %v281, 112
        %v717 = vpop.permute.xlu0 %716
        %v720 = vsel %vm289, %v713, 0
        %722 = vmatprep.subr.mxu0 0.0
        %723 = vmatpush1.msra.mxu0 0.0
        %724 = vmatprep.subr.mxu0 0.0
        %725 = vmatpush1.msra.mxu0 0.0
        %726 = vmatprep.subr.mxu0 0.0
        %727 = vmatpush1.msra.mxu0 0.0
        %728 = vmatprep.subr.mxu0 0.0
        %729 = vmatpush1.msra.mxu0 0.0
        %730 = vmatprep.subr.mxu0 0.0
        %731 = vmatpush1.msra.mxu0 0.0
        %732 = vmatprep.subr.mxu0 0.0
        %733 = vmatpush1.msra.mxu0 0.0
        %734 = vmatprep.subr.mxu0 0.0
        %735 = vmatpush1.msra.mxu0 0.0
        %736 = vmatprep.subr.mxu0 0.0
        %737 = vmatpush1.msra.mxu0 0.0
        %738 = vmatprep.subr.mxu0 0.0
        %739 = vmatpush1.msra.mxu0 0.0
        %740 = vmatprep.subr.mxu0 0.0
        %741 = vmatpush1.msra.mxu0 0.0
        %742 = vmatprep.subr.mxu0 0.0
        %743 = vmatpush1.msra.mxu0 0.0
        %744 = vmatprep.subr.mxu0 0.0
        %745 = vmatpush1.msra.mxu0 0.0
        %746 = vmatprep.subr.mxu0 0.0
        %747 = vmatpush1.msra.mxu0 0.0
        %748 = vmatprep.subr.mxu0 0.0
        %749 = vmatpush1.msra.mxu0 0.0
        %750 = vmatprep.subr.mxu0 0.0
        %751 = vmatpush1.msra.mxu0 0.0
        %752 = vmatprep.subr.mxu0 0.0
        %753 = vmatpush1.msra.mxu0 %v717
        %754 = vmatprep.subr.mxu0 0.0
        %755 = vmatpush2.msra.mxu0 0.0
        %756 = vmatprep.subr.mxu0 0.0
        %757 = vmatpush2.msra.mxu0 0.0
        %758 = vmatprep.subr.mxu0 0.0
        %759 = vmatpush2.msra.mxu0 0.0
        %760 = vmatprep.subr.mxu0 0.0
        %761 = vmatpush2.msra.mxu0 0.0
        %762 = vmatprep.subr.mxu0 0.0
        %763 = vmatpush2.msra.mxu0 0.0
        %764 = vmatprep.subr.mxu0 0.0
        %765 = vmatpush2.msra.mxu0 0.0
        %766 = vmatprep.subr.mxu0 0.0
        %767 = vmatpush2.msra.mxu0 0.0
        %768 = vmatprep.subr.mxu0 0.0
        %769 = vmatpush2.msra.mxu0 0.0
        %770 = vmatprep.subr.mxu0 0.0
        %771 = vmatpush2.msra.mxu0 0.0
        %772 = vmatprep.subr.mxu0 0.0
        %773 = vmatpush2.msra.mxu0 0.0
        %774 = vmatprep.subr.mxu0 0.0
        %775 = vmatpush2.msra.mxu0 0.0
        %776 = vmatprep.subr.mxu0 0.0
        %777 = vmatpush2.msra.mxu0 0.0
        %778 = vmatprep.subr.mxu0 0.0
        %779 = vmatpush2.msra.mxu0 0.0
        %780 = vmatprep.subr.mxu0 0.0
        %781 = vmatpush2.msra.mxu0 0.0
        %782 = vmatprep.subr.mxu0 0.0
        %783 = vmatpush2.msra.mxu0 0.0
        %784 = vmatprep.subr.mxu0 0.0
        %785 = vmatpush2.msra.mxu0 0.0
        %786 = vmatprep.mubr.f32.mxu0 0.0
        %787 = vmatmul.mubr.f32.gmra.mxu0 %v720
        %v788 = vpop.f32.mrf.mxu0
        %v789 = vadd.f32 0.0, %v788
        %v790 = vpop.f32.mrf.mxu0
        %791 = vdwg.mxu0
        %792 = vrot.lane.b32.xlu0 %v279, 104
        %v793 = vpop.permute.xlu0 %792
        %794 = vrot.lane.b32.xlu0 %v280, 104
        %v795 = vpop.permute.xlu0 %794
        %v796 = vsel %vm289, %v793, 0
        %v798 = vsel %vm289, %v795, 0
        %800 = vmatprep.subr.mxu0 0.0
        %801 = vmatpush1.xpose.msra.mxu0 0.0
        %802 = vmatprep.subr.mxu0 0.0
        %803 = vmatpush1.xpose.msra.mxu0 0.0
        %804 = vmatprep.subr.mxu0 0.0
        %805 = vmatpush1.xpose.msra.mxu0 0.0
        %806 = vmatprep.subr.mxu0 0.0
        %807 = vmatpush1.xpose.msra.mxu0 0.0
        %808 = vmatprep.subr.mxu0 0.0
        %809 = vmatpush1.xpose.msra.mxu0 0.0
        %810 = vmatprep.subr.mxu0 0.0
        %811 = vmatpush1.xpose.msra.mxu0 0.0
        %812 = vmatprep.subr.mxu0 0.0
        %813 = vmatpush1.xpose.msra.mxu0 0.0
        %814 = vmatprep.subr.mxu0 0.0
        %815 = vmatpush1.xpose.msra.mxu0 0.0
        %816 = vmatprep.subr.mxu0 0.0
        %817 = vmatpush1.xpose.msra.mxu0 0.0
        %818 = vmatprep.subr.mxu0 0.0
        %819 = vmatpush1.xpose.msra.mxu0 0.0
        %820 = vmatprep.subr.mxu0 0.0
        %821 = vmatpush1.xpose.msra.mxu0 0.0
        %822 = vmatprep.subr.mxu0 0.0
        %823 = vmatpush1.xpose.msra.mxu0 0.0
        %824 = vmatprep.subr.mxu0 0.0
        %825 = vmatpush1.xpose.msra.mxu0 0.0
        %826 = vmatprep.subr.mxu0 0.0
        %827 = vmatpush1.xpose.msra.mxu0 0.0
        %828 = vmatprep.subr.mxu0 0.0
        %829 = vmatpush1.xpose.msra.mxu0 0.0
        %830 = vmatprep.subr.mxu0 0.0
        %831 = vmatpush1.xpose.msra.mxu0 %v798
        %832 = vmatprep.subr.mxu0 0.0
        %833 = vmatpush2.xpose.msra.mxu0 0.0
        %834 = vmatprep.subr.mxu0 0.0
        %835 = vmatpush2.xpose.msra.mxu0 0.0
        %836 = vmatprep.subr.mxu0 0.0
        %837 = vmatpush2.xpose.msra.mxu0 0.0
        %838 = vmatprep.subr.mxu0 0.0
        %839 = vmatpush2.xpose.msra.mxu0 0.0
        %840 = vmatprep.subr.mxu0 0.0
        %841 = vmatpush2.xpose.msra.mxu0 0.0
        %842 = vmatprep.subr.mxu0 0.0
        %843 = vmatpush2.xpose.msra.mxu0 0.0
        %844 = vmatprep.subr.mxu0 0.0
        %845 = vmatpush2.xpose.msra.mxu0 0.0
        %846 = vmatprep.subr.mxu0 0.0
        %847 = vmatpush2.xpose.msra.mxu0 0.0
        %848 = vmatprep.subr.mxu0 0.0
        %849 = vmatpush2.xpose.msra.mxu0 0.0
        %850 = vmatprep.subr.mxu0 0.0
        %851 = vmatpush2.xpose.msra.mxu0 0.0
        %852 = vmatprep.subr.mxu0 0.0
        %853 = vmatpush2.xpose.msra.mxu0 0.0
        %854 = vmatprep.subr.mxu0 0.0
        %855 = vmatpush2.xpose.msra.mxu0 0.0
        %856 = vmatprep.subr.mxu0 0.0
        %857 = vmatpush2.xpose.msra.mxu0 0.0
        %858 = vmatprep.subr.mxu0 0.0
        %859 = vmatpush2.xpose.msra.mxu0 0.0
        %860 = vmatprep.subr.mxu0 0.0
        %861 = vmatpush2.xpose.msra.mxu0 0.0
        %862 = vmatprep.subr.mxu0 0.0
        %863 = vmatpush2.xpose.msra.mxu0 0.0
        %864 = vmatprep.mubr.f32.mxu0 0.0
        %865 = vmatmul.mubr.f32.gmra.mxu0 %v796
        %v866 = vpop.f32.mrf.mxu0
        %v867 = vadd.f32 0.0, %v866
        %v868 = vpop.f32.mrf.mxu0
        %869 = vdwg.mxu0
        %v870 = vmul.f32 %v867, 0.35355338
        %v871 = vadd.f32 %v870, %v287
        %v872 = vsel %vm289, %v871, -inf
        %873 = vmax.xlane.f32.xlu0 %v872
        %v874 = vpop.xlane.xlu0 %873
        %v875 = vsub.f32 %v871, %v874
        %v876 = vmul.f32 %v875, 1.442695
        %v877 = vpow.pop %v876
        %v878 = vsel %vm289, %v877, 0.0
        %879 = vadd.xlane.f32.xlu0 %v878
        %v880 = vpop.xlane.xlu0 %879
        %v881 = vrcp.pop %v880
        %v882 = vmul.f32 %v877, %v881
        %s883 = scalar_lea.vmem %s259, 24 [#allocation2]
        %884 = vst.msk [vmem:[%s883] sm:$0xff] %vm289, %v882
        %885 = vrot.lane.b32.xlu0 %v281, 104
        %v886 = vpop.permute.xlu0 %885
        %v889 = vsel %vm289, %v882, 0
        %891 = vmatprep.subr.mxu0 0.0
        %892 = vmatpush1.msra.mxu0 0.0
        %893 = vmatprep.subr.mxu0 0.0
        %894 = vmatpush1.msra.mxu0 0.0
        %895 = vmatprep.subr.mxu0 0.0
        %896 = vmatpush1.msra.mxu0 0.0
        %897 = vmatprep.subr.mxu0 0.0
        %898 = vmatpush1.msra.mxu0 0.0
        %899 = vmatprep.subr.mxu0 0.0
        %900 = vmatpush1.msra.mxu0 0.0
        %901 = vmatprep.subr.mxu0 0.0
        %902 = vmatpush1.msra.mxu0 0.0
        %903 = vmatprep.subr.mxu0 0.0
        %904 = vmatpush1.msra.mxu0 0.0
        %905 = vmatprep.subr.mxu0 0.0
        %906 = vmatpush1.msra.mxu0 0.0
        %907 = vmatprep.subr.mxu0 0.0
        %908 = vmatpush1.msra.mxu0 0.0
        %909 = vmatprep.subr.mxu0 0.0
        %910 = vmatpush1.msra.mxu0 0.0
        %911 = vmatprep.subr.mxu0 0.0
        %912 = vmatpush1.msra.mxu0 0.0
        %913 = vmatprep.subr.mxu0 0.0
        %914 = vmatpush1.msra.mxu0 0.0
        %915 = vmatprep.subr.mxu0 0.0
        %916 = vmatpush1.msra.mxu0 0.0
        %917 = vmatprep.subr.mxu0 0.0
        %918 = vmatpush1.msra.mxu0 0.0
        %919 = vmatprep.subr.mxu0 0.0
        %920 = vmatpush1.msra.mxu0 0.0
        %921 = vmatprep.subr.mxu0 0.0
        %922 = vmatpush1.msra.mxu0 %v886
        %923 = vmatprep.subr.mxu0 0.0
        %924 = vmatpush2.msra.mxu0 0.0
        %925 = vmatprep.subr.mxu0 0.0
        %926 = vmatpush2.msra.mxu0 0.0
        %927 = vmatprep.subr.mxu0 0.0
        %928 = vmatpush2.msra.mxu0 0.0
        %929 = vmatprep.subr.mxu0 0.0
        %930 = vmatpush2.msra.mxu0 0.0
        %931 = vmatprep.subr.mxu0 0.0
        %932 = vmatpush2.msra.mxu0 0.0
        %933 = vmatprep.subr.mxu0 0.0
        %934 = vmatpush2.msra.mxu0 0.0
        %935 = vmatprep.subr.mxu0 0.0
        %936 = vmatpush2.msra.mxu0 0.0
        %937 = vmatprep.subr.mxu0 0.0
        %938 = vmatpush2.msra.mxu0 0.0
        %939 = vmatprep.subr.mxu0 0.0
        %940 = vmatpush2.msra.mxu0 0.0
        %941 = vmatprep.subr.mxu0 0.0
        %942 = vmatpush2.msra.mxu0 0.0
        %943 = vmatprep.subr.mxu0 0.0
        %944 = vmatpush2.msra.mxu0 0.0
        %945 = vmatprep.subr.mxu0 0.0
        %946 = vmatpush2.msra.mxu0 0.0
        %947 = vmatprep.subr.mxu0 0.0
        %948 = vmatpush2.msra.mxu0 0.0
        %949 = vmatprep.subr.mxu0 0.0
        %950 = vmatpush2.msra.mxu0 0.0
        %951 = vmatprep.subr.mxu0 0.0
        %952 = vmatpush2.msra.mxu0 0.0
        %953 = vmatprep.subr.mxu0 0.0
        %954 = vmatpush2.msra.mxu0 0.0
        %955 = vmatprep.mubr.f32.mxu0 0.0
        %956 = vmatmul.mubr.f32.gmra.mxu0 %v889
        %v957 = vpop.f32.mrf.mxu0
        %v958 = vadd.f32 0.0, %v957
        %v959 = vpop.f32.mrf.mxu0
        %960 = vdwg.mxu0
        %962 = vrot.lane.b32.xlu0 %v620, 8
        %v963 = vpop.permute.xlu0 %962
        %966 = vrot.lane.b32.xlu0 %v789, 16
        %v967 = vpop.permute.xlu0 %966
        %970 = vrot.lane.b32.xlu0 %v958, 24
        %v971 = vpop.permute.xlu0 %970
        %v973 = vsel %vm289, %v450, %v963
        %vm974 = vcmask 130048
        %v975 = vsel %vm974, %v973, %v967
        %vm976 = vcmask 195584
        %v977 = vsel %vm976, %v975, %v971
        %vm978 = vcmask 261120
        %979 = vst.msk [vmem:[%s278] sm:$0xff] %vm978, %v977
        %p980 = scmp.lt.s32.totalorder %s20, 1
        %s981 = scalar_select %p980, %s20, 1
        %s982 = smul.addr %s981, 8
        %s983 = scalar_lea.vmem %s4, %s982
        %s984 = sand.u32 %s158, 1
        %s985 = scalar_lea.sflag [#allocation3], %s984
        %s986 = sand.u32 %s158, 1
        %s987 = smul.addr %s986, 32
        %s988 = scalar_lea.vmem [#allocation2], %s987
        // Predicated region
        $region37: #{transformer_forward.35} parent=35 // pred_check
          %p989 = pneg %p142
        $region38: #{transformer_forward.35} parent=35 // pred_check_branch
          %991 = sbr.rel (%p989) target = $region40
        $region39: #{transformer_forward.35} parent=35 // pred_region
          _
        $region40: #{transformer_forward.35} parent=35 // pred_fallthru
          _
        // Predicated region
        $region41: #{transformer_forward.35} parent=35 // pred_check
          %p992 = pneg %p168
        $region42: #{transformer_forward.35} parent=35 // pred_check_branch
          %994 = sbr.rel (%p992) target = $region44
        $region43: #{transformer_forward.35} parent=35 // pred_region
          %s996 = ssub.s32 512, 512
          %997 = vsyncadd %s985, %s996
          %s998 = smul.addr %s20, 4
          %s999 = smul.addr %s998, 128
          %s1000 = scalar_lea.hbm %s5, %s999
          %s1001 = sshll.u32 %s988, 4
          %s1002 = int_to_ptr.vmem [resolvable:$true] %s1001
          %1007 = dma.vmem_to_hbm [thread:$0]  %s1002, 512, %s1000, %s985, 128, 128, 8
        $region44: #{transformer_forward.35} parent=35 // pred_fallthru
          _
      $region36: #{transformer_forward.35} parent=5 // pred_fallthru
        _
      %p1008 = scmp.le.s32.totalorder 2, %s15
      // Predicated region
      $region45: #{transformer_forward.35} parent=5 // pred_check
        %p1009 = pneg %p1008
      $region46: #{transformer_forward.35} parent=5 // pred_check_branch
        %1011 = sbr.rel (%p1009) target = $region48
      $region47: #{transformer_forward.35} parent=5 // pred_region
        %s1012 = ssub.s32 %s15, 2
        // Predicated region
        $region49: #{transformer_forward.35} parent=47 // pred_check
          %p1013 = pneg %p148
        $region50: #{transformer_forward.35} parent=47 // pred_check_branch
          %1015 = sbr.rel (%p1013) target = $region52
        $region51: #{transformer_forward.35} parent=47 // pred_region
          %p1016 = scmp.lt.s32.totalorder %s21, 1
          %s1017 = scalar_select %p1016, %s21, 1
          %s1018 = smul.addr %s1017, 8
          %s1019 = scalar_lea.vmem %s4, %s1018
        $region52: #{transformer_forward.35} parent=47 // pred_fallthru
          _
        // Predicated region
        $region53: #{transformer_forward.35} parent=47 // pred_check
          %p1020 = pneg %p174
        $region54: #{transformer_forward.35} parent=47 // pred_check_branch
          %1022 = sbr.rel (%p1020) target = $region56
        $region55: #{transformer_forward.35} parent=47 // pred_region
          %s1023 = sand.u32 %s159, 1
          %s1024 = scalar_lea.sflag [#allocation3], %s1023
          %s1025 = sand.u32 %s159, 1
          %s1026 = smul.addr %s1025, 32
          %s1027 = scalar_lea.vmem [#allocation2], %s1026
          %1028 = dma.done %s1024, 512
        $region56: #{transformer_forward.35} parent=47 // pred_fallthru
          _
      $region48: #{transformer_forward.35} parent=5 // pred_fallthru
        _
    $region6: #{transformer_forward.35} parent=1 // loop_footer
      %s19 = sadd.s32 1, %s15
    $region7: #{transformer_forward.35} parent=1 // loop_footer_branch
      %14 = sbr.rel target = $region3
    $region8: #{transformer_forward.35} parent=1 // loop_exit
      _
    %1029 = vsyncpa [#allocation3], 1
    %s1030 = scalar_lea.sflag [#allocation3], 1
    %1031 = vsyncpa %s1030, 1

// kernel: transformer_forward.42
$region0: #{transformer_forward.42}
  #allocation0 [shape = 'u32[]', space=smem, size = 0x4, offset = 0x4, fixed_abs, tag = 'smem constant byte address 0x4 - core index']
  #allocation1 [shape = 'u32[144,128]{1,0:T(1,128)}', space=vmem, size = 0x12000, scoped, tag = 'internal scratch']
  %s0 = inlined_call_operand.vmem [shape: f32[16,32], index: 0, kind: input, shape index: {}]
  %s1 = inlined_call_operand.vmem [shape: f32[32,32], index: 1, kind: input, shape index: {}]
  %s2 = inlined_call_operand.vmem [shape: f32[1,32], index: 2, kind: input, shape index: {}]
  %s3 = inlined_call_operand.vmem [shape: f32[16,32], index: 3, kind: output, shape index: {}]
  %s4 = sld [smem:[#allocation0]]
  $region22: #{transformer_forward.42} parent=0
    _
  %s6 = ssub.s32 1, %s4
  %s7 = scalar_select 0, %s6, %s4
  // Predicated region
  $region2: #{transformer_forward.42} parent=0 // pred_check
    _
  $region3: #{transformer_forward.42} parent=0 // pred_check_branch
    %9 = sbr.rel (0) target = $region5
  $region4: #{transformer_forward.42} parent=0 // pred_region
    _
  $region5: #{transformer_forward.42} parent=0 // pred_fallthru
    _
  // Predicated region
  $region6: #{transformer_forward.42} parent=0 // pred_check
    _
  $region7: #{transformer_forward.42} parent=0 // pred_check_branch
    %11 = sbr.rel (0) target = $region9
  $region8: #{transformer_forward.42} parent=0 // pred_region
    _
  $region9: #{transformer_forward.42} parent=0 // pred_fallthru
    _
  // Predicated region
  $region10: #{transformer_forward.42} parent=0 // pred_check
    _
  $region11: #{transformer_forward.42} parent=0 // pred_check_branch
    %13 = sbr.rel (0) target = $region13
  $region12: #{transformer_forward.42} parent=0 // pred_region
    _
  $region13: #{transformer_forward.42} parent=0 // pred_fallthru
    _
  %v14 = vld [vmem:[%s0] sm:$0xff]
  %v15 = vld [vmem:[%s0 + $0x8] sm:$0xff]
  %v16 = vld [vmem:[%s1] sm:$0xff]
  %v17 = vld [vmem:[%s1 + $0x8] sm:$0xff]
  %v18 = vld [vmem:[%s1 + $0x10] sm:$0xff]
  %v19 = vld [vmem:[%s1 + $0x18] sm:$0xff]
  %v20 = vld [vmem:[%s2] sm:$0x1]
  %v22 = vlaneseq
  %v23 = vshrl.u32 %v22, 7
  %v24 = vsub.s32 0, %v23
  %v25 = vrot.slane %v20, %v24
  %vm27 = vcmask 261120
  %v29 = vsel %vm27, %v14, 0
  %v32 = vsel %vm27, %v15, 0
  %34 = vmatprep.subr.mxu0 0.0
  %35 = vmatpush1.msra.mxu0 0.0
  %36 = vmatprep.subr.mxu0 0.0
  %37 = vmatpush1.msra.mxu0 0.0
  %38 = vmatprep.subr.mxu0 0.0
  %39 = vmatpush1.msra.mxu0 0.0
  %40 = vmatprep.subr.mxu0 0.0
  %41 = vmatpush1.msra.mxu0 0.0
  %42 = vmatprep.subr.mxu0 0.0
  %43 = vmatpush1.msra.mxu0 0.0
  %44 = vmatprep.subr.mxu0 0.0
  %45 = vmatpush1.msra.mxu0 0.0
  %46 = vmatprep.subr.mxu0 0.0
  %47 = vmatpush1.msra.mxu0 0.0
  %48 = vmatprep.subr.mxu0 0.0
  %49 = vmatpush1.msra.mxu0 0.0
  %50 = vmatprep.subr.mxu0 0.0
  %51 = vmatpush1.msra.mxu0 0.0
  %52 = vmatprep.subr.mxu0 0.0
  %53 = vmatpush1.msra.mxu0 0.0
  %54 = vmatprep.subr.mxu0 0.0
  %55 = vmatpush1.msra.mxu0 0.0
  %56 = vmatprep.subr.mxu0 0.0
  %57 = vmatpush1.msra.mxu0 0.0
  %58 = vmatprep.subr.mxu0 0.0
  %59 = vmatpush1.msra.mxu0 %v19
  %60 = vmatprep.subr.mxu0 0.0
  %61 = vmatpush1.msra.mxu0 %v18
  %62 = vmatprep.subr.mxu0 0.0
  %63 = vmatpush1.msra.mxu0 %v17
  %64 = vmatprep.subr.mxu0 0.0
  %65 = vmatpush1.msra.mxu0 %v16
  %66 = vmatprep.subr.mxu0 0.0
  %67 = vmatpush2.msra.mxu0 0.0
  %68 = vmatprep.subr.mxu0 0.0
  %69 = vmatpush2.msra.mxu0 0.0
  %70 = vmatprep.subr.mxu0 0.0
  %71 = vmatpush2.msra.mxu0 0.0
  %72 = vmatprep.subr.mxu0 0.0
  %73 = vmatpush2.msra.mxu0 0.0
  %74 = vmatprep.subr.mxu0 0.0
  %75 = vmatpush2.msra.mxu0 0.0
  %76 = vmatprep.subr.mxu0 0.0
  %77 = vmatpush2.msra.mxu0 0.0
  %78 = vmatprep.subr.mxu0 0.0
  %79 = vmatpush2.msra.mxu0 0.0
  %80 = vmatprep.subr.mxu0 0.0
  %81 = vmatpush2.msra.mxu0 0.0
  %82 = vmatprep.subr.mxu0 0.0
  %83 = vmatpush2.msra.mxu0 0.0
  %84 = vmatprep.subr.mxu0 0.0
  %85 = vmatpush2.msra.mxu0 0.0
  %86 = vmatprep.subr.mxu0 0.0
  %87 = vmatpush2.msra.mxu0 0.0
  %88 = vmatprep.subr.mxu0 0.0
  %89 = vmatpush2.msra.mxu0 0.0
  %90 = vmatprep.subr.mxu0 0.0
  %91 = vmatpush2.msra.mxu0 0.0
  %92 = vmatprep.subr.mxu0 0.0
  %93 = vmatpush2.msra.mxu0 0.0
  %94 = vmatprep.subr.mxu0 0.0
  %95 = vmatpush2.msra.mxu0 0.0
  %96 = vmatprep.subr.mxu0 0.0
  %97 = vmatpush2.msra.mxu0 0.0
  %98 = vmatprep.mubr.f32.mxu0 0.0
  %99 = vmatmul.mubr.f32.gmra.mxu0 %v29
  %v100 = vpop.f32.mrf.mxu0
  %v101 = vadd.f32 %v25, %v100
  %v102 = vpop.f32.mrf.mxu0
  %103 = vmatprep.mubr.f32.mxu0 0.0
  %104 = vmatmul.mubr.f32.gmra.mxu0 %v32
  %v105 = vpop.f32.mrf.mxu0
  %v106 = vadd.f32 %v25, %v105
  %v107 = vpop.f32.mrf.mxu0
  %108 = vdwg.mxu0
  %109 = vst.msk [vmem:[%s3] sm:$0xff] %vm27, %v101
  %110 = vst.msk [vmem:[%s3 + $0x8] sm:$0xff] %vm27, %v106
  // Predicated region
  $region14: #{transformer_forward.42} parent=0 // pred_check
    _
  $region15: #{transformer_forward.42} parent=0 // pred_check_branch
    %112 = sbr.rel (0) target = $region17
  $region16: #{transformer_forward.42} parent=0 // pred_region
    _
  $region17: #{transformer_forward.42} parent=0 // pred_fallthru
    _
  // Predicated region
  $region18: #{transformer_forward.42} parent=0 // pred_check
    _
  $region19: #{transformer_forward.42} parent=0 // pred_check_branch
    %114 = sbr.rel (0) target = $region21
  $region20: #{transformer_forward.42} parent=0 // pred_region
    _
  $region21: #{transformer_forward.42} parent=0 // pred_fallthru
    _

// kernel: transformer_forward.40
$region0: #{transformer_forward.40}
  #allocation0 [shape = 'u32[]', space=smem, size = 0x4, offset = 0x4, fixed_abs, tag = 'smem constant byte address 0x4 - core index']
  #allocation1 [shape = 'u32[144,128]{1,0:T(1,128)}', space=vmem, size = 0x12000, scoped, tag = 'internal scratch']
  %s0 = inlined_call_operand.vmem [shape: f32[2,8,32], index: 0, kind: input, shape index: {}]
  %s1 = inlined_call_operand.vmem [shape: f32[2,8,32], index: 1, kind: input, shape index: {}]
  %s2 = inlined_call_operand.vmem [shape: f32[2,8,32], index: 2, kind: input, shape index: {}]
  %s3 = inlined_call_operand.vmem [shape: f32[2,1,8], index: 3, kind: input, shape index: {}]
  %s4 = inlined_call_operand.vmem [shape: f32[2,8,32], index: 4, kind: output, shape index: {}]
  %s5 = sld [smem:[#allocation0]]
  $region49: #{transformer_forward.40} parent=0
    _
  %s7 = ssub.s32 1, %s5
  %s8 = scalar_select 0, %s7, %s5
  loop: start=0, step=1, limit=4
  $region2: #{transformer_forward.40} parent=0 // loop_pre_header
    _
  $region3: #{transformer_forward.40} parent=0 // loop_header
    %s10 = sphi 0, %s14
    %p11 = scmp.ge.s32.totalorder %s10, 4
    %s20 = sphi 0, %s22
    %s23 = sphi 0, %s20
    %s24 = sphi 0, %s23
    %s40 = sphi 0, %s24
    %s46 = sphi 0, %s48
    %s49 = sphi 0, %s46
    %s50 = sphi 0, %s49
    %s66 = sphi 0, %s50
    %s72 = sphi 0, %s74
    %s75 = sphi 0, %s72
    %s76 = sphi 0, %s75
    %s92 = sphi 0, %s76
    %s98 = sphi 0, %s100
    %s101 = sphi 0, %s98
    %s102 = sphi 0, %s101
    %s118 = sphi 0, %s102
    %s124 = sphi 0, %s126
    %s127 = sphi 0, %s124
    %s128 = sphi 0, %s127
    %s144 = sphi 0, %s128
  $region4: #{transformer_forward.40} parent=0 // loop_header_branch
    %13 = sbr.rel (%p11) target = $region8
  $region5: #{transformer_forward.40} parent=0 // loop_body
    %s15 = ssub.s32 %s10, 1
    %s16 = ssub.s32 %s10, 2
    %s17 = sadd.s32 %s10, 1
    %s18 = ssub.s32 %s10, %s17
    %p19 = scmp.eq.s32.totalorder %s18, 0
    %s21 = sadd.s32 %s20, 1
    %s22 = scalar_select %p19, %s20, %s21
    %p25 = pneg %p19
    %p26 = scmp.eq.s32.totalorder %s10, 1
    %p27 = por %p25, %p26
    %p28 = scmp.ne.s32.totalorder %s20, %s23
    %p29 = scmp.eq.s32.totalorder %s10, 0
    %p30 = por %p28, %p29
    %p31 = scmp.ne.s32.totalorder %s20, %s23
    %p32 = scmp.eq.s32.totalorder %s15, 1
    %p33 = por %p31, %p32
    %p34 = scmp.ne.s32.totalorder %s23, %s24
    %p35 = scmp.eq.s32.totalorder %s15, 0
    %p36 = por %p34, %p35
    %p37 = scmp.ne.s32.totalorder %s23, %s24
    %p38 = scmp.eq.s32.totalorder %s16, 1
    %p39 = por %p37, %p38
    %p41 = scmp.ne.s32.totalorder %s24, %s40
    %p42 = scmp.eq.s32.totalorder %s16, 0
    %p43 = por %p41, %p42
    %s44 = ssub.s32 %s10, %s17
    %p45 = scmp.eq.s32.totalorder %s44, 0
    %s47 = sadd.s32 %s46, 1
    %s48 = scalar_select %p45, %s46, %s47
    %p51 = pneg %p45
    %p52 = scmp.eq.s32.totalorder %s10, 1
    %p53 = por %p51, %p52
    %p54 = scmp.ne.s32.totalorder %s46, %s49
    %p55 = scmp.eq.s32.totalorder %s10, 0
    %p56 = por %p54, %p55
    %p57 = scmp.ne.s32.totalorder %s46, %s49
    %p58 = scmp.eq.s32.totalorder %s15, 1
    %p59 = por %p57, %p58
    %p60 = scmp.ne.s32.totalorder %s49, %s50
    %p61 = scmp.eq.s32.totalorder %s15, 0
    %p62 = por %p60, %p61
    %p63 = scmp.ne.s32.totalorder %s49, %s50
    %p64 = scmp.eq.s32.totalorder %s16, 1
    %p65 = por %p63, %p64
    %p67 = scmp.ne.s32.totalorder %s50, %s66
    %p68 = scmp.eq.s32.totalorder %s16, 0
    %p69 = por %p67, %p68
    %s70 = ssub.s32 %s10, %s17
    %p71 = scmp.eq.s32.totalorder %s70, 0
    %s73 = sadd.s32 %s72, 1
    %s74 = scalar_select %p71, %s72, %s73
    %p77 = pneg %p71
    %p78 = scmp.eq.s32.totalorder %s10, 1
    %p79 = por %p77, %p78
    %p80 = scmp.ne.s32.totalorder %s72, %s75
    %p81 = scmp.eq.s32.totalorder %s10, 0
    %p82 = por %p80, %p81
    %p83 = scmp.ne.s32.totalorder %s72, %s75
    %p84 = scmp.eq.s32.totalorder %s15, 1
    %p85 = por %p83, %p84
    %p86 = scmp.ne.s32.totalorder %s75, %s76
    %p87 = scmp.eq.s32.totalorder %s15, 0
    %p88 = por %p86, %p87
    %p89 = scmp.ne.s32.totalorder %s75, %s76
    %p90 = scmp.eq.s32.totalorder %s16, 1
    %p91 = por %p89, %p90
    %p93 = scmp.ne.s32.totalorder %s76, %s92
    %p94 = scmp.eq.s32.totalorder %s16, 0
    %p95 = por %p93, %p94
    %s96 = ssub.s32 %s10, %s17
    %p97 = scmp.eq.s32.totalorder %s96, 0
    %s99 = sadd.s32 %s98, 1
    %s100 = scalar_select %p97, %s98, %s99
    %p103 = pneg %p97
    %p104 = scmp.eq.s32.totalorder %s10, 1
    %p105 = por %p103, %p104
    %p106 = scmp.ne.s32.totalorder %s98, %s101
    %p107 = scmp.eq.s32.totalorder %s10, 0
    %p108 = por %p106, %p107
    %p109 = scmp.ne.s32.totalorder %s98, %s101
    %p110 = scmp.eq.s32.totalorder %s15, 1
    %p111 = por %p109, %p110
    %p112 = scmp.ne.s32.totalorder %s101, %s102
    %p113 = scmp.eq.s32.totalorder %s15, 0
    %p114 = por %p112, %p113
    %p115 = scmp.ne.s32.totalorder %s101, %s102
    %p116 = scmp.eq.s32.totalorder %s16, 1
    %p117 = por %p115, %p116
    %p119 = scmp.ne.s32.totalorder %s102, %s118
    %p120 = scmp.eq.s32.totalorder %s16, 0
    %p121 = por %p119, %p120
    %s122 = ssub.s32 %s10, %s17
    %p123 = scmp.eq.s32.totalorder %s122, 0
    %s125 = sadd.s32 %s124, 1
    %s126 = scalar_select %p123, %s124, %s125
    %p129 = pneg %p123
    %p130 = scmp.eq.s32.totalorder %s10, 1
    %p131 = por %p129, %p130
    %p132 = scmp.ne.s32.totalorder %s124, %s127
    %p133 = scmp.eq.s32.totalorder %s10, 0
    %p134 = por %p132, %p133
    %p135 = scmp.ne.s32.totalorder %s124, %s127
    %p136 = scmp.eq.s32.totalorder %s15, 1
    %p137 = por %p135, %p136
    %p138 = scmp.ne.s32.totalorder %s127, %s128
    %p139 = scmp.eq.s32.totalorder %s15, 0
    %p140 = por %p138, %p139
    %p141 = scmp.ne.s32.totalorder %s127, %s128
    %p142 = scmp.eq.s32.totalorder %s16, 1
    %p143 = por %p141, %p142
    %p145 = scmp.ne.s32.totalorder %s128, %s144
    %p146 = scmp.eq.s32.totalorder %s16, 0
    %p147 = por %p145, %p146
    %p148 = scmp.le.s32.totalorder 1, %s10
    %p149 = scmp.lt.s32.totalorder %s10, 3
    %p150 = pnand %p148, %p149
    %p151 = pneg %p150
    // Predicated region
    $region9: #{transformer_forward.40} parent=5 // pred_check
      _
    $region10: #{transformer_forward.40} parent=5 // pred_check_branch
      %153 = sbr.rel (%p150) target = $region12
    $region11: #{transformer_forward.40} parent=5 // pred_region
      %s154 = ssub.s32 %s10, 1
    $region12: #{transformer_forward.40} parent=5 // pred_fallthru
      _
    %p155 = scmp.lt.s32.totalorder %s10, 2
    // Predicated region
    $region13: #{transformer_forward.40} parent=5 // pred_check
      %p156 = pneg %p155
    $region14: #{transformer_forward.40} parent=5 // pred_check_branch
      %158 = sbr.rel (%p156) target = $region16
    $region15: #{transformer_forward.40} parent=5 // pred_region
      // Predicated region
      $region17: #{transformer_forward.40} parent=15 // pred_check
        %p159 = pneg %p30
      $region18: #{transformer_forward.40} parent=15 // pred_check_branch
        %161 = sbr.rel (%p159) target = $region20
      $region19: #{transformer_forward.40} parent=15 // pred_region
        %p162 = scmp.lt.s32.totalorder %s10, 1
        %s163 = scalar_select %p162, %s10, 1
        %s164 = smul.addr %s163, 8
        %s165 = scalar_lea.vmem %s0, %s164
      $region20: #{transformer_forward.40} parent=15 // pred_fallthru
        _
      // Predicated region
      $region21: #{transformer_forward.40} parent=15 // pred_check
        %p166 = pneg %p56
      $region22: #{transformer_forward.40} parent=15 // pred_check_branch
        %168 = sbr.rel (%p166) target = $region24
      $region23: #{transformer_forward.40} parent=15 // pred_region
        %p169 = scmp.lt.s32.totalorder %s10, 1
        %s170 = scalar_select %p169, %s10, 1
        %s171 = smul.addr %s170, 8
        %s172 = scalar_lea.vmem %s1, %s171
      $region24: #{transformer_forward.40} parent=15 // pred_fallthru
        _
      // Predicated region
      $region25: #{transformer_forward.40} parent=15 // pred_check
        %p173 = pneg %p82
      $region26: #{transformer_forward.40} parent=15 // pred_check_branch
        %175 = sbr.rel (%p173) target = $region28
      $region27: #{transformer_forward.40} parent=15 // pred_region
        %p176 = scmp.lt.s32.totalorder %s10, 1
        %s177 = scalar_select %p176, %s10, 1
        %s178 = smul.addr %s177, 8
        %s179 = scalar_lea.vmem %s2, %s178
      $region28: #{transformer_forward.40} parent=15 // pred_fallthru
        _
      // Predicated region
      $region29: #{transformer_forward.40} parent=15 // pred_check
        %p180 = pneg %p108
      $region30: #{transformer_forward.40} parent=15 // pred_check_branch
        %182 = sbr.rel (%p180) target = $region32
      $region31: #{transformer_forward.40} parent=15 // pred_region
        %p183 = scmp.lt.s32.totalorder %s10, 1
        %s184 = scalar_select %p183, %s10, 1
        %s185 = scalar_lea.vmem %s3, %s184
      $region32: #{transformer_forward.40} parent=15 // pred_fallthru
        _
    $region16: #{transformer_forward.40} parent=5 // pred_fallthru
      _
    %p186 = scmp.le.s32.totalorder 1, %s10
    %p187 = scmp.lt.s32.totalorder %s10, 3
    %p188 = pnand %p186, %p187
    %p189 = pneg %p188
    // Predicated region
    $region33: #{transformer_forward.40} parent=5 // pred_check
      _
    $region34: #{transformer_forward.40} parent=5 // pred_check_branch
      %191 = sbr.rel (%p188) target = $region36
    $region35: #{transformer_forward.40} parent=5 // pred_region
      %s192 = ssub.s32 %s10, 1
      %p193 = scmp.lt.s32.totalorder %s15, 1
      %s194 = scalar_select %p193, %s15, 1
      %s195 = smul.addr %s194, 8
      %s196 = scalar_lea.vmem %s0, %s195
      %p197 = pneg %p36
      %p198 = pneg %p33
      %p199 = scmp.lt.s32.totalorder %s15, 1
      %s200 = scalar_select %p199, %s15, 1
      %s201 = smul.addr %s200, 8
      %s202 = scalar_lea.vmem %s1, %s201
      %p203 = pneg %p62
      %p204 = pneg %p59
      %p205 = scmp.lt.s32.totalorder %s15, 1
      %s206 = scalar_select %p205, %s15, 1
      %s207 = smul.addr %s206, 8
      %s208 = scalar_lea.vmem %s2, %s207
      %p209 = pneg %p88
      %p210 = pneg %p85
      %p211 = scmp.lt.s32.totalorder %s15, 1
      %s212 = scalar_select %p211, %s15, 1
      %s213 = scalar_lea.vmem %s3, %s212
      %p214 = pneg %p114
      %p215 = pneg %p111
      %p216 = pneg %p140
      %p217 = pneg %p137
      %p218 = scmp.lt.s32.totalorder %s15, 1
      %s219 = scalar_select %p218, %s15, 1
      %s220 = smul.addr %s219, 8
      %s221 = scalar_lea.vmem %s4, %s220
      %p222 = scmp.lt.s32.totalorder %s15, 1
      %s223 = scalar_select %p222, %s15, 1
      %s224 = smul.addr %s223, 8
      %s225 = scalar_lea.vmem %s0, %s224
      %p226 = scmp.lt.s32.totalorder %s15, 1
      %s227 = scalar_select %p226, %s15, 1
      %s228 = smul.addr %s227, 8
      %s229 = scalar_lea.vmem %s1, %s228
      %p230 = scmp.lt.s32.totalorder %s15, 1
      %s231 = scalar_select %p230, %s15, 1
      %s232 = smul.addr %s231, 8
      %s233 = scalar_lea.vmem %s2, %s232
      %p234 = scmp.lt.s32.totalorder %s15, 1
      %s235 = scalar_select %p234, %s15, 1
      %s236 = scalar_lea.vmem %s3, %s235
      %p237 = scmp.lt.s32.totalorder %s15, 1
      %s238 = scalar_select %p237, %s15, 1
      %s239 = smul.addr %s238, 8
      %s240 = scalar_lea.vmem %s4, %s239
      %v241 = vld [vmem:[%s225] sm:$0xff]
      %v242 = vld [vmem:[%s229] sm:$0xff]
      %v243 = vld [vmem:[%s233] sm:$0xff]
      %v244 = vld [vmem:[%s236] sm:$0x1]
      %v246 = vlaneseq
      %v247 = vshrl.u32 %v246, 7
      %v248 = vsub.s32 0, %v247
      %v249 = vrot.slane %v244, %v248
      %v251 = vlaneseq
      %v252 = vshrl.u32 %v251, 7
      %v253 = vlaneseq
      %v254 = vand.u32 %v253, 127
      %vm255 = vcmp.ge.s32.totalorder %v252, %v254
      %v256 = vsel %vm255, 0.0, -1e+09
      %v257 = vadd.f32 %v249, %v256
      %vm258 = vcmask 64512
      %v260 = vsel %vm258, %v241, 0
      %v263 = vsel %vm258, %v242, 0
      %265 = vmatprep.subr.mxu0 0.0
      %266 = vmatpush1.xpose.msra.mxu0 0.0
      %267 = vmatprep.subr.mxu0 0.0
      %268 = vmatpush1.xpose.msra.mxu0 0.0
      %269 = vmatprep.subr.mxu0 0.0
      %270 = vmatpush1.xpose.msra.mxu0 0.0
      %271 = vmatprep.subr.mxu0 0.0
      %272 = vmatpush1.xpose.msra.mxu0 0.0
      %273 = vmatprep.subr.mxu0 0.0
      %274 = vmatpush1.xpose.msra.mxu0 0.0
      %275 = vmatprep.subr.mxu0 0.0
      %276 = vmatpush1.xpose.msra.mxu0 0.0
      %277 = vmatprep.subr.mxu0 0.0
      %278 = vmatpush1.xpose.msra.mxu0 0.0
      %279 = vmatprep.subr.mxu0 0.0
      %280 = vmatpush1.xpose.msra.mxu0 0.0
      %281 = vmatprep.subr.mxu0 0.0
      %282 = vmatpush1.xpose.msra.mxu0 0.0
      %283 = vmatprep.subr.mxu0 0.0
      %284 = vmatpush1.xpose.msra.mxu0 0.0
      %285 = vmatprep.subr.mxu0 0.0
      %286 = vmatpush1.xpose.msra.mxu0 0.0
      %287 = vmatprep.subr.mxu0 0.0
      %288 = vmatpush1.xpose.msra.mxu0 0.0
      %289 = vmatprep.subr.mxu0 0.0
      %290 = vmatpush1.xpose.msra.mxu0 0.0
      %291 = vmatprep.subr.mxu0 0.0
      %292 = vmatpush1.xpose.msra.mxu0 0.0
      %293 = vmatprep.subr.mxu0 0.0
      %294 = vmatpush1.xpose.msra.mxu0 0.0
      %295 = vmatprep.subr.mxu0 0.0
      %296 = vmatpush1.xpose.msra.mxu0 %v263
      %297 = vmatprep.subr.mxu0 0.0
      %298 = vmatpush2.xpose.msra.mxu0 0.0
      %299 = vmatprep.subr.mxu0 0.0
      %300 = vmatpush2.xpose.msra.mxu0 0.0
      %301 = vmatprep.subr.mxu0 0.0
      %302 = vmatpush2.xpose.msra.mxu0 0.0
      %303 = vmatprep.subr.mxu0 0.0
      %304 = vmatpush2.xpose.msra.mxu0 0.0
      %305 = vmatprep.subr.mxu0 0.0
      %306 = vmatpush2.xpose.msra.mxu0 0.0
      %307 = vmatprep.subr.mxu0 0.0
      %308 = vmatpush2.xpose.msra.mxu0 0.0
      %309 = vmatprep.subr.mxu0 0.0
      %310 = vmatpush2.xpose.msra.mxu0 0.0
      %311 = vmatprep.subr.mxu0 0.0
      %312 = vmatpush2.xpose.msra.mxu0 0.0
      %313 = vmatprep.subr.mxu0 0.0
      %314 = vmatpush2.xpose.msra.mxu0 0.0
      %315 = vmatprep.subr.mxu0 0.0
      %316 = vmatpush2.xpose.msra.mxu0 0.0
      %317 = vmatprep.subr.mxu0 0.0
      %318 = vmatpush2.xpose.msra.mxu0 0.0
      %319 = vmatprep.subr.mxu0 0.0
      %320 = vmatpush2.xpose.msra.mxu0 0.0
      %321 = vmatprep.subr.mxu0 0.0
      %322 = vmatpush2.xpose.msra.mxu0 0.0
      %323 = vmatprep.subr.mxu0 0.0
      %324 = vmatpush2.xpose.msra.mxu0 0.0
      %325 = vmatprep.subr.mxu0 0.0
      %326 = vmatpush2.xpose.msra.mxu0 0.0
      %327 = vmatprep.subr.mxu0 0.0
      %328 = vmatpush2.xpose.msra.mxu0 0.0
      %329 = vmatprep.mubr.f32.mxu0 0.0
      %330 = vmatmul.mubr.f32.gmra.mxu0 %v260
      %v331 = vpop.f32.mrf.mxu0
      %v332 = vadd.f32 0.0, %v331
      %v333 = vpop.f32.mrf.mxu0
      %334 = vdwg.mxu0
      %v335 = vmul.f32 %v332, 0.35355338
      %v336 = vadd.f32 %v335, %v257
      %v337 = vsel %vm258, %v336, -inf
      %338 = vmax.xlane.f32.xlu0 %v337
      %v339 = vpop.xlane.xlu0 %338
      %v340 = vsub.f32 %v336, %v339
      %v341 = vmul.f32 %v340, 1.442695
      %v342 = vpow.pop %v341
      %v343 = vsel %vm258, %v342, 0.0
      %344 = vadd.xlane.f32.xlu0 %v343
      %v345 = vpop.xlane.xlu0 %344
      %v346 = vrcp.pop %v345
      %v347 = vmul.f32 %v342, %v346
      %v349 = vsel %vm258, %v347, 0
      %351 = vmatprep.subr.mxu0 0.0
      %352 = vmatpush1.msra.mxu0 0.0
      %353 = vmatprep.subr.mxu0 0.0
      %354 = vmatpush1.msra.mxu0 0.0
      %355 = vmatprep.subr.mxu0 0.0
      %356 = vmatpush1.msra.mxu0 0.0
      %357 = vmatprep.subr.mxu0 0.0
      %358 = vmatpush1.msra.mxu0 0.0
      %359 = vmatprep.subr.mxu0 0.0
      %360 = vmatpush1.msra.mxu0 0.0
      %361 = vmatprep.subr.mxu0 0.0
      %362 = vmatpush1.msra.mxu0 0.0
      %363 = vmatprep.subr.mxu0 0.0
      %364 = vmatpush1.msra.mxu0 0.0
      %365 = vmatprep.subr.mxu0 0.0
      %366 = vmatpush1.msra.mxu0 0.0
      %367 = vmatprep.subr.mxu0 0.0
      %368 = vmatpush1.msra.mxu0 0.0
      %369 = vmatprep.subr.mxu0 0.0
      %370 = vmatpush1.msra.mxu0 0.0
      %371 = vmatprep.subr.mxu0 0.0
      %372 = vmatpush1.msra.mxu0 0.0
      %373 = vmatprep.subr.mxu0 0.0
      %374 = vmatpush1.msra.mxu0 0.0
      %375 = vmatprep.subr.mxu0 0.0
      %376 = vmatpush1.msra.mxu0 0.0
      %377 = vmatprep.subr.mxu0 0.0
      %378 = vmatpush1.msra.mxu0 0.0
      %379 = vmatprep.subr.mxu0 0.0
      %380 = vmatpush1.msra.mxu0 0.0
      %381 = vmatprep.subr.mxu0 0.0
      %382 = vmatpush1.msra.mxu0 %v243
      %383 = vmatprep.subr.mxu0 0.0
      %384 = vmatpush2.msra.mxu0 0.0
      %385 = vmatprep.subr.mxu0 0.0
      %386 = vmatpush2.msra.mxu0 0.0
      %387 = vmatprep.subr.mxu0 0.0
      %388 = vmatpush2.msra.mxu0 0.0
      %389 = vmatprep.subr.mxu0 0.0
      %390 = vmatpush2.msra.mxu0 0.0
      %391 = vmatprep.subr.mxu0 0.0
      %392 = vmatpush2.msra.mxu0 0.0
      %393 = vmatprep.subr.mxu0 0.0
      %394 = vmatpush2.msra.mxu0 0.0
      %395 = vmatprep.subr.mxu0 0.0
      %396 = vmatpush2.msra.mxu0 0.0
      %397 = vmatprep.subr.mxu0 0.0
      %398 = vmatpush2.msra.mxu0 0.0
      %399 = vmatprep.subr.mxu0 0.0
      %400 = vmatpush2.msra.mxu0 0.0
      %401 = vmatprep.subr.mxu0 0.0
      %402 = vmatpush2.msra.mxu0 0.0
      %403 = vmatprep.subr.mxu0 0.0
      %404 = vmatpush2.msra.mxu0 0.0
      %405 = vmatprep.subr.mxu0 0.0
      %406 = vmatpush2.msra.mxu0 0.0
      %407 = vmatprep.subr.mxu0 0.0
      %408 = vmatpush2.msra.mxu0 0.0
      %409 = vmatprep.subr.mxu0 0.0
      %410 = vmatpush2.msra.mxu0 0.0
      %411 = vmatprep.subr.mxu0 0.0
      %412 = vmatpush2.msra.mxu0 0.0
      %413 = vmatprep.subr.mxu0 0.0
      %414 = vmatpush2.msra.mxu0 0.0
      %415 = vmatprep.mubr.f32.mxu0 0.0
      %416 = vmatmul.mubr.f32.gmra.mxu0 %v349
      %v417 = vpop.f32.mrf.mxu0
      %v418 = vadd.f32 0.0, %v417
      %v419 = vpop.f32.mrf.mxu0
      %420 = vdwg.mxu0
      %421 = vrot.lane.b32.xlu0 %v241, 120
      %v422 = vpop.permute.xlu0 %421
      %423 = vrot.lane.b32.xlu0 %v242, 120
      %v424 = vpop.permute.xlu0 %423
      %v425 = vsel %vm258, %v422, 0
      %v427 = vsel %vm258, %v424, 0
      %429 = vmatprep.subr.mxu0 0.0
      %430 = vmatpush1.xpose.msra.mxu0 0.0
      %431 = vmatprep.subr.mxu0 0.0
      %432 = vmatpush1.xpose.msra.mxu0 0.0
      %433 = vmatprep.subr.mxu0 0.0
      %434 = vmatpush1.xpose.msra.mxu0 0.0
      %435 = vmatprep.subr.mxu0 0.0
      %436 = vmatpush1.xpose.msra.mxu0 0.0
      %437 = vmatprep.subr.mxu0 0.0
      %438 = vmatpush1.xpose.msra.mxu0 0.0
      %439 = vmatprep.subr.mxu0 0.0
      %440 = vmatpush1.xpose.msra.mxu0 0.0
      %441 = vmatprep.subr.mxu0 0.0
      %442 = vmatpush1.xpose.msra.mxu0 0.0
      %443 = vmatprep.subr.mxu0 0.0
      %444 = vmatpush1.xpose.msra.mxu0 0.0
      %445 = vmatprep.subr.mxu0 0.0
      %446 = vmatpush1.xpose.msra.mxu0 0.0
      %447 = vmatprep.subr.mxu0 0.0
      %448 = vmatpush1.xpose.msra.mxu0 0.0
      %449 = vmatprep.subr.mxu0 0.0
      %450 = vmatpush1.xpose.msra.mxu0 0.0
      %451 = vmatprep.subr.mxu0 0.0
      %452 = vmatpush1.xpose.msra.mxu0 0.0
      %453 = vmatprep.subr.mxu0 0.0
      %454 = vmatpush1.xpose.msra.mxu0 0.0
      %455 = vmatprep.subr.mxu0 0.0
      %456 = vmatpush1.xpose.msra.mxu0 0.0
      %457 = vmatprep.subr.mxu0 0.0
      %458 = vmatpush1.xpose.msra.mxu0 0.0
      %459 = vmatprep.subr.mxu0 0.0
      %460 = vmatpush1.xpose.msra.mxu0 %v427
      %461 = vmatprep.subr.mxu0 0.0
      %462 = vmatpush2.xpose.msra.mxu0 0.0
      %463 = vmatprep.subr.mxu0 0.0
      %464 = vmatpush2.xpose.msra.mxu0 0.0
      %465 = vmatprep.subr.mxu0 0.0
      %466 = vmatpush2.xpose.msra.mxu0 0.0
      %467 = vmatprep.subr.mxu0 0.0
      %468 = vmatpush2.xpose.msra.mxu0 0.0
      %469 = vmatprep.subr.mxu0 0.0
      %470 = vmatpush2.xpose.msra.mxu0 0.0
      %471 = vmatprep.subr.mxu0 0.0
      %472 = vmatpush2.xpose.msra.mxu0 0.0
      %473 = vmatprep.subr.mxu0 0.0
      %474 = vmatpush2.xpose.msra.mxu0 0.0
      %475 = vmatprep.subr.mxu0 0.0
      %476 = vmatpush2.xpose.msra.mxu0 0.0
      %477 = vmatprep.subr.mxu0 0.0
      %478 = vmatpush2.xpose.msra.mxu0 0.0
      %479 = vmatprep.subr.mxu0 0.0
      %480 = vmatpush2.xpose.msra.mxu0 0.0
      %481 = vmatprep.subr.mxu0 0.0
      %482 = vmatpush2.xpose.msra.mxu0 0.0
      %483 = vmatprep.subr.mxu0 0.0
      %484 = vmatpush2.xpose.msra.mxu0 0.0
      %485 = vmatprep.subr.mxu0 0.0
      %486 = vmatpush2.xpose.msra.mxu0 0.0
      %487 = vmatprep.subr.mxu0 0.0
      %488 = vmatpush2.xpose.msra.mxu0 0.0
      %489 = vmatprep.subr.mxu0 0.0
      %490 = vmatpush2.xpose.msra.mxu0 0.0
      %491 = vmatprep.subr.mxu0 0.0
      %492 = vmatpush2.xpose.msra.mxu0 0.0
      %493 = vmatprep.mubr.f32.mxu0 0.0
      %494 = vmatmul.mubr.f32.gmra.mxu0 %v425
      %v495 = vpop.f32.mrf.mxu0
      %v496 = vadd.f32 0.0, %v495
      %v497 = vpop.f32.mrf.mxu0
      %498 = vdwg.mxu0
      %v499 = vmul.f32 %v496, 0.35355338
      %v500 = vadd.f32 %v499, %v257
      %v501 = vsel %vm258, %v500, -inf
      %502 = vmax.xlane.f32.xlu0 %v501
      %v503 = vpop.xlane.xlu0 %502
      %v504 = vsub.f32 %v500, %v503
      %v505 = vmul.f32 %v504, 1.442695
      %v506 = vpow.pop %v505
      %v507 = vsel %vm258, %v506, 0.0
      %508 = vadd.xlane.f32.xlu0 %v507
      %v509 = vpop.xlane.xlu0 %508
      %v510 = vrcp.pop %v509
      %v511 = vmul.f32 %v506, %v510
      %513 = vrot.lane.b32.xlu0 %v243, 120
      %v514 = vpop.permute.xlu0 %513
      %v517 = vsel %vm258, %v511, 0
      %519 = vmatprep.subr.mxu0 0.0
      %520 = vmatpush1.msra.mxu0 0.0
      %521 = vmatprep.subr.mxu0 0.0
      %522 = vmatpush1.msra.mxu0 0.0
      %523 = vmatprep.subr.mxu0 0.0
      %524 = vmatpush1.msra.mxu0 0.0
      %525 = vmatprep.subr.mxu0 0.0
      %526 = vmatpush1.msra.mxu0 0.0
      %527 = vmatprep.subr.mxu0 0.0
      %528 = vmatpush1.msra.mxu0 0.0
      %529 = vmatprep.subr.mxu0 0.0
      %530 = vmatpush1.msra.mxu0 0.0
      %531 = vmatprep.subr.mxu0 0.0
      %532 = vmatpush1.msra.mxu0 0.0
      %533 = vmatprep.subr.mxu0 0.0
      %534 = vmatpush1.msra.mxu0 0.0
      %535 = vmatprep.subr.mxu0 0.0
      %536 = vmatpush1.msra.mxu0 0.0
      %537 = vmatprep.subr.mxu0 0.0
      %538 = vmatpush1.msra.mxu0 0.0
      %539 = vmatprep.subr.mxu0 0.0
      %540 = vmatpush1.msra.mxu0 0.0
      %541 = vmatprep.subr.mxu0 0.0
      %542 = vmatpush1.msra.mxu0 0.0
      %543 = vmatprep.subr.mxu0 0.0
      %544 = vmatpush1.msra.mxu0 0.0
      %545 = vmatprep.subr.mxu0 0.0
      %546 = vmatpush1.msra.mxu0 0.0
      %547 = vmatprep.subr.mxu0 0.0
      %548 = vmatpush1.msra.mxu0 0.0
      %549 = vmatprep.subr.mxu0 0.0
      %550 = vmatpush1.msra.mxu0 %v514
      %551 = vmatprep.subr.mxu0 0.0
      %552 = vmatpush2.msra.mxu0 0.0
      %553 = vmatprep.subr.mxu0 0.0
      %554 = vmatpush2.msra.mxu0 0.0
      %555 = vmatprep.subr.mxu0 0.0
      %556 = vmatpush2.msra.mxu0 0.0
      %557 = vmatprep.subr.mxu0 0.0
      %558 = vmatpush2.msra.mxu0 0.0
      %559 = vmatprep.subr.mxu0 0.0
      %560 = vmatpush2.msra.mxu0 0.0
      %561 = vmatprep.subr.mxu0 0.0
      %562 = vmatpush2.msra.mxu0 0.0
      %563 = vmatprep.subr.mxu0 0.0
      %564 = vmatpush2.msra.mxu0 0.0
      %565 = vmatprep.subr.mxu0 0.0
      %566 = vmatpush2.msra.mxu0 0.0
      %567 = vmatprep.subr.mxu0 0.0
      %568 = vmatpush2.msra.mxu0 0.0
      %569 = vmatprep.subr.mxu0 0.0
      %570 = vmatpush2.msra.mxu0 0.0
      %571 = vmatprep.subr.mxu0 0.0
      %572 = vmatpush2.msra.mxu0 0.0
      %573 = vmatprep.subr.mxu0 0.0
      %574 = vmatpush2.msra.mxu0 0.0
      %575 = vmatprep.subr.mxu0 0.0
      %576 = vmatpush2.msra.mxu0 0.0
      %577 = vmatprep.subr.mxu0 0.0
      %578 = vmatpush2.msra.mxu0 0.0
      %579 = vmatprep.subr.mxu0 0.0
      %580 = vmatpush2.msra.mxu0 0.0
      %581 = vmatprep.subr.mxu0 0.0
      %582 = vmatpush2.msra.mxu0 0.0
      %583 = vmatprep.mubr.f32.mxu0 0.0
      %584 = vmatmul.mubr.f32.gmra.mxu0 %v517
      %v585 = vpop.f32.mrf.mxu0
      %v586 = vadd.f32 0.0, %v585
      %v587 = vpop.f32.mrf.mxu0
      %588 = vdwg.mxu0
      %589 = vrot.lane.b32.xlu0 %v241, 112
      %v590 = vpop.permute.xlu0 %589
      %591 = vrot.lane.b32.xlu0 %v242, 112
      %v592 = vpop.permute.xlu0 %591
      %v593 = vsel %vm258, %v590, 0
      %v595 = vsel %vm258, %v592, 0
      %597 = vmatprep.subr.mxu0 0.0
      %598 = vmatpush1.xpose.msra.mxu0 0.0
      %599 = vmatprep.subr.mxu0 0.0
      %600 = vmatpush1.xpose.msra.mxu0 0.0
      %601 = vmatprep.subr.mxu0 0.0
      %602 = vmatpush1.xpose.msra.mxu0 0.0
      %603 = vmatprep.subr.mxu0 0.0
      %604 = vmatpush1.xpose.msra.mxu0 0.0
      %605 = vmatprep.subr.mxu0 0.0
      %606 = vmatpush1.xpose.msra.mxu0 0.0
      %607 = vmatprep.subr.mxu0 0.0
      %608 = vmatpush1.xpose.msra.mxu0 0.0
      %609 = vmatprep.subr.mxu0 0.0
      %610 = vmatpush1.xpose.msra.mxu0 0.0
      %611 = vmatprep.subr.mxu0 0.0
      %612 = vmatpush1.xpose.msra.mxu0 0.0
      %613 = vmatprep.subr.mxu0 0.0
      %614 = vmatpush1.xpose.msra.mxu0 0.0
      %615 = vmatprep.subr.mxu0 0.0
      %616 = vmatpush1.xpose.msra.mxu0 0.0
      %617 = vmatprep.subr.mxu0 0.0
      %618 = vmatpush1.xpose.msra.mxu0 0.0
      %619 = vmatprep.subr.mxu0 0.0
      %620 = vmatpush1.xpose.msra.mxu0 0.0
      %621 = vmatprep.subr.mxu0 0.0
      %622 = vmatpush1.xpose.msra.mxu0 0.0
      %623 = vmatprep.subr.mxu0 0.0
      %624 = vmatpush1.xpose.msra.mxu0 0.0
      %625 = vmatprep.subr.mxu0 0.0
      %626 = vmatpush1.xpose.msra.mxu0 0.0
      %627 = vmatprep.subr.mxu0 0.0
      %628 = vmatpush1.xpose.msra.mxu0 %v595
      %629 = vmatprep.subr.mxu0 0.0
      %630 = vmatpush2.xpose.msra.mxu0 0.0
      %631 = vmatprep.subr.mxu0 0.0
      %632 = vmatpush2.xpose.msra.mxu0 0.0
      %633 = vmatprep.subr.mxu0 0.0
      %634 = vmatpush2.xpose.msra.mxu0 0.0
      %635 = vmatprep.subr.mxu0 0.0
      %636 = vmatpush2.xpose.msra.mxu0 0.0
      %637 = vmatprep.subr.mxu0 0.0
      %638 = vmatpush2.xpose.msra.mxu0 0.0
      %639 = vmatprep.subr.mxu0 0.0
      %640 = vmatpush2.xpose.msra.mxu0 0.0
      %641 = vmatprep.subr.mxu0 0.0
      %642 = vmatpush2.xpose.msra.mxu0 0.0
      %643 = vmatprep.subr.mxu0 0.0
      %644 = vmatpush2.xpose.msra.mxu0 0.0
      %645 = vmatprep.subr.mxu0 0.0
      %646 = vmatpush2.xpose.msra.mxu0 0.0
      %647 = vmatprep.subr.mxu0 0.0
      %648 = vmatpush2.xpose.msra.mxu0 0.0
      %649 = vmatprep.subr.mxu0 0.0
      %650 = vmatpush2.xpose.msra.mxu0 0.0
      %651 = vmatprep.subr.mxu0 0.0
      %652 = vmatpush2.xpose.msra.mxu0 0.0
      %653 = vmatprep.subr.mxu0 0.0
      %654 = vmatpush2.xpose.msra.mxu0 0.0
      %655 = vmatprep.subr.mxu0 0.0
      %656 = vmatpush2.xpose.msra.mxu0 0.0
      %657 = vmatprep.subr.mxu0 0.0
      %658 = vmatpush2.xpose.msra.mxu0 0.0
      %659 = vmatprep.subr.mxu0 0.0
      %660 = vmatpush2.xpose.msra.mxu0 0.0
      %661 = vmatprep.mubr.f32.mxu0 0.0
      %662 = vmatmul.mubr.f32.gmra.mxu0 %v593
      %v663 = vpop.f32.mrf.mxu0
      %v664 = vadd.f32 0.0, %v663
      %v665 = vpop.f32.mrf.mxu0
      %666 = vdwg.mxu0
      %v667 = vmul.f32 %v664, 0.35355338
      %v668 = vadd.f32 %v667, %v257
      %v669 = vsel %vm258, %v668, -inf
      %670 = vmax.xlane.f32.xlu0 %v669
      %v671 = vpop.xlane.xlu0 %670
      %v672 = vsub.f32 %v668, %v671
      %v673 = vmul.f32 %v672, 1.442695
      %v674 = vpow.pop %v673
      %v675 = vsel %vm258, %v674, 0.0
      %676 = vadd.xlane.f32.xlu0 %v675
      %v677 = vpop.xlane.xlu0 %676
      %v678 = vrcp.pop %v677
      %v679 = vmul.f32 %v674, %v678
      %680 = vrot.lane.b32.xlu0 %v243, 112
      %v681 = vpop.permute.xlu0 %680
      %v684 = vsel %vm258, %v679, 0
      %686 = vmatprep.subr.mxu0 0.0
      %687 = vmatpush1.msra.mxu0 0.0
      %688 = vmatprep.subr.mxu0 0.0
      %689 = vmatpush1.msra.mxu0 0.0
      %690 = vmatprep.subr.mxu0 0.0
      %691 = vmatpush1.msra.mxu0 0.0
      %692 = vmatprep.subr.mxu0 0.0
      %693 = vmatpush1.msra.mxu0 0.0
      %694 = vmatprep.subr.mxu0 0.0
      %695 = vmatpush1.msra.mxu0 0.0
      %696 = vmatprep.subr.mxu0 0.0
      %697 = vmatpush1.msra.mxu0 0.0
      %698 = vmatprep.subr.mxu0 0.0
      %699 = vmatpush1.msra.mxu0 0.0
      %700 = vmatprep.subr.mxu0 0.0
      %701 = vmatpush1.msra.mxu0 0.0
      %702 = vmatprep.subr.mxu0 0.0
      %703 = vmatpush1.msra.mxu0 0.0
      %704 = vmatprep.subr.mxu0 0.0
      %705 = vmatpush1.msra.mxu0 0.0
      %706 = vmatprep.subr.mxu0 0.0
      %707 = vmatpush1.msra.mxu0 0.0
      %708 = vmatprep.subr.mxu0 0.0
      %709 = vmatpush1.msra.mxu0 0.0
      %710 = vmatprep.subr.mxu0 0.0
      %711 = vmatpush1.msra.mxu0 0.0
      %712 = vmatprep.subr.mxu0 0.0
      %713 = vmatpush1.msra.mxu0 0.0
      %714 = vmatprep.subr.mxu0 0.0
      %715 = vmatpush1.msra.mxu0 0.0
      %716 = vmatprep.subr.mxu0 0.0
      %717 = vmatpush1.msra.mxu0 %v681
      %718 = vmatprep.subr.mxu0 0.0
      %719 = vmatpush2.msra.mxu0 0.0
      %720 = vmatprep.subr.mxu0 0.0
      %721 = vmatpush2.msra.mxu0 0.0
      %722 = vmatprep.subr.mxu0 0.0
      %723 = vmatpush2.msra.mxu0 0.0
      %724 = vmatprep.subr.mxu0 0.0
      %725 = vmatpush2.msra.mxu0 0.0
      %726 = vmatprep.subr.mxu0 0.0
      %727 = vmatpush2.msra.mxu0 0.0
      %728 = vmatprep.subr.mxu0 0.0
      %729 = vmatpush2.msra.mxu0 0.0
      %730 = vmatprep.subr.mxu0 0.0
      %731 = vmatpush2.msra.mxu0 0.0
      %732 = vmatprep.subr.mxu0 0.0
      %733 = vmatpush2.msra.mxu0 0.0
      %734 = vmatprep.subr.mxu0 0.0
      %735 = vmatpush2.msra.mxu0 0.0
      %736 = vmatprep.subr.mxu0 0.0
      %737 = vmatpush2.msra.mxu0 0.0
      %738 = vmatprep.subr.mxu0 0.0
      %739 = vmatpush2.msra.mxu0 0.0
      %740 = vmatprep.subr.mxu0 0.0
      %741 = vmatpush2.msra.mxu0 0.0
      %742 = vmatprep.subr.mxu0 0.0
      %743 = vmatpush2.msra.mxu0 0.0
      %744 = vmatprep.subr.mxu0 0.0
      %745 = vmatpush2.msra.mxu0 0.0
      %746 = vmatprep.subr.mxu0 0.0
      %747 = vmatpush2.msra.mxu0 0.0
      %748 = vmatprep.subr.mxu0 0.0
      %749 = vmatpush2.msra.mxu0 0.0
      %750 = vmatprep.mubr.f32.mxu0 0.0
      %751 = vmatmul.mubr.f32.gmra.mxu0 %v684
      %v752 = vpop.f32.mrf.mxu0
      %v753 = vadd.f32 0.0, %v752
      %v754 = vpop.f32.mrf.mxu0
      %755 = vdwg.mxu0
      %756 = vrot.lane.b32.xlu0 %v241, 104
      %v757 = vpop.permute.xlu0 %756
      %758 = vrot.lane.b32.xlu0 %v242, 104
      %v759 = vpop.permute.xlu0 %758
      %v760 = vsel %vm258, %v757, 0
      %v762 = vsel %vm258, %v759, 0
      %764 = vmatprep.subr.mxu0 0.0
      %765 = vmatpush1.xpose.msra.mxu0 0.0
      %766 = vmatprep.subr.mxu0 0.0
      %767 = vmatpush1.xpose.msra.mxu0 0.0
      %768 = vmatprep.subr.mxu0 0.0
      %769 = vmatpush1.xpose.msra.mxu0 0.0
      %770 = vmatprep.subr.mxu0 0.0
      %771 = vmatpush1.xpose.msra.mxu0 0.0
      %772 = vmatprep.subr.mxu0 0.0
      %773 = vmatpush1.xpose.msra.mxu0 0.0
      %774 = vmatprep.subr.mxu0 0.0
      %775 = vmatpush1.xpose.msra.mxu0 0.0
      %776 = vmatprep.subr.mxu0 0.0
      %777 = vmatpush1.xpose.msra.mxu0 0.0
      %778 = vmatprep.subr.mxu0 0.0
      %779 = vmatpush1.xpose.msra.mxu0 0.0
      %780 = vmatprep.subr.mxu0 0.0
      %781 = vmatpush1.xpose.msra.mxu0 0.0
      %782 = vmatprep.subr.mxu0 0.0
      %783 = vmatpush1.xpose.msra.mxu0 0.0
      %784 = vmatprep.subr.mxu0 0.0
      %785 = vmatpush1.xpose.msra.mxu0 0.0
      %786 = vmatprep.subr.mxu0 0.0
      %787 = vmatpush1.xpose.msra.mxu0 0.0
      %788 = vmatprep.subr.mxu0 0.0
      %789 = vmatpush1.xpose.msra.mxu0 0.0
      %790 = vmatprep.subr.mxu0 0.0
      %791 = vmatpush1.xpose.msra.mxu0 0.0
      %792 = vmatprep.subr.mxu0 0.0
      %793 = vmatpush1.xpose.msra.mxu0 0.0
      %794 = vmatprep.subr.mxu0 0.0
      %795 = vmatpush1.xpose.msra.mxu0 %v762
      %796 = vmatprep.subr.mxu0 0.0
      %797 = vmatpush2.xpose.msra.mxu0 0.0
      %798 = vmatprep.subr.mxu0 0.0
      %799 = vmatpush2.xpose.msra.mxu0 0.0
      %800 = vmatprep.subr.mxu0 0.0
      %801 = vmatpush2.xpose.msra.mxu0 0.0
      %802 = vmatprep.subr.mxu0 0.0
      %803 = vmatpush2.xpose.msra.mxu0 0.0
      %804 = vmatprep.subr.mxu0 0.0
      %805 = vmatpush2.xpose.msra.mxu0 0.0
      %806 = vmatprep.subr.mxu0 0.0
      %807 = vmatpush2.xpose.msra.mxu0 0.0
      %808 = vmatprep.subr.mxu0 0.0
      %809 = vmatpush2.xpose.msra.mxu0 0.0
      %810 = vmatprep.subr.mxu0 0.0
      %811 = vmatpush2.xpose.msra.mxu0 0.0
      %812 = vmatprep.subr.mxu0 0.0
      %813 = vmatpush2.xpose.msra.mxu0 0.0
      %814 = vmatprep.subr.mxu0 0.0
      %815 = vmatpush2.xpose.msra.mxu0 0.0
      %816 = vmatprep.subr.mxu0 0.0
      %817 = vmatpush2.xpose.msra.mxu0 0.0
      %818 = vmatprep.subr.mxu0 0.0
      %819 = vmatpush2.xpose.msra.mxu0 0.0
      %820 = vmatprep.subr.mxu0 0.0
      %821 = vmatpush2.xpose.msra.mxu0 0.0
      %822 = vmatprep.subr.mxu0 0.0
      %823 = vmatpush2.xpose.msra.mxu0 0.0
      %824 = vmatprep.subr.mxu0 0.0
      %825 = vmatpush2.xpose.msra.mxu0 0.0
      %826 = vmatprep.subr.mxu0 0.0
      %827 = vmatpush2.xpose.msra.mxu0 0.0
      %828 = vmatprep.mubr.f32.mxu0 0.0
      %829 = vmatmul.mubr.f32.gmra.mxu0 %v760
      %v830 = vpop.f32.mrf.mxu0
      %v831 = vadd.f32 0.0, %v830
      %v832 = vpop.f32.mrf.mxu0
      %833 = vdwg.mxu0
      %v834 = vmul.f32 %v831, 0.35355338
      %v835 = vadd.f32 %v834, %v257
      %v836 = vsel %vm258, %v835, -inf
      %837 = vmax.xlane.f32.xlu0 %v836
      %v838 = vpop.xlane.xlu0 %837
      %v839 = vsub.f32 %v835, %v838
      %v840 = vmul.f32 %v839, 1.442695
      %v841 = vpow.pop %v840
      %v842 = vsel %vm258, %v841, 0.0
      %843 = vadd.xlane.f32.xlu0 %v842
      %v844 = vpop.xlane.xlu0 %843
      %v845 = vrcp.pop %v844
      %v846 = vmul.f32 %v841, %v845
      %847 = vrot.lane.b32.xlu0 %v243, 104
      %v848 = vpop.permute.xlu0 %847
      %v851 = vsel %vm258, %v846, 0
      %853 = vmatprep.subr.mxu0 0.0
      %854 = vmatpush1.msra.mxu0 0.0
      %855 = vmatprep.subr.mxu0 0.0
      %856 = vmatpush1.msra.mxu0 0.0
      %857 = vmatprep.subr.mxu0 0.0
      %858 = vmatpush1.msra.mxu0 0.0
      %859 = vmatprep.subr.mxu0 0.0
      %860 = vmatpush1.msra.mxu0 0.0
      %861 = vmatprep.subr.mxu0 0.0
      %862 = vmatpush1.msra.mxu0 0.0
      %863 = vmatprep.subr.mxu0 0.0
      %864 = vmatpush1.msra.mxu0 0.0
      %865 = vmatprep.subr.mxu0 0.0
      %866 = vmatpush1.msra.mxu0 0.0
      %867 = vmatprep.subr.mxu0 0.0
      %868 = vmatpush1.msra.mxu0 0.0
      %869 = vmatprep.subr.mxu0 0.0
      %870 = vmatpush1.msra.mxu0 0.0
      %871 = vmatprep.subr.mxu0 0.0
      %872 = vmatpush1.msra.mxu0 0.0
      %873 = vmatprep.subr.mxu0 0.0
      %874 = vmatpush1.msra.mxu0 0.0
      %875 = vmatprep.subr.mxu0 0.0
      %876 = vmatpush1.msra.mxu0 0.0
      %877 = vmatprep.subr.mxu0 0.0
      %878 = vmatpush1.msra.mxu0 0.0
      %879 = vmatprep.subr.mxu0 0.0
      %880 = vmatpush1.msra.mxu0 0.0
      %881 = vmatprep.subr.mxu0 0.0
      %882 = vmatpush1.msra.mxu0 0.0
      %883 = vmatprep.subr.mxu0 0.0
      %884 = vmatpush1.msra.mxu0 %v848
      %885 = vmatprep.subr.mxu0 0.0
      %886 = vmatpush2.msra.mxu0 0.0
      %887 = vmatprep.subr.mxu0 0.0
      %888 = vmatpush2.msra.mxu0 0.0
      %889 = vmatprep.subr.mxu0 0.0
      %890 = vmatpush2.msra.mxu0 0.0
      %891 = vmatprep.subr.mxu0 0.0
      %892 = vmatpush2.msra.mxu0 0.0
      %893 = vmatprep.subr.mxu0 0.0
      %894 = vmatpush2.msra.mxu0 0.0
      %895 = vmatprep.subr.mxu0 0.0
      %896 = vmatpush2.msra.mxu0 0.0
      %897 = vmatprep.subr.mxu0 0.0
      %898 = vmatpush2.msra.mxu0 0.0
      %899 = vmatprep.subr.mxu0 0.0
      %900 = vmatpush2.msra.mxu0 0.0
      %901 = vmatprep.subr.mxu0 0.0
      %902 = vmatpush2.msra.mxu0 0.0
      %903 = vmatprep.subr.mxu0 0.0
      %904 = vmatpush2.msra.mxu0 0.0
      %905 = vmatprep.subr.mxu0 0.0
      %906 = vmatpush2.msra.mxu0 0.0
      %907 = vmatprep.subr.mxu0 0.0
      %908 = vmatpush2.msra.mxu0 0.0
      %909 = vmatprep.subr.mxu0 0.0
      %910 = vmatpush2.msra.mxu0 0.0
      %911 = vmatprep.subr.mxu0 0.0
      %912 = vmatpush2.msra.mxu0 0.0
      %913 = vmatprep.subr.mxu0 0.0
      %914 = vmatpush2.msra.mxu0 0.0
      %915 = vmatprep.subr.mxu0 0.0
      %916 = vmatpush2.msra.mxu0 0.0
      %917 = vmatprep.mubr.f32.mxu0 0.0
      %918 = vmatmul.mubr.f32.gmra.mxu0 %v851
      %v919 = vpop.f32.mrf.mxu0
      %v920 = vadd.f32 0.0, %v919
      %v921 = vpop.f32.mrf.mxu0
      %922 = vdwg.mxu0
      %924 = vrot.lane.b32.xlu0 %v586, 8
      %v925 = vpop.permute.xlu0 %924
      %928 = vrot.lane.b32.xlu0 %v753, 16
      %v929 = vpop.permute.xlu0 %928
      %932 = vrot.lane.b32.xlu0 %v920, 24
      %v933 = vpop.permute.xlu0 %932
      %v935 = vsel %vm258, %v418, %v925
      %vm936 = vcmask 130048
      %v937 = vsel %vm936, %v935, %v929
      %vm938 = vcmask 195584
      %v939 = vsel %vm938, %v937, %v933
      %vm940 = vcmask 261120
      %941 = vst.msk [vmem:[%s240] sm:$0xff] %vm940, %v939
      %p942 = scmp.lt.s32.totalorder %s15, 1
      %s943 = scalar_select %p942, %s15, 1
      %s944 = smul.addr %s943, 8
      %s945 = scalar_lea.vmem %s4, %s944
      // Predicated region
      $region37: #{transformer_forward.40} parent=35 // pred_check
        %p946 = pneg %p137
      $region38: #{transformer_forward.40} parent=35 // pred_check_branch
        %948 = sbr.rel (%p946) target = $region40
      $region39: #{transformer_forward.40} parent=35 // pred_region
        _
      $region40: #{transformer_forward.40} parent=35 // pred_fallthru
        _
    $region36: #{transformer_forward.40} parent=5 // pred_fallthru
      _
    %p949 = scmp.le.s32.totalorder 2, %s10
    // Predicated region
    $region41: #{transformer_forward.40} parent=5 // pred_check
      %p950 = pneg %p949
    $region42: #{transformer_forward.40} parent=5 // pred_check_branch
      %952 = sbr.rel (%p950) target = $region44
    $region43: #{transformer_forward.40} parent=5 // pred_region
      %s953 = ssub.s32 %s10, 2
      // Predicated region
      $region45: #{transformer_forward.40} parent=43 // pred_check
        %p954 = pneg %p143
      $region46: #{transformer_forward.40} parent=43 // pred_check_branch
        %956 = sbr.rel (%p954) target = $region48
      $region47: #{transformer_forward.40} parent=43 // pred_region
        %p957 = scmp.lt.s32.totalorder %s16, 1
        %s958 = scalar_select %p957, %s16, 1
        %s959 = smul.addr %s958, 8
        %s960 = scalar_lea.vmem %s4, %s959
      $region48: #{transformer_forward.40} parent=43 // pred_fallthru
        _
    $region44: #{transformer_forward.40} parent=5 // pred_fallthru
      _
  $region6: #{transformer_forward.40} parent=0 // loop_footer
    %s14 = sadd.s32 1, %s10
  $region7: #{transformer_forward.40} parent=0 // loop_footer_branch
    %9 = sbr.rel target = $region3
  $region8: #{transformer_forward.40} parent=0 // loop_exit
    _

// kernel: transformer_forward.57
$region0: #{transformer_forward.57}
  #allocation0 [shape = 'u32[]', space=smem, size = 0x4, offset = 0x4, fixed_abs, tag = 'smem constant byte address 0x4 - core index']
  #allocation1 [shape = 'u32[144,128]{1,0:T(1,128)}', space=vmem, size = 0x12000, scoped, tag = 'internal scratch']
  %s0 = inlined_call_operand.vmem [shape: f32[16,32], index: 0, kind: input, shape index: {}]
  %s1 = inlined_call_operand.vmem [shape: f32[32,128], index: 1, kind: input, shape index: {}]
  %s2 = inlined_call_operand.vmem [shape: f32[1,128], index: 2, kind: input, shape index: {}]
  %s3 = inlined_call_operand.vmem [shape: f32[16,128], index: 3, kind: output, shape index: {}]
  %s4 = sld [smem:[#allocation0]]
  $region22: #{transformer_forward.57} parent=0
    _
  %s6 = ssub.s32 1, %s4
  %s7 = scalar_select 0, %s6, %s4
  // Predicated region
  $region2: #{transformer_forward.57} parent=0 // pred_check
    _
  $region3: #{transformer_forward.57} parent=0 // pred_check_branch
    %9 = sbr.rel (0) target = $region5
  $region4: #{transformer_forward.57} parent=0 // pred_region
    _
  $region5: #{transformer_forward.57} parent=0 // pred_fallthru
    _
  // Predicated region
  $region6: #{transformer_forward.57} parent=0 // pred_check
    _
  $region7: #{transformer_forward.57} parent=0 // pred_check_branch
    %11 = sbr.rel (0) target = $region9
  $region8: #{transformer_forward.57} parent=0 // pred_region
    _
  $region9: #{transformer_forward.57} parent=0 // pred_fallthru
    _
  // Predicated region
  $region10: #{transformer_forward.57} parent=0 // pred_check
    _
  $region11: #{transformer_forward.57} parent=0 // pred_check_branch
    %13 = sbr.rel (0) target = $region13
  $region12: #{transformer_forward.57} parent=0 // pred_region
    _
  $region13: #{transformer_forward.57} parent=0 // pred_fallthru
    _
  %v14 = vld [vmem:[%s0] sm:$0xff]
  %v15 = vld [vmem:[%s0 + $0x8] sm:$0xff]
  %v16 = vld [vmem:[%s1] sm:$0xff]
  %v17 = vld [vmem:[%s1 + $0x8] sm:$0xff]
  %v18 = vld [vmem:[%s1 + $0x10] sm:$0xff]
  %v19 = vld [vmem:[%s1 + $0x18] sm:$0xff]
  %v20 = vld [vmem:[%s2] sm:$0x1]
  %v22 = vlaneseq
  %v23 = vshrl.u32 %v22, 7
  %v24 = vsub.s32 0, %v23
  %v25 = vrot.slane %v20, %v24
  %vm27 = vcmask 261120
  %v29 = vsel %vm27, %v14, 0
  %v32 = vsel %vm27, %v15, 0
  %34 = vmatprep.subr.mxu0 0.0
  %35 = vmatpush1.msra.mxu0 0.0
  %36 = vmatprep.subr.mxu0 0.0
  %37 = vmatpush1.msra.mxu0 0.0
  %38 = vmatprep.subr.mxu0 0.0
  %39 = vmatpush1.msra.mxu0 0.0
  %40 = vmatprep.subr.mxu0 0.0
  %41 = vmatpush1.msra.mxu0 0.0
  %42 = vmatprep.subr.mxu0 0.0
  %43 = vmatpush1.msra.mxu0 0.0
  %44 = vmatprep.subr.mxu0 0.0
  %45 = vmatpush1.msra.mxu0 0.0
  %46 = vmatprep.subr.mxu0 0.0
  %47 = vmatpush1.msra.mxu0 0.0
  %48 = vmatprep.subr.mxu0 0.0
  %49 = vmatpush1.msra.mxu0 0.0
  %50 = vmatprep.subr.mxu0 0.0
  %51 = vmatpush1.msra.mxu0 0.0
  %52 = vmatprep.subr.mxu0 0.0
  %53 = vmatpush1.msra.mxu0 0.0
  %54 = vmatprep.subr.mxu0 0.0
  %55 = vmatpush1.msra.mxu0 0.0
  %56 = vmatprep.subr.mxu0 0.0
  %57 = vmatpush1.msra.mxu0 0.0
  %58 = vmatprep.subr.mxu0 0.0
  %59 = vmatpush1.msra.mxu0 %v19
  %60 = vmatprep.subr.mxu0 0.0
  %61 = vmatpush1.msra.mxu0 %v18
  %62 = vmatprep.subr.mxu0 0.0
  %63 = vmatpush1.msra.mxu0 %v17
  %64 = vmatprep.subr.mxu0 0.0
  %65 = vmatpush1.msra.mxu0 %v16
  %66 = vmatprep.subr.mxu0 0.0
  %67 = vmatpush2.msra.mxu0 0.0
  %68 = vmatprep.subr.mxu0 0.0
  %69 = vmatpush2.msra.mxu0 0.0
  %70 = vmatprep.subr.mxu0 0.0
  %71 = vmatpush2.msra.mxu0 0.0
  %72 = vmatprep.subr.mxu0 0.0
  %73 = vmatpush2.msra.mxu0 0.0
  %74 = vmatprep.subr.mxu0 0.0
  %75 = vmatpush2.msra.mxu0 0.0
  %76 = vmatprep.subr.mxu0 0.0
  %77 = vmatpush2.msra.mxu0 0.0
  %78 = vmatprep.subr.mxu0 0.0
  %79 = vmatpush2.msra.mxu0 0.0
  %80 = vmatprep.subr.mxu0 0.0
  %81 = vmatpush2.msra.mxu0 0.0
  %82 = vmatprep.subr.mxu0 0.0
  %83 = vmatpush2.msra.mxu0 0.0
  %84 = vmatprep.subr.mxu0 0.0
  %85 = vmatpush2.msra.mxu0 0.0
  %86 = vmatprep.subr.mxu0 0.0
  %87 = vmatpush2.msra.mxu0 0.0
  %88 = vmatprep.subr.mxu0 0.0
  %89 = vmatpush2.msra.mxu0 0.0
  %90 = vmatprep.subr.mxu0 0.0
  %91 = vmatpush2.msra.mxu0 0.0
  %92 = vmatprep.subr.mxu0 0.0
  %93 = vmatpush2.msra.mxu0 0.0
  %94 = vmatprep.subr.mxu0 0.0
  %95 = vmatpush2.msra.mxu0 0.0
  %96 = vmatprep.subr.mxu0 0.0
  %97 = vmatpush2.msra.mxu0 0.0
  %98 = vmatprep.mubr.f32.mxu0 0.0
  %99 = vmatmul.mubr.f32.gmra.mxu0 %v29
  %v100 = vpop.f32.mrf.mxu0
  %v101 = vadd.f32 %v25, %v100
  %v102 = vpop.f32.mrf.mxu0
  %103 = vmatprep.mubr.f32.mxu0 0.0
  %104 = vmatmul.mubr.f32.gmra.mxu0 %v32
  %v105 = vpop.f32.mrf.mxu0
  %v106 = vadd.f32 %v25, %v105
  %v107 = vpop.f32.mrf.mxu0
  %108 = vdwg.mxu0
  %109 = vst [vmem:[%s3] sm:$0xff] %v101
  %110 = vst [vmem:[%s3 + $0x8] sm:$0xff] %v106
  // Predicated region
  $region14: #{transformer_forward.57} parent=0 // pred_check
    _
  $region15: #{transformer_forward.57} parent=0 // pred_check_branch
    %112 = sbr.rel (0) target = $region17
  $region16: #{transformer_forward.57} parent=0 // pred_region
    _
  $region17: #{transformer_forward.57} parent=0 // pred_fallthru
    _
  // Predicated region
  $region18: #{transformer_forward.57} parent=0 // pred_check
    _
  $region19: #{transformer_forward.57} parent=0 // pred_check_branch
    %114 = sbr.rel (0) target = $region21
  $region20: #{transformer_forward.57} parent=0 // pred_region
    _
  $region21: #{transformer_forward.57} parent=0 // pred_fallthru
    _

// kernel: transformer_forward.49
$region0: #{transformer_forward.49}
  #allocation0 [shape = 'u32[]', space=smem, size = 0x4, offset = 0x4, fixed_abs, tag = 'smem constant byte address 0x4 - core index']
  #allocation1 [shape = 'u32[144,128]{1,0:T(1,128)}', space=vmem, size = 0x12000, scoped, tag = 'internal scratch']
  %s0 = inlined_call_operand.vmem [shape: f32[2,8,32], index: 0, kind: input, shape index: {}]
  %s1 = inlined_call_operand.vmem [shape: f32[2,8,32], index: 1, kind: input, shape index: {}]
  %s2 = inlined_call_operand.vmem [shape: f32[2,8,32], index: 2, kind: input, shape index: {}]
  %s3 = inlined_call_operand.vmem [shape: f32[2,1,8], index: 3, kind: input, shape index: {}]
  %s4 = inlined_call_operand.vmem [shape: f32[2,8,32], index: 4, kind: output, shape index: {0}]
  %s5 = inlined_call_operand.hbm [shape: f32[2,4,8,8], index: 5, kind: output, shape index: {1}]
  %6 = xla_tuple %s4, %s5
  %s7 = sld [smem:[#allocation0]]
  $region57: #{transformer_forward.49} parent=0
    _
  %s9 = ssub.s32 1, %s7
  %s10 = scalar_select 0, %s9, %s7
  $region1: #{transformer_forward.49} parent=0
    #allocation2 [shape = 'u8[32768]{0}', space=vmem, size = 0x8000, scoped, tag = 'output window, operand 1']
    #allocation3 [shape = 's32[2]{0}', space=sflag, size = 0x8, scoped, tag = 'scoped memory for transformer_forward.49']
    %11 = vsyncpa [#allocation3], 0
    %s12 = scalar_lea.sflag [#allocation3], 1
    %13 = vsyncpa %s12, 0
    loop: start=0, step=1, limit=4
    $region2: #{transformer_forward.49} parent=1 // loop_pre_header
      _
    $region3: #{transformer_forward.49} parent=1 // loop_header
      %s15 = sphi 0, %s19
      %p16 = scmp.ge.s32.totalorder %s15, 4
      %s25 = sphi 0, %s27
      %s28 = sphi 0, %s25
      %s29 = sphi 0, %s28
      %s45 = sphi 0, %s29
      %s51 = sphi 0, %s53
      %s54 = sphi 0, %s51
      %s55 = sphi 0, %s54
      %s71 = sphi 0, %s55
      %s77 = sphi 0, %s79
      %s80 = sphi 0, %s77
      %s81 = sphi 0, %s80
      %s97 = sphi 0, %s81
      %s103 = sphi 0, %s105
      %s106 = sphi 0, %s103
      %s107 = sphi 0, %s106
      %s123 = sphi 0, %s107
      %s129 = sphi 0, %s131
      %s132 = sphi 0, %s129
      %s133 = sphi 0, %s132
      %s149 = sphi 0, %s133
      %s155 = sphi 0, %s157
      %s158 = sphi 0, %s155
      %s159 = sphi 0, %s158
      %s175 = sphi 0, %s159
    $region4: #{transformer_forward.49} parent=1 // loop_header_branch
      %18 = sbr.rel (%p16) target = $region8
    $region5: #{transformer_forward.49} parent=1 // loop_body
      %s20 = ssub.s32 %s15, 1
      %s21 = ssub.s32 %s15, 2
      %s22 = sadd.s32 %s15, 1
      %s23 = ssub.s32 %s15, %s22
      %p24 = scmp.eq.s32.totalorder %s23, 0
      %s26 = sadd.s32 %s25, 1
      %s27 = scalar_select %p24, %s25, %s26
      %p30 = pneg %p24
      %p31 = scmp.eq.s32.totalorder %s15, 1
      %p32 = por %p30, %p31
      %p33 = scmp.ne.s32.totalorder %s25, %s28
      %p34 = scmp.eq.s32.totalorder %s15, 0
      %p35 = por %p33, %p34
      %p36 = scmp.ne.s32.totalorder %s25, %s28
      %p37 = scmp.eq.s32.totalorder %s20, 1
      %p38 = por %p36, %p37
      %p39 = scmp.ne.s32.totalorder %s28, %s29
      %p40 = scmp.eq.s32.totalorder %s20, 0
      %p41 = por %p39, %p40
      %p42 = scmp.ne.s32.totalorder %s28, %s29
      %p43 = scmp.eq.s32.totalorder %s21, 1
      %p44 = por %p42, %p43
      %p46 = scmp.ne.s32.totalorder %s29, %s45
      %p47 = scmp.eq.s32.totalorder %s21, 0
      %p48 = por %p46, %p47
      %s49 = ssub.s32 %s15, %s22
      %p50 = scmp.eq.s32.totalorder %s49, 0
      %s52 = sadd.s32 %s51, 1
      %s53 = scalar_select %p50, %s51, %s52
      %p56 = pneg %p50
      %p57 = scmp.eq.s32.totalorder %s15, 1
      %p58 = por %p56, %p57
      %p59 = scmp.ne.s32.totalorder %s51, %s54
      %p60 = scmp.eq.s32.totalorder %s15, 0
      %p61 = por %p59, %p60
      %p62 = scmp.ne.s32.totalorder %s51, %s54
      %p63 = scmp.eq.s32.totalorder %s20, 1
      %p64 = por %p62, %p63
      %p65 = scmp.ne.s32.totalorder %s54, %s55
      %p66 = scmp.eq.s32.totalorder %s20, 0
      %p67 = por %p65, %p66
      %p68 = scmp.ne.s32.totalorder %s54, %s55
      %p69 = scmp.eq.s32.totalorder %s21, 1
      %p70 = por %p68, %p69
      %p72 = scmp.ne.s32.totalorder %s55, %s71
      %p73 = scmp.eq.s32.totalorder %s21, 0
      %p74 = por %p72, %p73
      %s75 = ssub.s32 %s15, %s22
      %p76 = scmp.eq.s32.totalorder %s75, 0
      %s78 = sadd.s32 %s77, 1
      %s79 = scalar_select %p76, %s77, %s78
      %p82 = pneg %p76
      %p83 = scmp.eq.s32.totalorder %s15, 1
      %p84 = por %p82, %p83
      %p85 = scmp.ne.s32.totalorder %s77, %s80
      %p86 = scmp.eq.s32.totalorder %s15, 0
      %p87 = por %p85, %p86
      %p88 = scmp.ne.s32.totalorder %s77, %s80
      %p89 = scmp.eq.s32.totalorder %s20, 1
      %p90 = por %p88, %p89
      %p91 = scmp.ne.s32.totalorder %s80, %s81
      %p92 = scmp.eq.s32.totalorder %s20, 0
      %p93 = por %p91, %p92
      %p94 = scmp.ne.s32.totalorder %s80, %s81
      %p95 = scmp.eq.s32.totalorder %s21, 1
      %p96 = por %p94, %p95
      %p98 = scmp.ne.s32.totalorder %s81, %s97
      %p99 = scmp.eq.s32.totalorder %s21, 0
      %p100 = por %p98, %p99
      %s101 = ssub.s32 %s15, %s22
      %p102 = scmp.eq.s32.totalorder %s101, 0
      %s104 = sadd.s32 %s103, 1
      %s105 = scalar_select %p102, %s103, %s104
      %p108 = pneg %p102
      %p109 = scmp.eq.s32.totalorder %s15, 1
      %p110 = por %p108, %p109
      %p111 = scmp.ne.s32.totalorder %s103, %s106
      %p112 = scmp.eq.s32.totalorder %s15, 0
      %p113 = por %p111, %p112
      %p114 = scmp.ne.s32.totalorder %s103, %s106
      %p115 = scmp.eq.s32.totalorder %s20, 1
      %p116 = por %p114, %p115
      %p117 = scmp.ne.s32.totalorder %s106, %s107
      %p118 = scmp.eq.s32.totalorder %s20, 0
      %p119 = por %p117, %p118
      %p120 = scmp.ne.s32.totalorder %s106, %s107
      %p121 = scmp.eq.s32.totalorder %s21, 1
      %p122 = por %p120, %p121
      %p124 = scmp.ne.s32.totalorder %s107, %s123
      %p125 = scmp.eq.s32.totalorder %s21, 0
      %p126 = por %p124, %p125
      %s127 = ssub.s32 %s15, %s22
      %p128 = scmp.eq.s32.totalorder %s127, 0
      %s130 = sadd.s32 %s129, 1
      %s131 = scalar_select %p128, %s129, %s130
      %p134 = pneg %p128
      %p135 = scmp.eq.s32.totalorder %s15, 1
      %p136 = por %p134, %p135
      %p137 = scmp.ne.s32.totalorder %s129, %s132
      %p138 = scmp.eq.s32.totalorder %s15, 0
      %p139 = por %p137, %p138
      %p140 = scmp.ne.s32.totalorder %s129, %s132
      %p141 = scmp.eq.s32.totalorder %s20, 1
      %p142 = por %p140, %p141
      %p143 = scmp.ne.s32.totalorder %s132, %s133
      %p144 = scmp.eq.s32.totalorder %s20, 0
      %p145 = por %p143, %p144
      %p146 = scmp.ne.s32.totalorder %s132, %s133
      %p147 = scmp.eq.s32.totalorder %s21, 1
      %p148 = por %p146, %p147
      %p150 = scmp.ne.s32.totalorder %s133, %s149
      %p151 = scmp.eq.s32.totalorder %s21, 0
      %p152 = por %p150, %p151
      %s153 = ssub.s32 %s15, %s22
      %p154 = scmp.eq.s32.totalorder %s153, 0
      %s156 = sadd.s32 %s155, 1
      %s157 = scalar_select %p154, %s155, %s156
      %p160 = pneg %p154
      %p161 = scmp.eq.s32.totalorder %s15, 1
      %p162 = por %p160, %p161
      %p163 = scmp.ne.s32.totalorder %s155, %s158
      %p164 = scmp.eq.s32.totalorder %s15, 0
      %p165 = por %p163, %p164
      %p166 = scmp.ne.s32.totalorder %s155, %s158
      %p167 = scmp.eq.s32.totalorder %s20, 1
      %p168 = por %p166, %p167
      %p169 = scmp.ne.s32.totalorder %s158, %s159
      %p170 = scmp.eq.s32.totalorder %s20, 0
      %p171 = por %p169, %p170
      %p172 = scmp.ne.s32.totalorder %s158, %s159
      %p173 = scmp.eq.s32.totalorder %s21, 1
      %p174 = por %p172, %p173
      %p176 = scmp.ne.s32.totalorder %s159, %s175
      %p177 = scmp.eq.s32.totalorder %s21, 0
      %p178 = por %p176, %p177
      %p179 = scmp.le.s32.totalorder 1, %s15
      %p180 = scmp.lt.s32.totalorder %s15, 3
      %p181 = pnand %p179, %p180
      %p182 = pneg %p181
      // Predicated region
      $region9: #{transformer_forward.49} parent=5 // pred_check
        _
      $region10: #{transformer_forward.49} parent=5 // pred_check_branch
        %184 = sbr.rel (%p181) target = $region12
      $region11: #{transformer_forward.49} parent=5 // pred_region
        %s185 = ssub.s32 %s15, 1
      $region12: #{transformer_forward.49} parent=5 // pred_fallthru
        _
      %p186 = scmp.lt.s32.totalorder %s15, 2
      // Predicated region
      $region13: #{transformer_forward.49} parent=5 // pred_check
        %p187 = pneg %p186
      $region14: #{transformer_forward.49} parent=5 // pred_check_branch
        %189 = sbr.rel (%p187) target = $region16
      $region15: #{transformer_forward.49} parent=5 // pred_region
        // Predicated region
        $region17: #{transformer_forward.49} parent=15 // pred_check
          %p190 = pneg %p35
        $region18: #{transformer_forward.49} parent=15 // pred_check_branch
          %192 = sbr.rel (%p190) target = $region20
        $region19: #{transformer_forward.49} parent=15 // pred_region
          %p193 = scmp.lt.s32.totalorder %s15, 1
          %s194 = scalar_select %p193, %s15, 1
          %s195 = smul.addr %s194, 8
          %s196 = scalar_lea.vmem %s0, %s195
        $region20: #{transformer_forward.49} parent=15 // pred_fallthru
          _
        // Predicated region
        $region21: #{transformer_forward.49} parent=15 // pred_check
          %p197 = pneg %p61
        $region22: #{transformer_forward.49} parent=15 // pred_check_branch
          %199 = sbr.rel (%p197) target = $region24
        $region23: #{transformer_forward.49} parent=15 // pred_region
          %p200 = scmp.lt.s32.totalorder %s15, 1
          %s201 = scalar_select %p200, %s15, 1
          %s202 = smul.addr %s201, 8
          %s203 = scalar_lea.vmem %s1, %s202
        $region24: #{transformer_forward.49} parent=15 // pred_fallthru
          _
        // Predicated region
        $region25: #{transformer_forward.49} parent=15 // pred_check
          %p204 = pneg %p87
        $region26: #{transformer_forward.49} parent=15 // pred_check_branch
          %206 = sbr.rel (%p204) target = $region28
        $region27: #{transformer_forward.49} parent=15 // pred_region
          %p207 = scmp.lt.s32.totalorder %s15, 1
          %s208 = scalar_select %p207, %s15, 1
          %s209 = smul.addr %s208, 8
          %s210 = scalar_lea.vmem %s2, %s209
        $region28: #{transformer_forward.49} parent=15 // pred_fallthru
          _
        // Predicated region
        $region29: #{transformer_forward.49} parent=15 // pred_check
          %p211 = pneg %p113
        $region30: #{transformer_forward.49} parent=15 // pred_check_branch
          %213 = sbr.rel (%p211) target = $region32
        $region31: #{transformer_forward.49} parent=15 // pred_region
          %p214 = scmp.lt.s32.totalorder %s15, 1
          %s215 = scalar_select %p214, %s15, 1
          %s216 = scalar_lea.vmem %s3, %s215
        $region32: #{transformer_forward.49} parent=15 // pred_fallthru
          _
      $region16: #{transformer_forward.49} parent=5 // pred_fallthru
        _
      %p217 = scmp.le.s32.totalorder 1, %s15
      %p218 = scmp.lt.s32.totalorder %s15, 3
      %p219 = pnand %p217, %p218
      %p220 = pneg %p219
      // Predicated region
      $region33: #{transformer_forward.49} parent=5 // pred_check
        _
      $region34: #{transformer_forward.49} parent=5 // pred_check_branch
        %222 = sbr.rel (%p219) target = $region36
      $region35: #{transformer_forward.49} parent=5 // pred_region
        %s223 = ssub.s32 %s15, 1
        %p224 = scmp.lt.s32.totalorder %s20, 1
        %s225 = scalar_select %p224, %s20, 1
        %s226 = smul.addr %s225, 8
        %s227 = scalar_lea.vmem %s0, %s226
        %p228 = pneg %p41
        %p229 = pneg %p38
        %p230 = scmp.lt.s32.totalorder %s20, 1
        %s231 = scalar_select %p230, %s20, 1
        %s232 = smul.addr %s231, 8
        %s233 = scalar_lea.vmem %s1, %s232
        %p234 = pneg %p67
        %p235 = pneg %p64
        %p236 = scmp.lt.s32.totalorder %s20, 1
        %s237 = scalar_select %p236, %s20, 1
        %s238 = smul.addr %s237, 8
        %s239 = scalar_lea.vmem %s2, %s238
        %p240 = pneg %p93
        %p241 = pneg %p90
        %p242 = scmp.lt.s32.totalorder %s20, 1
        %s243 = scalar_select %p242, %s20, 1
        %s244 = scalar_lea.vmem %s3, %s243
        %p245 = pneg %p119
        %p246 = pneg %p116
        %p247 = pneg %p145
        %p248 = pneg %p142
        %p249 = scmp.lt.s32.totalorder %s20, 1
        %s250 = scalar_select %p249, %s20, 1
        %s251 = smul.addr %s250, 8
        %s252 = scalar_lea.vmem %s4, %s251
        %p253 = pneg %p171
        %p254 = pneg %p168
        %s255 = sand.u32 %s158, 1
        %s256 = scalar_lea.sflag [#allocation3], %s255
        %s257 = sand.u32 %s158, 1
        %s258 = smul.addr %s257, 32
        %s259 = scalar_lea.vmem [#allocation2], %s258
        %p260 = scmp.lt.s32.totalorder %s20, 1
        %s261 = scalar_select %p260, %s20, 1
        %s262 = smul.addr %s261, 8
        %s263 = scalar_lea.vmem %s0, %s262
        %p264 = scmp.lt.s32.totalorder %s20, 1
        %s265 = scalar_select %p264, %s20, 1
        %s266 = smul.addr %s265, 8
        %s267 = scalar_lea.vmem %s1, %s266
        %p268 = scmp.lt.s32.totalorder %s20, 1
        %s269 = scalar_select %p268, %s20, 1
        %s270 = smul.addr %s269, 8
        %s271 = scalar_lea.vmem %s2, %s270
        %p272 = scmp.lt.s32.totalorder %s20, 1
        %s273 = scalar_select %p272, %s20, 1
        %s274 = scalar_lea.vmem %s3, %s273
        %p275 = scmp.lt.s32.totalorder %s20, 1
        %s276 = scalar_select %p275, %s20, 1
        %s277 = smul.addr %s276, 8
        %s278 = scalar_lea.vmem %s4, %s277
        %v279 = vld [vmem:[%s263] sm:$0xff]
        %v280 = vld [vmem:[%s267] sm:$0xff]
        %v281 = vld [vmem:[%s271] sm:$0xff]
        %v282 = vld [vmem:[%s274] sm:$0x1]
        %v284 = vlaneseq
        %v285 = vshrl.u32 %v284, 7
        %v286 = vsub.s32 0, %v285
        %v287 = vrot.slane %v282, %v286
        %v289 = vlaneseq
        %v290 = vshrl.u32 %v289, 7
        %v291 = vlaneseq
        %v292 = vand.u32 %v291, 127
        %vm293 = vcmp.ge.s32.totalorder %v290, %v292
        %v294 = vsel %vm293, 0.0, -1e+09
        %v295 = vadd.f32 %v287, %v294
        %vm296 = vcmask 64512
        %v298 = vsel %vm296, %v279, 0
        %v301 = vsel %vm296, %v280, 0
        %303 = vmatprep.subr.mxu0 0.0
        %304 = vmatpush1.xpose.msra.mxu0 0.0
        %305 = vmatprep.subr.mxu0 0.0
        %306 = vmatpush1.xpose.msra.mxu0 0.0
        %307 = vmatprep.subr.mxu0 0.0
        %308 = vmatpush1.xpose.msra.mxu0 0.0
        %309 = vmatprep.subr.mxu0 0.0
        %310 = vmatpush1.xpose.msra.mxu0 0.0
        %311 = vmatprep.subr.mxu0 0.0
        %312 = vmatpush1.xpose.msra.mxu0 0.0
        %313 = vmatprep.subr.mxu0 0.0
        %314 = vmatpush1.xpose.msra.mxu0 0.0
        %315 = vmatprep.subr.mxu0 0.0
        %316 = vmatpush1.xpose.msra.mxu0 0.0
        %317 = vmatprep.subr.mxu0 0.0
        %318 = vmatpush1.xpose.msra.mxu0 0.0
        %319 = vmatprep.subr.mxu0 0.0
        %320 = vmatpush1.xpose.msra.mxu0 0.0
        %321 = vmatprep.subr.mxu0 0.0
        %322 = vmatpush1.xpose.msra.mxu0 0.0
        %323 = vmatprep.subr.mxu0 0.0
        %324 = vmatpush1.xpose.msra.mxu0 0.0
        %325 = vmatprep.subr.mxu0 0.0
        %326 = vmatpush1.xpose.msra.mxu0 0.0
        %327 = vmatprep.subr.mxu0 0.0
        %328 = vmatpush1.xpose.msra.mxu0 0.0
        %329 = vmatprep.subr.mxu0 0.0
        %330 = vmatpush1.xpose.msra.mxu0 0.0
        %331 = vmatprep.subr.mxu0 0.0
        %332 = vmatpush1.xpose.msra.mxu0 0.0
        %333 = vmatprep.subr.mxu0 0.0
        %334 = vmatpush1.xpose.msra.mxu0 %v301
        %335 = vmatprep.subr.mxu0 0.0
        %336 = vmatpush2.xpose.msra.mxu0 0.0
        %337 = vmatprep.subr.mxu0 0.0
        %338 = vmatpush2.xpose.msra.mxu0 0.0
        %339 = vmatprep.subr.mxu0 0.0
        %340 = vmatpush2.xpose.msra.mxu0 0.0
        %341 = vmatprep.subr.mxu0 0.0
        %342 = vmatpush2.xpose.msra.mxu0 0.0
        %343 = vmatprep.subr.mxu0 0.0
        %344 = vmatpush2.xpose.msra.mxu0 0.0
        %345 = vmatprep.subr.mxu0 0.0
        %346 = vmatpush2.xpose.msra.mxu0 0.0
        %347 = vmatprep.subr.mxu0 0.0
        %348 = vmatpush2.xpose.msra.mxu0 0.0
        %349 = vmatprep.subr.mxu0 0.0
        %350 = vmatpush2.xpose.msra.mxu0 0.0
        %351 = vmatprep.subr.mxu0 0.0
        %352 = vmatpush2.xpose.msra.mxu0 0.0
        %353 = vmatprep.subr.mxu0 0.0
        %354 = vmatpush2.xpose.msra.mxu0 0.0
        %355 = vmatprep.subr.mxu0 0.0
        %356 = vmatpush2.xpose.msra.mxu0 0.0
        %357 = vmatprep.subr.mxu0 0.0
        %358 = vmatpush2.xpose.msra.mxu0 0.0
        %359 = vmatprep.subr.mxu0 0.0
        %360 = vmatpush2.xpose.msra.mxu0 0.0
        %361 = vmatprep.subr.mxu0 0.0
        %362 = vmatpush2.xpose.msra.mxu0 0.0
        %363 = vmatprep.subr.mxu0 0.0
        %364 = vmatpush2.xpose.msra.mxu0 0.0
        %365 = vmatprep.subr.mxu0 0.0
        %366 = vmatpush2.xpose.msra.mxu0 0.0
        %367 = vmatprep.mubr.f32.mxu0 0.0
        %368 = vmatmul.mubr.f32.gmra.mxu0 %v298
        %v369 = vpop.f32.mrf.mxu0
        %v370 = vadd.f32 0.0, %v369
        %v371 = vpop.f32.mrf.mxu0
        %372 = vdwg.mxu0
        %v373 = vmul.f32 %v370, 0.35355338
        %v374 = vadd.f32 %v373, %v295
        %v375 = vsel %vm296, %v374, -inf
        %376 = vmax.xlane.f32.xlu0 %v375
        %v377 = vpop.xlane.xlu0 %376
        %v378 = vsub.f32 %v374, %v377
        %v379 = vmul.f32 %v378, 1.442695
        %v380 = vpow.pop %v379
        %v381 = vsel %vm296, %v380, 0.0
        %382 = vadd.xlane.f32.xlu0 %v381
        %v383 = vpop.xlane.xlu0 %382
        %v384 = vrcp.pop %v383
        %v385 = vmul.f32 %v380, %v384
        %386 = vst.msk [vmem:[%s259] sm:$0xff] %vm296, %v385
        %v388 = vsel %vm296, %v385, 0
        %390 = vmatprep.subr.mxu0 0.0
        %391 = vmatpush1.msra.mxu0 0.0
        %392 = vmatprep.subr.mxu0 0.0
        %393 = vmatpush1.msra.mxu0 0.0
        %394 = vmatprep.subr.mxu0 0.0
        %395 = vmatpush1.msra.mxu0 0.0
        %396 = vmatprep.subr.mxu0 0.0
        %397 = vmatpush1.msra.mxu0 0.0
        %398 = vmatprep.subr.mxu0 0.0
        %399 = vmatpush1.msra.mxu0 0.0
        %400 = vmatprep.subr.mxu0 0.0
        %401 = vmatpush1.msra.mxu0 0.0
        %402 = vmatprep.subr.mxu0 0.0
        %403 = vmatpush1.msra.mxu0 0.0
        %404 = vmatprep.subr.mxu0 0.0
        %405 = vmatpush1.msra.mxu0 0.0
        %406 = vmatprep.subr.mxu0 0.0
        %407 = vmatpush1.msra.mxu0 0.0
        %408 = vmatprep.subr.mxu0 0.0
        %409 = vmatpush1.msra.mxu0 0.0
        %410 = vmatprep.subr.mxu0 0.0
        %411 = vmatpush1.msra.mxu0 0.0
        %412 = vmatprep.subr.mxu0 0.0
        %413 = vmatpush1.msra.mxu0 0.0
        %414 = vmatprep.subr.mxu0 0.0
        %415 = vmatpush1.msra.mxu0 0.0
        %416 = vmatprep.subr.mxu0 0.0
        %417 = vmatpush1.msra.mxu0 0.0
        %418 = vmatprep.subr.mxu0 0.0
        %419 = vmatpush1.msra.mxu0 0.0
        %420 = vmatprep.subr.mxu0 0.0
        %421 = vmatpush1.msra.mxu0 %v281
        %422 = vmatprep.subr.mxu0 0.0
        %423 = vmatpush2.msra.mxu0 0.0
        %424 = vmatprep.subr.mxu0 0.0
        %425 = vmatpush2.msra.mxu0 0.0
        %426 = vmatprep.subr.mxu0 0.0
        %427 = vmatpush2.msra.mxu0 0.0
        %428 = vmatprep.subr.mxu0 0.0
        %429 = vmatpush2.msra.mxu0 0.0
        %430 = vmatprep.subr.mxu0 0.0
        %431 = vmatpush2.msra.mxu0 0.0
        %432 = vmatprep.subr.mxu0 0.0
        %433 = vmatpush2.msra.mxu0 0.0
        %434 = vmatprep.subr.mxu0 0.0
        %435 = vmatpush2.msra.mxu0 0.0
        %436 = vmatprep.subr.mxu0 0.0
        %437 = vmatpush2.msra.mxu0 0.0
        %438 = vmatprep.subr.mxu0 0.0
        %439 = vmatpush2.msra.mxu0 0.0
        %440 = vmatprep.subr.mxu0 0.0
        %441 = vmatpush2.msra.mxu0 0.0
        %442 = vmatprep.subr.mxu0 0.0
        %443 = vmatpush2.msra.mxu0 0.0
        %444 = vmatprep.subr.mxu0 0.0
        %445 = vmatpush2.msra.mxu0 0.0
        %446 = vmatprep.subr.mxu0 0.0
        %447 = vmatpush2.msra.mxu0 0.0
        %448 = vmatprep.subr.mxu0 0.0
        %449 = vmatpush2.msra.mxu0 0.0
        %450 = vmatprep.subr.mxu0 0.0
        %451 = vmatpush2.msra.mxu0 0.0
        %452 = vmatprep.subr.mxu0 0.0
        %453 = vmatpush2.msra.mxu0 0.0
        %454 = vmatprep.mubr.f32.mxu0 0.0
        %455 = vmatmul.mubr.f32.gmra.mxu0 %v388
        %v456 = vpop.f32.mrf.mxu0
        %v457 = vadd.f32 0.0, %v456
        %v458 = vpop.f32.mrf.mxu0
        %459 = vdwg.mxu0
        %460 = vrot.lane.b32.xlu0 %v279, 120
        %v461 = vpop.permute.xlu0 %460
        %462 = vrot.lane.b32.xlu0 %v280, 120
        %v463 = vpop.permute.xlu0 %462
        %v464 = vsel %vm296, %v461, 0
        %v466 = vsel %vm296, %v463, 0
        %468 = vmatprep.subr.mxu0 0.0
        %469 = vmatpush1.xpose.msra.mxu0 0.0
        %470 = vmatprep.subr.mxu0 0.0
        %471 = vmatpush1.xpose.msra.mxu0 0.0
        %472 = vmatprep.subr.mxu0 0.0
        %473 = vmatpush1.xpose.msra.mxu0 0.0
        %474 = vmatprep.subr.mxu0 0.0
        %475 = vmatpush1.xpose.msra.mxu0 0.0
        %476 = vmatprep.subr.mxu0 0.0
        %477 = vmatpush1.xpose.msra.mxu0 0.0
        %478 = vmatprep.subr.mxu0 0.0
        %479 = vmatpush1.xpose.msra.mxu0 0.0
        %480 = vmatprep.subr.mxu0 0.0
        %481 = vmatpush1.xpose.msra.mxu0 0.0
        %482 = vmatprep.subr.mxu0 0.0
        %483 = vmatpush1.xpose.msra.mxu0 0.0
        %484 = vmatprep.subr.mxu0 0.0
        %485 = vmatpush1.xpose.msra.mxu0 0.0
        %486 = vmatprep.subr.mxu0 0.0
        %487 = vmatpush1.xpose.msra.mxu0 0.0
        %488 = vmatprep.subr.mxu0 0.0
        %489 = vmatpush1.xpose.msra.mxu0 0.0
        %490 = vmatprep.subr.mxu0 0.0
        %491 = vmatpush1.xpose.msra.mxu0 0.0
        %492 = vmatprep.subr.mxu0 0.0
        %493 = vmatpush1.xpose.msra.mxu0 0.0
        %494 = vmatprep.subr.mxu0 0.0
        %495 = vmatpush1.xpose.msra.mxu0 0.0
        %496 = vmatprep.subr.mxu0 0.0
        %497 = vmatpush1.xpose.msra.mxu0 0.0
        %498 = vmatprep.subr.mxu0 0.0
        %499 = vmatpush1.xpose.msra.mxu0 %v466
        %500 = vmatprep.subr.mxu0 0.0
        %501 = vmatpush2.xpose.msra.mxu0 0.0
        %502 = vmatprep.subr.mxu0 0.0
        %503 = vmatpush2.xpose.msra.mxu0 0.0
        %504 = vmatprep.subr.mxu0 0.0
        %505 = vmatpush2.xpose.msra.mxu0 0.0
        %506 = vmatprep.subr.mxu0 0.0
        %507 = vmatpush2.xpose.msra.mxu0 0.0
        %508 = vmatprep.subr.mxu0 0.0
        %509 = vmatpush2.xpose.msra.mxu0 0.0
        %510 = vmatprep.subr.mxu0 0.0
        %511 = vmatpush2.xpose.msra.mxu0 0.0
        %512 = vmatprep.subr.mxu0 0.0
        %513 = vmatpush2.xpose.msra.mxu0 0.0
        %514 = vmatprep.subr.mxu0 0.0
        %515 = vmatpush2.xpose.msra.mxu0 0.0
        %516 = vmatprep.subr.mxu0 0.0
        %517 = vmatpush2.xpose.msra.mxu0 0.0
        %518 = vmatprep.subr.mxu0 0.0
        %519 = vmatpush2.xpose.msra.mxu0 0.0
        %520 = vmatprep.subr.mxu0 0.0
        %521 = vmatpush2.xpose.msra.mxu0 0.0
        %522 = vmatprep.subr.mxu0 0.0
        %523 = vmatpush2.xpose.msra.mxu0 0.0
        %524 = vmatprep.subr.mxu0 0.0
        %525 = vmatpush2.xpose.msra.mxu0 0.0
        %526 = vmatprep.subr.mxu0 0.0
        %527 = vmatpush2.xpose.msra.mxu0 0.0
        %528 = vmatprep.subr.mxu0 0.0
        %529 = vmatpush2.xpose.msra.mxu0 0.0
        %530 = vmatprep.subr.mxu0 0.0
        %531 = vmatpush2.xpose.msra.mxu0 0.0
        %532 = vmatprep.mubr.f32.mxu0 0.0
        %533 = vmatmul.mubr.f32.gmra.mxu0 %v464
        %v534 = vpop.f32.mrf.mxu0
        %v535 = vadd.f32 0.0, %v534
        %v536 = vpop.f32.mrf.mxu0
        %537 = vdwg.mxu0
        %v538 = vmul.f32 %v535, 0.35355338
        %v539 = vadd.f32 %v538, %v295
        %v540 = vsel %vm296, %v539, -inf
        %541 = vmax.xlane.f32.xlu0 %v540
        %v542 = vpop.xlane.xlu0 %541
        %v543 = vsub.f32 %v539, %v542
        %v544 = vmul.f32 %v543, 1.442695
        %v545 = vpow.pop %v544
        %v546 = vsel %vm296, %v545, 0.0
        %547 = vadd.xlane.f32.xlu0 %v546
        %v548 = vpop.xlane.xlu0 %547
        %v549 = vrcp.pop %v548
        %v550 = vmul.f32 %v545, %v549
        %s551 = scalar_lea.vmem %s259, 8 [#allocation2]
        %552 = vst.msk [vmem:[%s551] sm:$0xff] %vm296, %v550
        %554 = vrot.lane.b32.xlu0 %v281, 120
        %v555 = vpop.permute.xlu0 %554
        %v558 = vsel %vm296, %v550, 0
        %560 = vmatprep.subr.mxu0 0.0
        %561 = vmatpush1.msra.mxu0 0.0
        %562 = vmatprep.subr.mxu0 0.0
        %563 = vmatpush1.msra.mxu0 0.0
        %564 = vmatprep.subr.mxu0 0.0
        %565 = vmatpush1.msra.mxu0 0.0
        %566 = vmatprep.subr.mxu0 0.0
        %567 = vmatpush1.msra.mxu0 0.0
        %568 = vmatprep.subr.mxu0 0.0
        %569 = vmatpush1.msra.mxu0 0.0
        %570 = vmatprep.subr.mxu0 0.0
        %571 = vmatpush1.msra.mxu0 0.0
        %572 = vmatprep.subr.mxu0 0.0
        %573 = vmatpush1.msra.mxu0 0.0
        %574 = vmatprep.subr.mxu0 0.0
        %575 = vmatpush1.msra.mxu0 0.0
        %576 = vmatprep.subr.mxu0 0.0
        %577 = vmatpush1.msra.mxu0 0.0
        %578 = vmatprep.subr.mxu0 0.0
        %579 = vmatpush1.msra.mxu0 0.0
        %580 = vmatprep.subr.mxu0 0.0
        %581 = vmatpush1.msra.mxu0 0.0
        %582 = vmatprep.subr.mxu0 0.0
        %583 = vmatpush1.msra.mxu0 0.0
        %584 = vmatprep.subr.mxu0 0.0
        %585 = vmatpush1.msra.mxu0 0.0
        %586 = vmatprep.subr.mxu0 0.0
        %587 = vmatpush1.msra.mxu0 0.0
        %588 = vmatprep.subr.mxu0 0.0
        %589 = vmatpush1.msra.mxu0 0.0
        %590 = vmatprep.subr.mxu0 0.0
        %591 = vmatpush1.msra.mxu0 %v555
        %592 = vmatprep.subr.mxu0 0.0
        %593 = vmatpush2.msra.mxu0 0.0
        %594 = vmatprep.subr.mxu0 0.0
        %595 = vmatpush2.msra.mxu0 0.0
        %596 = vmatprep.subr.mxu0 0.0
        %597 = vmatpush2.msra.mxu0 0.0
        %598 = vmatprep.subr.mxu0 0.0
        %599 = vmatpush2.msra.mxu0 0.0
        %600 = vmatprep.subr.mxu0 0.0
        %601 = vmatpush2.msra.mxu0 0.0
        %602 = vmatprep.subr.mxu0 0.0
        %603 = vmatpush2.msra.mxu0 0.0
        %604 = vmatprep.subr.mxu0 0.0
        %605 = vmatpush2.msra.mxu0 0.0
        %606 = vmatprep.subr.mxu0 0.0
        %607 = vmatpush2.msra.mxu0 0.0
        %608 = vmatprep.subr.mxu0 0.0
        %609 = vmatpush2.msra.mxu0 0.0
        %610 = vmatprep.subr.mxu0 0.0
        %611 = vmatpush2.msra.mxu0 0.0
        %612 = vmatprep.subr.mxu0 0.0
        %613 = vmatpush2.msra.mxu0 0.0
        %614 = vmatprep.subr.mxu0 0.0
        %615 = vmatpush2.msra.mxu0 0.0
        %616 = vmatprep.subr.mxu0 0.0
        %617 = vmatpush2.msra.mxu0 0.0
        %618 = vmatprep.subr.mxu0 0.0
        %619 = vmatpush2.msra.mxu0 0.0
        %620 = vmatprep.subr.mxu0 0.0
        %621 = vmatpush2.msra.mxu0 0.0
        %622 = vmatprep.subr.mxu0 0.0
        %623 = vmatpush2.msra.mxu0 0.0
        %624 = vmatprep.mubr.f32.mxu0 0.0
        %625 = vmatmul.mubr.f32.gmra.mxu0 %v558
        %v626 = vpop.f32.mrf.mxu0
        %v627 = vadd.f32 0.0, %v626
        %v628 = vpop.f32.mrf.mxu0
        %629 = vdwg.mxu0
        %630 = vrot.lane.b32.xlu0 %v279, 112
        %v631 = vpop.permute.xlu0 %630
        %632 = vrot.lane.b32.xlu0 %v280, 112
        %v633 = vpop.permute.xlu0 %632
        %v634 = vsel %vm296, %v631, 0
        %v636 = vsel %vm296, %v633, 0
        %638 = vmatprep.subr.mxu0 0.0
        %639 = vmatpush1.xpose.msra.mxu0 0.0
        %640 = vmatprep.subr.mxu0 0.0
        %641 = vmatpush1.xpose.msra.mxu0 0.0
        %642 = vmatprep.subr.mxu0 0.0
        %643 = vmatpush1.xpose.msra.mxu0 0.0
        %644 = vmatprep.subr.mxu0 0.0
        %645 = vmatpush1.xpose.msra.mxu0 0.0
        %646 = vmatprep.subr.mxu0 0.0
        %647 = vmatpush1.xpose.msra.mxu0 0.0
        %648 = vmatprep.subr.mxu0 0.0
        %649 = vmatpush1.xpose.msra.mxu0 0.0
        %650 = vmatprep.subr.mxu0 0.0
        %651 = vmatpush1.xpose.msra.mxu0 0.0
        %652 = vmatprep.subr.mxu0 0.0
        %653 = vmatpush1.xpose.msra.mxu0 0.0
        %654 = vmatprep.subr.mxu0 0.0
        %655 = vmatpush1.xpose.msra.mxu0 0.0
        %656 = vmatprep.subr.mxu0 0.0
        %657 = vmatpush1.xpose.msra.mxu0 0.0
        %658 = vmatprep.subr.mxu0 0.0
        %659 = vmatpush1.xpose.msra.mxu0 0.0
        %660 = vmatprep.subr.mxu0 0.0
        %661 = vmatpush1.xpose.msra.mxu0 0.0
        %662 = vmatprep.subr.mxu0 0.0
        %663 = vmatpush1.xpose.msra.mxu0 0.0
        %664 = vmatprep.subr.mxu0 0.0
        %665 = vmatpush1.xpose.msra.mxu0 0.0
        %666 = vmatprep.subr.mxu0 0.0
        %667 = vmatpush1.xpose.msra.mxu0 0.0
        %668 = vmatprep.subr.mxu0 0.0
        %669 = vmatpush1.xpose.msra.mxu0 %v636
        %670 = vmatprep.subr.mxu0 0.0
        %671 = vmatpush2.xpose.msra.mxu0 0.0
        %672 = vmatprep.subr.mxu0 0.0
        %673 = vmatpush2.xpose.msra.mxu0 0.0
        %674 = vmatprep.subr.mxu0 0.0
        %675 = vmatpush2.xpose.msra.mxu0 0.0
        %676 = vmatprep.subr.mxu0 0.0
        %677 = vmatpush2.xpose.msra.mxu0 0.0
        %678 = vmatprep.subr.mxu0 0.0
        %679 = vmatpush2.xpose.msra.mxu0 0.0
        %680 = vmatprep.subr.mxu0 0.0
        %681 = vmatpush2.xpose.msra.mxu0 0.0
        %682 = vmatprep.subr.mxu0 0.0
        %683 = vmatpush2.xpose.msra.mxu0 0.0
        %684 = vmatprep.subr.mxu0 0.0
        %685 = vmatpush2.xpose.msra.mxu0 0.0
        %686 = vmatprep.subr.mxu0 0.0
        %687 = vmatpush2.xpose.msra.mxu0 0.0
        %688 = vmatprep.subr.mxu0 0.0
        %689 = vmatpush2.xpose.msra.mxu0 0.0
        %690 = vmatprep.subr.mxu0 0.0
        %691 = vmatpush2.xpose.msra.mxu0 0.0
        %692 = vmatprep.subr.mxu0 0.0
        %693 = vmatpush2.xpose.msra.mxu0 0.0
        %694 = vmatprep.subr.mxu0 0.0
        %695 = vmatpush2.xpose.msra.mxu0 0.0
        %696 = vmatprep.subr.mxu0 0.0
        %697 = vmatpush2.xpose.msra.mxu0 0.0
        %698 = vmatprep.subr.mxu0 0.0
        %699 = vmatpush2.xpose.msra.mxu0 0.0
        %700 = vmatprep.subr.mxu0 0.0
        %701 = vmatpush2.xpose.msra.mxu0 0.0
        %702 = vmatprep.mubr.f32.mxu0 0.0
        %703 = vmatmul.mubr.f32.gmra.mxu0 %v634
        %v704 = vpop.f32.mrf.mxu0
        %v705 = vadd.f32 0.0, %v704
        %v706 = vpop.f32.mrf.mxu0
        %707 = vdwg.mxu0
        %v708 = vmul.f32 %v705, 0.35355338
        %v709 = vadd.f32 %v708, %v295
        %v710 = vsel %vm296, %v709, -inf
        %711 = vmax.xlane.f32.xlu0 %v710
        %v712 = vpop.xlane.xlu0 %711
        %v713 = vsub.f32 %v709, %v712
        %v714 = vmul.f32 %v713, 1.442695
        %v715 = vpow.pop %v714
        %v716 = vsel %vm296, %v715, 0.0
        %717 = vadd.xlane.f32.xlu0 %v716
        %v718 = vpop.xlane.xlu0 %717
        %v719 = vrcp.pop %v718
        %v720 = vmul.f32 %v715, %v719
        %s721 = scalar_lea.vmem %s259, 16 [#allocation2]
        %722 = vst.msk [vmem:[%s721] sm:$0xff] %vm296, %v720
        %723 = vrot.lane.b32.xlu0 %v281, 112
        %v724 = vpop.permute.xlu0 %723
        %v727 = vsel %vm296, %v720, 0
        %729 = vmatprep.subr.mxu0 0.0
        %730 = vmatpush1.msra.mxu0 0.0
        %731 = vmatprep.subr.mxu0 0.0
        %732 = vmatpush1.msra.mxu0 0.0
        %733 = vmatprep.subr.mxu0 0.0
        %734 = vmatpush1.msra.mxu0 0.0
        %735 = vmatprep.subr.mxu0 0.0
        %736 = vmatpush1.msra.mxu0 0.0
        %737 = vmatprep.subr.mxu0 0.0
        %738 = vmatpush1.msra.mxu0 0.0
        %739 = vmatprep.subr.mxu0 0.0
        %740 = vmatpush1.msra.mxu0 0.0
        %741 = vmatprep.subr.mxu0 0.0
        %742 = vmatpush1.msra.mxu0 0.0
        %743 = vmatprep.subr.mxu0 0.0
        %744 = vmatpush1.msra.mxu0 0.0
        %745 = vmatprep.subr.mxu0 0.0
        %746 = vmatpush1.msra.mxu0 0.0
        %747 = vmatprep.subr.mxu0 0.0
        %748 = vmatpush1.msra.mxu0 0.0
        %749 = vmatprep.subr.mxu0 0.0
        %750 = vmatpush1.msra.mxu0 0.0
        %751 = vmatprep.subr.mxu0 0.0
        %752 = vmatpush1.msra.mxu0 0.0
        %753 = vmatprep.subr.mxu0 0.0
        %754 = vmatpush1.msra.mxu0 0.0
        %755 = vmatprep.subr.mxu0 0.0
        %756 = vmatpush1.msra.mxu0 0.0
        %757 = vmatprep.subr.mxu0 0.0
        %758 = vmatpush1.msra.mxu0 0.0
        %759 = vmatprep.subr.mxu0 0.0
        %760 = vmatpush1.msra.mxu0 %v724
        %761 = vmatprep.subr.mxu0 0.0
        %762 = vmatpush2.msra.mxu0 0.0
        %763 = vmatprep.subr.mxu0 0.0
        %764 = vmatpush2.msra.mxu0 0.0
        %765 = vmatprep.subr.mxu0 0.0
        %766 = vmatpush2.msra.mxu0 0.0
        %767 = vmatprep.subr.mxu0 0.0
        %768 = vmatpush2.msra.mxu0 0.0
        %769 = vmatprep.subr.mxu0 0.0
        %770 = vmatpush2.msra.mxu0 0.0
        %771 = vmatprep.subr.mxu0 0.0
        %772 = vmatpush2.msra.mxu0 0.0
        %773 = vmatprep.subr.mxu0 0.0
        %774 = vmatpush2.msra.mxu0 0.0
        %775 = vmatprep.subr.mxu0 0.0
        %776 = vmatpush2.msra.mxu0 0.0
        %777 = vmatprep.subr.mxu0 0.0
        %778 = vmatpush2.msra.mxu0 0.0
        %779 = vmatprep.subr.mxu0 0.0
        %780 = vmatpush2.msra.mxu0 0.0
        %781 = vmatprep.subr.mxu0 0.0
        %782 = vmatpush2.msra.mxu0 0.0
        %783 = vmatprep.subr.mxu0 0.0
        %784 = vmatpush2.msra.mxu0 0.0
        %785 = vmatprep.subr.mxu0 0.0
        %786 = vmatpush2.msra.mxu0 0.0
        %787 = vmatprep.subr.mxu0 0.0
        %788 = vmatpush2.msra.mxu0 0.0
        %789 = vmatprep.subr.mxu0 0.0
        %790 = vmatpush2.msra.mxu0 0.0
        %791 = vmatprep.subr.mxu0 0.0
        %792 = vmatpush2.msra.mxu0 0.0
        %793 = vmatprep.mubr.f32.mxu0 0.0
        %794 = vmatmul.mubr.f32.gmra.mxu0 %v727
        %v795 = vpop.f32.mrf.mxu0
        %v796 = vadd.f32 0.0, %v795
        %v797 = vpop.f32.mrf.mxu0
        %798 = vdwg.mxu0
        %799 = vrot.lane.b32.xlu0 %v279, 104
        %v800 = vpop.permute.xlu0 %799
        %801 = vrot.lane.b32.xlu0 %v280, 104
        %v802 = vpop.permute.xlu0 %801
        %v803 = vsel %vm296, %v800, 0
        %v805 = vsel %vm296, %v802, 0
        %807 = vmatprep.subr.mxu0 0.0
        %808 = vmatpush1.xpose.msra.mxu0 0.0
        %809 = vmatprep.subr.mxu0 0.0
        %810 = vmatpush1.xpose.msra.mxu0 0.0
        %811 = vmatprep.subr.mxu0 0.0
        %812 = vmatpush1.xpose.msra.mxu0 0.0
        %813 = vmatprep.subr.mxu0 0.0
        %814 = vmatpush1.xpose.msra.mxu0 0.0
        %815 = vmatprep.subr.mxu0 0.0
        %816 = vmatpush1.xpose.msra.mxu0 0.0
        %817 = vmatprep.subr.mxu0 0.0
        %818 = vmatpush1.xpose.msra.mxu0 0.0
        %819 = vmatprep.subr.mxu0 0.0
        %820 = vmatpush1.xpose.msra.mxu0 0.0
        %821 = vmatprep.subr.mxu0 0.0
        %822 = vmatpush1.xpose.msra.mxu0 0.0
        %823 = vmatprep.subr.mxu0 0.0
        %824 = vmatpush1.xpose.msra.mxu0 0.0
        %825 = vmatprep.subr.mxu0 0.0
        %826 = vmatpush1.xpose.msra.mxu0 0.0
        %827 = vmatprep.subr.mxu0 0.0
        %828 = vmatpush1.xpose.msra.mxu0 0.0
        %829 = vmatprep.subr.mxu0 0.0
        %830 = vmatpush1.xpose.msra.mxu0 0.0
        %831 = vmatprep.subr.mxu0 0.0
        %832 = vmatpush1.xpose.msra.mxu0 0.0
        %833 = vmatprep.subr.mxu0 0.0
        %834 = vmatpush1.xpose.msra.mxu0 0.0
        %835 = vmatprep.subr.mxu0 0.0
        %836 = vmatpush1.xpose.msra.mxu0 0.0
        %837 = vmatprep.subr.mxu0 0.0
        %838 = vmatpush1.xpose.msra.mxu0 %v805
        %839 = vmatprep.subr.mxu0 0.0
        %840 = vmatpush2.xpose.msra.mxu0 0.0
        %841 = vmatprep.subr.mxu0 0.0
        %842 = vmatpush2.xpose.msra.mxu0 0.0
        %843 = vmatprep.subr.mxu0 0.0
        %844 = vmatpush2.xpose.msra.mxu0 0.0
        %845 = vmatprep.subr.mxu0 0.0
        %846 = vmatpush2.xpose.msra.mxu0 0.0
        %847 = vmatprep.subr.mxu0 0.0
        %848 = vmatpush2.xpose.msra.mxu0 0.0
        %849 = vmatprep.subr.mxu0 0.0
        %850 = vmatpush2.xpose.msra.mxu0 0.0
        %851 = vmatprep.subr.mxu0 0.0
        %852 = vmatpush2.xpose.msra.mxu0 0.0
        %853 = vmatprep.subr.mxu0 0.0
        %854 = vmatpush2.xpose.msra.mxu0 0.0
        %855 = vmatprep.subr.mxu0 0.0
        %856 = vmatpush2.xpose.msra.mxu0 0.0
        %857 = vmatprep.subr.mxu0 0.0
        %858 = vmatpush2.xpose.msra.mxu0 0.0
        %859 = vmatprep.subr.mxu0 0.0
        %860 = vmatpush2.xpose.msra.mxu0 0.0
        %861 = vmatprep.subr.mxu0 0.0
        %862 = vmatpush2.xpose.msra.mxu0 0.0
        %863 = vmatprep.subr.mxu0 0.0
        %864 = vmatpush2.xpose.msra.mxu0 0.0
        %865 = vmatprep.subr.mxu0 0.0
        %866 = vmatpush2.xpose.msra.mxu0 0.0
        %867 = vmatprep.subr.mxu0 0.0
        %868 = vmatpush2.xpose.msra.mxu0 0.0
        %869 = vmatprep.subr.mxu0 0.0
        %870 = vmatpush2.xpose.msra.mxu0 0.0
        %871 = vmatprep.mubr.f32.mxu0 0.0
        %872 = vmatmul.mubr.f32.gmra.mxu0 %v803
        %v873 = vpop.f32.mrf.mxu0
        %v874 = vadd.f32 0.0, %v873
        %v875 = vpop.f32.mrf.mxu0
        %876 = vdwg.mxu0
        %v877 = vmul.f32 %v874, 0.35355338
        %v878 = vadd.f32 %v877, %v295
        %v879 = vsel %vm296, %v878, -inf
        %880 = vmax.xlane.f32.xlu0 %v879
        %v881 = vpop.xlane.xlu0 %880
        %v882 = vsub.f32 %v878, %v881
        %v883 = vmul.f32 %v882, 1.442695
        %v884 = vpow.pop %v883
        %v885 = vsel %vm296, %v884, 0.0
        %886 = vadd.xlane.f32.xlu0 %v885
        %v887 = vpop.xlane.xlu0 %886
        %v888 = vrcp.pop %v887
        %v889 = vmul.f32 %v884, %v888
        %s890 = scalar_lea.vmem %s259, 24 [#allocation2]
        %891 = vst.msk [vmem:[%s890] sm:$0xff] %vm296, %v889
        %892 = vrot.lane.b32.xlu0 %v281, 104
        %v893 = vpop.permute.xlu0 %892
        %v896 = vsel %vm296, %v889, 0
        %898 = vmatprep.subr.mxu0 0.0
        %899 = vmatpush1.msra.mxu0 0.0
        %900 = vmatprep.subr.mxu0 0.0
        %901 = vmatpush1.msra.mxu0 0.0
        %902 = vmatprep.subr.mxu0 0.0
        %903 = vmatpush1.msra.mxu0 0.0
        %904 = vmatprep.subr.mxu0 0.0
        %905 = vmatpush1.msra.mxu0 0.0
        %906 = vmatprep.subr.mxu0 0.0
        %907 = vmatpush1.msra.mxu0 0.0
        %908 = vmatprep.subr.mxu0 0.0
        %909 = vmatpush1.msra.mxu0 0.0
        %910 = vmatprep.subr.mxu0 0.0
        %911 = vmatpush1.msra.mxu0 0.0
        %912 = vmatprep.subr.mxu0 0.0
        %913 = vmatpush1.msra.mxu0 0.0
        %914 = vmatprep.subr.mxu0 0.0
        %915 = vmatpush1.msra.mxu0 0.0
        %916 = vmatprep.subr.mxu0 0.0
        %917 = vmatpush1.msra.mxu0 0.0
        %918 = vmatprep.subr.mxu0 0.0
        %919 = vmatpush1.msra.mxu0 0.0
        %920 = vmatprep.subr.mxu0 0.0
        %921 = vmatpush1.msra.mxu0 0.0
        %922 = vmatprep.subr.mxu0 0.0
        %923 = vmatpush1.msra.mxu0 0.0
        %924 = vmatprep.subr.mxu0 0.0
        %925 = vmatpush1.msra.mxu0 0.0
        %926 = vmatprep.subr.mxu0 0.0
        %927 = vmatpush1.msra.mxu0 0.0
        %928 = vmatprep.subr.mxu0 0.0
        %929 = vmatpush1.msra.mxu0 %v893
        %930 = vmatprep.subr.mxu0 0.0
        %931 = vmatpush2.msra.mxu0 0.0
        %932 = vmatprep.subr.mxu0 0.0
        %933 = vmatpush2.msra.mxu0 0.0
        %934 = vmatprep.subr.mxu0 0.0
        %935 = vmatpush2.msra.mxu0 0.0
        %936 = vmatprep.subr.mxu0 0.0
        %937 = vmatpush2.msra.mxu0 0.0
        %938 = vmatprep.subr.mxu0 0.0
        %939 = vmatpush2.msra.mxu0 0.0
        %940 = vmatprep.subr.mxu0 0.0
        %941 = vmatpush2.msra.mxu0 0.0
        %942 = vmatprep.subr.mxu0 0.0
        %943 = vmatpush2.msra.mxu0 0.0
        %944 = vmatprep.subr.mxu0 0.0
        %945 = vmatpush2.msra.mxu0 0.0
        %946 = vmatprep.subr.mxu0 0.0
        %947 = vmatpush2.msra.mxu0 0.0
        %948 = vmatprep.subr.mxu0 0.0
        %949 = vmatpush2.msra.mxu0 0.0
        %950 = vmatprep.subr.mxu0 0.0
        %951 = vmatpush2.msra.mxu0 0.0
        %952 = vmatprep.subr.mxu0 0.0
        %953 = vmatpush2.msra.mxu0 0.0
        %954 = vmatprep.subr.mxu0 0.0
        %955 = vmatpush2.msra.mxu0 0.0
        %956 = vmatprep.subr.mxu0 0.0
        %957 = vmatpush2.msra.mxu0 0.0
        %958 = vmatprep.subr.mxu0 0.0
        %959 = vmatpush2.msra.mxu0 0.0
        %960 = vmatprep.subr.mxu0 0.0
        %961 = vmatpush2.msra.mxu0 0.0
        %962 = vmatprep.mubr.f32.mxu0 0.0
        %963 = vmatmul.mubr.f32.gmra.mxu0 %v896
        %v964 = vpop.f32.mrf.mxu0
        %v965 = vadd.f32 0.0, %v964
        %v966 = vpop.f32.mrf.mxu0
        %967 = vdwg.mxu0
        %969 = vrot.lane.b32.xlu0 %v627, 8
        %v970 = vpop.permute.xlu0 %969
        %973 = vrot.lane.b32.xlu0 %v796, 16
        %v974 = vpop.permute.xlu0 %973
        %977 = vrot.lane.b32.xlu0 %v965, 24
        %v978 = vpop.permute.xlu0 %977
        %v980 = vsel %vm296, %v457, %v970
        %vm981 = vcmask 130048
        %v982 = vsel %vm981, %v980, %v974
        %vm983 = vcmask 195584
        %v984 = vsel %vm983, %v982, %v978
        %vm985 = vcmask 261120
        %986 = vst.msk [vmem:[%s278] sm:$0xff] %vm985, %v984
        %p987 = scmp.lt.s32.totalorder %s20, 1
        %s988 = scalar_select %p987, %s20, 1
        %s989 = smul.addr %s988, 8
        %s990 = scalar_lea.vmem %s4, %s989
        %s991 = sand.u32 %s158, 1
        %s992 = scalar_lea.sflag [#allocation3], %s991
        %s993 = sand.u32 %s158, 1
        %s994 = smul.addr %s993, 32
        %s995 = scalar_lea.vmem [#allocation2], %s994
        // Predicated region
        $region37: #{transformer_forward.49} parent=35 // pred_check
          %p996 = pneg %p142
        $region38: #{transformer_forward.49} parent=35 // pred_check_branch
          %998 = sbr.rel (%p996) target = $region40
        $region39: #{transformer_forward.49} parent=35 // pred_region
          _
        $region40: #{transformer_forward.49} parent=35 // pred_fallthru
          _
        // Predicated region
        $region41: #{transformer_forward.49} parent=35 // pred_check
          %p999 = pneg %p168
        $region42: #{transformer_forward.49} parent=35 // pred_check_branch
          %1001 = sbr.rel (%p999) target = $region44
        $region43: #{transformer_forward.49} parent=35 // pred_region
          %s1003 = ssub.s32 512, 512
          %1004 = vsyncadd %s992, %s1003
          %s1005 = smul.addr %s20, 4
          %s1006 = smul.addr %s1005, 128
          %s1007 = scalar_lea.hbm %s5, %s1006
          %s1008 = sshll.u32 %s995, 4
          %s1009 = int_to_ptr.vmem [resolvable:$true] %s1008
          %1014 = dma.vmem_to_hbm [thread:$0]  %s1009, 512, %s1007, %s992, 128, 128, 8
        $region44: #{transformer_forward.49} parent=35 // pred_fallthru
          _
      $region36: #{transformer_forward.49} parent=5 // pred_fallthru
        _
      %p1015 = scmp.le.s32.totalorder 2, %s15
      // Predicated region
      $region45: #{transformer_forward.49} parent=5 // pred_check
        %p1016 = pneg %p1015
      $region46: #{transformer_forward.49} parent=5 // pred_check_branch
        %1018 = sbr.rel (%p1016) target = $region48
      $region47: #{transformer_forward.49} parent=5 // pred_region
        %s1019 = ssub.s32 %s15, 2
        // Predicated region
        $region49: #{transformer_forward.49} parent=47 // pred_check
          %p1020 = pneg %p148
        $region50: #{transformer_forward.49} parent=47 // pred_check_branch
          %1022 = sbr.rel (%p1020) target = $region52
        $region51: #{transformer_forward.49} parent=47 // pred_region
          %p1023 = scmp.lt.s32.totalorder %s21, 1
          %s1024 = scalar_select %p1023, %s21, 1
          %s1025 = smul.addr %s1024, 8
          %s1026 = scalar_lea.vmem %s4, %s1025
        $region52: #{transformer_forward.49} parent=47 // pred_fallthru
          _
        // Predicated region
        $region53: #{transformer_forward.49} parent=47 // pred_check
          %p1027 = pneg %p174
        $region54: #{transformer_forward.49} parent=47 // pred_check_branch
          %1029 = sbr.rel (%p1027) target = $region56
        $region55: #{transformer_forward.49} parent=47 // pred_region
          %s1030 = sand.u32 %s159, 1
          %s1031 = scalar_lea.sflag [#allocation3], %s1030
          %s1032 = sand.u32 %s159, 1
          %s1033 = smul.addr %s1032, 32
          %s1034 = scalar_lea.vmem [#allocation2], %s1033
          %1035 = dma.done %s1031, 512
        $region56: #{transformer_forward.49} parent=47 // pred_fallthru
          _
      $region48: #{transformer_forward.49} parent=5 // pred_fallthru
        _
    $region6: #{transformer_forward.49} parent=1 // loop_footer
      %s19 = sadd.s32 1, %s15
    $region7: #{transformer_forward.49} parent=1 // loop_footer_branch
      %14 = sbr.rel target = $region3
    $region8: #{transformer_forward.49} parent=1 // loop_exit
      _
    %1036 = vsyncpa [#allocation3], 1
    %s1037 = scalar_lea.sflag [#allocation3], 1
    %1038 = vsyncpa %s1037, 1

</llo_original>
